<compile_context>
chip_gen: v6e
topology: v6e:2x2x1
jax: 0.10.0
libtpu: 0.0.40
codegen_flags: <defaults>
</compile_context>

<pallas_src>
import math

import jax
import jax.numpy as jnp
from jax.experimental import pallas as pl
from jax.experimental.pallas import tpu as pltpu

# ----------------------------- config ---------------------------------------
VOCAB = 50     # vocab size
D     = 32     # embedding_dim == transformer d_model == transformer_out
NHEAD = 4
DH    = D // NHEAD
FF    = 64     # transformer feed-forward dim
H     = 32     # rnn hidden size == rnn_out
HC    = 32     # classifier hidden
C     = 2      # num classes
B     = 2      # batch
S     = 8      # sequence length
BB    = 2 * B          # both sequences of the siamese pair in one kernel
G     = NHEAD * BB     # grouped (head, sequence) batch axis for attention


# --------------------------- helpers (traced) --------------------------------
def _layer_norm(x, g, b, eps=1e-5):
    mu = jnp.mean(x, axis=-1, keepdims=True)
    var = jnp.mean((x - mu) ** 2, axis=-1, keepdims=True)
    return (x - mu) * jax.lax.rsqrt(var + eps) * g + b


# --------------------- single fused forward kernel ---------------------------
def fused_forward_kernel(
    ids_ref, mask_ref, lens_ref, emb_ref,
    wq_ref, bq_ref, wk_ref, bk_ref, wv_ref, bv_ref, wo_ref, bo_ref,
    ln1g_ref, ln1b_ref, fw1_ref, fb1_ref, fw2_ref, fb2_ref, ln2g_ref, ln2b_ref,
    wih_ref, whh_ref, bih_ref, bhh_ref,
    cw1_ref, cb1_ref, cw2_ref, cb2_ref,
    out_ref,
):
    f32 = jnp.float32

    # ------------- embedding: exact gather via one-hot matmul (MXU) ---------
    ids = ids_ref[...]                                              # [BB*S, 1] int32
    vocab_iota = jax.lax.broadcasted_iota(jnp.int32, (BB * S, VOCAB), 1)
    onehot = (ids == vocab_iota).astype(f32)                        # [BB*S, VOCAB]
    x = jnp.dot(onehot, emb_ref[...], preferred_element_type=f32)   # [BB*S, D]

    # ------------- transformer encoder layer (post-norm, ReLU, eval) --------
    q = jnp.dot(x, wq_ref[...], preferred_element_type=f32) + bq_ref[...]
    k = jnp.dot(x, wk_ref[...], preferred_element_type=f32) + bk_ref[...]
    v = jnp.dot(x, wv_ref[...], preferred_element_type=f32) + bv_ref[...]

    q3 = q.reshape(BB, S, D)
    k3 = k.reshape(BB, S, D)
    v3 = v.reshape(BB, S, D)
    # group (head, sequence) into one leading batch axis: g = h * BB + b
    qg = jnp.concatenate([q3[:, :, h * DH:(h + 1) * DH] for h in range(NHEAD)], axis=0)
    kg = jnp.concatenate([k3[:, :, h * DH:(h + 1) * DH] for h in range(NHEAD)], axis=0)
    vg = jnp.concatenate([v3[:, :, h * DH:(h + 1) * DH] for h in range(NHEAD)], axis=0)

    # additive key-padding bias built in-kernel from the small [BB,1,S] mask
    bias = jnp.where(mask_ref[...] != 0, -1e9, 0.0).astype(f32)     # [BB, 1, S]
    bias_g = jnp.concatenate([bias] * NHEAD, axis=0)                # [G,  1, S]

    scale = 1.0 / math.sqrt(DH)
    s = jnp.einsum('gqd,gkd->gqk', qg, kg, preferred_element_type=f32) * scale + bias_g
    s = s - jnp.max(s, axis=-1, keepdims=True)                      # one softmax for all heads
    p = jnp.exp(s)
    p = p / jnp.sum(p, axis=-1, keepdims=True)
    ctx = jnp.einsum('gqk,gkd->gqd', p, vg, preferred_element_type=f32)   # [G, S, DH]

    # output projection accumulated per head (avoids cross-lane concatenation)
    wo = wo_ref[...]
    attn = jnp.zeros((BB * S, D), f32)
    for h in range(NHEAD):
        ctx_h = ctx[h * BB:(h + 1) * BB].reshape(BB * S, DH)
        attn = attn + jnp.dot(ctx_h, wo[h * DH:(h + 1) * DH, :],
                              preferred_element_type=f32)
    attn = attn + bo_ref[...]

    h1 = _layer_norm(x + attn, ln1g_ref[...], ln1b_ref[...])
    ff = jnp.maximum(
        jnp.dot(h1, fw1_ref[...], preferred_element_type=f32) + fb1_ref[...], 0.0)
    ff = jnp.dot(ff, fw2_ref[...], preferred_element_type=f32) + fb2_ref[...]
    h2 = _layer_norm(h1 + ff, ln2g_ref[...], ln2b_ref[...])        # [BB*S, D]

    # ------------- GRU: last valid hidden state, batched over 2B ------------
    # input projection hoisted out of the serial recurrence (one matmul)
    gi_all = jnp.dot(h2, wih_ref[...], preferred_element_type=f32) + bih_ref[...]
    gi_seq = gi_all.reshape(BB, S, 3 * H)
    whh = whh_ref[...]
    bhh = bhh_ref[...]
    lens = lens_ref[...]                                            # [BB, 1] int32

    h_state = jnp.zeros((BB, H), f32)
    for t in range(S):                                              # fully unrolled (S = 8)
        gi_t = gi_seq[:, t, :]                                      # [BB, 3H]
        gh = jnp.dot(h_state, whh, preferred_element_type=f32) + bhh
        r = jax.nn.sigmoid(gi_t[:, 0:H] + gh[:, 0:H])
        z = jax.nn.sigmoid(gi_t[:, H:2 * H] + gh[:, H:2 * H])
        n = jnp.tanh(gi_t[:, 2 * H:3 * H] + r * gh[:, 2 * H:3 * H])
        h_new = (1.0 - z) * n + z * h_state
        # freeze hidden state after the valid length (pack_padded semantics)
        h_state = jnp.where(lens > t, h_new, h_state)

    # ------------- classifier over [r1, r2, |r1-r2|, r1*r2] -----------------
    r1 = h_state[0:B, :]
    r2 = h_state[B:BB, :]
    feat = jnp.concatenate([r1, r2, jnp.abs(r1 - r2), r1 * r2], axis=-1)   # [B, 4H] lane-dense
    c1 = jnp.maximum(
        jnp.dot(feat, cw1_ref[...], preferred_element_type=f32) + cb1_ref[...], 0.0)
    logits = jnp.dot(c1, cw2_ref[...], preferred_element_type=f32) + cb2_ref[...]
    out_ref[...] = logits.astype(out_ref.dtype)


# ------------------------------ wrapper ---------------------------------------
def forward(params, X1, X2, len1, len2):
    ids = jnp.concatenate([X1, X2], axis=0).astype(jnp.int32)       # [BB, S]
    ids_col = ids.reshape(BB * S, 1)                                # lane-broadcast friendly
    padmask = (ids == 0).astype(jnp.int32)[:, None, :]              # [BB, 1, S]
    lens = jnp.concatenate([len1, len2], axis=0).astype(jnp.int32).reshape(BB, 1)

    tr, rnn, cls = params['tr'], params['rnn'], params['cls']
    inputs = [
        ids_col, padmask, lens, params['emb'],
        tr['wq'], tr['bq'], tr['wk'], tr['bk'], tr['wv'], tr['bv'],
        tr['wo'], tr['bo'], tr['ln1g'], tr['ln1b'],
        tr['w1'], tr['b1'], tr['w2'], tr['b2'], tr['ln2g'], tr['ln2b'],
        rnn['wih'], rnn['whh'], rnn['bih'], rnn['bhh'],
        cls['w1'], cls['b1'], cls['w2'], cls['b2'],
    ]
    vmem = pltpu.MemorySpace.VMEM
    return pl.pallas_call(
        fused_forward_kernel,
        out_shape=jax.ShapeDtypeStruct((B, C), jnp.float32),
        in_specs=[pl.BlockSpec(memory_space=vmem)] * len(inputs),
        out_specs=pl.BlockSpec(memory_space=vmem),
    )(*inputs)


# ------------------------------ parameters -----------------------------------
def init_params(key):
    ks = iter(jax.random.split(key, 32))

    def w(shape, scale=0.05):
        return jax.random.normal(next(ks), shape, jnp.float32) * scale

    emb = w((VOCAB, D), 0.1)
    emb = emb.at[0].set(0.0)                  # padding_idx=0 row zeroed

    tr = dict(
        wq=w((D, D)), bq=w((1, D)), wk=w((D, D)), bk=w((1, D)),
        wv=w((D, D)), bv=w((1, D)), wo=w((D, D)), bo=w((1, D)),
        ln1g=jnp.ones((1, D), jnp.float32), ln1b=jnp.zeros((1, D), jnp.float32),
        w1=w((D, FF)), b1=w((1, FF)), w2=w((FF, D)), b2=w((1, D)),
        ln2g=jnp.ones((1, D), jnp.float32), ln2b=jnp.zeros((1, D), jnp.float32),
    )
    rnn = dict(wih=w((D, 3 * H)), whh=w((H, 3 * H)),
               bih=w((1, 3 * H)), bhh=w((1, 3 * H)))
    cls = dict(w1=w((4 * H, HC)), b1=w((1, HC)), w2=w((HC, C)), b2=w((1, C)))
    return dict(emb=emb, tr=tr, rnn=rnn, cls=cls)


# ---------------------- pure-JAX reference (correctness) ---------------------
def reference_forward(params, X1, X2, len1, len2):
    emb, tr, rnn, cls = params['emb'], params['tr'], params['rnn'], params['cls']

    def encode(ids, lengths):
        mask = (ids == 0)
        x = jnp.take(emb, ids, axis=0)                              # [B, S, D]
        q = x @ tr['wq'] + tr['bq']
        k = x @ tr['wk'] + tr['bk']
        v = x @ tr['wv'] + tr['bv']
        qh = q.reshape(B, S, NHEAD, DH).transpose(0, 2, 1, 3)
        kh = k.reshape(B, S, NHEAD, DH).transpose(0, 2, 1, 3)
        vh = v.reshape(B, S, NHEAD, DH).transpose(0, 2, 1, 3)
        s = jnp.einsum('bhqd,bhkd->bhqk', qh, kh) / math.sqrt(DH)
        s = s + jnp.where(mask, -1e9, 0.0)[:, None, None, :]
        p = jax.nn.softmax(s, axis=-1)
        ctx = jnp.einsum('bhqk,bhkd->bhqd', p, vh).transpose(0, 2, 1, 3).reshape(B, S, D)
        attn = ctx @ tr['wo'] + tr['bo']
        h1 = _layer_norm(x + attn, tr['ln1g'], tr['ln1b'])
        ff = jax.nn.relu(h1 @ tr['w1'] + tr['b1']) @ tr['w2'] + tr['b2']
        h2 = _layer_norm(h1 + ff, tr['ln2g'], tr['ln2b'])

        h = jnp.zeros((B, H), jnp.float32)
        for t in range(S):
            gi = h2[:, t, :] @ rnn['wih'] + rnn['bih']
            gh = h @ rnn['whh'] + rnn['bhh']
            r = jax.nn.sigmoid(gi[:, :H] + gh[:, :H])
            z = jax.nn.sigmoid(gi[:, H:2 * H] + gh[:, H:2 * H])
            n = jnp.tanh(gi[:, 2 * H:] + r * gh[:, 2 * H:])
            h_new = (1.0 - z) * n + z * h
            h = jnp.where((lengths > t)[:, None], h_new, h)
        return h

    r1 = encode(X1, len1)
    r2 = encode(X2, len2)
    feat = jnp.concatenate([r1, r2, jnp.abs(r1 - r2), r1 * r2], axis=-1)
    c1 = jax.nn.relu(feat @ cls['w1'] + cls['b1'])
    return c1 @ cls['w2'] + cls['b2']


# --------------------------------- main ---------------------------------------
if __name__ == "__main__":
    root = jax.random.PRNGKey(0)
    kp, kx1, kx2 = jax.random.split(root, 3)
    params = init_params(kp)

    X1 = jax.random.randint(kx1, (B, S), 1, VOCAB).astype(jnp.int32)
    X2 = jax.random.randint(kx2, (B, S), 1, VOCAB).astype(jnp.int32)
    len1 = jnp.array([S, 5], jnp.int32)
    len2 = jnp.array([6, S], jnp.int32)
    pos = jnp.arange(S)[None, :]
    X1 = jnp.where(pos < len1[:, None], X1, 0).astype(jnp.int32)   # zero-pad tail
    X2 = jnp.where(pos < len2[:, None], X2, 0).astype(jnp.int32)

    out = jax.block_until_ready(forward(params, X1, X2, len1, len2))
    assert out.shape == (B, C)
    assert bool(jnp.all(jnp.isfinite(out)))

    # correctness check against a pure-JAX reference of the same module
    with jax.default_matmul_precision("highest"):
        ref = jax.block_until_ready(reference_forward(params, X1, X2, len1, len2))
    assert jnp.allclose(out, ref, atol=2e-3, rtol=2e-3), (out, ref)

    print("KERNEL_OK")
</pallas_src>

<mosaic_0001>
module attributes {stable_mosaic.version = 11 : i64} {
  func.func @fused_forward_kernel(%arg0: memref<32x1xi32, #tpu.memory_space<vmem>>, %arg1: memref<4x1x8xi32, #tpu.memory_space<vmem>>, %arg2: memref<4x1xi32, #tpu.memory_space<vmem>>, %arg3: memref<50x32xf32, #tpu.memory_space<vmem>>, %arg4: memref<32x32xf32, #tpu.memory_space<vmem>>, %arg5: memref<1x32xf32, #tpu.memory_space<vmem>>, %arg6: memref<32x32xf32, #tpu.memory_space<vmem>>, %arg7: memref<1x32xf32, #tpu.memory_space<vmem>>, %arg8: memref<32x32xf32, #tpu.memory_space<vmem>>, %arg9: memref<1x32xf32, #tpu.memory_space<vmem>>, %arg10: memref<32x32xf32, #tpu.memory_space<vmem>>, %arg11: memref<1x32xf32, #tpu.memory_space<vmem>>, %arg12: memref<1x32xf32, #tpu.memory_space<vmem>>, %arg13: memref<1x32xf32, #tpu.memory_space<vmem>>, %arg14: memref<32x64xf32, #tpu.memory_space<vmem>>, %arg15: memref<1x64xf32, #tpu.memory_space<vmem>>, %arg16: memref<64x32xf32, #tpu.memory_space<vmem>>, %arg17: memref<1x32xf32, #tpu.memory_space<vmem>>, %arg18: memref<1x32xf32, #tpu.memory_space<vmem>>, %arg19: memref<1x32xf32, #tpu.memory_space<vmem>>, %arg20: memref<32x96xf32, #tpu.memory_space<vmem>>, %arg21: memref<32x96xf32, #tpu.memory_space<vmem>>, %arg22: memref<1x96xf32, #tpu.memory_space<vmem>>, %arg23: memref<1x96xf32, #tpu.memory_space<vmem>>, %arg24: memref<128x32xf32, #tpu.memory_space<vmem>>, %arg25: memref<1x32xf32, #tpu.memory_space<vmem>>, %arg26: memref<32x2xf32, #tpu.memory_space<vmem>>, %arg27: memref<1x2xf32, #tpu.memory_space<vmem>>, %arg28: memref<2x2xf32, #tpu.memory_space<vmem>>) attributes {dimension_semantics = [], scalar_prefetch = 0 : i64, scratch_operands = 0 : i64, tpu.core_type = #tpu.core_type<tc>} {
    %c0 = arith.constant 0 : index
    %c0_0 = arith.constant 0 : index
    %0 = vector.load %arg0[%c0, %c0_0] : memref<32x1xi32, #tpu.memory_space<vmem>>, vector<32x1xi32>
    %1 = tpu.iota {dimensions = array<i32: 1>} : vector<32x50xi32>
    %2 = vector.broadcast %0 : vector<32x1xi32> to vector<32x50xi32>
    %3 = arith.cmpi eq, %2, %1 : vector<32x50xi32>
    %4 = arith.extui %3 : vector<32x50xi1> to vector<32x50xi32>
    %5 = arith.sitofp %4 : vector<32x50xi32> to vector<32x50xf32>
    %c0_1 = arith.constant 0 : index
    %c0_2 = arith.constant 0 : index
    %6 = vector.load %arg3[%c0_1, %c0_2] : memref<50x32xf32, #tpu.memory_space<vmem>>, vector<50x32xf32>
    %cst = arith.constant dense<0.000000e+00> : vector<32x32xf32>
    %7 = tpu.matmul %5, %6, %cst {dimension_numbers = #tpu.dot_dimension_numbers<[1], [0], [0], [1], [0, 0, 1, 1], [], []>} : vector<32x50xf32>, vector<50x32xf32>, vector<32x32xf32> -> vector<32x32xf32>
    %c0_3 = arith.constant 0 : index
    %c0_4 = arith.constant 0 : index
    %8 = vector.load %arg4[%c0_3, %c0_4] : memref<32x32xf32, #tpu.memory_space<vmem>>, vector<32x32xf32>
    %cst_5 = arith.constant dense<0.000000e+00> : vector<32x32xf32>
    %9 = tpu.matmul %7, %8, %cst_5 {dimension_numbers = #tpu.dot_dimension_numbers<[1], [0], [0], [1], [0, 0, 1, 1], [], []>} : vector<32x32xf32>, vector<32x32xf32>, vector<32x32xf32> -> vector<32x32xf32>
    %c0_6 = arith.constant 0 : index
    %c0_7 = arith.constant 0 : index
    %10 = vector.load %arg5[%c0_6, %c0_7] : memref<1x32xf32, #tpu.memory_space<vmem>>, vector<1x32xf32>
    %11 = vector.broadcast %10 : vector<1x32xf32> to vector<32x32xf32>
    %12 = arith.addf %9, %11 : vector<32x32xf32>
    %c0_8 = arith.constant 0 : index
    %c0_9 = arith.constant 0 : index
    %13 = vector.load %arg6[%c0_8, %c0_9] : memref<32x32xf32, #tpu.memory_space<vmem>>, vector<32x32xf32>
    %cst_10 = arith.constant dense<0.000000e+00> : vector<32x32xf32>
    %14 = tpu.matmul %7, %13, %cst_10 {dimension_numbers = #tpu.dot_dimension_numbers<[1], [0], [0], [1], [0, 0, 1, 1], [], []>} : vector<32x32xf32>, vector<32x32xf32>, vector<32x32xf32> -> vector<32x32xf32>
    %c0_11 = arith.constant 0 : index
    %c0_12 = arith.constant 0 : index
    %15 = vector.load %arg7[%c0_11, %c0_12] : memref<1x32xf32, #tpu.memory_space<vmem>>, vector<1x32xf32>
    %16 = vector.broadcast %15 : vector<1x32xf32> to vector<32x32xf32>
    %17 = arith.addf %14, %16 : vector<32x32xf32>
    %c0_13 = arith.constant 0 : index
    %c0_14 = arith.constant 0 : index
    %18 = vector.load %arg8[%c0_13, %c0_14] : memref<32x32xf32, #tpu.memory_space<vmem>>, vector<32x32xf32>
    %cst_15 = arith.constant dense<0.000000e+00> : vector<32x32xf32>
    %19 = tpu.matmul %7, %18, %cst_15 {dimension_numbers = #tpu.dot_dimension_numbers<[1], [0], [0], [1], [0, 0, 1, 1], [], []>} : vector<32x32xf32>, vector<32x32xf32>, vector<32x32xf32> -> vector<32x32xf32>
    %c0_16 = arith.constant 0 : index
    %c0_17 = arith.constant 0 : index
    %20 = vector.load %arg9[%c0_16, %c0_17] : memref<1x32xf32, #tpu.memory_space<vmem>>, vector<1x32xf32>
    %21 = vector.broadcast %20 : vector<1x32xf32> to vector<32x32xf32>
    %22 = arith.addf %19, %21 : vector<32x32xf32>
    %23 = vector.shape_cast %12 : vector<32x32xf32> to vector<4x8x32xf32>
    %24 = vector.shape_cast %17 : vector<32x32xf32> to vector<4x8x32xf32>
    %25 = vector.shape_cast %22 : vector<32x32xf32> to vector<4x8x32xf32>
    %26 = vector.extract_strided_slice %23 {offsets = [0, 0, 0], sizes = [4, 8, 8], strides = [1, 1, 1]} : vector<4x8x32xf32> to vector<4x8x8xf32>
    %27 = vector.extract_strided_slice %23 {offsets = [0, 0, 8], sizes = [4, 8, 8], strides = [1, 1, 1]} : vector<4x8x32xf32> to vector<4x8x8xf32>
    %28 = vector.extract_strided_slice %23 {offsets = [0, 0, 16], sizes = [4, 8, 8], strides = [1, 1, 1]} : vector<4x8x32xf32> to vector<4x8x8xf32>
    %29 = vector.extract_strided_slice %23 {offsets = [0, 0, 24], sizes = [4, 8, 8], strides = [1, 1, 1]} : vector<4x8x32xf32> to vector<4x8x8xf32>
    %30 = tpu.concatenate %26, %27, %28, %29 in 0 : vector<4x8x8xf32>, vector<4x8x8xf32>, vector<4x8x8xf32>, vector<4x8x8xf32> -> vector<16x8x8xf32>
    %31 = vector.extract_strided_slice %24 {offsets = [0, 0, 0], sizes = [4, 8, 8], strides = [1, 1, 1]} : vector<4x8x32xf32> to vector<4x8x8xf32>
    %32 = vector.extract_strided_slice %24 {offsets = [0, 0, 8], sizes = [4, 8, 8], strides = [1, 1, 1]} : vector<4x8x32xf32> to vector<4x8x8xf32>
    %33 = vector.extract_strided_slice %24 {offsets = [0, 0, 16], sizes = [4, 8, 8], strides = [1, 1, 1]} : vector<4x8x32xf32> to vector<4x8x8xf32>
    %34 = vector.extract_strided_slice %24 {offsets = [0, 0, 24], sizes = [4, 8, 8], strides = [1, 1, 1]} : vector<4x8x32xf32> to vector<4x8x8xf32>
    %35 = tpu.concatenate %31, %32, %33, %34 in 0 : vector<4x8x8xf32>, vector<4x8x8xf32>, vector<4x8x8xf32>, vector<4x8x8xf32> -> vector<16x8x8xf32>
    %36 = vector.extract_strided_slice %25 {offsets = [0, 0, 0], sizes = [4, 8, 8], strides = [1, 1, 1]} : vector<4x8x32xf32> to vector<4x8x8xf32>
    %37 = vector.extract_strided_slice %25 {offsets = [0, 0, 8], sizes = [4, 8, 8], strides = [1, 1, 1]} : vector<4x8x32xf32> to vector<4x8x8xf32>
    %38 = vector.extract_strided_slice %25 {offsets = [0, 0, 16], sizes = [4, 8, 8], strides = [1, 1, 1]} : vector<4x8x32xf32> to vector<4x8x8xf32>
    %39 = vector.extract_strided_slice %25 {offsets = [0, 0, 24], sizes = [4, 8, 8], strides = [1, 1, 1]} : vector<4x8x32xf32> to vector<4x8x8xf32>
    %40 = tpu.concatenate %36, %37, %38, %39 in 0 : vector<4x8x8xf32>, vector<4x8x8xf32>, vector<4x8x8xf32>, vector<4x8x8xf32> -> vector<16x8x8xf32>
    %c0_18 = arith.constant 0 : index
    %c0_19 = arith.constant 0 : index
    %c0_20 = arith.constant 0 : index
    %41 = vector.load %arg1[%c0_18, %c0_19, %c0_20] : memref<4x1x8xi32, #tpu.memory_space<vmem>>, vector<4x1x8xi32>
    %c0_i32 = arith.constant 0 : i32
    %42 = vector.broadcast %c0_i32 : i32 to vector<4x1x8xi32>
    %43 = arith.cmpi ne, %41, %42 : vector<4x1x8xi32>
    %cst_21 = arith.constant -1.000000e+09 : f32
    %cst_22 = arith.constant 0.000000e+00 : f32
    %44 = vector.broadcast %cst_21 : f32 to vector<4x1x8xf32>
    %45 = vector.broadcast %cst_22 : f32 to vector<4x1x8xf32>
    %46 = arith.select %43, %44, %45 : vector<4x1x8xi1>, vector<4x1x8xf32>
    %47 = tpu.concatenate %46, %46, %46, %46 in 0 : vector<4x1x8xf32>, vector<4x1x8xf32>, vector<4x1x8xf32>, vector<4x1x8xf32> -> vector<16x1x8xf32>
    "tpu.trace_start"() <{level = 10 : i32, message = "gqd,gkd->gqk"}> : () -> ()
    %cst_23 = arith.constant dense<0.000000e+00> : vector<16x8x8xf32>
    %48 = tpu.matmul %30, %35, %cst_23 {dimension_numbers = #tpu.dot_dimension_numbers<[2], [2], [1], [1], [0, 0, 0, 1, 1, 1], [0], [0]>} : vector<16x8x8xf32>, vector<16x8x8xf32>, vector<16x8x8xf32> -> vector<16x8x8xf32>
    "tpu.trace_stop"() : () -> ()
    %cst_24 = arith.constant 0.353553385 : f32
    %49 = vector.broadcast %cst_24 : f32 to vector<16x8x8xf32>
    %50 = arith.mulf %48, %49 : vector<16x8x8xf32>
    %51 = vector.broadcast %47 : vector<16x1x8xf32> to vector<16x8x8xf32>
    %52 = arith.addf %50, %51 : vector<16x8x8xf32>
    %cst_25 = arith.constant dense<0xFF800000> : vector<16x8xf32>
    %53 = vector.multi_reduction <maximumf>, %52, %cst_25 [2] : vector<16x8x8xf32> to vector<16x8xf32>
    %54 = vector.shape_cast %53 : vector<16x8xf32> to vector<16x8x1xf32>
    %55 = vector.broadcast %54 : vector<16x8x1xf32> to vector<16x8x8xf32>
    %56 = arith.subf %52, %55 : vector<16x8x8xf32>
    %57 = math.exp %56 : vector<16x8x8xf32>
    %cst_26 = arith.constant dense<0.000000e+00> : vector<16x8xf32>
    %58 = vector.multi_reduction <add>, %57, %cst_26 [2] : vector<16x8x8xf32> to vector<16x8xf32>
    %59 = vector.shape_cast %58 : vector<16x8xf32> to vector<16x8x1xf32>
    %60 = vector.broadcast %59 : vector<16x8x1xf32> to vector<16x8x8xf32>
    %61 = arith.divf %57, %60 : vector<16x8x8xf32>
    "tpu.trace_start"() <{level = 10 : i32, message = "gqk,gkd->gqd"}> : () -> ()
    %cst_27 = arith.constant dense<0.000000e+00> : vector<16x8x8xf32>
    %62 = tpu.matmul %61, %40, %cst_27 {dimension_numbers = #tpu.dot_dimension_numbers<[2], [1], [1], [2], [0, 0, 0, 1, 1, 2], [0], [0]>} : vector<16x8x8xf32>, vector<16x8x8xf32>, vector<16x8x8xf32> -> vector<16x8x8xf32>
    "tpu.trace_stop"() : () -> ()
    %c0_28 = arith.constant 0 : index
    %c0_29 = arith.constant 0 : index
    %63 = vector.load %arg10[%c0_28, %c0_29] : memref<32x32xf32, #tpu.memory_space<vmem>>, vector<32x32xf32>
    %cst_30 = arith.constant 0.000000e+00 : f32
    %64 = vector.broadcast %cst_30 : f32 to vector<32x32xf32>
    %65 = vector.extract_strided_slice %62 {offsets = [0, 0, 0], sizes = [4, 8, 8], strides = [1, 1, 1]} : vector<16x8x8xf32> to vector<4x8x8xf32>
    %66 = vector.shape_cast %65 : vector<4x8x8xf32> to vector<32x8xf32>
    %67 = vector.extract_strided_slice %63 {offsets = [0, 0], sizes = [8, 32], strides = [1, 1]} : vector<32x32xf32> to vector<8x32xf32>
    %cst_31 = arith.constant dense<0.000000e+00> : vector<32x32xf32>
    %68 = tpu.matmul %66, %67, %cst_31 {dimension_numbers = #tpu.dot_dimension_numbers<[1], [0], [0], [1], [0, 0, 1, 1], [], []>} : vector<32x8xf32>, vector<8x32xf32>, vector<32x32xf32> -> vector<32x32xf32>
    %69 = arith.addf %64, %68 : vector<32x32xf32>
    %70 = vector.extract_strided_slice %62 {offsets = [4, 0, 0], sizes = [4, 8, 8], strides = [1, 1, 1]} : vector<16x8x8xf32> to vector<4x8x8xf32>
    %71 = vector.shape_cast %70 : vector<4x8x8xf32> to vector<32x8xf32>
    %72 = vector.extract_strided_slice %63 {offsets = [8, 0], sizes = [8, 32], strides = [1, 1]} : vector<32x32xf32> to vector<8x32xf32>
    %cst_32 = arith.constant dense<0.000000e+00> : vector<32x32xf32>
    %73 = tpu.matmul %71, %72, %cst_32 {dimension_numbers = #tpu.dot_dimension_numbers<[1], [0], [0], [1], [0, 0, 1, 1], [], []>} : vector<32x8xf32>, vector<8x32xf32>, vector<32x32xf32> -> vector<32x32xf32>
    %74 = arith.addf %69, %73 : vector<32x32xf32>
    %75 = vector.extract_strided_slice %62 {offsets = [8, 0, 0], sizes = [4, 8, 8], strides = [1, 1, 1]} : vector<16x8x8xf32> to vector<4x8x8xf32>
    %76 = vector.shape_cast %75 : vector<4x8x8xf32> to vector<32x8xf32>
    %77 = vector.extract_strided_slice %63 {offsets = [16, 0], sizes = [8, 32], strides = [1, 1]} : vector<32x32xf32> to vector<8x32xf32>
    %cst_33 = arith.constant dense<0.000000e+00> : vector<32x32xf32>
    %78 = tpu.matmul %76, %77, %cst_33 {dimension_numbers = #tpu.dot_dimension_numbers<[1], [0], [0], [1], [0, 0, 1, 1], [], []>} : vector<32x8xf32>, vector<8x32xf32>, vector<32x32xf32> -> vector<32x32xf32>
    %79 = arith.addf %74, %78 : vector<32x32xf32>
    %80 = vector.extract_strided_slice %62 {offsets = [12, 0, 0], sizes = [4, 8, 8], strides = [1, 1, 1]} : vector<16x8x8xf32> to vector<4x8x8xf32>
    %81 = vector.shape_cast %80 : vector<4x8x8xf32> to vector<32x8xf32>
    %82 = vector.extract_strided_slice %63 {offsets = [24, 0], sizes = [8, 32], strides = [1, 1]} : vector<32x32xf32> to vector<8x32xf32>
    %cst_34 = arith.constant dense<0.000000e+00> : vector<32x32xf32>
    %83 = tpu.matmul %81, %82, %cst_34 {dimension_numbers = #tpu.dot_dimension_numbers<[1], [0], [0], [1], [0, 0, 1, 1], [], []>} : vector<32x8xf32>, vector<8x32xf32>, vector<32x32xf32> -> vector<32x32xf32>
    %84 = arith.addf %79, %83 : vector<32x32xf32>
    %c0_35 = arith.constant 0 : index
    %c0_36 = arith.constant 0 : index
    %85 = vector.load %arg11[%c0_35, %c0_36] : memref<1x32xf32, #tpu.memory_space<vmem>>, vector<1x32xf32>
    %86 = vector.broadcast %85 : vector<1x32xf32> to vector<32x32xf32>
    %87 = arith.addf %84, %86 : vector<32x32xf32>
    %88 = arith.addf %7, %87 : vector<32x32xf32>
    %c0_37 = arith.constant 0 : index
    %c0_38 = arith.constant 0 : index
    %89 = vector.load %arg12[%c0_37, %c0_38] : memref<1x32xf32, #tpu.memory_space<vmem>>, vector<1x32xf32>
    %c0_39 = arith.constant 0 : index
    %c0_40 = arith.constant 0 : index
    %90 = vector.load %arg13[%c0_39, %c0_40] : memref<1x32xf32, #tpu.memory_space<vmem>>, vector<1x32xf32>
    %cst_41 = arith.constant dense<0.000000e+00> : vector<32xf32>
    %91 = vector.multi_reduction <add>, %88, %cst_41 [1] : vector<32x32xf32> to vector<32xf32>
    %92 = vector.shape_cast %91 : vector<32xf32> to vector<32x1xf32>
    %cst_42 = arith.constant 3.200000e+01 : f32
    %93 = vector.broadcast %cst_42 : f32 to vector<32x1xf32>
    %94 = arith.divf %92, %93 : vector<32x1xf32>
    %95 = vector.broadcast %94 : vector<32x1xf32> to vector<32x32xf32>
    %96 = arith.subf %88, %95 : vector<32x32xf32>
    %97 = arith.mulf %96, %96 : vector<32x32xf32>
    %cst_43 = arith.constant dense<0.000000e+00> : vector<32xf32>
    %98 = vector.multi_reduction <add>, %97, %cst_43 [1] : vector<32x32xf32> to vector<32xf32>
    %99 = vector.shape_cast %98 : vector<32xf32> to vector<32x1xf32>
    %cst_44 = arith.constant 3.200000e+01 : f32
    %100 = vector.broadcast %cst_44 : f32 to vector<32x1xf32>
    %101 = arith.divf %99, %100 : vector<32x1xf32>
    %102 = vector.broadcast %94 : vector<32x1xf32> to vector<32x32xf32>
    %103 = arith.subf %88, %102 : vector<32x32xf32>
    %cst_45 = arith.constant 9.99999974E-6 : f32
    %104 = vector.broadcast %cst_45 : f32 to vector<32x1xf32>
    %105 = arith.addf %101, %104 : vector<32x1xf32>
    %106 = math.rsqrt %105 : vector<32x1xf32>
    %107 = vector.broadcast %106 : vector<32x1xf32> to vector<32x32xf32>
    %108 = arith.mulf %103, %107 : vector<32x32xf32>
    %109 = vector.broadcast %89 : vector<1x32xf32> to vector<32x32xf32>
    %110 = arith.mulf %108, %109 : vector<32x32xf32>
    %111 = vector.broadcast %90 : vector<1x32xf32> to vector<32x32xf32>
    %112 = arith.addf %110, %111 : vector<32x32xf32>
    %c0_46 = arith.constant 0 : index
    %c0_47 = arith.constant 0 : index
    %113 = vector.load %arg14[%c0_46, %c0_47] : memref<32x64xf32, #tpu.memory_space<vmem>>, vector<32x64xf32>
    %cst_48 = arith.constant dense<0.000000e+00> : vector<32x64xf32>
    %114 = tpu.matmul %112, %113, %cst_48 {dimension_numbers = #tpu.dot_dimension_numbers<[1], [0], [0], [1], [0, 0, 1, 1], [], []>} : vector<32x32xf32>, vector<32x64xf32>, vector<32x64xf32> -> vector<32x64xf32>
    %c0_49 = arith.constant 0 : index
    %c0_50 = arith.constant 0 : index
    %115 = vector.load %arg15[%c0_49, %c0_50] : memref<1x64xf32, #tpu.memory_space<vmem>>, vector<1x64xf32>
    %116 = vector.broadcast %115 : vector<1x64xf32> to vector<32x64xf32>
    %117 = arith.addf %114, %116 : vector<32x64xf32>
    %cst_51 = arith.constant 0.000000e+00 : f32
    %118 = vector.broadcast %cst_51 : f32 to vector<32x64xf32>
    %119 = arith.maximumf %117, %118 : vector<32x64xf32>
    %c0_52 = arith.constant 0 : index
    %c0_53 = arith.constant 0 : index
    %120 = vector.load %arg16[%c0_52, %c0_53] : memref<64x32xf32, #tpu.memory_space<vmem>>, vector<64x32xf32>
    %cst_54 = arith.constant dense<0.000000e+00> : vector<32x32xf32>
    %121 = tpu.matmul %119, %120, %cst_54 {dimension_numbers = #tpu.dot_dimension_numbers<[1], [0], [0], [1], [0, 0, 1, 1], [], []>} : vector<32x64xf32>, vector<64x32xf32>, vector<32x32xf32> -> vector<32x32xf32>
    %c0_55 = arith.constant 0 : index
    %c0_56 = arith.constant 0 : index
    %122 = vector.load %arg17[%c0_55, %c0_56] : memref<1x32xf32, #tpu.memory_space<vmem>>, vector<1x32xf32>
    %123 = vector.broadcast %122 : vector<1x32xf32> to vector<32x32xf32>
    %124 = arith.addf %121, %123 : vector<32x32xf32>
    %125 = arith.addf %112, %124 : vector<32x32xf32>
    %c0_57 = arith.constant 0 : index
    %c0_58 = arith.constant 0 : index
    %126 = vector.load %arg18[%c0_57, %c0_58] : memref<1x32xf32, #tpu.memory_space<vmem>>, vector<1x32xf32>
    %c0_59 = arith.constant 0 : index
    %c0_60 = arith.constant 0 : index
    %127 = vector.load %arg19[%c0_59, %c0_60] : memref<1x32xf32, #tpu.memory_space<vmem>>, vector<1x32xf32>
    %cst_61 = arith.constant dense<0.000000e+00> : vector<32xf32>
    %128 = vector.multi_reduction <add>, %125, %cst_61 [1] : vector<32x32xf32> to vector<32xf32>
    %129 = vector.shape_cast %128 : vector<32xf32> to vector<32x1xf32>
    %cst_62 = arith.constant 3.200000e+01 : f32
    %130 = vector.broadcast %cst_62 : f32 to vector<32x1xf32>
    %131 = arith.divf %129, %130 : vector<32x1xf32>
    %132 = vector.broadcast %131 : vector<32x1xf32> to vector<32x32xf32>
    %133 = arith.subf %125, %132 : vector<32x32xf32>
    %134 = arith.mulf %133, %133 : vector<32x32xf32>
    %cst_63 = arith.constant dense<0.000000e+00> : vector<32xf32>
    %135 = vector.multi_reduction <add>, %134, %cst_63 [1] : vector<32x32xf32> to vector<32xf32>
    %136 = vector.shape_cast %135 : vector<32xf32> to vector<32x1xf32>
    %cst_64 = arith.constant 3.200000e+01 : f32
    %137 = vector.broadcast %cst_64 : f32 to vector<32x1xf32>
    %138 = arith.divf %136, %137 : vector<32x1xf32>
    %139 = vector.broadcast %131 : vector<32x1xf32> to vector<32x32xf32>
    %140 = arith.subf %125, %139 : vector<32x32xf32>
    %cst_65 = arith.constant 9.99999974E-6 : f32
    %141 = vector.broadcast %cst_65 : f32 to vector<32x1xf32>
    %142 = arith.addf %138, %141 : vector<32x1xf32>
    %143 = math.rsqrt %142 : vector<32x1xf32>
    %144 = vector.broadcast %143 : vector<32x1xf32> to vector<32x32xf32>
    %145 = arith.mulf %140, %144 : vector<32x32xf32>
    %146 = vector.broadcast %126 : vector<1x32xf32> to vector<32x32xf32>
    %147 = arith.mulf %145, %146 : vector<32x32xf32>
    %148 = vector.broadcast %127 : vector<1x32xf32> to vector<32x32xf32>
    %149 = arith.addf %147, %148 : vector<32x32xf32>
    %c0_66 = arith.constant 0 : index
    %c0_67 = arith.constant 0 : index
    %150 = vector.load %arg20[%c0_66, %c0_67] : memref<32x96xf32, #tpu.memory_space<vmem>>, vector<32x96xf32>
    %cst_68 = arith.constant dense<0.000000e+00> : vector<32x96xf32>
    %151 = tpu.matmul %149, %150, %cst_68 {dimension_numbers = #tpu.dot_dimension_numbers<[1], [0], [0], [1], [0, 0, 1, 1], [], []>} : vector<32x32xf32>, vector<32x96xf32>, vector<32x96xf32> -> vector<32x96xf32>
    %c0_69 = arith.constant 0 : index
    %c0_70 = arith.constant 0 : index
    %152 = vector.load %arg22[%c0_69, %c0_70] : memref<1x96xf32, #tpu.memory_space<vmem>>, vector<1x96xf32>
    %153 = vector.broadcast %152 : vector<1x96xf32> to vector<32x96xf32>
    %154 = arith.addf %151, %153 : vector<32x96xf32>
    %155 = vector.shape_cast %154 : vector<32x96xf32> to vector<4x8x96xf32>
    %c0_71 = arith.constant 0 : index
    %c0_72 = arith.constant 0 : index
    %156 = vector.load %arg21[%c0_71, %c0_72] : memref<32x96xf32, #tpu.memory_space<vmem>>, vector<32x96xf32>
    %c0_73 = arith.constant 0 : index
    %c0_74 = arith.constant 0 : index
    %157 = vector.load %arg23[%c0_73, %c0_74] : memref<1x96xf32, #tpu.memory_space<vmem>>, vector<1x96xf32>
    %c0_75 = arith.constant 0 : index
    %c0_76 = arith.constant 0 : index
    %158 = vector.load %arg2[%c0_75, %c0_76] : memref<4x1xi32, #tpu.memory_space<vmem>>, vector<4x1xi32>
    %cst_77 = arith.constant 0.000000e+00 : f32
    %159 = vector.broadcast %cst_77 : f32 to vector<4x32xf32>
    %160 = vector.extract_strided_slice %155 {offsets = [0, 0, 0], sizes = [4, 1, 96], strides = [1, 1, 1]} : vector<4x8x96xf32> to vector<4x1x96xf32>
    %161 = vector.shape_cast %160 : vector<4x1x96xf32> to vector<4x96xf32>
    %cst_78 = arith.constant dense<0.000000e+00> : vector<4x96xf32>
    %162 = tpu.matmul %159, %156, %cst_78 {dimension_numbers = #tpu.dot_dimension_numbers<[1], [0], [0], [1], [0, 0, 1, 1], [], []>} : vector<4x32xf32>, vector<32x96xf32>, vector<4x96xf32> -> vector<4x96xf32>
    %163 = vector.broadcast %157 : vector<1x96xf32> to vector<4x96xf32>
    %164 = arith.addf %162, %163 : vector<4x96xf32>
    %165 = vector.extract_strided_slice %161 {offsets = [0, 0], sizes = [4, 32], strides = [1, 1]} : vector<4x96xf32> to vector<4x32xf32>
    %166 = vector.extract_strided_slice %164 {offsets = [0, 0], sizes = [4, 32], strides = [1, 1]} : vector<4x96xf32> to vector<4x32xf32>
    %167 = arith.addf %165, %166 : vector<4x32xf32>
    %168 = arith.negf %167 : vector<4x32xf32>
    %169 = math.exp %168 : vector<4x32xf32>
    %cst_79 = arith.constant 1.000000e+00 : f32
    %170 = vector.broadcast %cst_79 : f32 to vector<4x32xf32>
    %171 = arith.addf %170, %169 : vector<4x32xf32>
    %172 = arith.divf %170, %171 : vector<4x32xf32>
    %173 = vector.extract_strided_slice %161 {offsets = [0, 32], sizes = [4, 32], strides = [1, 1]} : vector<4x96xf32> to vector<4x32xf32>
    %174 = vector.extract_strided_slice %164 {offsets = [0, 32], sizes = [4, 32], strides = [1, 1]} : vector<4x96xf32> to vector<4x32xf32>
    %175 = arith.addf %173, %174 : vector<4x32xf32>
    %176 = arith.negf %175 : vector<4x32xf32>
    %177 = math.exp %176 : vector<4x32xf32>
    %cst_80 = arith.constant 1.000000e+00 : f32
    %178 = vector.broadcast %cst_80 : f32 to vector<4x32xf32>
    %179 = arith.addf %178, %177 : vector<4x32xf32>
    %180 = arith.divf %178, %179 : vector<4x32xf32>
    %181 = vector.extract_strided_slice %161 {offsets = [0, 64], sizes = [4, 32], strides = [1, 1]} : vector<4x96xf32> to vector<4x32xf32>
    %182 = vector.extract_strided_slice %164 {offsets = [0, 64], sizes = [4, 32], strides = [1, 1]} : vector<4x96xf32> to vector<4x32xf32>
    %183 = arith.mulf %172, %182 : vector<4x32xf32>
    %184 = arith.addf %181, %183 : vector<4x32xf32>
    %185 = math.tanh %184 : vector<4x32xf32>
    %cst_81 = arith.constant 1.000000e+00 : f32
    %186 = vector.broadcast %cst_81 : f32 to vector<4x32xf32>
    %187 = arith.subf %186, %180 : vector<4x32xf32>
    %188 = arith.mulf %187, %185 : vector<4x32xf32>
    %189 = arith.mulf %180, %159 : vector<4x32xf32>
    %190 = arith.addf %188, %189 : vector<4x32xf32>
    %c0_i32_82 = arith.constant 0 : i32
    %191 = vector.broadcast %c0_i32_82 : i32 to vector<4x1xi32>
    %192 = arith.cmpi sgt, %158, %191 : vector<4x1xi32>
    %193 = vector.shape_cast %192 : vector<4x1xi1> to vector<4x1xi1>
    %194 = vector.broadcast %193 : vector<4x1xi1> to vector<4x32xi1>
    %195 = arith.select %194, %190, %159 : vector<4x32xi1>, vector<4x32xf32>
    %196 = vector.extract_strided_slice %155 {offsets = [0, 1, 0], sizes = [4, 1, 96], strides = [1, 1, 1]} : vector<4x8x96xf32> to vector<4x1x96xf32>
    %197 = vector.shape_cast %196 : vector<4x1x96xf32> to vector<4x96xf32>
    %cst_83 = arith.constant dense<0.000000e+00> : vector<4x96xf32>
    %198 = tpu.matmul %195, %156, %cst_83 {dimension_numbers = #tpu.dot_dimension_numbers<[1], [0], [0], [1], [0, 0, 1, 1], [], []>} : vector<4x32xf32>, vector<32x96xf32>, vector<4x96xf32> -> vector<4x96xf32>
    %199 = vector.broadcast %157 : vector<1x96xf32> to vector<4x96xf32>
    %200 = arith.addf %198, %199 : vector<4x96xf32>
    %201 = vector.extract_strided_slice %197 {offsets = [0, 0], sizes = [4, 32], strides = [1, 1]} : vector<4x96xf32> to vector<4x32xf32>
    %202 = vector.extract_strided_slice %200 {offsets = [0, 0], sizes = [4, 32], strides = [1, 1]} : vector<4x96xf32> to vector<4x32xf32>
    %203 = arith.addf %201, %202 : vector<4x32xf32>
    %204 = arith.negf %203 : vector<4x32xf32>
    %205 = math.exp %204 : vector<4x32xf32>
    %cst_84 = arith.constant 1.000000e+00 : f32
    %206 = vector.broadcast %cst_84 : f32 to vector<4x32xf32>
    %207 = arith.addf %206, %205 : vector<4x32xf32>
    %208 = arith.divf %206, %207 : vector<4x32xf32>
    %209 = vector.extract_strided_slice %197 {offsets = [0, 32], sizes = [4, 32], strides = [1, 1]} : vector<4x96xf32> to vector<4x32xf32>
    %210 = vector.extract_strided_slice %200 {offsets = [0, 32], sizes = [4, 32], strides = [1, 1]} : vector<4x96xf32> to vector<4x32xf32>
    %211 = arith.addf %209, %210 : vector<4x32xf32>
    %212 = arith.negf %211 : vector<4x32xf32>
    %213 = math.exp %212 : vector<4x32xf32>
    %cst_85 = arith.constant 1.000000e+00 : f32
    %214 = vector.broadcast %cst_85 : f32 to vector<4x32xf32>
    %215 = arith.addf %214, %213 : vector<4x32xf32>
    %216 = arith.divf %214, %215 : vector<4x32xf32>
    %217 = vector.extract_strided_slice %197 {offsets = [0, 64], sizes = [4, 32], strides = [1, 1]} : vector<4x96xf32> to vector<4x32xf32>
    %218 = vector.extract_strided_slice %200 {offsets = [0, 64], sizes = [4, 32], strides = [1, 1]} : vector<4x96xf32> to vector<4x32xf32>
    %219 = arith.mulf %208, %218 : vector<4x32xf32>
    %220 = arith.addf %217, %219 : vector<4x32xf32>
    %221 = math.tanh %220 : vector<4x32xf32>
    %cst_86 = arith.constant 1.000000e+00 : f32
    %222 = vector.broadcast %cst_86 : f32 to vector<4x32xf32>
    %223 = arith.subf %222, %216 : vector<4x32xf32>
    %224 = arith.mulf %223, %221 : vector<4x32xf32>
    %225 = arith.mulf %216, %195 : vector<4x32xf32>
    %226 = arith.addf %224, %225 : vector<4x32xf32>
    %c1_i32 = arith.constant 1 : i32
    %227 = vector.broadcast %c1_i32 : i32 to vector<4x1xi32>
    %228 = arith.cmpi sgt, %158, %227 : vector<4x1xi32>
    %229 = vector.shape_cast %228 : vector<4x1xi1> to vector<4x1xi1>
    %230 = vector.broadcast %229 : vector<4x1xi1> to vector<4x32xi1>
    %231 = arith.select %230, %226, %195 : vector<4x32xi1>, vector<4x32xf32>
    %232 = vector.extract_strided_slice %155 {offsets = [0, 2, 0], sizes = [4, 1, 96], strides = [1, 1, 1]} : vector<4x8x96xf32> to vector<4x1x96xf32>
    %233 = vector.shape_cast %232 : vector<4x1x96xf32> to vector<4x96xf32>
    %cst_87 = arith.constant dense<0.000000e+00> : vector<4x96xf32>
    %234 = tpu.matmul %231, %156, %cst_87 {dimension_numbers = #tpu.dot_dimension_numbers<[1], [0], [0], [1], [0, 0, 1, 1], [], []>} : vector<4x32xf32>, vector<32x96xf32>, vector<4x96xf32> -> vector<4x96xf32>
    %235 = vector.broadcast %157 : vector<1x96xf32> to vector<4x96xf32>
    %236 = arith.addf %234, %235 : vector<4x96xf32>
    %237 = vector.extract_strided_slice %233 {offsets = [0, 0], sizes = [4, 32], strides = [1, 1]} : vector<4x96xf32> to vector<4x32xf32>
    %238 = vector.extract_strided_slice %236 {offsets = [0, 0], sizes = [4, 32], strides = [1, 1]} : vector<4x96xf32> to vector<4x32xf32>
    %239 = arith.addf %237, %238 : vector<4x32xf32>
    %240 = arith.negf %239 : vector<4x32xf32>
    %241 = math.exp %240 : vector<4x32xf32>
    %cst_88 = arith.constant 1.000000e+00 : f32
    %242 = vector.broadcast %cst_88 : f32 to vector<4x32xf32>
    %243 = arith.addf %242, %241 : vector<4x32xf32>
    %244 = arith.divf %242, %243 : vector<4x32xf32>
    %245 = vector.extract_strided_slice %233 {offsets = [0, 32], sizes = [4, 32], strides = [1, 1]} : vector<4x96xf32> to vector<4x32xf32>
    %246 = vector.extract_strided_slice %236 {offsets = [0, 32], sizes = [4, 32], strides = [1, 1]} : vector<4x96xf32> to vector<4x32xf32>
    %247 = arith.addf %245, %246 : vector<4x32xf32>
    %248 = arith.negf %247 : vector<4x32xf32>
    %249 = math.exp %248 : vector<4x32xf32>
    %cst_89 = arith.constant 1.000000e+00 : f32
    %250 = vector.broadcast %cst_89 : f32 to vector<4x32xf32>
    %251 = arith.addf %250, %249 : vector<4x32xf32>
    %252 = arith.divf %250, %251 : vector<4x32xf32>
    %253 = vector.extract_strided_slice %233 {offsets = [0, 64], sizes = [4, 32], strides = [1, 1]} : vector<4x96xf32> to vector<4x32xf32>
    %254 = vector.extract_strided_slice %236 {offsets = [0, 64], sizes = [4, 32], strides = [1, 1]} : vector<4x96xf32> to vector<4x32xf32>
    %255 = arith.mulf %244, %254 : vector<4x32xf32>
    %256 = arith.addf %253, %255 : vector<4x32xf32>
    %257 = math.tanh %256 : vector<4x32xf32>
    %cst_90 = arith.constant 1.000000e+00 : f32
    %258 = vector.broadcast %cst_90 : f32 to vector<4x32xf32>
    %259 = arith.subf %258, %252 : vector<4x32xf32>
    %260 = arith.mulf %259, %257 : vector<4x32xf32>
    %261 = arith.mulf %252, %231 : vector<4x32xf32>
    %262 = arith.addf %260, %261 : vector<4x32xf32>
    %c2_i32 = arith.constant 2 : i32
    %263 = vector.broadcast %c2_i32 : i32 to vector<4x1xi32>
    %264 = arith.cmpi sgt, %158, %263 : vector<4x1xi32>
    %265 = vector.shape_cast %264 : vector<4x1xi1> to vector<4x1xi1>
    %266 = vector.broadcast %265 : vector<4x1xi1> to vector<4x32xi1>
    %267 = arith.select %266, %262, %231 : vector<4x32xi1>, vector<4x32xf32>
    %268 = vector.extract_strided_slice %155 {offsets = [0, 3, 0], sizes = [4, 1, 96], strides = [1, 1, 1]} : vector<4x8x96xf32> to vector<4x1x96xf32>
    %269 = vector.shape_cast %268 : vector<4x1x96xf32> to vector<4x96xf32>
    %cst_91 = arith.constant dense<0.000000e+00> : vector<4x96xf32>
    %270 = tpu.matmul %267, %156, %cst_91 {dimension_numbers = #tpu.dot_dimension_numbers<[1], [0], [0], [1], [0, 0, 1, 1], [], []>} : vector<4x32xf32>, vector<32x96xf32>, vector<4x96xf32> -> vector<4x96xf32>
    %271 = vector.broadcast %157 : vector<1x96xf32> to vector<4x96xf32>
    %272 = arith.addf %270, %271 : vector<4x96xf32>
    %273 = vector.extract_strided_slice %269 {offsets = [0, 0], sizes = [4, 32], strides = [1, 1]} : vector<4x96xf32> to vector<4x32xf32>
    %274 = vector.extract_strided_slice %272 {offsets = [0, 0], sizes = [4, 32], strides = [1, 1]} : vector<4x96xf32> to vector<4x32xf32>
    %275 = arith.addf %273, %274 : vector<4x32xf32>
    %276 = arith.negf %275 : vector<4x32xf32>
    %277 = math.exp %276 : vector<4x32xf32>
    %cst_92 = arith.constant 1.000000e+00 : f32
    %278 = vector.broadcast %cst_92 : f32 to vector<4x32xf32>
    %279 = arith.addf %278, %277 : vector<4x32xf32>
    %280 = arith.divf %278, %279 : vector<4x32xf32>
    %281 = vector.extract_strided_slice %269 {offsets = [0, 32], sizes = [4, 32], strides = [1, 1]} : vector<4x96xf32> to vector<4x32xf32>
    %282 = vector.extract_strided_slice %272 {offsets = [0, 32], sizes = [4, 32], strides = [1, 1]} : vector<4x96xf32> to vector<4x32xf32>
    %283 = arith.addf %281, %282 : vector<4x32xf32>
    %284 = arith.negf %283 : vector<4x32xf32>
    %285 = math.exp %284 : vector<4x32xf32>
    %cst_93 = arith.constant 1.000000e+00 : f32
    %286 = vector.broadcast %cst_93 : f32 to vector<4x32xf32>
    %287 = arith.addf %286, %285 : vector<4x32xf32>
    %288 = arith.divf %286, %287 : vector<4x32xf32>
    %289 = vector.extract_strided_slice %269 {offsets = [0, 64], sizes = [4, 32], strides = [1, 1]} : vector<4x96xf32> to vector<4x32xf32>
    %290 = vector.extract_strided_slice %272 {offsets = [0, 64], sizes = [4, 32], strides = [1, 1]} : vector<4x96xf32> to vector<4x32xf32>
    %291 = arith.mulf %280, %290 : vector<4x32xf32>
    %292 = arith.addf %289, %291 : vector<4x32xf32>
    %293 = math.tanh %292 : vector<4x32xf32>
    %cst_94 = arith.constant 1.000000e+00 : f32
    %294 = vector.broadcast %cst_94 : f32 to vector<4x32xf32>
    %295 = arith.subf %294, %288 : vector<4x32xf32>
    %296 = arith.mulf %295, %293 : vector<4x32xf32>
    %297 = arith.mulf %288, %267 : vector<4x32xf32>
    %298 = arith.addf %296, %297 : vector<4x32xf32>
    %c3_i32 = arith.constant 3 : i32
    %299 = vector.broadcast %c3_i32 : i32 to vector<4x1xi32>
    %300 = arith.cmpi sgt, %158, %299 : vector<4x1xi32>
    %301 = vector.shape_cast %300 : vector<4x1xi1> to vector<4x1xi1>
    %302 = vector.broadcast %301 : vector<4x1xi1> to vector<4x32xi1>
    %303 = arith.select %302, %298, %267 : vector<4x32xi1>, vector<4x32xf32>
    %304 = vector.extract_strided_slice %155 {offsets = [0, 4, 0], sizes = [4, 1, 96], strides = [1, 1, 1]} : vector<4x8x96xf32> to vector<4x1x96xf32>
    %305 = vector.shape_cast %304 : vector<4x1x96xf32> to vector<4x96xf32>
    %cst_95 = arith.constant dense<0.000000e+00> : vector<4x96xf32>
    %306 = tpu.matmul %303, %156, %cst_95 {dimension_numbers = #tpu.dot_dimension_numbers<[1], [0], [0], [1], [0, 0, 1, 1], [], []>} : vector<4x32xf32>, vector<32x96xf32>, vector<4x96xf32> -> vector<4x96xf32>
    %307 = vector.broadcast %157 : vector<1x96xf32> to vector<4x96xf32>
    %308 = arith.addf %306, %307 : vector<4x96xf32>
    %309 = vector.extract_strided_slice %305 {offsets = [0, 0], sizes = [4, 32], strides = [1, 1]} : vector<4x96xf32> to vector<4x32xf32>
    %310 = vector.extract_strided_slice %308 {offsets = [0, 0], sizes = [4, 32], strides = [1, 1]} : vector<4x96xf32> to vector<4x32xf32>
    %311 = arith.addf %309, %310 : vector<4x32xf32>
    %312 = arith.negf %311 : vector<4x32xf32>
    %313 = math.exp %312 : vector<4x32xf32>
    %cst_96 = arith.constant 1.000000e+00 : f32
    %314 = vector.broadcast %cst_96 : f32 to vector<4x32xf32>
    %315 = arith.addf %314, %313 : vector<4x32xf32>
    %316 = arith.divf %314, %315 : vector<4x32xf32>
    %317 = vector.extract_strided_slice %305 {offsets = [0, 32], sizes = [4, 32], strides = [1, 1]} : vector<4x96xf32> to vector<4x32xf32>
    %318 = vector.extract_strided_slice %308 {offsets = [0, 32], sizes = [4, 32], strides = [1, 1]} : vector<4x96xf32> to vector<4x32xf32>
    %319 = arith.addf %317, %318 : vector<4x32xf32>
    %320 = arith.negf %319 : vector<4x32xf32>
    %321 = math.exp %320 : vector<4x32xf32>
    %cst_97 = arith.constant 1.000000e+00 : f32
    %322 = vector.broadcast %cst_97 : f32 to vector<4x32xf32>
    %323 = arith.addf %322, %321 : vector<4x32xf32>
    %324 = arith.divf %322, %323 : vector<4x32xf32>
    %325 = vector.extract_strided_slice %305 {offsets = [0, 64], sizes = [4, 32], strides = [1, 1]} : vector<4x96xf32> to vector<4x32xf32>
    %326 = vector.extract_strided_slice %308 {offsets = [0, 64], sizes = [4, 32], strides = [1, 1]} : vector<4x96xf32> to vector<4x32xf32>
    %327 = arith.mulf %316, %326 : vector<4x32xf32>
    %328 = arith.addf %325, %327 : vector<4x32xf32>
    %329 = math.tanh %328 : vector<4x32xf32>
    %cst_98 = arith.constant 1.000000e+00 : f32
    %330 = vector.broadcast %cst_98 : f32 to vector<4x32xf32>
    %331 = arith.subf %330, %324 : vector<4x32xf32>
    %332 = arith.mulf %331, %329 : vector<4x32xf32>
    %333 = arith.mulf %324, %303 : vector<4x32xf32>
    %334 = arith.addf %332, %333 : vector<4x32xf32>
    %c4_i32 = arith.constant 4 : i32
    %335 = vector.broadcast %c4_i32 : i32 to vector<4x1xi32>
    %336 = arith.cmpi sgt, %158, %335 : vector<4x1xi32>
    %337 = vector.shape_cast %336 : vector<4x1xi1> to vector<4x1xi1>
    %338 = vector.broadcast %337 : vector<4x1xi1> to vector<4x32xi1>
    %339 = arith.select %338, %334, %303 : vector<4x32xi1>, vector<4x32xf32>
    %340 = vector.extract_strided_slice %155 {offsets = [0, 5, 0], sizes = [4, 1, 96], strides = [1, 1, 1]} : vector<4x8x96xf32> to vector<4x1x96xf32>
    %341 = vector.shape_cast %340 : vector<4x1x96xf32> to vector<4x96xf32>
    %cst_99 = arith.constant dense<0.000000e+00> : vector<4x96xf32>
    %342 = tpu.matmul %339, %156, %cst_99 {dimension_numbers = #tpu.dot_dimension_numbers<[1], [0], [0], [1], [0, 0, 1, 1], [], []>} : vector<4x32xf32>, vector<32x96xf32>, vector<4x96xf32> -> vector<4x96xf32>
    %343 = vector.broadcast %157 : vector<1x96xf32> to vector<4x96xf32>
    %344 = arith.addf %342, %343 : vector<4x96xf32>
    %345 = vector.extract_strided_slice %341 {offsets = [0, 0], sizes = [4, 32], strides = [1, 1]} : vector<4x96xf32> to vector<4x32xf32>
    %346 = vector.extract_strided_slice %344 {offsets = [0, 0], sizes = [4, 32], strides = [1, 1]} : vector<4x96xf32> to vector<4x32xf32>
    %347 = arith.addf %345, %346 : vector<4x32xf32>
    %348 = arith.negf %347 : vector<4x32xf32>
    %349 = math.exp %348 : vector<4x32xf32>
    %cst_100 = arith.constant 1.000000e+00 : f32
    %350 = vector.broadcast %cst_100 : f32 to vector<4x32xf32>
    %351 = arith.addf %350, %349 : vector<4x32xf32>
    %352 = arith.divf %350, %351 : vector<4x32xf32>
    %353 = vector.extract_strided_slice %341 {offsets = [0, 32], sizes = [4, 32], strides = [1, 1]} : vector<4x96xf32> to vector<4x32xf32>
    %354 = vector.extract_strided_slice %344 {offsets = [0, 32], sizes = [4, 32], strides = [1, 1]} : vector<4x96xf32> to vector<4x32xf32>
    %355 = arith.addf %353, %354 : vector<4x32xf32>
    %356 = arith.negf %355 : vector<4x32xf32>
    %357 = math.exp %356 : vector<4x32xf32>
    %cst_101 = arith.constant 1.000000e+00 : f32
    %358 = vector.broadcast %cst_101 : f32 to vector<4x32xf32>
    %359 = arith.addf %358, %357 : vector<4x32xf32>
    %360 = arith.divf %358, %359 : vector<4x32xf32>
    %361 = vector.extract_strided_slice %341 {offsets = [0, 64], sizes = [4, 32], strides = [1, 1]} : vector<4x96xf32> to vector<4x32xf32>
    %362 = vector.extract_strided_slice %344 {offsets = [0, 64], sizes = [4, 32], strides = [1, 1]} : vector<4x96xf32> to vector<4x32xf32>
    %363 = arith.mulf %352, %362 : vector<4x32xf32>
    %364 = arith.addf %361, %363 : vector<4x32xf32>
    %365 = math.tanh %364 : vector<4x32xf32>
    %cst_102 = arith.constant 1.000000e+00 : f32
    %366 = vector.broadcast %cst_102 : f32 to vector<4x32xf32>
    %367 = arith.subf %366, %360 : vector<4x32xf32>
    %368 = arith.mulf %367, %365 : vector<4x32xf32>
    %369 = arith.mulf %360, %339 : vector<4x32xf32>
    %370 = arith.addf %368, %369 : vector<4x32xf32>
    %c5_i32 = arith.constant 5 : i32
    %371 = vector.broadcast %c5_i32 : i32 to vector<4x1xi32>
    %372 = arith.cmpi sgt, %158, %371 : vector<4x1xi32>
    %373 = vector.shape_cast %372 : vector<4x1xi1> to vector<4x1xi1>
    %374 = vector.broadcast %373 : vector<4x1xi1> to vector<4x32xi1>
    %375 = arith.select %374, %370, %339 : vector<4x32xi1>, vector<4x32xf32>
    %376 = vector.extract_strided_slice %155 {offsets = [0, 6, 0], sizes = [4, 1, 96], strides = [1, 1, 1]} : vector<4x8x96xf32> to vector<4x1x96xf32>
    %377 = vector.shape_cast %376 : vector<4x1x96xf32> to vector<4x96xf32>
    %cst_103 = arith.constant dense<0.000000e+00> : vector<4x96xf32>
    %378 = tpu.matmul %375, %156, %cst_103 {dimension_numbers = #tpu.dot_dimension_numbers<[1], [0], [0], [1], [0, 0, 1, 1], [], []>} : vector<4x32xf32>, vector<32x96xf32>, vector<4x96xf32> -> vector<4x96xf32>
    %379 = vector.broadcast %157 : vector<1x96xf32> to vector<4x96xf32>
    %380 = arith.addf %378, %379 : vector<4x96xf32>
    %381 = vector.extract_strided_slice %377 {offsets = [0, 0], sizes = [4, 32], strides = [1, 1]} : vector<4x96xf32> to vector<4x32xf32>
    %382 = vector.extract_strided_slice %380 {offsets = [0, 0], sizes = [4, 32], strides = [1, 1]} : vector<4x96xf32> to vector<4x32xf32>
    %383 = arith.addf %381, %382 : vector<4x32xf32>
    %384 = arith.negf %383 : vector<4x32xf32>
    %385 = math.exp %384 : vector<4x32xf32>
    %cst_104 = arith.constant 1.000000e+00 : f32
    %386 = vector.broadcast %cst_104 : f32 to vector<4x32xf32>
    %387 = arith.addf %386, %385 : vector<4x32xf32>
    %388 = arith.divf %386, %387 : vector<4x32xf32>
    %389 = vector.extract_strided_slice %377 {offsets = [0, 32], sizes = [4, 32], strides = [1, 1]} : vector<4x96xf32> to vector<4x32xf32>
    %390 = vector.extract_strided_slice %380 {offsets = [0, 32], sizes = [4, 32], strides = [1, 1]} : vector<4x96xf32> to vector<4x32xf32>
    %391 = arith.addf %389, %390 : vector<4x32xf32>
    %392 = arith.negf %391 : vector<4x32xf32>
    %393 = math.exp %392 : vector<4x32xf32>
    %cst_105 = arith.constant 1.000000e+00 : f32
    %394 = vector.broadcast %cst_105 : f32 to vector<4x32xf32>
    %395 = arith.addf %394, %393 : vector<4x32xf32>
    %396 = arith.divf %394, %395 : vector<4x32xf32>
    %397 = vector.extract_strided_slice %377 {offsets = [0, 64], sizes = [4, 32], strides = [1, 1]} : vector<4x96xf32> to vector<4x32xf32>
    %398 = vector.extract_strided_slice %380 {offsets = [0, 64], sizes = [4, 32], strides = [1, 1]} : vector<4x96xf32> to vector<4x32xf32>
    %399 = arith.mulf %388, %398 : vector<4x32xf32>
    %400 = arith.addf %397, %399 : vector<4x32xf32>
    %401 = math.tanh %400 : vector<4x32xf32>
    %cst_106 = arith.constant 1.000000e+00 : f32
    %402 = vector.broadcast %cst_106 : f32 to vector<4x32xf32>
    %403 = arith.subf %402, %396 : vector<4x32xf32>
    %404 = arith.mulf %403, %401 : vector<4x32xf32>
    %405 = arith.mulf %396, %375 : vector<4x32xf32>
    %406 = arith.addf %404, %405 : vector<4x32xf32>
    %c6_i32 = arith.constant 6 : i32
    %407 = vector.broadcast %c6_i32 : i32 to vector<4x1xi32>
    %408 = arith.cmpi sgt, %158, %407 : vector<4x1xi32>
    %409 = vector.shape_cast %408 : vector<4x1xi1> to vector<4x1xi1>
    %410 = vector.broadcast %409 : vector<4x1xi1> to vector<4x32xi1>
    %411 = arith.select %410, %406, %375 : vector<4x32xi1>, vector<4x32xf32>
    %412 = vector.extract_strided_slice %155 {offsets = [0, 7, 0], sizes = [4, 1, 96], strides = [1, 1, 1]} : vector<4x8x96xf32> to vector<4x1x96xf32>
    %413 = vector.shape_cast %412 : vector<4x1x96xf32> to vector<4x96xf32>
    %cst_107 = arith.constant dense<0.000000e+00> : vector<4x96xf32>
    %414 = tpu.matmul %411, %156, %cst_107 {dimension_numbers = #tpu.dot_dimension_numbers<[1], [0], [0], [1], [0, 0, 1, 1], [], []>} : vector<4x32xf32>, vector<32x96xf32>, vector<4x96xf32> -> vector<4x96xf32>
    %415 = vector.broadcast %157 : vector<1x96xf32> to vector<4x96xf32>
    %416 = arith.addf %414, %415 : vector<4x96xf32>
    %417 = vector.extract_strided_slice %413 {offsets = [0, 0], sizes = [4, 32], strides = [1, 1]} : vector<4x96xf32> to vector<4x32xf32>
    %418 = vector.extract_strided_slice %416 {offsets = [0, 0], sizes = [4, 32], strides = [1, 1]} : vector<4x96xf32> to vector<4x32xf32>
    %419 = arith.addf %417, %418 : vector<4x32xf32>
    %420 = arith.negf %419 : vector<4x32xf32>
    %421 = math.exp %420 : vector<4x32xf32>
    %cst_108 = arith.constant 1.000000e+00 : f32
    %422 = vector.broadcast %cst_108 : f32 to vector<4x32xf32>
    %423 = arith.addf %422, %421 : vector<4x32xf32>
    %424 = arith.divf %422, %423 : vector<4x32xf32>
    %425 = vector.extract_strided_slice %413 {offsets = [0, 32], sizes = [4, 32], strides = [1, 1]} : vector<4x96xf32> to vector<4x32xf32>
    %426 = vector.extract_strided_slice %416 {offsets = [0, 32], sizes = [4, 32], strides = [1, 1]} : vector<4x96xf32> to vector<4x32xf32>
    %427 = arith.addf %425, %426 : vector<4x32xf32>
    %428 = arith.negf %427 : vector<4x32xf32>
    %429 = math.exp %428 : vector<4x32xf32>
    %cst_109 = arith.constant 1.000000e+00 : f32
    %430 = vector.broadcast %cst_109 : f32 to vector<4x32xf32>
    %431 = arith.addf %430, %429 : vector<4x32xf32>
    %432 = arith.divf %430, %431 : vector<4x32xf32>
    %433 = vector.extract_strided_slice %413 {offsets = [0, 64], sizes = [4, 32], strides = [1, 1]} : vector<4x96xf32> to vector<4x32xf32>
    %434 = vector.extract_strided_slice %416 {offsets = [0, 64], sizes = [4, 32], strides = [1, 1]} : vector<4x96xf32> to vector<4x32xf32>
    %435 = arith.mulf %424, %434 : vector<4x32xf32>
    %436 = arith.addf %433, %435 : vector<4x32xf32>
    %437 = math.tanh %436 : vector<4x32xf32>
    %cst_110 = arith.constant 1.000000e+00 : f32
    %438 = vector.broadcast %cst_110 : f32 to vector<4x32xf32>
    %439 = arith.subf %438, %432 : vector<4x32xf32>
    %440 = arith.mulf %439, %437 : vector<4x32xf32>
    %441 = arith.mulf %432, %411 : vector<4x32xf32>
    %442 = arith.addf %440, %441 : vector<4x32xf32>
    %c7_i32 = arith.constant 7 : i32
    %443 = vector.broadcast %c7_i32 : i32 to vector<4x1xi32>
    %444 = arith.cmpi sgt, %158, %443 : vector<4x1xi32>
    %445 = vector.shape_cast %444 : vector<4x1xi1> to vector<4x1xi1>
    %446 = vector.broadcast %445 : vector<4x1xi1> to vector<4x32xi1>
    %447 = arith.select %446, %442, %411 : vector<4x32xi1>, vector<4x32xf32>
    %448 = vector.extract_strided_slice %447 {offsets = [0, 0], sizes = [2, 32], strides = [1, 1]} : vector<4x32xf32> to vector<2x32xf32>
    %449 = vector.extract_strided_slice %447 {offsets = [2, 0], sizes = [2, 32], strides = [1, 1]} : vector<4x32xf32> to vector<2x32xf32>
    %450 = arith.subf %448, %449 : vector<2x32xf32>
    %451 = math.absf %450 : vector<2x32xf32>
    %452 = arith.mulf %448, %449 : vector<2x32xf32>
    %453 = tpu.concatenate %448, %449, %451, %452 in 1 : vector<2x32xf32>, vector<2x32xf32>, vector<2x32xf32>, vector<2x32xf32> -> vector<2x128xf32>
    %c0_111 = arith.constant 0 : index
    %c0_112 = arith.constant 0 : index
    %454 = vector.load %arg24[%c0_111, %c0_112] : memref<128x32xf32, #tpu.memory_space<vmem>>, vector<128x32xf32>
    %cst_113 = arith.constant dense<0.000000e+00> : vector<2x32xf32>
    %455 = tpu.matmul %453, %454, %cst_113 {dimension_numbers = #tpu.dot_dimension_numbers<[1], [0], [0], [1], [0, 0, 1, 1], [], []>} : vector<2x128xf32>, vector<128x32xf32>, vector<2x32xf32> -> vector<2x32xf32>
    %c0_114 = arith.constant 0 : index
    %c0_115 = arith.constant 0 : index
    %456 = vector.load %arg25[%c0_114, %c0_115] : memref<1x32xf32, #tpu.memory_space<vmem>>, vector<1x32xf32>
    %457 = vector.broadcast %456 : vector<1x32xf32> to vector<2x32xf32>
    %458 = arith.addf %455, %457 : vector<2x32xf32>
    %cst_116 = arith.constant 0.000000e+00 : f32
    %459 = vector.broadcast %cst_116 : f32 to vector<2x32xf32>
    %460 = arith.maximumf %458, %459 : vector<2x32xf32>
    %c0_117 = arith.constant 0 : index
    %c0_118 = arith.constant 0 : index
    %461 = vector.load %arg26[%c0_117, %c0_118] : memref<32x2xf32, #tpu.memory_space<vmem>>, vector<32x2xf32>
    %cst_119 = arith.constant dense<0.000000e+00> : vector<2x2xf32>
    %462 = tpu.matmul %460, %461, %cst_119 {dimension_numbers = #tpu.dot_dimension_numbers<[1], [0], [0], [1], [0, 0, 1, 1], [], []>} : vector<2x32xf32>, vector<32x2xf32>, vector<2x2xf32> -> vector<2x2xf32>
    %c0_120 = arith.constant 0 : index
    %c0_121 = arith.constant 0 : index
    %463 = vector.load %arg27[%c0_120, %c0_121] : memref<1x2xf32, #tpu.memory_space<vmem>>, vector<1x2xf32>
    %464 = vector.broadcast %463 : vector<1x2xf32> to vector<2x2xf32>
    %465 = arith.addf %462, %464 : vector<2x2xf32>
    %c0_122 = arith.constant 0 : index
    %c0_123 = arith.constant 0 : index
    %466 = vector.load %arg28[%c0_122, %c0_123] : memref<2x2xf32, #tpu.memory_space<vmem>>, vector<2x2xf32>
    tpu.vector_store %arg28[%c0_122, %c0_123], %465 {strides = array<i32>} : memref<2x2xf32, #tpu.memory_space<vmem>>, vector<2x2xf32>,
    return
  }
}

</mosaic_0001>

<llo_original>
// kernel: tpu_custom_call.1
$region0: #{tpu_custom_call.1}
  #allocation0 [shape = 'u32[]', space=smem, size = 0x4, offset = 0x4, fixed_abs, tag = 'smem constant byte address 0x4 - core index']
  #allocation1 [shape = 'u32[144,128]{1,0:T(1,128)}', space=vmem, size = 0x12000, scoped, tag = 'internal scratch']
  %s0 = inlined_call_operand.vmem [shape: s32[32,1], index: 0, kind: input, shape index: {}]
  %s1 = inlined_call_operand.vmem [shape: s32[4,1,8], index: 1, kind: input, shape index: {}]
  %s2 = inlined_call_operand.vmem [shape: s32[4,1], index: 2, kind: input, shape index: {}]
  %s3 = inlined_call_operand.vmem [shape: f32[50,32], index: 3, kind: input, shape index: {}]
  %s4 = inlined_call_operand.vmem [shape: f32[32,32], index: 4, kind: input, shape index: {}]
  %s5 = inlined_call_operand.vmem [shape: f32[1,32], index: 5, kind: input, shape index: {}]
  %s6 = inlined_call_operand.vmem [shape: f32[32,32], index: 6, kind: input, shape index: {}]
  %s7 = inlined_call_operand.vmem [shape: f32[1,32], index: 7, kind: input, shape index: {}]
  %s8 = inlined_call_operand.vmem [shape: f32[32,32], index: 8, kind: input, shape index: {}]
  %s9 = inlined_call_operand.vmem [shape: f32[1,32], index: 9, kind: input, shape index: {}]
  %s10 = inlined_call_operand.vmem [shape: f32[32,32], index: 10, kind: input, shape index: {}]
  %s11 = inlined_call_operand.vmem [shape: f32[1,32], index: 11, kind: input, shape index: {}]
  %s12 = inlined_call_operand.vmem [shape: f32[1,32], index: 12, kind: input, shape index: {}]
  %s13 = inlined_call_operand.vmem [shape: f32[1,32], index: 13, kind: input, shape index: {}]
  %s14 = inlined_call_operand.vmem [shape: f32[32,64], index: 14, kind: input, shape index: {}]
  %s15 = inlined_call_operand.vmem [shape: f32[1,64], index: 15, kind: input, shape index: {}]
  %s16 = inlined_call_operand.vmem [shape: f32[64,32], index: 16, kind: input, shape index: {}]
  %s17 = inlined_call_operand.vmem [shape: f32[1,32], index: 17, kind: input, shape index: {}]
  %s18 = inlined_call_operand.vmem [shape: f32[1,32], index: 18, kind: input, shape index: {}]
  %s19 = inlined_call_operand.vmem [shape: f32[1,32], index: 19, kind: input, shape index: {}]
  %s20 = inlined_call_operand.vmem [shape: f32[32,96], index: 20, kind: input, shape index: {}]
  %s21 = inlined_call_operand.vmem [shape: f32[32,96], index: 21, kind: input, shape index: {}]
  %s22 = inlined_call_operand.vmem [shape: f32[1,96], index: 22, kind: input, shape index: {}]
  %s23 = inlined_call_operand.vmem [shape: f32[1,96], index: 23, kind: input, shape index: {}]
  %s24 = inlined_call_operand.vmem [shape: f32[128,32], index: 24, kind: input, shape index: {}]
  %s25 = inlined_call_operand.vmem [shape: f32[1,32], index: 25, kind: input, shape index: {}]
  %s26 = inlined_call_operand.vmem [shape: f32[32,2], index: 26, kind: input, shape index: {}]
  %s27 = inlined_call_operand.vmem [shape: f32[1,2], index: 27, kind: input, shape index: {}]
  %s28 = inlined_call_operand.hbm [shape: f32[2,2], index: 28, kind: output, shape index: {}]
  %s29 = sld [smem:[#allocation0]]
  $region122: #{tpu_custom_call.1} parent=0
    _
  %s31 = ssub.s32 1, %s29
  %s32 = scalar_select 0, %s31, %s29
  $region1: #{tpu_custom_call.1} parent=0
    #allocation2 [shape = 'u8[1024]{0}', space=vmem, size = 0x400, scoped, tag = 'output window, operand 0, single buffered']
    #allocation3 [shape = 's32[1]{0}', space=sflag, size = 0x4, scoped, tag = 'scoped memory for tpu_custom_call.1']
    %33 = vsyncpa [#allocation3], 0
    // Predicated region
    $region2: #{tpu_custom_call.1} parent=1 // pred_check
      _
    $region3: #{tpu_custom_call.1} parent=1 // pred_check_branch
      %35 = sbr.rel (0) target = $region5
    $region4: #{tpu_custom_call.1} parent=1 // pred_region
      _
    $region5: #{tpu_custom_call.1} parent=1 // pred_fallthru
      _
    // Predicated region
    $region6: #{tpu_custom_call.1} parent=1 // pred_check
      _
    $region7: #{tpu_custom_call.1} parent=1 // pred_check_branch
      %37 = sbr.rel (0) target = $region9
    $region8: #{tpu_custom_call.1} parent=1 // pred_region
      _
    $region9: #{tpu_custom_call.1} parent=1 // pred_fallthru
      _
    // Predicated region
    $region10: #{tpu_custom_call.1} parent=1 // pred_check
      _
    $region11: #{tpu_custom_call.1} parent=1 // pred_check_branch
      %39 = sbr.rel (0) target = $region13
    $region12: #{tpu_custom_call.1} parent=1 // pred_region
      _
    $region13: #{tpu_custom_call.1} parent=1 // pred_fallthru
      _
    // Predicated region
    $region14: #{tpu_custom_call.1} parent=1 // pred_check
      _
    $region15: #{tpu_custom_call.1} parent=1 // pred_check_branch
      %41 = sbr.rel (0) target = $region17
    $region16: #{tpu_custom_call.1} parent=1 // pred_region
      _
    $region17: #{tpu_custom_call.1} parent=1 // pred_fallthru
      _
    // Predicated region
    $region18: #{tpu_custom_call.1} parent=1 // pred_check
      _
    $region19: #{tpu_custom_call.1} parent=1 // pred_check_branch
      %43 = sbr.rel (0) target = $region21
    $region20: #{tpu_custom_call.1} parent=1 // pred_region
      _
    $region21: #{tpu_custom_call.1} parent=1 // pred_fallthru
      _
    // Predicated region
    $region22: #{tpu_custom_call.1} parent=1 // pred_check
      _
    $region23: #{tpu_custom_call.1} parent=1 // pred_check_branch
      %45 = sbr.rel (0) target = $region25
    $region24: #{tpu_custom_call.1} parent=1 // pred_region
      _
    $region25: #{tpu_custom_call.1} parent=1 // pred_fallthru
      _
    // Predicated region
    $region26: #{tpu_custom_call.1} parent=1 // pred_check
      _
    $region27: #{tpu_custom_call.1} parent=1 // pred_check_branch
      %47 = sbr.rel (0) target = $region29
    $region28: #{tpu_custom_call.1} parent=1 // pred_region
      _
    $region29: #{tpu_custom_call.1} parent=1 // pred_fallthru
      _
    // Predicated region
    $region30: #{tpu_custom_call.1} parent=1 // pred_check
      _
    $region31: #{tpu_custom_call.1} parent=1 // pred_check_branch
      %49 = sbr.rel (0) target = $region33
    $region32: #{tpu_custom_call.1} parent=1 // pred_region
      _
    $region33: #{tpu_custom_call.1} parent=1 // pred_fallthru
      _
    // Predicated region
    $region34: #{tpu_custom_call.1} parent=1 // pred_check
      _
    $region35: #{tpu_custom_call.1} parent=1 // pred_check_branch
      %51 = sbr.rel (0) target = $region37
    $region36: #{tpu_custom_call.1} parent=1 // pred_region
      _
    $region37: #{tpu_custom_call.1} parent=1 // pred_fallthru
      _
    // Predicated region
    $region38: #{tpu_custom_call.1} parent=1 // pred_check
      _
    $region39: #{tpu_custom_call.1} parent=1 // pred_check_branch
      %53 = sbr.rel (0) target = $region41
    $region40: #{tpu_custom_call.1} parent=1 // pred_region
      _
    $region41: #{tpu_custom_call.1} parent=1 // pred_fallthru
      _
    // Predicated region
    $region42: #{tpu_custom_call.1} parent=1 // pred_check
      _
    $region43: #{tpu_custom_call.1} parent=1 // pred_check_branch
      %55 = sbr.rel (0) target = $region45
    $region44: #{tpu_custom_call.1} parent=1 // pred_region
      _
    $region45: #{tpu_custom_call.1} parent=1 // pred_fallthru
      _
    // Predicated region
    $region46: #{tpu_custom_call.1} parent=1 // pred_check
      _
    $region47: #{tpu_custom_call.1} parent=1 // pred_check_branch
      %57 = sbr.rel (0) target = $region49
    $region48: #{tpu_custom_call.1} parent=1 // pred_region
      _
    $region49: #{tpu_custom_call.1} parent=1 // pred_fallthru
      _
    // Predicated region
    $region50: #{tpu_custom_call.1} parent=1 // pred_check
      _
    $region51: #{tpu_custom_call.1} parent=1 // pred_check_branch
      %59 = sbr.rel (0) target = $region53
    $region52: #{tpu_custom_call.1} parent=1 // pred_region
      _
    $region53: #{tpu_custom_call.1} parent=1 // pred_fallthru
      _
    // Predicated region
    $region54: #{tpu_custom_call.1} parent=1 // pred_check
      _
    $region55: #{tpu_custom_call.1} parent=1 // pred_check_branch
      %61 = sbr.rel (0) target = $region57
    $region56: #{tpu_custom_call.1} parent=1 // pred_region
      _
    $region57: #{tpu_custom_call.1} parent=1 // pred_fallthru
      _
    // Predicated region
    $region58: #{tpu_custom_call.1} parent=1 // pred_check
      _
    $region59: #{tpu_custom_call.1} parent=1 // pred_check_branch
      %63 = sbr.rel (0) target = $region61
    $region60: #{tpu_custom_call.1} parent=1 // pred_region
      _
    $region61: #{tpu_custom_call.1} parent=1 // pred_fallthru
      _
    // Predicated region
    $region62: #{tpu_custom_call.1} parent=1 // pred_check
      _
    $region63: #{tpu_custom_call.1} parent=1 // pred_check_branch
      %65 = sbr.rel (0) target = $region65
    $region64: #{tpu_custom_call.1} parent=1 // pred_region
      _
    $region65: #{tpu_custom_call.1} parent=1 // pred_fallthru
      _
    // Predicated region
    $region66: #{tpu_custom_call.1} parent=1 // pred_check
      _
    $region67: #{tpu_custom_call.1} parent=1 // pred_check_branch
      %67 = sbr.rel (0) target = $region69
    $region68: #{tpu_custom_call.1} parent=1 // pred_region
      _
    $region69: #{tpu_custom_call.1} parent=1 // pred_fallthru
      _
    // Predicated region
    $region70: #{tpu_custom_call.1} parent=1 // pred_check
      _
    $region71: #{tpu_custom_call.1} parent=1 // pred_check_branch
      %69 = sbr.rel (0) target = $region73
    $region72: #{tpu_custom_call.1} parent=1 // pred_region
      _
    $region73: #{tpu_custom_call.1} parent=1 // pred_fallthru
      _
    // Predicated region
    $region74: #{tpu_custom_call.1} parent=1 // pred_check
      _
    $region75: #{tpu_custom_call.1} parent=1 // pred_check_branch
      %71 = sbr.rel (0) target = $region77
    $region76: #{tpu_custom_call.1} parent=1 // pred_region
      _
    $region77: #{tpu_custom_call.1} parent=1 // pred_fallthru
      _
    // Predicated region
    $region78: #{tpu_custom_call.1} parent=1 // pred_check
      _
    $region79: #{tpu_custom_call.1} parent=1 // pred_check_branch
      %73 = sbr.rel (0) target = $region81
    $region80: #{tpu_custom_call.1} parent=1 // pred_region
      _
    $region81: #{tpu_custom_call.1} parent=1 // pred_fallthru
      _
    // Predicated region
    $region82: #{tpu_custom_call.1} parent=1 // pred_check
      _
    $region83: #{tpu_custom_call.1} parent=1 // pred_check_branch
      %75 = sbr.rel (0) target = $region85
    $region84: #{tpu_custom_call.1} parent=1 // pred_region
      _
    $region85: #{tpu_custom_call.1} parent=1 // pred_fallthru
      _
    // Predicated region
    $region86: #{tpu_custom_call.1} parent=1 // pred_check
      _
    $region87: #{tpu_custom_call.1} parent=1 // pred_check_branch
      %77 = sbr.rel (0) target = $region89
    $region88: #{tpu_custom_call.1} parent=1 // pred_region
      _
    $region89: #{tpu_custom_call.1} parent=1 // pred_fallthru
      _
    // Predicated region
    $region90: #{tpu_custom_call.1} parent=1 // pred_check
      _
    $region91: #{tpu_custom_call.1} parent=1 // pred_check_branch
      %79 = sbr.rel (0) target = $region93
    $region92: #{tpu_custom_call.1} parent=1 // pred_region
      _
    $region93: #{tpu_custom_call.1} parent=1 // pred_fallthru
      _
    // Predicated region
    $region94: #{tpu_custom_call.1} parent=1 // pred_check
      _
    $region95: #{tpu_custom_call.1} parent=1 // pred_check_branch
      %81 = sbr.rel (0) target = $region97
    $region96: #{tpu_custom_call.1} parent=1 // pred_region
      _
    $region97: #{tpu_custom_call.1} parent=1 // pred_fallthru
      _
    // Predicated region
    $region98: #{tpu_custom_call.1} parent=1 // pred_check
      _
    $region99: #{tpu_custom_call.1} parent=1 // pred_check_branch
      %83 = sbr.rel (0) target = $region101
    $region100: #{tpu_custom_call.1} parent=1 // pred_region
      _
    $region101: #{tpu_custom_call.1} parent=1 // pred_fallthru
      _
    // Predicated region
    $region102: #{tpu_custom_call.1} parent=1 // pred_check
      _
    $region103: #{tpu_custom_call.1} parent=1 // pred_check_branch
      %85 = sbr.rel (0) target = $region105
    $region104: #{tpu_custom_call.1} parent=1 // pred_region
      _
    $region105: #{tpu_custom_call.1} parent=1 // pred_fallthru
      _
    // Predicated region
    $region106: #{tpu_custom_call.1} parent=1 // pred_check
      _
    $region107: #{tpu_custom_call.1} parent=1 // pred_check_branch
      %87 = sbr.rel (0) target = $region109
    $region108: #{tpu_custom_call.1} parent=1 // pred_region
      _
    $region109: #{tpu_custom_call.1} parent=1 // pred_fallthru
      _
    // Predicated region
    $region110: #{tpu_custom_call.1} parent=1 // pred_check
      _
    $region111: #{tpu_custom_call.1} parent=1 // pred_check_branch
      %89 = sbr.rel (0) target = $region113
    $region112: #{tpu_custom_call.1} parent=1 // pred_region
      _
    $region113: #{tpu_custom_call.1} parent=1 // pred_fallthru
      _
    %v90 = vld [vmem:[%s0] sm:$0xff]
    %v91 = vld [vmem:[%s0 + $0x8] sm:$0xff]
    %v92 = vld [vmem:[%s0 + $0x10] sm:$0xff]
    %v93 = vld [vmem:[%s0 + $0x18] sm:$0xff]
    %v94 = vlaneseq
    %v95 = vand.u32 %v94, 127
    %96 = vset.pattern.permute.xlu0 0
    %97 = vperm.xlu0 %96, %v90
    %v98 = vpop.permute.xlu0 %97
    %99 = vset.pattern.permute.xlu0 0
    %100 = vperm.xlu0 %99, %v91
    %v101 = vpop.permute.xlu0 %100
    %102 = vset.pattern.permute.xlu0 0
    %103 = vperm.xlu0 %102, %v92
    %v104 = vpop.permute.xlu0 %103
    %105 = vset.pattern.permute.xlu0 0
    %106 = vperm.xlu0 %105, %v93
    %v107 = vpop.permute.xlu0 %106
    %vm108 = vcmp.eq.s32.totalorder %v98, %v95
    %vm109 = vcmp.eq.s32.totalorder %v101, %v95
    %vm110 = vcmp.eq.s32.totalorder %v104, %v95
    %vm111 = vcmp.eq.s32.totalorder %v107, %v95
    %v112 = vsel %vm108, 1, 0
    %v113 = vsel %vm109, 1, 0
    %v114 = vsel %vm110, 1, 0
    %v115 = vsel %vm111, 1, 0
    %v116 = vcvt.s32.f32 %v112
    %v117 = vcvt.s32.f32 %v113
    %v118 = vcvt.s32.f32 %v114
    %v119 = vcvt.s32.f32 %v115
    %v120 = vld [vmem:[%s3] sm:$0xff]
    %v121 = vld [vmem:[%s3 + $0x8] sm:$0xff]
    %v122 = vld [vmem:[%s3 + $0x10] sm:$0xff]
    %v123 = vld [vmem:[%s3 + $0x18] sm:$0xff]
    %v124 = vld [vmem:[%s3 + $0x20] sm:$0xff]
    %v125 = vld [vmem:[%s3 + $0x28] sm:$0xff]
    %v126 = vld [vmem:[%s3 + $0x30] sm:$0x3]
    %vm127 = vcmask 408576
    %v129 = vsel %vm127, %v116, 0
    %v132 = vsel %vm127, %v117, 0
    %v135 = vsel %vm127, %v118, 0
    %v138 = vsel %vm127, %v119, 0
    %vm140 = vcmask 1041408
    %v142 = vsel %vm140, %v126, 0
    %144 = vmatprep.subr.mxu0 0.0
    %145 = vmatpush1.msra.mxu0 0.0
    %146 = vmatprep.subr.mxu0 0.0
    %147 = vmatpush1.msra.mxu0 0.0
    %148 = vmatprep.subr.mxu0 0.0
    %149 = vmatpush1.msra.mxu0 0.0
    %150 = vmatprep.subr.mxu0 0.0
    %151 = vmatpush1.msra.mxu0 0.0
    %152 = vmatprep.subr.mxu0 0.0
    %153 = vmatpush1.msra.mxu0 0.0
    %154 = vmatprep.subr.mxu0 0.0
    %155 = vmatpush1.msra.mxu0 0.0
    %156 = vmatprep.subr.mxu0 0.0
    %157 = vmatpush1.msra.mxu0 0.0
    %158 = vmatprep.subr.mxu0 0.0
    %159 = vmatpush1.msra.mxu0 0.0
    %160 = vmatprep.subr.mxu0 0.0
    %161 = vmatpush1.msra.mxu0 0.0
    %162 = vmatprep.subr.mxu0 0.0
    %163 = vmatpush1.msra.mxu0 %v142
    %164 = vmatprep.subr.mxu0 0.0
    %165 = vmatpush1.msra.mxu0 %v125
    %166 = vmatprep.subr.mxu0 0.0
    %167 = vmatpush1.msra.mxu0 %v124
    %168 = vmatprep.subr.mxu0 0.0
    %169 = vmatpush1.msra.mxu0 %v123
    %170 = vmatprep.subr.mxu0 0.0
    %171 = vmatpush1.msra.mxu0 %v122
    %172 = vmatprep.subr.mxu0 0.0
    %173 = vmatpush1.msra.mxu0 %v121
    %174 = vmatprep.subr.mxu0 0.0
    %175 = vmatpush1.msra.mxu0 %v120
    %176 = vmatprep.subr.mxu0 0.0
    %177 = vmatpush2.msra.mxu0 0.0
    %178 = vmatprep.subr.mxu0 0.0
    %179 = vmatpush2.msra.mxu0 0.0
    %180 = vmatprep.subr.mxu0 0.0
    %181 = vmatpush2.msra.mxu0 0.0
    %182 = vmatprep.subr.mxu0 0.0
    %183 = vmatpush2.msra.mxu0 0.0
    %184 = vmatprep.subr.mxu0 0.0
    %185 = vmatpush2.msra.mxu0 0.0
    %186 = vmatprep.subr.mxu0 0.0
    %187 = vmatpush2.msra.mxu0 0.0
    %188 = vmatprep.subr.mxu0 0.0
    %189 = vmatpush2.msra.mxu0 0.0
    %190 = vmatprep.subr.mxu0 0.0
    %191 = vmatpush2.msra.mxu0 0.0
    %192 = vmatprep.subr.mxu0 0.0
    %193 = vmatpush2.msra.mxu0 0.0
    %194 = vmatprep.subr.mxu0 0.0
    %195 = vmatpush2.msra.mxu0 0.0
    %196 = vmatprep.subr.mxu0 0.0
    %197 = vmatpush2.msra.mxu0 0.0
    %198 = vmatprep.subr.mxu0 0.0
    %199 = vmatpush2.msra.mxu0 0.0
    %200 = vmatprep.subr.mxu0 0.0
    %201 = vmatpush2.msra.mxu0 0.0
    %202 = vmatprep.subr.mxu0 0.0
    %203 = vmatpush2.msra.mxu0 0.0
    %204 = vmatprep.subr.mxu0 0.0
    %205 = vmatpush2.msra.mxu0 0.0
    %206 = vmatprep.subr.mxu0 0.0
    %207 = vmatpush2.msra.mxu0 0.0
    %208 = vmatprep.mubr.f32.mxu0 0.0
    %209 = vmatmul.mubr.f32.gmra.mxu0 %v129
    %v210 = vpop.f32.mrf.mxu0
    %v211 = vadd.f32 0.0, %v210
    %v212 = vpop.f32.mrf.mxu0
    %213 = vmatprep.mubr.f32.mxu0 0.0
    %214 = vmatmul.mubr.f32.gmra.mxu0 %v132
    %v215 = vpop.f32.mrf.mxu0
    %v216 = vadd.f32 0.0, %v215
    %v217 = vpop.f32.mrf.mxu0
    %218 = vmatprep.mubr.f32.mxu0 0.0
    %219 = vmatmul.mubr.f32.gmra.mxu0 %v135
    %v220 = vpop.f32.mrf.mxu0
    %v221 = vadd.f32 0.0, %v220
    %v222 = vpop.f32.mrf.mxu0
    %223 = vmatprep.mubr.f32.mxu0 0.0
    %224 = vmatmul.mubr.f32.gmra.mxu0 %v138
    %v225 = vpop.f32.mrf.mxu0
    %v226 = vadd.f32 0.0, %v225
    %v227 = vpop.f32.mrf.mxu0
    %228 = vdwg.mxu0
    %v229 = vld [vmem:[%s4] sm:$0xff]
    %v230 = vld [vmem:[%s4 + $0x8] sm:$0xff]
    %v231 = vld [vmem:[%s4 + $0x10] sm:$0xff]
    %v232 = vld [vmem:[%s4 + $0x18] sm:$0xff]
    %v233 = vld [vmem:[%s5] sm:$0x1]
    %v235 = vlaneseq
    %v236 = vshrl.u32 %v235, 7
    %v237 = vsub.s32 0, %v236
    %v238 = vrot.slane %v233, %v237
    %vm240 = vcmask 261120
    %v242 = vsel %vm240, %v211, 0
    %v245 = vsel %vm240, %v216, 0
    %v248 = vsel %vm240, %v221, 0
    %v251 = vsel %vm240, %v226, 0
    %253 = vmatprep.subr.mxu0 0.0
    %254 = vmatpush1.msra.mxu0 0.0
    %255 = vmatprep.subr.mxu0 0.0
    %256 = vmatpush1.msra.mxu0 0.0
    %257 = vmatprep.subr.mxu0 0.0
    %258 = vmatpush1.msra.mxu0 0.0
    %259 = vmatprep.subr.mxu0 0.0
    %260 = vmatpush1.msra.mxu0 0.0
    %261 = vmatprep.subr.mxu0 0.0
    %262 = vmatpush1.msra.mxu0 0.0
    %263 = vmatprep.subr.mxu0 0.0
    %264 = vmatpush1.msra.mxu0 0.0
    %265 = vmatprep.subr.mxu0 0.0
    %266 = vmatpush1.msra.mxu0 0.0
    %267 = vmatprep.subr.mxu0 0.0
    %268 = vmatpush1.msra.mxu0 0.0
    %269 = vmatprep.subr.mxu0 0.0
    %270 = vmatpush1.msra.mxu0 0.0
    %271 = vmatprep.subr.mxu0 0.0
    %272 = vmatpush1.msra.mxu0 0.0
    %273 = vmatprep.subr.mxu0 0.0
    %274 = vmatpush1.msra.mxu0 0.0
    %275 = vmatprep.subr.mxu0 0.0
    %276 = vmatpush1.msra.mxu0 0.0
    %277 = vmatprep.subr.mxu0 0.0
    %278 = vmatpush1.msra.mxu0 %v232
    %279 = vmatprep.subr.mxu0 0.0
    %280 = vmatpush1.msra.mxu0 %v231
    %281 = vmatprep.subr.mxu0 0.0
    %282 = vmatpush1.msra.mxu0 %v230
    %283 = vmatprep.subr.mxu0 0.0
    %284 = vmatpush1.msra.mxu0 %v229
    %285 = vmatprep.subr.mxu0 0.0
    %286 = vmatpush2.msra.mxu0 0.0
    %287 = vmatprep.subr.mxu0 0.0
    %288 = vmatpush2.msra.mxu0 0.0
    %289 = vmatprep.subr.mxu0 0.0
    %290 = vmatpush2.msra.mxu0 0.0
    %291 = vmatprep.subr.mxu0 0.0
    %292 = vmatpush2.msra.mxu0 0.0
    %293 = vmatprep.subr.mxu0 0.0
    %294 = vmatpush2.msra.mxu0 0.0
    %295 = vmatprep.subr.mxu0 0.0
    %296 = vmatpush2.msra.mxu0 0.0
    %297 = vmatprep.subr.mxu0 0.0
    %298 = vmatpush2.msra.mxu0 0.0
    %299 = vmatprep.subr.mxu0 0.0
    %300 = vmatpush2.msra.mxu0 0.0
    %301 = vmatprep.subr.mxu0 0.0
    %302 = vmatpush2.msra.mxu0 0.0
    %303 = vmatprep.subr.mxu0 0.0
    %304 = vmatpush2.msra.mxu0 0.0
    %305 = vmatprep.subr.mxu0 0.0
    %306 = vmatpush2.msra.mxu0 0.0
    %307 = vmatprep.subr.mxu0 0.0
    %308 = vmatpush2.msra.mxu0 0.0
    %309 = vmatprep.subr.mxu0 0.0
    %310 = vmatpush2.msra.mxu0 0.0
    %311 = vmatprep.subr.mxu0 0.0
    %312 = vmatpush2.msra.mxu0 0.0
    %313 = vmatprep.subr.mxu0 0.0
    %314 = vmatpush2.msra.mxu0 0.0
    %315 = vmatprep.subr.mxu0 0.0
    %316 = vmatpush2.msra.mxu0 0.0
    %317 = vmatprep.mubr.f32.mxu0 0.0
    %318 = vmatmul.mubr.f32.gmra.mxu0 %v242
    %v319 = vpop.f32.mrf.mxu0
    %v320 = vadd.f32 %v238, %v319
    %v321 = vpop.f32.mrf.mxu0
    %322 = vmatprep.mubr.f32.mxu0 0.0
    %323 = vmatmul.mubr.f32.gmra.mxu0 %v245
    %v324 = vpop.f32.mrf.mxu0
    %v325 = vadd.f32 %v238, %v324
    %v326 = vpop.f32.mrf.mxu0
    %327 = vmatprep.mubr.f32.mxu0 0.0
    %328 = vmatmul.mubr.f32.gmra.mxu0 %v248
    %v329 = vpop.f32.mrf.mxu0
    %v330 = vadd.f32 %v238, %v329
    %v331 = vpop.f32.mrf.mxu0
    %332 = vmatprep.mubr.f32.mxu0 0.0
    %333 = vmatmul.mubr.f32.gmra.mxu0 %v251
    %v334 = vpop.f32.mrf.mxu0
    %v335 = vadd.f32 %v238, %v334
    %v336 = vpop.f32.mrf.mxu0
    %337 = vdwg.mxu0
    %v338 = vld [vmem:[%s6] sm:$0xff]
    %v339 = vld [vmem:[%s6 + $0x8] sm:$0xff]
    %v340 = vld [vmem:[%s6 + $0x10] sm:$0xff]
    %v341 = vld [vmem:[%s6 + $0x18] sm:$0xff]
    %v342 = vld [vmem:[%s7] sm:$0x1]
    %v344 = vlaneseq
    %v345 = vshrl.u32 %v344, 7
    %v346 = vsub.s32 0, %v345
    %v347 = vrot.slane %v342, %v346
    %349 = vmatprep.subr.mxu0 0.0
    %350 = vmatpush1.msra.mxu0 0.0
    %351 = vmatprep.subr.mxu0 0.0
    %352 = vmatpush1.msra.mxu0 0.0
    %353 = vmatprep.subr.mxu0 0.0
    %354 = vmatpush1.msra.mxu0 0.0
    %355 = vmatprep.subr.mxu0 0.0
    %356 = vmatpush1.msra.mxu0 0.0
    %357 = vmatprep.subr.mxu0 0.0
    %358 = vmatpush1.msra.mxu0 0.0
    %359 = vmatprep.subr.mxu0 0.0
    %360 = vmatpush1.msra.mxu0 0.0
    %361 = vmatprep.subr.mxu0 0.0
    %362 = vmatpush1.msra.mxu0 0.0
    %363 = vmatprep.subr.mxu0 0.0
    %364 = vmatpush1.msra.mxu0 0.0
    %365 = vmatprep.subr.mxu0 0.0
    %366 = vmatpush1.msra.mxu0 0.0
    %367 = vmatprep.subr.mxu0 0.0
    %368 = vmatpush1.msra.mxu0 0.0
    %369 = vmatprep.subr.mxu0 0.0
    %370 = vmatpush1.msra.mxu0 0.0
    %371 = vmatprep.subr.mxu0 0.0
    %372 = vmatpush1.msra.mxu0 0.0
    %373 = vmatprep.subr.mxu0 0.0
    %374 = vmatpush1.msra.mxu0 %v341
    %375 = vmatprep.subr.mxu0 0.0
    %376 = vmatpush1.msra.mxu0 %v340
    %377 = vmatprep.subr.mxu0 0.0
    %378 = vmatpush1.msra.mxu0 %v339
    %379 = vmatprep.subr.mxu0 0.0
    %380 = vmatpush1.msra.mxu0 %v338
    %381 = vmatprep.subr.mxu0 0.0
    %382 = vmatpush2.msra.mxu0 0.0
    %383 = vmatprep.subr.mxu0 0.0
    %384 = vmatpush2.msra.mxu0 0.0
    %385 = vmatprep.subr.mxu0 0.0
    %386 = vmatpush2.msra.mxu0 0.0
    %387 = vmatprep.subr.mxu0 0.0
    %388 = vmatpush2.msra.mxu0 0.0
    %389 = vmatprep.subr.mxu0 0.0
    %390 = vmatpush2.msra.mxu0 0.0
    %391 = vmatprep.subr.mxu0 0.0
    %392 = vmatpush2.msra.mxu0 0.0
    %393 = vmatprep.subr.mxu0 0.0
    %394 = vmatpush2.msra.mxu0 0.0
    %395 = vmatprep.subr.mxu0 0.0
    %396 = vmatpush2.msra.mxu0 0.0
    %397 = vmatprep.subr.mxu0 0.0
    %398 = vmatpush2.msra.mxu0 0.0
    %399 = vmatprep.subr.mxu0 0.0
    %400 = vmatpush2.msra.mxu0 0.0
    %401 = vmatprep.subr.mxu0 0.0
    %402 = vmatpush2.msra.mxu0 0.0
    %403 = vmatprep.subr.mxu0 0.0
    %404 = vmatpush2.msra.mxu0 0.0
    %405 = vmatprep.subr.mxu0 0.0
    %406 = vmatpush2.msra.mxu0 0.0
    %407 = vmatprep.subr.mxu0 0.0
    %408 = vmatpush2.msra.mxu0 0.0
    %409 = vmatprep.subr.mxu0 0.0
    %410 = vmatpush2.msra.mxu0 0.0
    %411 = vmatprep.subr.mxu0 0.0
    %412 = vmatpush2.msra.mxu0 0.0
    %413 = vmatprep.mubr.f32.mxu0 0.0
    %414 = vmatmul.mubr.f32.gmra.mxu0 %v242
    %v415 = vpop.f32.mrf.mxu0
    %v416 = vadd.f32 %v347, %v415
    %v417 = vpop.f32.mrf.mxu0
    %418 = vmatprep.mubr.f32.mxu0 0.0
    %419 = vmatmul.mubr.f32.gmra.mxu0 %v245
    %v420 = vpop.f32.mrf.mxu0
    %v421 = vadd.f32 %v347, %v420
    %v422 = vpop.f32.mrf.mxu0
    %423 = vmatprep.mubr.f32.mxu0 0.0
    %424 = vmatmul.mubr.f32.gmra.mxu0 %v248
    %v425 = vpop.f32.mrf.mxu0
    %v426 = vadd.f32 %v347, %v425
    %v427 = vpop.f32.mrf.mxu0
    %428 = vmatprep.mubr.f32.mxu0 0.0
    %429 = vmatmul.mubr.f32.gmra.mxu0 %v251
    %v430 = vpop.f32.mrf.mxu0
    %v431 = vadd.f32 %v347, %v430
    %v432 = vpop.f32.mrf.mxu0
    %433 = vdwg.mxu0
    %v434 = vld [vmem:[%s8] sm:$0xff]
    %v435 = vld [vmem:[%s8 + $0x8] sm:$0xff]
    %v436 = vld [vmem:[%s8 + $0x10] sm:$0xff]
    %v437 = vld [vmem:[%s8 + $0x18] sm:$0xff]
    %v438 = vld [vmem:[%s9] sm:$0x1]
    %v440 = vlaneseq
    %v441 = vshrl.u32 %v440, 7
    %v442 = vsub.s32 0, %v441
    %v443 = vrot.slane %v438, %v442
    %445 = vmatprep.subr.mxu0 0.0
    %446 = vmatpush1.msra.mxu0 0.0
    %447 = vmatprep.subr.mxu0 0.0
    %448 = vmatpush1.msra.mxu0 0.0
    %449 = vmatprep.subr.mxu0 0.0
    %450 = vmatpush1.msra.mxu0 0.0
    %451 = vmatprep.subr.mxu0 0.0
    %452 = vmatpush1.msra.mxu0 0.0
    %453 = vmatprep.subr.mxu0 0.0
    %454 = vmatpush1.msra.mxu0 0.0
    %455 = vmatprep.subr.mxu0 0.0
    %456 = vmatpush1.msra.mxu0 0.0
    %457 = vmatprep.subr.mxu0 0.0
    %458 = vmatpush1.msra.mxu0 0.0
    %459 = vmatprep.subr.mxu0 0.0
    %460 = vmatpush1.msra.mxu0 0.0
    %461 = vmatprep.subr.mxu0 0.0
    %462 = vmatpush1.msra.mxu0 0.0
    %463 = vmatprep.subr.mxu0 0.0
    %464 = vmatpush1.msra.mxu0 0.0
    %465 = vmatprep.subr.mxu0 0.0
    %466 = vmatpush1.msra.mxu0 0.0
    %467 = vmatprep.subr.mxu0 0.0
    %468 = vmatpush1.msra.mxu0 0.0
    %469 = vmatprep.subr.mxu0 0.0
    %470 = vmatpush1.msra.mxu0 %v437
    %471 = vmatprep.subr.mxu0 0.0
    %472 = vmatpush1.msra.mxu0 %v436
    %473 = vmatprep.subr.mxu0 0.0
    %474 = vmatpush1.msra.mxu0 %v435
    %475 = vmatprep.subr.mxu0 0.0
    %476 = vmatpush1.msra.mxu0 %v434
    %477 = vmatprep.subr.mxu0 0.0
    %478 = vmatpush2.msra.mxu0 0.0
    %479 = vmatprep.subr.mxu0 0.0
    %480 = vmatpush2.msra.mxu0 0.0
    %481 = vmatprep.subr.mxu0 0.0
    %482 = vmatpush2.msra.mxu0 0.0
    %483 = vmatprep.subr.mxu0 0.0
    %484 = vmatpush2.msra.mxu0 0.0
    %485 = vmatprep.subr.mxu0 0.0
    %486 = vmatpush2.msra.mxu0 0.0
    %487 = vmatprep.subr.mxu0 0.0
    %488 = vmatpush2.msra.mxu0 0.0
    %489 = vmatprep.subr.mxu0 0.0
    %490 = vmatpush2.msra.mxu0 0.0
    %491 = vmatprep.subr.mxu0 0.0
    %492 = vmatpush2.msra.mxu0 0.0
    %493 = vmatprep.subr.mxu0 0.0
    %494 = vmatpush2.msra.mxu0 0.0
    %495 = vmatprep.subr.mxu0 0.0
    %496 = vmatpush2.msra.mxu0 0.0
    %497 = vmatprep.subr.mxu0 0.0
    %498 = vmatpush2.msra.mxu0 0.0
    %499 = vmatprep.subr.mxu0 0.0
    %500 = vmatpush2.msra.mxu0 0.0
    %501 = vmatprep.subr.mxu0 0.0
    %502 = vmatpush2.msra.mxu0 0.0
    %503 = vmatprep.subr.mxu0 0.0
    %504 = vmatpush2.msra.mxu0 0.0
    %505 = vmatprep.subr.mxu0 0.0
    %506 = vmatpush2.msra.mxu0 0.0
    %507 = vmatprep.subr.mxu0 0.0
    %508 = vmatpush2.msra.mxu0 0.0
    %509 = vmatprep.mubr.f32.mxu0 0.0
    %510 = vmatmul.mubr.f32.gmra.mxu0 %v242
    %v511 = vpop.f32.mrf.mxu0
    %v512 = vadd.f32 %v443, %v511
    %v513 = vpop.f32.mrf.mxu0
    %514 = vmatprep.mubr.f32.mxu0 0.0
    %515 = vmatmul.mubr.f32.gmra.mxu0 %v245
    %v516 = vpop.f32.mrf.mxu0
    %v517 = vadd.f32 %v443, %v516
    %v518 = vpop.f32.mrf.mxu0
    %519 = vmatprep.mubr.f32.mxu0 0.0
    %520 = vmatmul.mubr.f32.gmra.mxu0 %v248
    %v521 = vpop.f32.mrf.mxu0
    %v522 = vadd.f32 %v443, %v521
    %v523 = vpop.f32.mrf.mxu0
    %524 = vmatprep.mubr.f32.mxu0 0.0
    %525 = vmatmul.mubr.f32.gmra.mxu0 %v251
    %v526 = vpop.f32.mrf.mxu0
    %v527 = vadd.f32 %v443, %v526
    %v528 = vpop.f32.mrf.mxu0
    %529 = vdwg.mxu0
    %534 = vrot.lane.b32.xlu0 %v320, 120
    %v535 = vpop.permute.xlu0 %534
    %536 = vrot.lane.b32.xlu0 %v325, 120
    %v537 = vpop.permute.xlu0 %536
    %538 = vrot.lane.b32.xlu0 %v330, 120
    %v539 = vpop.permute.xlu0 %538
    %540 = vrot.lane.b32.xlu0 %v335, 120
    %v541 = vpop.permute.xlu0 %540
    %542 = vrot.lane.b32.xlu0 %v320, 112
    %v543 = vpop.permute.xlu0 %542
    %544 = vrot.lane.b32.xlu0 %v325, 112
    %v545 = vpop.permute.xlu0 %544
    %546 = vrot.lane.b32.xlu0 %v330, 112
    %v547 = vpop.permute.xlu0 %546
    %548 = vrot.lane.b32.xlu0 %v335, 112
    %v549 = vpop.permute.xlu0 %548
    %550 = vrot.lane.b32.xlu0 %v320, 104
    %v551 = vpop.permute.xlu0 %550
    %552 = vrot.lane.b32.xlu0 %v325, 104
    %v553 = vpop.permute.xlu0 %552
    %554 = vrot.lane.b32.xlu0 %v330, 104
    %v555 = vpop.permute.xlu0 %554
    %556 = vrot.lane.b32.xlu0 %v335, 104
    %v557 = vpop.permute.xlu0 %556
    %562 = vrot.lane.b32.xlu0 %v416, 120
    %v563 = vpop.permute.xlu0 %562
    %564 = vrot.lane.b32.xlu0 %v421, 120
    %v565 = vpop.permute.xlu0 %564
    %566 = vrot.lane.b32.xlu0 %v426, 120
    %v567 = vpop.permute.xlu0 %566
    %568 = vrot.lane.b32.xlu0 %v431, 120
    %v569 = vpop.permute.xlu0 %568
    %570 = vrot.lane.b32.xlu0 %v416, 112
    %v571 = vpop.permute.xlu0 %570
    %572 = vrot.lane.b32.xlu0 %v421, 112
    %v573 = vpop.permute.xlu0 %572
    %574 = vrot.lane.b32.xlu0 %v426, 112
    %v575 = vpop.permute.xlu0 %574
    %576 = vrot.lane.b32.xlu0 %v431, 112
    %v577 = vpop.permute.xlu0 %576
    %578 = vrot.lane.b32.xlu0 %v416, 104
    %v579 = vpop.permute.xlu0 %578
    %580 = vrot.lane.b32.xlu0 %v421, 104
    %v581 = vpop.permute.xlu0 %580
    %582 = vrot.lane.b32.xlu0 %v426, 104
    %v583 = vpop.permute.xlu0 %582
    %584 = vrot.lane.b32.xlu0 %v431, 104
    %v585 = vpop.permute.xlu0 %584
    %590 = vrot.lane.b32.xlu0 %v512, 120
    %v591 = vpop.permute.xlu0 %590
    %592 = vrot.lane.b32.xlu0 %v517, 120
    %v593 = vpop.permute.xlu0 %592
    %594 = vrot.lane.b32.xlu0 %v522, 120
    %v595 = vpop.permute.xlu0 %594
    %596 = vrot.lane.b32.xlu0 %v527, 120
    %v597 = vpop.permute.xlu0 %596
    %602 = vrot.lane.b32.xlu0 %v512, 112
    %v603 = vpop.permute.xlu0 %602
    %604 = vrot.lane.b32.xlu0 %v517, 112
    %v605 = vpop.permute.xlu0 %604
    %606 = vrot.lane.b32.xlu0 %v522, 112
    %v607 = vpop.permute.xlu0 %606
    %608 = vrot.lane.b32.xlu0 %v527, 112
    %v609 = vpop.permute.xlu0 %608
    %614 = vrot.lane.b32.xlu0 %v512, 104
    %v615 = vpop.permute.xlu0 %614
    %616 = vrot.lane.b32.xlu0 %v517, 104
    %v617 = vpop.permute.xlu0 %616
    %618 = vrot.lane.b32.xlu0 %v522, 104
    %v619 = vpop.permute.xlu0 %618
    %620 = vrot.lane.b32.xlu0 %v527, 104
    %v621 = vpop.permute.xlu0 %620
    %v626 = vld [vmem:[%s1] sm:$0x1]
    %v627 = vld [vmem:[%s1 + $0x1] sm:$0x1]
    %v628 = vld [vmem:[%s1 + $0x2] sm:$0x1]
    %v629 = vld [vmem:[%s1 + $0x3] sm:$0x1]
    %vm630 = vcmp.ne.s32.totalorder %v626, 0
    %vm631 = vcmp.ne.s32.totalorder %v627, 0
    %vm632 = vcmp.ne.s32.totalorder %v628, 0
    %vm633 = vcmp.ne.s32.totalorder %v629, 0
    %v634 = vsel %vm630, -1e+09, 0.0
    %v635 = vsel %vm631, -1e+09, 0.0
    %v636 = vsel %vm632, -1e+09, 0.0
    %v637 = vsel %vm633, -1e+09, 0.0
    %vm638 = vcmask 64512
    %v639 = vsel %vm638, %v320, 0
    %v641 = vsel %vm638, %v416, 0
    %643 = vmatprep.subr.mxu0 0.0
    %644 = vmatpush1.xpose.msra.mxu0 0.0
    %645 = vmatprep.subr.mxu0 0.0
    %646 = vmatpush1.xpose.msra.mxu0 0.0
    %647 = vmatprep.subr.mxu0 0.0
    %648 = vmatpush1.xpose.msra.mxu0 0.0
    %649 = vmatprep.subr.mxu0 0.0
    %650 = vmatpush1.xpose.msra.mxu0 0.0
    %651 = vmatprep.subr.mxu0 0.0
    %652 = vmatpush1.xpose.msra.mxu0 0.0
    %653 = vmatprep.subr.mxu0 0.0
    %654 = vmatpush1.xpose.msra.mxu0 0.0
    %655 = vmatprep.subr.mxu0 0.0
    %656 = vmatpush1.xpose.msra.mxu0 0.0
    %657 = vmatprep.subr.mxu0 0.0
    %658 = vmatpush1.xpose.msra.mxu0 0.0
    %659 = vmatprep.subr.mxu0 0.0
    %660 = vmatpush1.xpose.msra.mxu0 0.0
    %661 = vmatprep.subr.mxu0 0.0
    %662 = vmatpush1.xpose.msra.mxu0 0.0
    %663 = vmatprep.subr.mxu0 0.0
    %664 = vmatpush1.xpose.msra.mxu0 0.0
    %665 = vmatprep.subr.mxu0 0.0
    %666 = vmatpush1.xpose.msra.mxu0 0.0
    %667 = vmatprep.subr.mxu0 0.0
    %668 = vmatpush1.xpose.msra.mxu0 0.0
    %669 = vmatprep.subr.mxu0 0.0
    %670 = vmatpush1.xpose.msra.mxu0 0.0
    %671 = vmatprep.subr.mxu0 0.0
    %672 = vmatpush1.xpose.msra.mxu0 0.0
    %673 = vmatprep.subr.mxu0 0.0
    %674 = vmatpush1.xpose.msra.mxu0 %v641
    %675 = vmatprep.subr.mxu0 0.0
    %676 = vmatpush2.xpose.msra.mxu0 0.0
    %677 = vmatprep.subr.mxu0 0.0
    %678 = vmatpush2.xpose.msra.mxu0 0.0
    %679 = vmatprep.subr.mxu0 0.0
    %680 = vmatpush2.xpose.msra.mxu0 0.0
    %681 = vmatprep.subr.mxu0 0.0
    %682 = vmatpush2.xpose.msra.mxu0 0.0
    %683 = vmatprep.subr.mxu0 0.0
    %684 = vmatpush2.xpose.msra.mxu0 0.0
    %685 = vmatprep.subr.mxu0 0.0
    %686 = vmatpush2.xpose.msra.mxu0 0.0
    %687 = vmatprep.subr.mxu0 0.0
    %688 = vmatpush2.xpose.msra.mxu0 0.0
    %689 = vmatprep.subr.mxu0 0.0
    %690 = vmatpush2.xpose.msra.mxu0 0.0
    %691 = vmatprep.subr.mxu0 0.0
    %692 = vmatpush2.xpose.msra.mxu0 0.0
    %693 = vmatprep.subr.mxu0 0.0
    %694 = vmatpush2.xpose.msra.mxu0 0.0
    %695 = vmatprep.subr.mxu0 0.0
    %696 = vmatpush2.xpose.msra.mxu0 0.0
    %697 = vmatprep.subr.mxu0 0.0
    %698 = vmatpush2.xpose.msra.mxu0 0.0
    %699 = vmatprep.subr.mxu0 0.0
    %700 = vmatpush2.xpose.msra.mxu0 0.0
    %701 = vmatprep.subr.mxu0 0.0
    %702 = vmatpush2.xpose.msra.mxu0 0.0
    %703 = vmatprep.subr.mxu0 0.0
    %704 = vmatpush2.xpose.msra.mxu0 0.0
    %705 = vmatprep.subr.mxu0 0.0
    %706 = vmatpush2.xpose.msra.mxu0 0.0
    %707 = vmatprep.mubr.f32.mxu0 0.0
    %708 = vmatmul.mubr.f32.gmra.mxu0 %v639
    %v709 = vpop.f32.mrf.mxu0
    %v710 = vadd.f32 0.0, %v709
    %v711 = vpop.f32.mrf.mxu0
    %712 = vdwg.mxu0
    %v713 = vsel %vm638, %v325, 0
    %v715 = vsel %vm638, %v421, 0
    %717 = vmatprep.subr.mxu0 0.0
    %718 = vmatpush1.xpose.msra.mxu0 0.0
    %719 = vmatprep.subr.mxu0 0.0
    %720 = vmatpush1.xpose.msra.mxu0 0.0
    %721 = vmatprep.subr.mxu0 0.0
    %722 = vmatpush1.xpose.msra.mxu0 0.0
    %723 = vmatprep.subr.mxu0 0.0
    %724 = vmatpush1.xpose.msra.mxu0 0.0
    %725 = vmatprep.subr.mxu0 0.0
    %726 = vmatpush1.xpose.msra.mxu0 0.0
    %727 = vmatprep.subr.mxu0 0.0
    %728 = vmatpush1.xpose.msra.mxu0 0.0
    %729 = vmatprep.subr.mxu0 0.0
    %730 = vmatpush1.xpose.msra.mxu0 0.0
    %731 = vmatprep.subr.mxu0 0.0
    %732 = vmatpush1.xpose.msra.mxu0 0.0
    %733 = vmatprep.subr.mxu0 0.0
    %734 = vmatpush1.xpose.msra.mxu0 0.0
    %735 = vmatprep.subr.mxu0 0.0
    %736 = vmatpush1.xpose.msra.mxu0 0.0
    %737 = vmatprep.subr.mxu0 0.0
    %738 = vmatpush1.xpose.msra.mxu0 0.0
    %739 = vmatprep.subr.mxu0 0.0
    %740 = vmatpush1.xpose.msra.mxu0 0.0
    %741 = vmatprep.subr.mxu0 0.0
    %742 = vmatpush1.xpose.msra.mxu0 0.0
    %743 = vmatprep.subr.mxu0 0.0
    %744 = vmatpush1.xpose.msra.mxu0 0.0
    %745 = vmatprep.subr.mxu0 0.0
    %746 = vmatpush1.xpose.msra.mxu0 0.0
    %747 = vmatprep.subr.mxu0 0.0
    %748 = vmatpush1.xpose.msra.mxu0 %v715
    %749 = vmatprep.subr.mxu0 0.0
    %750 = vmatpush2.xpose.msra.mxu0 0.0
    %751 = vmatprep.subr.mxu0 0.0
    %752 = vmatpush2.xpose.msra.mxu0 0.0
    %753 = vmatprep.subr.mxu0 0.0
    %754 = vmatpush2.xpose.msra.mxu0 0.0
    %755 = vmatprep.subr.mxu0 0.0
    %756 = vmatpush2.xpose.msra.mxu0 0.0
    %757 = vmatprep.subr.mxu0 0.0
    %758 = vmatpush2.xpose.msra.mxu0 0.0
    %759 = vmatprep.subr.mxu0 0.0
    %760 = vmatpush2.xpose.msra.mxu0 0.0
    %761 = vmatprep.subr.mxu0 0.0
    %762 = vmatpush2.xpose.msra.mxu0 0.0
    %763 = vmatprep.subr.mxu0 0.0
    %764 = vmatpush2.xpose.msra.mxu0 0.0
    %765 = vmatprep.subr.mxu0 0.0
    %766 = vmatpush2.xpose.msra.mxu0 0.0
    %767 = vmatprep.subr.mxu0 0.0
    %768 = vmatpush2.xpose.msra.mxu0 0.0
    %769 = vmatprep.subr.mxu0 0.0
    %770 = vmatpush2.xpose.msra.mxu0 0.0
    %771 = vmatprep.subr.mxu0 0.0
    %772 = vmatpush2.xpose.msra.mxu0 0.0
    %773 = vmatprep.subr.mxu0 0.0
    %774 = vmatpush2.xpose.msra.mxu0 0.0
    %775 = vmatprep.subr.mxu0 0.0
    %776 = vmatpush2.xpose.msra.mxu0 0.0
    %777 = vmatprep.subr.mxu0 0.0
    %778 = vmatpush2.xpose.msra.mxu0 0.0
    %779 = vmatprep.subr.mxu0 0.0
    %780 = vmatpush2.xpose.msra.mxu0 0.0
    %781 = vmatprep.mubr.f32.mxu0 0.0
    %782 = vmatmul.mubr.f32.gmra.mxu0 %v713
    %v783 = vpop.f32.mrf.mxu0
    %v784 = vadd.f32 0.0, %v783
    %v785 = vpop.f32.mrf.mxu0
    %786 = vdwg.mxu0
    %v787 = vsel %vm638, %v330, 0
    %v789 = vsel %vm638, %v426, 0
    %791 = vmatprep.subr.mxu0 0.0
    %792 = vmatpush1.xpose.msra.mxu0 0.0
    %793 = vmatprep.subr.mxu0 0.0
    %794 = vmatpush1.xpose.msra.mxu0 0.0
    %795 = vmatprep.subr.mxu0 0.0
    %796 = vmatpush1.xpose.msra.mxu0 0.0
    %797 = vmatprep.subr.mxu0 0.0
    %798 = vmatpush1.xpose.msra.mxu0 0.0
    %799 = vmatprep.subr.mxu0 0.0
    %800 = vmatpush1.xpose.msra.mxu0 0.0
    %801 = vmatprep.subr.mxu0 0.0
    %802 = vmatpush1.xpose.msra.mxu0 0.0
    %803 = vmatprep.subr.mxu0 0.0
    %804 = vmatpush1.xpose.msra.mxu0 0.0
    %805 = vmatprep.subr.mxu0 0.0
    %806 = vmatpush1.xpose.msra.mxu0 0.0
    %807 = vmatprep.subr.mxu0 0.0
    %808 = vmatpush1.xpose.msra.mxu0 0.0
    %809 = vmatprep.subr.mxu0 0.0
    %810 = vmatpush1.xpose.msra.mxu0 0.0
    %811 = vmatprep.subr.mxu0 0.0
    %812 = vmatpush1.xpose.msra.mxu0 0.0
    %813 = vmatprep.subr.mxu0 0.0
    %814 = vmatpush1.xpose.msra.mxu0 0.0
    %815 = vmatprep.subr.mxu0 0.0
    %816 = vmatpush1.xpose.msra.mxu0 0.0
    %817 = vmatprep.subr.mxu0 0.0
    %818 = vmatpush1.xpose.msra.mxu0 0.0
    %819 = vmatprep.subr.mxu0 0.0
    %820 = vmatpush1.xpose.msra.mxu0 0.0
    %821 = vmatprep.subr.mxu0 0.0
    %822 = vmatpush1.xpose.msra.mxu0 %v789
    %823 = vmatprep.subr.mxu0 0.0
    %824 = vmatpush2.xpose.msra.mxu0 0.0
    %825 = vmatprep.subr.mxu0 0.0
    %826 = vmatpush2.xpose.msra.mxu0 0.0
    %827 = vmatprep.subr.mxu0 0.0
    %828 = vmatpush2.xpose.msra.mxu0 0.0
    %829 = vmatprep.subr.mxu0 0.0
    %830 = vmatpush2.xpose.msra.mxu0 0.0
    %831 = vmatprep.subr.mxu0 0.0
    %832 = vmatpush2.xpose.msra.mxu0 0.0
    %833 = vmatprep.subr.mxu0 0.0
    %834 = vmatpush2.xpose.msra.mxu0 0.0
    %835 = vmatprep.subr.mxu0 0.0
    %836 = vmatpush2.xpose.msra.mxu0 0.0
    %837 = vmatprep.subr.mxu0 0.0
    %838 = vmatpush2.xpose.msra.mxu0 0.0
    %839 = vmatprep.subr.mxu0 0.0
    %840 = vmatpush2.xpose.msra.mxu0 0.0
    %841 = vmatprep.subr.mxu0 0.0
    %842 = vmatpush2.xpose.msra.mxu0 0.0
    %843 = vmatprep.subr.mxu0 0.0
    %844 = vmatpush2.xpose.msra.mxu0 0.0
    %845 = vmatprep.subr.mxu0 0.0
    %846 = vmatpush2.xpose.msra.mxu0 0.0
    %847 = vmatprep.subr.mxu0 0.0
    %848 = vmatpush2.xpose.msra.mxu0 0.0
    %849 = vmatprep.subr.mxu0 0.0
    %850 = vmatpush2.xpose.msra.mxu0 0.0
    %851 = vmatprep.subr.mxu0 0.0
    %852 = vmatpush2.xpose.msra.mxu0 0.0
    %853 = vmatprep.subr.mxu0 0.0
    %854 = vmatpush2.xpose.msra.mxu0 0.0
    %855 = vmatprep.mubr.f32.mxu0 0.0
    %856 = vmatmul.mubr.f32.gmra.mxu0 %v787
    %v857 = vpop.f32.mrf.mxu0
    %v858 = vadd.f32 0.0, %v857
    %v859 = vpop.f32.mrf.mxu0
    %860 = vdwg.mxu0
    %v861 = vsel %vm638, %v335, 0
    %v863 = vsel %vm638, %v431, 0
    %865 = vmatprep.subr.mxu0 0.0
    %866 = vmatpush1.xpose.msra.mxu0 0.0
    %867 = vmatprep.subr.mxu0 0.0
    %868 = vmatpush1.xpose.msra.mxu0 0.0
    %869 = vmatprep.subr.mxu0 0.0
    %870 = vmatpush1.xpose.msra.mxu0 0.0
    %871 = vmatprep.subr.mxu0 0.0
    %872 = vmatpush1.xpose.msra.mxu0 0.0
    %873 = vmatprep.subr.mxu0 0.0
    %874 = vmatpush1.xpose.msra.mxu0 0.0
    %875 = vmatprep.subr.mxu0 0.0
    %876 = vmatpush1.xpose.msra.mxu0 0.0
    %877 = vmatprep.subr.mxu0 0.0
    %878 = vmatpush1.xpose.msra.mxu0 0.0
    %879 = vmatprep.subr.mxu0 0.0
    %880 = vmatpush1.xpose.msra.mxu0 0.0
    %881 = vmatprep.subr.mxu0 0.0
    %882 = vmatpush1.xpose.msra.mxu0 0.0
    %883 = vmatprep.subr.mxu0 0.0
    %884 = vmatpush1.xpose.msra.mxu0 0.0
    %885 = vmatprep.subr.mxu0 0.0
    %886 = vmatpush1.xpose.msra.mxu0 0.0
    %887 = vmatprep.subr.mxu0 0.0
    %888 = vmatpush1.xpose.msra.mxu0 0.0
    %889 = vmatprep.subr.mxu0 0.0
    %890 = vmatpush1.xpose.msra.mxu0 0.0
    %891 = vmatprep.subr.mxu0 0.0
    %892 = vmatpush1.xpose.msra.mxu0 0.0
    %893 = vmatprep.subr.mxu0 0.0
    %894 = vmatpush1.xpose.msra.mxu0 0.0
    %895 = vmatprep.subr.mxu0 0.0
    %896 = vmatpush1.xpose.msra.mxu0 %v863
    %897 = vmatprep.subr.mxu0 0.0
    %898 = vmatpush2.xpose.msra.mxu0 0.0
    %899 = vmatprep.subr.mxu0 0.0
    %900 = vmatpush2.xpose.msra.mxu0 0.0
    %901 = vmatprep.subr.mxu0 0.0
    %902 = vmatpush2.xpose.msra.mxu0 0.0
    %903 = vmatprep.subr.mxu0 0.0
    %904 = vmatpush2.xpose.msra.mxu0 0.0
    %905 = vmatprep.subr.mxu0 0.0
    %906 = vmatpush2.xpose.msra.mxu0 0.0
    %907 = vmatprep.subr.mxu0 0.0
    %908 = vmatpush2.xpose.msra.mxu0 0.0
    %909 = vmatprep.subr.mxu0 0.0
    %910 = vmatpush2.xpose.msra.mxu0 0.0
    %911 = vmatprep.subr.mxu0 0.0
    %912 = vmatpush2.xpose.msra.mxu0 0.0
    %913 = vmatprep.subr.mxu0 0.0
    %914 = vmatpush2.xpose.msra.mxu0 0.0
    %915 = vmatprep.subr.mxu0 0.0
    %916 = vmatpush2.xpose.msra.mxu0 0.0
    %917 = vmatprep.subr.mxu0 0.0
    %918 = vmatpush2.xpose.msra.mxu0 0.0
    %919 = vmatprep.subr.mxu0 0.0
    %920 = vmatpush2.xpose.msra.mxu0 0.0
    %921 = vmatprep.subr.mxu0 0.0
    %922 = vmatpush2.xpose.msra.mxu0 0.0
    %923 = vmatprep.subr.mxu0 0.0
    %924 = vmatpush2.xpose.msra.mxu0 0.0
    %925 = vmatprep.subr.mxu0 0.0
    %926 = vmatpush2.xpose.msra.mxu0 0.0
    %927 = vmatprep.subr.mxu0 0.0
    %928 = vmatpush2.xpose.msra.mxu0 0.0
    %929 = vmatprep.mubr.f32.mxu0 0.0
    %930 = vmatmul.mubr.f32.gmra.mxu0 %v861
    %v931 = vpop.f32.mrf.mxu0
    %v932 = vadd.f32 0.0, %v931
    %v933 = vpop.f32.mrf.mxu0
    %934 = vdwg.mxu0
    %v935 = vsel %vm638, %v535, 0
    %v937 = vsel %vm638, %v563, 0
    %939 = vmatprep.subr.mxu0 0.0
    %940 = vmatpush1.xpose.msra.mxu0 0.0
    %941 = vmatprep.subr.mxu0 0.0
    %942 = vmatpush1.xpose.msra.mxu0 0.0
    %943 = vmatprep.subr.mxu0 0.0
    %944 = vmatpush1.xpose.msra.mxu0 0.0
    %945 = vmatprep.subr.mxu0 0.0
    %946 = vmatpush1.xpose.msra.mxu0 0.0
    %947 = vmatprep.subr.mxu0 0.0
    %948 = vmatpush1.xpose.msra.mxu0 0.0
    %949 = vmatprep.subr.mxu0 0.0
    %950 = vmatpush1.xpose.msra.mxu0 0.0
    %951 = vmatprep.subr.mxu0 0.0
    %952 = vmatpush1.xpose.msra.mxu0 0.0
    %953 = vmatprep.subr.mxu0 0.0
    %954 = vmatpush1.xpose.msra.mxu0 0.0
    %955 = vmatprep.subr.mxu0 0.0
    %956 = vmatpush1.xpose.msra.mxu0 0.0
    %957 = vmatprep.subr.mxu0 0.0
    %958 = vmatpush1.xpose.msra.mxu0 0.0
    %959 = vmatprep.subr.mxu0 0.0
    %960 = vmatpush1.xpose.msra.mxu0 0.0
    %961 = vmatprep.subr.mxu0 0.0
    %962 = vmatpush1.xpose.msra.mxu0 0.0
    %963 = vmatprep.subr.mxu0 0.0
    %964 = vmatpush1.xpose.msra.mxu0 0.0
    %965 = vmatprep.subr.mxu0 0.0
    %966 = vmatpush1.xpose.msra.mxu0 0.0
    %967 = vmatprep.subr.mxu0 0.0
    %968 = vmatpush1.xpose.msra.mxu0 0.0
    %969 = vmatprep.subr.mxu0 0.0
    %970 = vmatpush1.xpose.msra.mxu0 %v937
    %971 = vmatprep.subr.mxu0 0.0
    %972 = vmatpush2.xpose.msra.mxu0 0.0
    %973 = vmatprep.subr.mxu0 0.0
    %974 = vmatpush2.xpose.msra.mxu0 0.0
    %975 = vmatprep.subr.mxu0 0.0
    %976 = vmatpush2.xpose.msra.mxu0 0.0
    %977 = vmatprep.subr.mxu0 0.0
    %978 = vmatpush2.xpose.msra.mxu0 0.0
    %979 = vmatprep.subr.mxu0 0.0
    %980 = vmatpush2.xpose.msra.mxu0 0.0
    %981 = vmatprep.subr.mxu0 0.0
    %982 = vmatpush2.xpose.msra.mxu0 0.0
    %983 = vmatprep.subr.mxu0 0.0
    %984 = vmatpush2.xpose.msra.mxu0 0.0
    %985 = vmatprep.subr.mxu0 0.0
    %986 = vmatpush2.xpose.msra.mxu0 0.0
    %987 = vmatprep.subr.mxu0 0.0
    %988 = vmatpush2.xpose.msra.mxu0 0.0
    %989 = vmatprep.subr.mxu0 0.0
    %990 = vmatpush2.xpose.msra.mxu0 0.0
    %991 = vmatprep.subr.mxu0 0.0
    %992 = vmatpush2.xpose.msra.mxu0 0.0
    %993 = vmatprep.subr.mxu0 0.0
    %994 = vmatpush2.xpose.msra.mxu0 0.0
    %995 = vmatprep.subr.mxu0 0.0
    %996 = vmatpush2.xpose.msra.mxu0 0.0
    %997 = vmatprep.subr.mxu0 0.0
    %998 = vmatpush2.xpose.msra.mxu0 0.0
    %999 = vmatprep.subr.mxu0 0.0
    %1000 = vmatpush2.xpose.msra.mxu0 0.0
    %1001 = vmatprep.subr.mxu0 0.0
    %1002 = vmatpush2.xpose.msra.mxu0 0.0
    %1003 = vmatprep.mubr.f32.mxu0 0.0
    %1004 = vmatmul.mubr.f32.gmra.mxu0 %v935
    %v1005 = vpop.f32.mrf.mxu0
    %v1006 = vadd.f32 0.0, %v1005
    %v1007 = vpop.f32.mrf.mxu0
    %1008 = vdwg.mxu0
    %v1009 = vsel %vm638, %v537, 0
    %v1011 = vsel %vm638, %v565, 0
    %1013 = vmatprep.subr.mxu0 0.0
    %1014 = vmatpush1.xpose.msra.mxu0 0.0
    %1015 = vmatprep.subr.mxu0 0.0
    %1016 = vmatpush1.xpose.msra.mxu0 0.0
    %1017 = vmatprep.subr.mxu0 0.0
    %1018 = vmatpush1.xpose.msra.mxu0 0.0
    %1019 = vmatprep.subr.mxu0 0.0
    %1020 = vmatpush1.xpose.msra.mxu0 0.0
    %1021 = vmatprep.subr.mxu0 0.0
    %1022 = vmatpush1.xpose.msra.mxu0 0.0
    %1023 = vmatprep.subr.mxu0 0.0
    %1024 = vmatpush1.xpose.msra.mxu0 0.0
    %1025 = vmatprep.subr.mxu0 0.0
    %1026 = vmatpush1.xpose.msra.mxu0 0.0
    %1027 = vmatprep.subr.mxu0 0.0
    %1028 = vmatpush1.xpose.msra.mxu0 0.0
    %1029 = vmatprep.subr.mxu0 0.0
    %1030 = vmatpush1.xpose.msra.mxu0 0.0
    %1031 = vmatprep.subr.mxu0 0.0
    %1032 = vmatpush1.xpose.msra.mxu0 0.0
    %1033 = vmatprep.subr.mxu0 0.0
    %1034 = vmatpush1.xpose.msra.mxu0 0.0
    %1035 = vmatprep.subr.mxu0 0.0
    %1036 = vmatpush1.xpose.msra.mxu0 0.0
    %1037 = vmatprep.subr.mxu0 0.0
    %1038 = vmatpush1.xpose.msra.mxu0 0.0
    %1039 = vmatprep.subr.mxu0 0.0
    %1040 = vmatpush1.xpose.msra.mxu0 0.0
    %1041 = vmatprep.subr.mxu0 0.0
    %1042 = vmatpush1.xpose.msra.mxu0 0.0
    %1043 = vmatprep.subr.mxu0 0.0
    %1044 = vmatpush1.xpose.msra.mxu0 %v1011
    %1045 = vmatprep.subr.mxu0 0.0
    %1046 = vmatpush2.xpose.msra.mxu0 0.0
    %1047 = vmatprep.subr.mxu0 0.0
    %1048 = vmatpush2.xpose.msra.mxu0 0.0
    %1049 = vmatprep.subr.mxu0 0.0
    %1050 = vmatpush2.xpose.msra.mxu0 0.0
    %1051 = vmatprep.subr.mxu0 0.0
    %1052 = vmatpush2.xpose.msra.mxu0 0.0
    %1053 = vmatprep.subr.mxu0 0.0
    %1054 = vmatpush2.xpose.msra.mxu0 0.0
    %1055 = vmatprep.subr.mxu0 0.0
    %1056 = vmatpush2.xpose.msra.mxu0 0.0
    %1057 = vmatprep.subr.mxu0 0.0
    %1058 = vmatpush2.xpose.msra.mxu0 0.0
    %1059 = vmatprep.subr.mxu0 0.0
    %1060 = vmatpush2.xpose.msra.mxu0 0.0
    %1061 = vmatprep.subr.mxu0 0.0
    %1062 = vmatpush2.xpose.msra.mxu0 0.0
    %1063 = vmatprep.subr.mxu0 0.0
    %1064 = vmatpush2.xpose.msra.mxu0 0.0
    %1065 = vmatprep.subr.mxu0 0.0
    %1066 = vmatpush2.xpose.msra.mxu0 0.0
    %1067 = vmatprep.subr.mxu0 0.0
    %1068 = vmatpush2.xpose.msra.mxu0 0.0
    %1069 = vmatprep.subr.mxu0 0.0
    %1070 = vmatpush2.xpose.msra.mxu0 0.0
    %1071 = vmatprep.subr.mxu0 0.0
    %1072 = vmatpush2.xpose.msra.mxu0 0.0
    %1073 = vmatprep.subr.mxu0 0.0
    %1074 = vmatpush2.xpose.msra.mxu0 0.0
    %1075 = vmatprep.subr.mxu0 0.0
    %1076 = vmatpush2.xpose.msra.mxu0 0.0
    %1077 = vmatprep.mubr.f32.mxu0 0.0
    %1078 = vmatmul.mubr.f32.gmra.mxu0 %v1009
    %v1079 = vpop.f32.mrf.mxu0
    %v1080 = vadd.f32 0.0, %v1079
    %v1081 = vpop.f32.mrf.mxu0
    %1082 = vdwg.mxu0
    %v1083 = vsel %vm638, %v539, 0
    %v1085 = vsel %vm638, %v567, 0
    %1087 = vmatprep.subr.mxu0 0.0
    %1088 = vmatpush1.xpose.msra.mxu0 0.0
    %1089 = vmatprep.subr.mxu0 0.0
    %1090 = vmatpush1.xpose.msra.mxu0 0.0
    %1091 = vmatprep.subr.mxu0 0.0
    %1092 = vmatpush1.xpose.msra.mxu0 0.0
    %1093 = vmatprep.subr.mxu0 0.0
    %1094 = vmatpush1.xpose.msra.mxu0 0.0
    %1095 = vmatprep.subr.mxu0 0.0
    %1096 = vmatpush1.xpose.msra.mxu0 0.0
    %1097 = vmatprep.subr.mxu0 0.0
    %1098 = vmatpush1.xpose.msra.mxu0 0.0
    %1099 = vmatprep.subr.mxu0 0.0
    %1100 = vmatpush1.xpose.msra.mxu0 0.0
    %1101 = vmatprep.subr.mxu0 0.0
    %1102 = vmatpush1.xpose.msra.mxu0 0.0
    %1103 = vmatprep.subr.mxu0 0.0
    %1104 = vmatpush1.xpose.msra.mxu0 0.0
    %1105 = vmatprep.subr.mxu0 0.0
    %1106 = vmatpush1.xpose.msra.mxu0 0.0
    %1107 = vmatprep.subr.mxu0 0.0
    %1108 = vmatpush1.xpose.msra.mxu0 0.0
    %1109 = vmatprep.subr.mxu0 0.0
    %1110 = vmatpush1.xpose.msra.mxu0 0.0
    %1111 = vmatprep.subr.mxu0 0.0
    %1112 = vmatpush1.xpose.msra.mxu0 0.0
    %1113 = vmatprep.subr.mxu0 0.0
    %1114 = vmatpush1.xpose.msra.mxu0 0.0
    %1115 = vmatprep.subr.mxu0 0.0
    %1116 = vmatpush1.xpose.msra.mxu0 0.0
    %1117 = vmatprep.subr.mxu0 0.0
    %1118 = vmatpush1.xpose.msra.mxu0 %v1085
    %1119 = vmatprep.subr.mxu0 0.0
    %1120 = vmatpush2.xpose.msra.mxu0 0.0
    %1121 = vmatprep.subr.mxu0 0.0
    %1122 = vmatpush2.xpose.msra.mxu0 0.0
    %1123 = vmatprep.subr.mxu0 0.0
    %1124 = vmatpush2.xpose.msra.mxu0 0.0
    %1125 = vmatprep.subr.mxu0 0.0
    %1126 = vmatpush2.xpose.msra.mxu0 0.0
    %1127 = vmatprep.subr.mxu0 0.0
    %1128 = vmatpush2.xpose.msra.mxu0 0.0
    %1129 = vmatprep.subr.mxu0 0.0
    %1130 = vmatpush2.xpose.msra.mxu0 0.0
    %1131 = vmatprep.subr.mxu0 0.0
    %1132 = vmatpush2.xpose.msra.mxu0 0.0
    %1133 = vmatprep.subr.mxu0 0.0
    %1134 = vmatpush2.xpose.msra.mxu0 0.0
    %1135 = vmatprep.subr.mxu0 0.0
    %1136 = vmatpush2.xpose.msra.mxu0 0.0
    %1137 = vmatprep.subr.mxu0 0.0
    %1138 = vmatpush2.xpose.msra.mxu0 0.0
    %1139 = vmatprep.subr.mxu0 0.0
    %1140 = vmatpush2.xpose.msra.mxu0 0.0
    %1141 = vmatprep.subr.mxu0 0.0
    %1142 = vmatpush2.xpose.msra.mxu0 0.0
    %1143 = vmatprep.subr.mxu0 0.0
    %1144 = vmatpush2.xpose.msra.mxu0 0.0
    %1145 = vmatprep.subr.mxu0 0.0
    %1146 = vmatpush2.xpose.msra.mxu0 0.0
    %1147 = vmatprep.subr.mxu0 0.0
    %1148 = vmatpush2.xpose.msra.mxu0 0.0
    %1149 = vmatprep.subr.mxu0 0.0
    %1150 = vmatpush2.xpose.msra.mxu0 0.0
    %1151 = vmatprep.mubr.f32.mxu0 0.0
    %1152 = vmatmul.mubr.f32.gmra.mxu0 %v1083
    %v1153 = vpop.f32.mrf.mxu0
    %v1154 = vadd.f32 0.0, %v1153
    %v1155 = vpop.f32.mrf.mxu0
    %1156 = vdwg.mxu0
    %v1157 = vsel %vm638, %v541, 0
    %v1159 = vsel %vm638, %v569, 0
    %1161 = vmatprep.subr.mxu0 0.0
    %1162 = vmatpush1.xpose.msra.mxu0 0.0
    %1163 = vmatprep.subr.mxu0 0.0
    %1164 = vmatpush1.xpose.msra.mxu0 0.0
    %1165 = vmatprep.subr.mxu0 0.0
    %1166 = vmatpush1.xpose.msra.mxu0 0.0
    %1167 = vmatprep.subr.mxu0 0.0
    %1168 = vmatpush1.xpose.msra.mxu0 0.0
    %1169 = vmatprep.subr.mxu0 0.0
    %1170 = vmatpush1.xpose.msra.mxu0 0.0
    %1171 = vmatprep.subr.mxu0 0.0
    %1172 = vmatpush1.xpose.msra.mxu0 0.0
    %1173 = vmatprep.subr.mxu0 0.0
    %1174 = vmatpush1.xpose.msra.mxu0 0.0
    %1175 = vmatprep.subr.mxu0 0.0
    %1176 = vmatpush1.xpose.msra.mxu0 0.0
    %1177 = vmatprep.subr.mxu0 0.0
    %1178 = vmatpush1.xpose.msra.mxu0 0.0
    %1179 = vmatprep.subr.mxu0 0.0
    %1180 = vmatpush1.xpose.msra.mxu0 0.0
    %1181 = vmatprep.subr.mxu0 0.0
    %1182 = vmatpush1.xpose.msra.mxu0 0.0
    %1183 = vmatprep.subr.mxu0 0.0
    %1184 = vmatpush1.xpose.msra.mxu0 0.0
    %1185 = vmatprep.subr.mxu0 0.0
    %1186 = vmatpush1.xpose.msra.mxu0 0.0
    %1187 = vmatprep.subr.mxu0 0.0
    %1188 = vmatpush1.xpose.msra.mxu0 0.0
    %1189 = vmatprep.subr.mxu0 0.0
    %1190 = vmatpush1.xpose.msra.mxu0 0.0
    %1191 = vmatprep.subr.mxu0 0.0
    %1192 = vmatpush1.xpose.msra.mxu0 %v1159
    %1193 = vmatprep.subr.mxu0 0.0
    %1194 = vmatpush2.xpose.msra.mxu0 0.0
    %1195 = vmatprep.subr.mxu0 0.0
    %1196 = vmatpush2.xpose.msra.mxu0 0.0
    %1197 = vmatprep.subr.mxu0 0.0
    %1198 = vmatpush2.xpose.msra.mxu0 0.0
    %1199 = vmatprep.subr.mxu0 0.0
    %1200 = vmatpush2.xpose.msra.mxu0 0.0
    %1201 = vmatprep.subr.mxu0 0.0
    %1202 = vmatpush2.xpose.msra.mxu0 0.0
    %1203 = vmatprep.subr.mxu0 0.0
    %1204 = vmatpush2.xpose.msra.mxu0 0.0
    %1205 = vmatprep.subr.mxu0 0.0
    %1206 = vmatpush2.xpose.msra.mxu0 0.0
    %1207 = vmatprep.subr.mxu0 0.0
    %1208 = vmatpush2.xpose.msra.mxu0 0.0
    %1209 = vmatprep.subr.mxu0 0.0
    %1210 = vmatpush2.xpose.msra.mxu0 0.0
    %1211 = vmatprep.subr.mxu0 0.0
    %1212 = vmatpush2.xpose.msra.mxu0 0.0
    %1213 = vmatprep.subr.mxu0 0.0
    %1214 = vmatpush2.xpose.msra.mxu0 0.0
    %1215 = vmatprep.subr.mxu0 0.0
    %1216 = vmatpush2.xpose.msra.mxu0 0.0
    %1217 = vmatprep.subr.mxu0 0.0
    %1218 = vmatpush2.xpose.msra.mxu0 0.0
    %1219 = vmatprep.subr.mxu0 0.0
    %1220 = vmatpush2.xpose.msra.mxu0 0.0
    %1221 = vmatprep.subr.mxu0 0.0
    %1222 = vmatpush2.xpose.msra.mxu0 0.0
    %1223 = vmatprep.subr.mxu0 0.0
    %1224 = vmatpush2.xpose.msra.mxu0 0.0
    %1225 = vmatprep.mubr.f32.mxu0 0.0
    %1226 = vmatmul.mubr.f32.gmra.mxu0 %v1157
    %v1227 = vpop.f32.mrf.mxu0
    %v1228 = vadd.f32 0.0, %v1227
    %v1229 = vpop.f32.mrf.mxu0
    %1230 = vdwg.mxu0
    %v1231 = vsel %vm638, %v543, 0
    %v1233 = vsel %vm638, %v571, 0
    %1235 = vmatprep.subr.mxu0 0.0
    %1236 = vmatpush1.xpose.msra.mxu0 0.0
    %1237 = vmatprep.subr.mxu0 0.0
    %1238 = vmatpush1.xpose.msra.mxu0 0.0
    %1239 = vmatprep.subr.mxu0 0.0
    %1240 = vmatpush1.xpose.msra.mxu0 0.0
    %1241 = vmatprep.subr.mxu0 0.0
    %1242 = vmatpush1.xpose.msra.mxu0 0.0
    %1243 = vmatprep.subr.mxu0 0.0
    %1244 = vmatpush1.xpose.msra.mxu0 0.0
    %1245 = vmatprep.subr.mxu0 0.0
    %1246 = vmatpush1.xpose.msra.mxu0 0.0
    %1247 = vmatprep.subr.mxu0 0.0
    %1248 = vmatpush1.xpose.msra.mxu0 0.0
    %1249 = vmatprep.subr.mxu0 0.0
    %1250 = vmatpush1.xpose.msra.mxu0 0.0
    %1251 = vmatprep.subr.mxu0 0.0
    %1252 = vmatpush1.xpose.msra.mxu0 0.0
    %1253 = vmatprep.subr.mxu0 0.0
    %1254 = vmatpush1.xpose.msra.mxu0 0.0
    %1255 = vmatprep.subr.mxu0 0.0
    %1256 = vmatpush1.xpose.msra.mxu0 0.0
    %1257 = vmatprep.subr.mxu0 0.0
    %1258 = vmatpush1.xpose.msra.mxu0 0.0
    %1259 = vmatprep.subr.mxu0 0.0
    %1260 = vmatpush1.xpose.msra.mxu0 0.0
    %1261 = vmatprep.subr.mxu0 0.0
    %1262 = vmatpush1.xpose.msra.mxu0 0.0
    %1263 = vmatprep.subr.mxu0 0.0
    %1264 = vmatpush1.xpose.msra.mxu0 0.0
    %1265 = vmatprep.subr.mxu0 0.0
    %1266 = vmatpush1.xpose.msra.mxu0 %v1233
    %1267 = vmatprep.subr.mxu0 0.0
    %1268 = vmatpush2.xpose.msra.mxu0 0.0
    %1269 = vmatprep.subr.mxu0 0.0
    %1270 = vmatpush2.xpose.msra.mxu0 0.0
    %1271 = vmatprep.subr.mxu0 0.0
    %1272 = vmatpush2.xpose.msra.mxu0 0.0
    %1273 = vmatprep.subr.mxu0 0.0
    %1274 = vmatpush2.xpose.msra.mxu0 0.0
    %1275 = vmatprep.subr.mxu0 0.0
    %1276 = vmatpush2.xpose.msra.mxu0 0.0
    %1277 = vmatprep.subr.mxu0 0.0
    %1278 = vmatpush2.xpose.msra.mxu0 0.0
    %1279 = vmatprep.subr.mxu0 0.0
    %1280 = vmatpush2.xpose.msra.mxu0 0.0
    %1281 = vmatprep.subr.mxu0 0.0
    %1282 = vmatpush2.xpose.msra.mxu0 0.0
    %1283 = vmatprep.subr.mxu0 0.0
    %1284 = vmatpush2.xpose.msra.mxu0 0.0
    %1285 = vmatprep.subr.mxu0 0.0
    %1286 = vmatpush2.xpose.msra.mxu0 0.0
    %1287 = vmatprep.subr.mxu0 0.0
    %1288 = vmatpush2.xpose.msra.mxu0 0.0
    %1289 = vmatprep.subr.mxu0 0.0
    %1290 = vmatpush2.xpose.msra.mxu0 0.0
    %1291 = vmatprep.subr.mxu0 0.0
    %1292 = vmatpush2.xpose.msra.mxu0 0.0
    %1293 = vmatprep.subr.mxu0 0.0
    %1294 = vmatpush2.xpose.msra.mxu0 0.0
    %1295 = vmatprep.subr.mxu0 0.0
    %1296 = vmatpush2.xpose.msra.mxu0 0.0
    %1297 = vmatprep.subr.mxu0 0.0
    %1298 = vmatpush2.xpose.msra.mxu0 0.0
    %1299 = vmatprep.mubr.f32.mxu0 0.0
    %1300 = vmatmul.mubr.f32.gmra.mxu0 %v1231
    %v1301 = vpop.f32.mrf.mxu0
    %v1302 = vadd.f32 0.0, %v1301
    %v1303 = vpop.f32.mrf.mxu0
    %1304 = vdwg.mxu0
    %v1305 = vsel %vm638, %v545, 0
    %v1307 = vsel %vm638, %v573, 0
    %1309 = vmatprep.subr.mxu0 0.0
    %1310 = vmatpush1.xpose.msra.mxu0 0.0
    %1311 = vmatprep.subr.mxu0 0.0
    %1312 = vmatpush1.xpose.msra.mxu0 0.0
    %1313 = vmatprep.subr.mxu0 0.0
    %1314 = vmatpush1.xpose.msra.mxu0 0.0
    %1315 = vmatprep.subr.mxu0 0.0
    %1316 = vmatpush1.xpose.msra.mxu0 0.0
    %1317 = vmatprep.subr.mxu0 0.0
    %1318 = vmatpush1.xpose.msra.mxu0 0.0
    %1319 = vmatprep.subr.mxu0 0.0
    %1320 = vmatpush1.xpose.msra.mxu0 0.0
    %1321 = vmatprep.subr.mxu0 0.0
    %1322 = vmatpush1.xpose.msra.mxu0 0.0
    %1323 = vmatprep.subr.mxu0 0.0
    %1324 = vmatpush1.xpose.msra.mxu0 0.0
    %1325 = vmatprep.subr.mxu0 0.0
    %1326 = vmatpush1.xpose.msra.mxu0 0.0
    %1327 = vmatprep.subr.mxu0 0.0
    %1328 = vmatpush1.xpose.msra.mxu0 0.0
    %1329 = vmatprep.subr.mxu0 0.0
    %1330 = vmatpush1.xpose.msra.mxu0 0.0
    %1331 = vmatprep.subr.mxu0 0.0
    %1332 = vmatpush1.xpose.msra.mxu0 0.0
    %1333 = vmatprep.subr.mxu0 0.0
    %1334 = vmatpush1.xpose.msra.mxu0 0.0
    %1335 = vmatprep.subr.mxu0 0.0
    %1336 = vmatpush1.xpose.msra.mxu0 0.0
    %1337 = vmatprep.subr.mxu0 0.0
    %1338 = vmatpush1.xpose.msra.mxu0 0.0
    %1339 = vmatprep.subr.mxu0 0.0
    %1340 = vmatpush1.xpose.msra.mxu0 %v1307
    %1341 = vmatprep.subr.mxu0 0.0
    %1342 = vmatpush2.xpose.msra.mxu0 0.0
    %1343 = vmatprep.subr.mxu0 0.0
    %1344 = vmatpush2.xpose.msra.mxu0 0.0
    %1345 = vmatprep.subr.mxu0 0.0
    %1346 = vmatpush2.xpose.msra.mxu0 0.0
    %1347 = vmatprep.subr.mxu0 0.0
    %1348 = vmatpush2.xpose.msra.mxu0 0.0
    %1349 = vmatprep.subr.mxu0 0.0
    %1350 = vmatpush2.xpose.msra.mxu0 0.0
    %1351 = vmatprep.subr.mxu0 0.0
    %1352 = vmatpush2.xpose.msra.mxu0 0.0
    %1353 = vmatprep.subr.mxu0 0.0
    %1354 = vmatpush2.xpose.msra.mxu0 0.0
    %1355 = vmatprep.subr.mxu0 0.0
    %1356 = vmatpush2.xpose.msra.mxu0 0.0
    %1357 = vmatprep.subr.mxu0 0.0
    %1358 = vmatpush2.xpose.msra.mxu0 0.0
    %1359 = vmatprep.subr.mxu0 0.0
    %1360 = vmatpush2.xpose.msra.mxu0 0.0
    %1361 = vmatprep.subr.mxu0 0.0
    %1362 = vmatpush2.xpose.msra.mxu0 0.0
    %1363 = vmatprep.subr.mxu0 0.0
    %1364 = vmatpush2.xpose.msra.mxu0 0.0
    %1365 = vmatprep.subr.mxu0 0.0
    %1366 = vmatpush2.xpose.msra.mxu0 0.0
    %1367 = vmatprep.subr.mxu0 0.0
    %1368 = vmatpush2.xpose.msra.mxu0 0.0
    %1369 = vmatprep.subr.mxu0 0.0
    %1370 = vmatpush2.xpose.msra.mxu0 0.0
    %1371 = vmatprep.subr.mxu0 0.0
    %1372 = vmatpush2.xpose.msra.mxu0 0.0
    %1373 = vmatprep.mubr.f32.mxu0 0.0
    %1374 = vmatmul.mubr.f32.gmra.mxu0 %v1305
    %v1375 = vpop.f32.mrf.mxu0
    %v1376 = vadd.f32 0.0, %v1375
    %v1377 = vpop.f32.mrf.mxu0
    %1378 = vdwg.mxu0
    %v1379 = vsel %vm638, %v547, 0
    %v1381 = vsel %vm638, %v575, 0
    %1383 = vmatprep.subr.mxu0 0.0
    %1384 = vmatpush1.xpose.msra.mxu0 0.0
    %1385 = vmatprep.subr.mxu0 0.0
    %1386 = vmatpush1.xpose.msra.mxu0 0.0
    %1387 = vmatprep.subr.mxu0 0.0
    %1388 = vmatpush1.xpose.msra.mxu0 0.0
    %1389 = vmatprep.subr.mxu0 0.0
    %1390 = vmatpush1.xpose.msra.mxu0 0.0
    %1391 = vmatprep.subr.mxu0 0.0
    %1392 = vmatpush1.xpose.msra.mxu0 0.0
    %1393 = vmatprep.subr.mxu0 0.0
    %1394 = vmatpush1.xpose.msra.mxu0 0.0
    %1395 = vmatprep.subr.mxu0 0.0
    %1396 = vmatpush1.xpose.msra.mxu0 0.0
    %1397 = vmatprep.subr.mxu0 0.0
    %1398 = vmatpush1.xpose.msra.mxu0 0.0
    %1399 = vmatprep.subr.mxu0 0.0
    %1400 = vmatpush1.xpose.msra.mxu0 0.0
    %1401 = vmatprep.subr.mxu0 0.0
    %1402 = vmatpush1.xpose.msra.mxu0 0.0
    %1403 = vmatprep.subr.mxu0 0.0
    %1404 = vmatpush1.xpose.msra.mxu0 0.0
    %1405 = vmatprep.subr.mxu0 0.0
    %1406 = vmatpush1.xpose.msra.mxu0 0.0
    %1407 = vmatprep.subr.mxu0 0.0
    %1408 = vmatpush1.xpose.msra.mxu0 0.0
    %1409 = vmatprep.subr.mxu0 0.0
    %1410 = vmatpush1.xpose.msra.mxu0 0.0
    %1411 = vmatprep.subr.mxu0 0.0
    %1412 = vmatpush1.xpose.msra.mxu0 0.0
    %1413 = vmatprep.subr.mxu0 0.0
    %1414 = vmatpush1.xpose.msra.mxu0 %v1381
    %1415 = vmatprep.subr.mxu0 0.0
    %1416 = vmatpush2.xpose.msra.mxu0 0.0
    %1417 = vmatprep.subr.mxu0 0.0
    %1418 = vmatpush2.xpose.msra.mxu0 0.0
    %1419 = vmatprep.subr.mxu0 0.0
    %1420 = vmatpush2.xpose.msra.mxu0 0.0
    %1421 = vmatprep.subr.mxu0 0.0
    %1422 = vmatpush2.xpose.msra.mxu0 0.0
    %1423 = vmatprep.subr.mxu0 0.0
    %1424 = vmatpush2.xpose.msra.mxu0 0.0
    %1425 = vmatprep.subr.mxu0 0.0
    %1426 = vmatpush2.xpose.msra.mxu0 0.0
    %1427 = vmatprep.subr.mxu0 0.0
    %1428 = vmatpush2.xpose.msra.mxu0 0.0
    %1429 = vmatprep.subr.mxu0 0.0
    %1430 = vmatpush2.xpose.msra.mxu0 0.0
    %1431 = vmatprep.subr.mxu0 0.0
    %1432 = vmatpush2.xpose.msra.mxu0 0.0
    %1433 = vmatprep.subr.mxu0 0.0
    %1434 = vmatpush2.xpose.msra.mxu0 0.0
    %1435 = vmatprep.subr.mxu0 0.0
    %1436 = vmatpush2.xpose.msra.mxu0 0.0
    %1437 = vmatprep.subr.mxu0 0.0
    %1438 = vmatpush2.xpose.msra.mxu0 0.0
    %1439 = vmatprep.subr.mxu0 0.0
    %1440 = vmatpush2.xpose.msra.mxu0 0.0
    %1441 = vmatprep.subr.mxu0 0.0
    %1442 = vmatpush2.xpose.msra.mxu0 0.0
    %1443 = vmatprep.subr.mxu0 0.0
    %1444 = vmatpush2.xpose.msra.mxu0 0.0
    %1445 = vmatprep.subr.mxu0 0.0
    %1446 = vmatpush2.xpose.msra.mxu0 0.0
    %1447 = vmatprep.mubr.f32.mxu0 0.0
    %1448 = vmatmul.mubr.f32.gmra.mxu0 %v1379
    %v1449 = vpop.f32.mrf.mxu0
    %v1450 = vadd.f32 0.0, %v1449
    %v1451 = vpop.f32.mrf.mxu0
    %1452 = vdwg.mxu0
    %v1453 = vsel %vm638, %v549, 0
    %v1455 = vsel %vm638, %v577, 0
    %1457 = vmatprep.subr.mxu0 0.0
    %1458 = vmatpush1.xpose.msra.mxu0 0.0
    %1459 = vmatprep.subr.mxu0 0.0
    %1460 = vmatpush1.xpose.msra.mxu0 0.0
    %1461 = vmatprep.subr.mxu0 0.0
    %1462 = vmatpush1.xpose.msra.mxu0 0.0
    %1463 = vmatprep.subr.mxu0 0.0
    %1464 = vmatpush1.xpose.msra.mxu0 0.0
    %1465 = vmatprep.subr.mxu0 0.0
    %1466 = vmatpush1.xpose.msra.mxu0 0.0
    %1467 = vmatprep.subr.mxu0 0.0
    %1468 = vmatpush1.xpose.msra.mxu0 0.0
    %1469 = vmatprep.subr.mxu0 0.0
    %1470 = vmatpush1.xpose.msra.mxu0 0.0
    %1471 = vmatprep.subr.mxu0 0.0
    %1472 = vmatpush1.xpose.msra.mxu0 0.0
    %1473 = vmatprep.subr.mxu0 0.0
    %1474 = vmatpush1.xpose.msra.mxu0 0.0
    %1475 = vmatprep.subr.mxu0 0.0
    %1476 = vmatpush1.xpose.msra.mxu0 0.0
    %1477 = vmatprep.subr.mxu0 0.0
    %1478 = vmatpush1.xpose.msra.mxu0 0.0
    %1479 = vmatprep.subr.mxu0 0.0
    %1480 = vmatpush1.xpose.msra.mxu0 0.0
    %1481 = vmatprep.subr.mxu0 0.0
    %1482 = vmatpush1.xpose.msra.mxu0 0.0
    %1483 = vmatprep.subr.mxu0 0.0
    %1484 = vmatpush1.xpose.msra.mxu0 0.0
    %1485 = vmatprep.subr.mxu0 0.0
    %1486 = vmatpush1.xpose.msra.mxu0 0.0
    %1487 = vmatprep.subr.mxu0 0.0
    %1488 = vmatpush1.xpose.msra.mxu0 %v1455
    %1489 = vmatprep.subr.mxu0 0.0
    %1490 = vmatpush2.xpose.msra.mxu0 0.0
    %1491 = vmatprep.subr.mxu0 0.0
    %1492 = vmatpush2.xpose.msra.mxu0 0.0
    %1493 = vmatprep.subr.mxu0 0.0
    %1494 = vmatpush2.xpose.msra.mxu0 0.0
    %1495 = vmatprep.subr.mxu0 0.0
    %1496 = vmatpush2.xpose.msra.mxu0 0.0
    %1497 = vmatprep.subr.mxu0 0.0
    %1498 = vmatpush2.xpose.msra.mxu0 0.0
    %1499 = vmatprep.subr.mxu0 0.0
    %1500 = vmatpush2.xpose.msra.mxu0 0.0
    %1501 = vmatprep.subr.mxu0 0.0
    %1502 = vmatpush2.xpose.msra.mxu0 0.0
    %1503 = vmatprep.subr.mxu0 0.0
    %1504 = vmatpush2.xpose.msra.mxu0 0.0
    %1505 = vmatprep.subr.mxu0 0.0
    %1506 = vmatpush2.xpose.msra.mxu0 0.0
    %1507 = vmatprep.subr.mxu0 0.0
    %1508 = vmatpush2.xpose.msra.mxu0 0.0
    %1509 = vmatprep.subr.mxu0 0.0
    %1510 = vmatpush2.xpose.msra.mxu0 0.0
    %1511 = vmatprep.subr.mxu0 0.0
    %1512 = vmatpush2.xpose.msra.mxu0 0.0
    %1513 = vmatprep.subr.mxu0 0.0
    %1514 = vmatpush2.xpose.msra.mxu0 0.0
    %1515 = vmatprep.subr.mxu0 0.0
    %1516 = vmatpush2.xpose.msra.mxu0 0.0
    %1517 = vmatprep.subr.mxu0 0.0
    %1518 = vmatpush2.xpose.msra.mxu0 0.0
    %1519 = vmatprep.subr.mxu0 0.0
    %1520 = vmatpush2.xpose.msra.mxu0 0.0
    %1521 = vmatprep.mubr.f32.mxu0 0.0
    %1522 = vmatmul.mubr.f32.gmra.mxu0 %v1453
    %v1523 = vpop.f32.mrf.mxu0
    %v1524 = vadd.f32 0.0, %v1523
    %v1525 = vpop.f32.mrf.mxu0
    %1526 = vdwg.mxu0
    %v1527 = vsel %vm638, %v551, 0
    %v1529 = vsel %vm638, %v579, 0
    %1531 = vmatprep.subr.mxu0 0.0
    %1532 = vmatpush1.xpose.msra.mxu0 0.0
    %1533 = vmatprep.subr.mxu0 0.0
    %1534 = vmatpush1.xpose.msra.mxu0 0.0
    %1535 = vmatprep.subr.mxu0 0.0
    %1536 = vmatpush1.xpose.msra.mxu0 0.0
    %1537 = vmatprep.subr.mxu0 0.0
    %1538 = vmatpush1.xpose.msra.mxu0 0.0
    %1539 = vmatprep.subr.mxu0 0.0
    %1540 = vmatpush1.xpose.msra.mxu0 0.0
    %1541 = vmatprep.subr.mxu0 0.0
    %1542 = vmatpush1.xpose.msra.mxu0 0.0
    %1543 = vmatprep.subr.mxu0 0.0
    %1544 = vmatpush1.xpose.msra.mxu0 0.0
    %1545 = vmatprep.subr.mxu0 0.0
    %1546 = vmatpush1.xpose.msra.mxu0 0.0
    %1547 = vmatprep.subr.mxu0 0.0
    %1548 = vmatpush1.xpose.msra.mxu0 0.0
    %1549 = vmatprep.subr.mxu0 0.0
    %1550 = vmatpush1.xpose.msra.mxu0 0.0
    %1551 = vmatprep.subr.mxu0 0.0
    %1552 = vmatpush1.xpose.msra.mxu0 0.0
    %1553 = vmatprep.subr.mxu0 0.0
    %1554 = vmatpush1.xpose.msra.mxu0 0.0
    %1555 = vmatprep.subr.mxu0 0.0
    %1556 = vmatpush1.xpose.msra.mxu0 0.0
    %1557 = vmatprep.subr.mxu0 0.0
    %1558 = vmatpush1.xpose.msra.mxu0 0.0
    %1559 = vmatprep.subr.mxu0 0.0
    %1560 = vmatpush1.xpose.msra.mxu0 0.0
    %1561 = vmatprep.subr.mxu0 0.0
    %1562 = vmatpush1.xpose.msra.mxu0 %v1529
    %1563 = vmatprep.subr.mxu0 0.0
    %1564 = vmatpush2.xpose.msra.mxu0 0.0
    %1565 = vmatprep.subr.mxu0 0.0
    %1566 = vmatpush2.xpose.msra.mxu0 0.0
    %1567 = vmatprep.subr.mxu0 0.0
    %1568 = vmatpush2.xpose.msra.mxu0 0.0
    %1569 = vmatprep.subr.mxu0 0.0
    %1570 = vmatpush2.xpose.msra.mxu0 0.0
    %1571 = vmatprep.subr.mxu0 0.0
    %1572 = vmatpush2.xpose.msra.mxu0 0.0
    %1573 = vmatprep.subr.mxu0 0.0
    %1574 = vmatpush2.xpose.msra.mxu0 0.0
    %1575 = vmatprep.subr.mxu0 0.0
    %1576 = vmatpush2.xpose.msra.mxu0 0.0
    %1577 = vmatprep.subr.mxu0 0.0
    %1578 = vmatpush2.xpose.msra.mxu0 0.0
    %1579 = vmatprep.subr.mxu0 0.0
    %1580 = vmatpush2.xpose.msra.mxu0 0.0
    %1581 = vmatprep.subr.mxu0 0.0
    %1582 = vmatpush2.xpose.msra.mxu0 0.0
    %1583 = vmatprep.subr.mxu0 0.0
    %1584 = vmatpush2.xpose.msra.mxu0 0.0
    %1585 = vmatprep.subr.mxu0 0.0
    %1586 = vmatpush2.xpose.msra.mxu0 0.0
    %1587 = vmatprep.subr.mxu0 0.0
    %1588 = vmatpush2.xpose.msra.mxu0 0.0
    %1589 = vmatprep.subr.mxu0 0.0
    %1590 = vmatpush2.xpose.msra.mxu0 0.0
    %1591 = vmatprep.subr.mxu0 0.0
    %1592 = vmatpush2.xpose.msra.mxu0 0.0
    %1593 = vmatprep.subr.mxu0 0.0
    %1594 = vmatpush2.xpose.msra.mxu0 0.0
    %1595 = vmatprep.mubr.f32.mxu0 0.0
    %1596 = vmatmul.mubr.f32.gmra.mxu0 %v1527
    %v1597 = vpop.f32.mrf.mxu0
    %v1598 = vadd.f32 0.0, %v1597
    %v1599 = vpop.f32.mrf.mxu0
    %1600 = vdwg.mxu0
    %v1601 = vsel %vm638, %v553, 0
    %v1603 = vsel %vm638, %v581, 0
    %1605 = vmatprep.subr.mxu0 0.0
    %1606 = vmatpush1.xpose.msra.mxu0 0.0
    %1607 = vmatprep.subr.mxu0 0.0
    %1608 = vmatpush1.xpose.msra.mxu0 0.0
    %1609 = vmatprep.subr.mxu0 0.0
    %1610 = vmatpush1.xpose.msra.mxu0 0.0
    %1611 = vmatprep.subr.mxu0 0.0
    %1612 = vmatpush1.xpose.msra.mxu0 0.0
    %1613 = vmatprep.subr.mxu0 0.0
    %1614 = vmatpush1.xpose.msra.mxu0 0.0
    %1615 = vmatprep.subr.mxu0 0.0
    %1616 = vmatpush1.xpose.msra.mxu0 0.0
    %1617 = vmatprep.subr.mxu0 0.0
    %1618 = vmatpush1.xpose.msra.mxu0 0.0
    %1619 = vmatprep.subr.mxu0 0.0
    %1620 = vmatpush1.xpose.msra.mxu0 0.0
    %1621 = vmatprep.subr.mxu0 0.0
    %1622 = vmatpush1.xpose.msra.mxu0 0.0
    %1623 = vmatprep.subr.mxu0 0.0
    %1624 = vmatpush1.xpose.msra.mxu0 0.0
    %1625 = vmatprep.subr.mxu0 0.0
    %1626 = vmatpush1.xpose.msra.mxu0 0.0
    %1627 = vmatprep.subr.mxu0 0.0
    %1628 = vmatpush1.xpose.msra.mxu0 0.0
    %1629 = vmatprep.subr.mxu0 0.0
    %1630 = vmatpush1.xpose.msra.mxu0 0.0
    %1631 = vmatprep.subr.mxu0 0.0
    %1632 = vmatpush1.xpose.msra.mxu0 0.0
    %1633 = vmatprep.subr.mxu0 0.0
    %1634 = vmatpush1.xpose.msra.mxu0 0.0
    %1635 = vmatprep.subr.mxu0 0.0
    %1636 = vmatpush1.xpose.msra.mxu0 %v1603
    %1637 = vmatprep.subr.mxu0 0.0
    %1638 = vmatpush2.xpose.msra.mxu0 0.0
    %1639 = vmatprep.subr.mxu0 0.0
    %1640 = vmatpush2.xpose.msra.mxu0 0.0
    %1641 = vmatprep.subr.mxu0 0.0
    %1642 = vmatpush2.xpose.msra.mxu0 0.0
    %1643 = vmatprep.subr.mxu0 0.0
    %1644 = vmatpush2.xpose.msra.mxu0 0.0
    %1645 = vmatprep.subr.mxu0 0.0
    %1646 = vmatpush2.xpose.msra.mxu0 0.0
    %1647 = vmatprep.subr.mxu0 0.0
    %1648 = vmatpush2.xpose.msra.mxu0 0.0
    %1649 = vmatprep.subr.mxu0 0.0
    %1650 = vmatpush2.xpose.msra.mxu0 0.0
    %1651 = vmatprep.subr.mxu0 0.0
    %1652 = vmatpush2.xpose.msra.mxu0 0.0
    %1653 = vmatprep.subr.mxu0 0.0
    %1654 = vmatpush2.xpose.msra.mxu0 0.0
    %1655 = vmatprep.subr.mxu0 0.0
    %1656 = vmatpush2.xpose.msra.mxu0 0.0
    %1657 = vmatprep.subr.mxu0 0.0
    %1658 = vmatpush2.xpose.msra.mxu0 0.0
    %1659 = vmatprep.subr.mxu0 0.0
    %1660 = vmatpush2.xpose.msra.mxu0 0.0
    %1661 = vmatprep.subr.mxu0 0.0
    %1662 = vmatpush2.xpose.msra.mxu0 0.0
    %1663 = vmatprep.subr.mxu0 0.0
    %1664 = vmatpush2.xpose.msra.mxu0 0.0
    %1665 = vmatprep.subr.mxu0 0.0
    %1666 = vmatpush2.xpose.msra.mxu0 0.0
    %1667 = vmatprep.subr.mxu0 0.0
    %1668 = vmatpush2.xpose.msra.mxu0 0.0
    %1669 = vmatprep.mubr.f32.mxu0 0.0
    %1670 = vmatmul.mubr.f32.gmra.mxu0 %v1601
    %v1671 = vpop.f32.mrf.mxu0
    %v1672 = vadd.f32 0.0, %v1671
    %v1673 = vpop.f32.mrf.mxu0
    %1674 = vdwg.mxu0
    %v1675 = vsel %vm638, %v555, 0
    %v1677 = vsel %vm638, %v583, 0
    %1679 = vmatprep.subr.mxu0 0.0
    %1680 = vmatpush1.xpose.msra.mxu0 0.0
    %1681 = vmatprep.subr.mxu0 0.0
    %1682 = vmatpush1.xpose.msra.mxu0 0.0
    %1683 = vmatprep.subr.mxu0 0.0
    %1684 = vmatpush1.xpose.msra.mxu0 0.0
    %1685 = vmatprep.subr.mxu0 0.0
    %1686 = vmatpush1.xpose.msra.mxu0 0.0
    %1687 = vmatprep.subr.mxu0 0.0
    %1688 = vmatpush1.xpose.msra.mxu0 0.0
    %1689 = vmatprep.subr.mxu0 0.0
    %1690 = vmatpush1.xpose.msra.mxu0 0.0
    %1691 = vmatprep.subr.mxu0 0.0
    %1692 = vmatpush1.xpose.msra.mxu0 0.0
    %1693 = vmatprep.subr.mxu0 0.0
    %1694 = vmatpush1.xpose.msra.mxu0 0.0
    %1695 = vmatprep.subr.mxu0 0.0
    %1696 = vmatpush1.xpose.msra.mxu0 0.0
    %1697 = vmatprep.subr.mxu0 0.0
    %1698 = vmatpush1.xpose.msra.mxu0 0.0
    %1699 = vmatprep.subr.mxu0 0.0
    %1700 = vmatpush1.xpose.msra.mxu0 0.0
    %1701 = vmatprep.subr.mxu0 0.0
    %1702 = vmatpush1.xpose.msra.mxu0 0.0
    %1703 = vmatprep.subr.mxu0 0.0
    %1704 = vmatpush1.xpose.msra.mxu0 0.0
    %1705 = vmatprep.subr.mxu0 0.0
    %1706 = vmatpush1.xpose.msra.mxu0 0.0
    %1707 = vmatprep.subr.mxu0 0.0
    %1708 = vmatpush1.xpose.msra.mxu0 0.0
    %1709 = vmatprep.subr.mxu0 0.0
    %1710 = vmatpush1.xpose.msra.mxu0 %v1677
    %1711 = vmatprep.subr.mxu0 0.0
    %1712 = vmatpush2.xpose.msra.mxu0 0.0
    %1713 = vmatprep.subr.mxu0 0.0
    %1714 = vmatpush2.xpose.msra.mxu0 0.0
    %1715 = vmatprep.subr.mxu0 0.0
    %1716 = vmatpush2.xpose.msra.mxu0 0.0
    %1717 = vmatprep.subr.mxu0 0.0
    %1718 = vmatpush2.xpose.msra.mxu0 0.0
    %1719 = vmatprep.subr.mxu0 0.0
    %1720 = vmatpush2.xpose.msra.mxu0 0.0
    %1721 = vmatprep.subr.mxu0 0.0
    %1722 = vmatpush2.xpose.msra.mxu0 0.0
    %1723 = vmatprep.subr.mxu0 0.0
    %1724 = vmatpush2.xpose.msra.mxu0 0.0
    %1725 = vmatprep.subr.mxu0 0.0
    %1726 = vmatpush2.xpose.msra.mxu0 0.0
    %1727 = vmatprep.subr.mxu0 0.0
    %1728 = vmatpush2.xpose.msra.mxu0 0.0
    %1729 = vmatprep.subr.mxu0 0.0
    %1730 = vmatpush2.xpose.msra.mxu0 0.0
    %1731 = vmatprep.subr.mxu0 0.0
    %1732 = vmatpush2.xpose.msra.mxu0 0.0
    %1733 = vmatprep.subr.mxu0 0.0
    %1734 = vmatpush2.xpose.msra.mxu0 0.0
    %1735 = vmatprep.subr.mxu0 0.0
    %1736 = vmatpush2.xpose.msra.mxu0 0.0
    %1737 = vmatprep.subr.mxu0 0.0
    %1738 = vmatpush2.xpose.msra.mxu0 0.0
    %1739 = vmatprep.subr.mxu0 0.0
    %1740 = vmatpush2.xpose.msra.mxu0 0.0
    %1741 = vmatprep.subr.mxu0 0.0
    %1742 = vmatpush2.xpose.msra.mxu0 0.0
    %1743 = vmatprep.mubr.f32.mxu0 0.0
    %1744 = vmatmul.mubr.f32.gmra.mxu0 %v1675
    %v1745 = vpop.f32.mrf.mxu0
    %v1746 = vadd.f32 0.0, %v1745
    %v1747 = vpop.f32.mrf.mxu0
    %1748 = vdwg.mxu0
    %v1749 = vsel %vm638, %v557, 0
    %v1751 = vsel %vm638, %v585, 0
    %1753 = vmatprep.subr.mxu0 0.0
    %1754 = vmatpush1.xpose.msra.mxu0 0.0
    %1755 = vmatprep.subr.mxu0 0.0
    %1756 = vmatpush1.xpose.msra.mxu0 0.0
    %1757 = vmatprep.subr.mxu0 0.0
    %1758 = vmatpush1.xpose.msra.mxu0 0.0
    %1759 = vmatprep.subr.mxu0 0.0
    %1760 = vmatpush1.xpose.msra.mxu0 0.0
    %1761 = vmatprep.subr.mxu0 0.0
    %1762 = vmatpush1.xpose.msra.mxu0 0.0
    %1763 = vmatprep.subr.mxu0 0.0
    %1764 = vmatpush1.xpose.msra.mxu0 0.0
    %1765 = vmatprep.subr.mxu0 0.0
    %1766 = vmatpush1.xpose.msra.mxu0 0.0
    %1767 = vmatprep.subr.mxu0 0.0
    %1768 = vmatpush1.xpose.msra.mxu0 0.0
    %1769 = vmatprep.subr.mxu0 0.0
    %1770 = vmatpush1.xpose.msra.mxu0 0.0
    %1771 = vmatprep.subr.mxu0 0.0
    %1772 = vmatpush1.xpose.msra.mxu0 0.0
    %1773 = vmatprep.subr.mxu0 0.0
    %1774 = vmatpush1.xpose.msra.mxu0 0.0
    %1775 = vmatprep.subr.mxu0 0.0
    %1776 = vmatpush1.xpose.msra.mxu0 0.0
    %1777 = vmatprep.subr.mxu0 0.0
    %1778 = vmatpush1.xpose.msra.mxu0 0.0
    %1779 = vmatprep.subr.mxu0 0.0
    %1780 = vmatpush1.xpose.msra.mxu0 0.0
    %1781 = vmatprep.subr.mxu0 0.0
    %1782 = vmatpush1.xpose.msra.mxu0 0.0
    %1783 = vmatprep.subr.mxu0 0.0
    %1784 = vmatpush1.xpose.msra.mxu0 %v1751
    %1785 = vmatprep.subr.mxu0 0.0
    %1786 = vmatpush2.xpose.msra.mxu0 0.0
    %1787 = vmatprep.subr.mxu0 0.0
    %1788 = vmatpush2.xpose.msra.mxu0 0.0
    %1789 = vmatprep.subr.mxu0 0.0
    %1790 = vmatpush2.xpose.msra.mxu0 0.0
    %1791 = vmatprep.subr.mxu0 0.0
    %1792 = vmatpush2.xpose.msra.mxu0 0.0
    %1793 = vmatprep.subr.mxu0 0.0
    %1794 = vmatpush2.xpose.msra.mxu0 0.0
    %1795 = vmatprep.subr.mxu0 0.0
    %1796 = vmatpush2.xpose.msra.mxu0 0.0
    %1797 = vmatprep.subr.mxu0 0.0
    %1798 = vmatpush2.xpose.msra.mxu0 0.0
    %1799 = vmatprep.subr.mxu0 0.0
    %1800 = vmatpush2.xpose.msra.mxu0 0.0
    %1801 = vmatprep.subr.mxu0 0.0
    %1802 = vmatpush2.xpose.msra.mxu0 0.0
    %1803 = vmatprep.subr.mxu0 0.0
    %1804 = vmatpush2.xpose.msra.mxu0 0.0
    %1805 = vmatprep.subr.mxu0 0.0
    %1806 = vmatpush2.xpose.msra.mxu0 0.0
    %1807 = vmatprep.subr.mxu0 0.0
    %1808 = vmatpush2.xpose.msra.mxu0 0.0
    %1809 = vmatprep.subr.mxu0 0.0
    %1810 = vmatpush2.xpose.msra.mxu0 0.0
    %1811 = vmatprep.subr.mxu0 0.0
    %1812 = vmatpush2.xpose.msra.mxu0 0.0
    %1813 = vmatprep.subr.mxu0 0.0
    %1814 = vmatpush2.xpose.msra.mxu0 0.0
    %1815 = vmatprep.subr.mxu0 0.0
    %1816 = vmatpush2.xpose.msra.mxu0 0.0
    %1817 = vmatprep.mubr.f32.mxu0 0.0
    %1818 = vmatmul.mubr.f32.gmra.mxu0 %v1749
    %v1819 = vpop.f32.mrf.mxu0
    %v1820 = vadd.f32 0.0, %v1819
    %v1821 = vpop.f32.mrf.mxu0
    %1822 = vdwg.mxu0
    %v1823 = vmul.f32 %v710, 0.35355338
    %v1824 = vmul.f32 %v784, 0.35355338
    %v1825 = vmul.f32 %v858, 0.35355338
    %v1826 = vmul.f32 %v932, 0.35355338
    %v1827 = vmul.f32 %v1006, 0.35355338
    %v1828 = vmul.f32 %v1080, 0.35355338
    %v1829 = vmul.f32 %v1154, 0.35355338
    %v1830 = vmul.f32 %v1228, 0.35355338
    %v1831 = vmul.f32 %v1302, 0.35355338
    %v1832 = vmul.f32 %v1376, 0.35355338
    %v1833 = vmul.f32 %v1450, 0.35355338
    %v1834 = vmul.f32 %v1524, 0.35355338
    %v1835 = vmul.f32 %v1598, 0.35355338
    %v1836 = vmul.f32 %v1672, 0.35355338
    %v1837 = vmul.f32 %v1746, 0.35355338
    %v1838 = vmul.f32 %v1820, 0.35355338
    %v1843 = vlaneseq
    %v1844 = vshrl.u32 %v1843, 7
    %v1845 = vsub.s32 0, %v1844
    %v1846 = vrot.slane %v634, %v1845
    %v1847 = vlaneseq
    %v1848 = vshrl.u32 %v1847, 7
    %v1849 = vsub.s32 0, %v1848
    %v1850 = vrot.slane %v635, %v1849
    %v1851 = vlaneseq
    %v1852 = vshrl.u32 %v1851, 7
    %v1853 = vsub.s32 0, %v1852
    %v1854 = vrot.slane %v636, %v1853
    %v1855 = vlaneseq
    %v1856 = vshrl.u32 %v1855, 7
    %v1857 = vsub.s32 0, %v1856
    %v1858 = vrot.slane %v637, %v1857
    %v1863 = vadd.f32 %v1823, %v1846
    %v1864 = vadd.f32 %v1824, %v1850
    %v1865 = vadd.f32 %v1825, %v1854
    %v1866 = vadd.f32 %v1826, %v1858
    %v1867 = vadd.f32 %v1827, %v1846
    %v1868 = vadd.f32 %v1828, %v1850
    %v1869 = vadd.f32 %v1829, %v1854
    %v1870 = vadd.f32 %v1830, %v1858
    %v1871 = vadd.f32 %v1831, %v1846
    %v1872 = vadd.f32 %v1832, %v1850
    %v1873 = vadd.f32 %v1833, %v1854
    %v1874 = vadd.f32 %v1834, %v1858
    %v1875 = vadd.f32 %v1835, %v1846
    %v1876 = vadd.f32 %v1836, %v1850
    %v1877 = vadd.f32 %v1837, %v1854
    %v1878 = vadd.f32 %v1838, %v1858
    %v1879 = vsel %vm638, %v1863, -inf
    %1880 = vmax.xlane.f32.xlu0 %v1879
    %v1881 = vpop.xlane.xlu0 %1880
    %v1882 = vsel %vm638, %v1864, -inf
    %1883 = vmax.xlane.f32.xlu0 %v1882
    %v1884 = vpop.xlane.xlu0 %1883
    %v1885 = vsel %vm638, %v1865, -inf
    %1886 = vmax.xlane.f32.xlu0 %v1885
    %v1887 = vpop.xlane.xlu0 %1886
    %v1888 = vsel %vm638, %v1866, -inf
    %1889 = vmax.xlane.f32.xlu0 %v1888
    %v1890 = vpop.xlane.xlu0 %1889
    %v1891 = vsel %vm638, %v1867, -inf
    %1892 = vmax.xlane.f32.xlu0 %v1891
    %v1893 = vpop.xlane.xlu0 %1892
    %v1894 = vsel %vm638, %v1868, -inf
    %1895 = vmax.xlane.f32.xlu0 %v1894
    %v1896 = vpop.xlane.xlu0 %1895
    %v1897 = vsel %vm638, %v1869, -inf
    %1898 = vmax.xlane.f32.xlu0 %v1897
    %v1899 = vpop.xlane.xlu0 %1898
    %v1900 = vsel %vm638, %v1870, -inf
    %1901 = vmax.xlane.f32.xlu0 %v1900
    %v1902 = vpop.xlane.xlu0 %1901
    %v1903 = vsel %vm638, %v1871, -inf
    %1904 = vmax.xlane.f32.xlu0 %v1903
    %v1905 = vpop.xlane.xlu0 %1904
    %v1906 = vsel %vm638, %v1872, -inf
    %1907 = vmax.xlane.f32.xlu0 %v1906
    %v1908 = vpop.xlane.xlu0 %1907
    %v1909 = vsel %vm638, %v1873, -inf
    %1910 = vmax.xlane.f32.xlu0 %v1909
    %v1911 = vpop.xlane.xlu0 %1910
    %v1912 = vsel %vm638, %v1874, -inf
    %1913 = vmax.xlane.f32.xlu0 %v1912
    %v1914 = vpop.xlane.xlu0 %1913
    %v1915 = vsel %vm638, %v1875, -inf
    %1916 = vmax.xlane.f32.xlu0 %v1915
    %v1917 = vpop.xlane.xlu0 %1916
    %v1918 = vsel %vm638, %v1876, -inf
    %1919 = vmax.xlane.f32.xlu0 %v1918
    %v1920 = vpop.xlane.xlu0 %1919
    %v1921 = vsel %vm638, %v1877, -inf
    %1922 = vmax.xlane.f32.xlu0 %v1921
    %v1923 = vpop.xlane.xlu0 %1922
    %v1924 = vsel %vm638, %v1878, -inf
    %1925 = vmax.xlane.f32.xlu0 %v1924
    %v1926 = vpop.xlane.xlu0 %1925
    %v1927 = vsub.f32 %v1863, %v1881
    %v1928 = vsub.f32 %v1864, %v1884
    %v1929 = vsub.f32 %v1865, %v1887
    %v1930 = vsub.f32 %v1866, %v1890
    %v1931 = vsub.f32 %v1867, %v1893
    %v1932 = vsub.f32 %v1868, %v1896
    %v1933 = vsub.f32 %v1869, %v1899
    %v1934 = vsub.f32 %v1870, %v1902
    %v1935 = vsub.f32 %v1871, %v1905
    %v1936 = vsub.f32 %v1872, %v1908
    %v1937 = vsub.f32 %v1873, %v1911
    %v1938 = vsub.f32 %v1874, %v1914
    %v1939 = vsub.f32 %v1875, %v1917
    %v1940 = vsub.f32 %v1876, %v1920
    %v1941 = vsub.f32 %v1877, %v1923
    %v1942 = vsub.f32 %v1878, %v1926
    %v1943 = vmul.f32 %v1927, 1.442695
    %v1944 = vpow.pop %v1943
    %v1945 = vmul.f32 %v1928, 1.442695
    %v1946 = vpow.pop %v1945
    %v1947 = vmul.f32 %v1929, 1.442695
    %v1948 = vpow.pop %v1947
    %v1949 = vmul.f32 %v1930, 1.442695
    %v1950 = vpow.pop %v1949
    %v1951 = vmul.f32 %v1931, 1.442695
    %v1952 = vpow.pop %v1951
    %v1953 = vmul.f32 %v1932, 1.442695
    %v1954 = vpow.pop %v1953
    %v1955 = vmul.f32 %v1933, 1.442695
    %v1956 = vpow.pop %v1955
    %v1957 = vmul.f32 %v1934, 1.442695
    %v1958 = vpow.pop %v1957
    %v1959 = vmul.f32 %v1935, 1.442695
    %v1960 = vpow.pop %v1959
    %v1961 = vmul.f32 %v1936, 1.442695
    %v1962 = vpow.pop %v1961
    %v1963 = vmul.f32 %v1937, 1.442695
    %v1964 = vpow.pop %v1963
    %v1965 = vmul.f32 %v1938, 1.442695
    %v1966 = vpow.pop %v1965
    %v1967 = vmul.f32 %v1939, 1.442695
    %v1968 = vpow.pop %v1967
    %v1969 = vmul.f32 %v1940, 1.442695
    %v1970 = vpow.pop %v1969
    %v1971 = vmul.f32 %v1941, 1.442695
    %v1972 = vpow.pop %v1971
    %v1973 = vmul.f32 %v1942, 1.442695
    %v1974 = vpow.pop %v1973
    %v1975 = vsel %vm638, %v1944, 0.0
    %1976 = vadd.xlane.f32.xlu0 %v1975
    %v1977 = vpop.xlane.xlu0 %1976
    %v1978 = vsel %vm638, %v1946, 0.0
    %1979 = vadd.xlane.f32.xlu0 %v1978
    %v1980 = vpop.xlane.xlu0 %1979
    %v1981 = vsel %vm638, %v1948, 0.0
    %1982 = vadd.xlane.f32.xlu0 %v1981
    %v1983 = vpop.xlane.xlu0 %1982
    %v1984 = vsel %vm638, %v1950, 0.0
    %1985 = vadd.xlane.f32.xlu0 %v1984
    %v1986 = vpop.xlane.xlu0 %1985
    %v1987 = vsel %vm638, %v1952, 0.0
    %1988 = vadd.xlane.f32.xlu0 %v1987
    %v1989 = vpop.xlane.xlu0 %1988
    %v1990 = vsel %vm638, %v1954, 0.0
    %1991 = vadd.xlane.f32.xlu0 %v1990
    %v1992 = vpop.xlane.xlu0 %1991
    %v1993 = vsel %vm638, %v1956, 0.0
    %1994 = vadd.xlane.f32.xlu0 %v1993
    %v1995 = vpop.xlane.xlu0 %1994
    %v1996 = vsel %vm638, %v1958, 0.0
    %1997 = vadd.xlane.f32.xlu0 %v1996
    %v1998 = vpop.xlane.xlu0 %1997
    %v1999 = vsel %vm638, %v1960, 0.0
    %2000 = vadd.xlane.f32.xlu0 %v1999
    %v2001 = vpop.xlane.xlu0 %2000
    %v2002 = vsel %vm638, %v1962, 0.0
    %2003 = vadd.xlane.f32.xlu0 %v2002
    %v2004 = vpop.xlane.xlu0 %2003
    %v2005 = vsel %vm638, %v1964, 0.0
    %2006 = vadd.xlane.f32.xlu0 %v2005
    %v2007 = vpop.xlane.xlu0 %2006
    %v2008 = vsel %vm638, %v1966, 0.0
    %2009 = vadd.xlane.f32.xlu0 %v2008
    %v2010 = vpop.xlane.xlu0 %2009
    %v2011 = vsel %vm638, %v1968, 0.0
    %2012 = vadd.xlane.f32.xlu0 %v2011
    %v2013 = vpop.xlane.xlu0 %2012
    %v2014 = vsel %vm638, %v1970, 0.0
    %2015 = vadd.xlane.f32.xlu0 %v2014
    %v2016 = vpop.xlane.xlu0 %2015
    %v2017 = vsel %vm638, %v1972, 0.0
    %2018 = vadd.xlane.f32.xlu0 %v2017
    %v2019 = vpop.xlane.xlu0 %2018
    %v2020 = vsel %vm638, %v1974, 0.0
    %2021 = vadd.xlane.f32.xlu0 %v2020
    %v2022 = vpop.xlane.xlu0 %2021
    %v2023 = vrcp.pop %v1977
    %v2024 = vmul.f32 %v1944, %v2023
    %v2025 = vrcp.pop %v1980
    %v2026 = vmul.f32 %v1946, %v2025
    %v2027 = vrcp.pop %v1983
    %v2028 = vmul.f32 %v1948, %v2027
    %v2029 = vrcp.pop %v1986
    %v2030 = vmul.f32 %v1950, %v2029
    %v2031 = vrcp.pop %v1989
    %v2032 = vmul.f32 %v1952, %v2031
    %v2033 = vrcp.pop %v1992
    %v2034 = vmul.f32 %v1954, %v2033
    %v2035 = vrcp.pop %v1995
    %v2036 = vmul.f32 %v1956, %v2035
    %v2037 = vrcp.pop %v1998
    %v2038 = vmul.f32 %v1958, %v2037
    %v2039 = vrcp.pop %v2001
    %v2040 = vmul.f32 %v1960, %v2039
    %v2041 = vrcp.pop %v2004
    %v2042 = vmul.f32 %v1962, %v2041
    %v2043 = vrcp.pop %v2007
    %v2044 = vmul.f32 %v1964, %v2043
    %v2045 = vrcp.pop %v2010
    %v2046 = vmul.f32 %v1966, %v2045
    %v2047 = vrcp.pop %v2013
    %v2048 = vmul.f32 %v1968, %v2047
    %v2049 = vrcp.pop %v2016
    %v2050 = vmul.f32 %v1970, %v2049
    %v2051 = vrcp.pop %v2019
    %v2052 = vmul.f32 %v1972, %v2051
    %v2053 = vrcp.pop %v2022
    %v2054 = vmul.f32 %v1974, %v2053
    %v2056 = vsel %vm638, %v2024, 0
    %2058 = vmatprep.subr.mxu0 0.0
    %2059 = vmatpush1.msra.mxu0 0.0
    %2060 = vmatprep.subr.mxu0 0.0
    %2061 = vmatpush1.msra.mxu0 0.0
    %2062 = vmatprep.subr.mxu0 0.0
    %2063 = vmatpush1.msra.mxu0 0.0
    %2064 = vmatprep.subr.mxu0 0.0
    %2065 = vmatpush1.msra.mxu0 0.0
    %2066 = vmatprep.subr.mxu0 0.0
    %2067 = vmatpush1.msra.mxu0 0.0
    %2068 = vmatprep.subr.mxu0 0.0
    %2069 = vmatpush1.msra.mxu0 0.0
    %2070 = vmatprep.subr.mxu0 0.0
    %2071 = vmatpush1.msra.mxu0 0.0
    %2072 = vmatprep.subr.mxu0 0.0
    %2073 = vmatpush1.msra.mxu0 0.0
    %2074 = vmatprep.subr.mxu0 0.0
    %2075 = vmatpush1.msra.mxu0 0.0
    %2076 = vmatprep.subr.mxu0 0.0
    %2077 = vmatpush1.msra.mxu0 0.0
    %2078 = vmatprep.subr.mxu0 0.0
    %2079 = vmatpush1.msra.mxu0 0.0
    %2080 = vmatprep.subr.mxu0 0.0
    %2081 = vmatpush1.msra.mxu0 0.0
    %2082 = vmatprep.subr.mxu0 0.0
    %2083 = vmatpush1.msra.mxu0 0.0
    %2084 = vmatprep.subr.mxu0 0.0
    %2085 = vmatpush1.msra.mxu0 0.0
    %2086 = vmatprep.subr.mxu0 0.0
    %2087 = vmatpush1.msra.mxu0 0.0
    %2088 = vmatprep.subr.mxu0 0.0
    %2089 = vmatpush1.msra.mxu0 %v512
    %2090 = vmatprep.subr.mxu0 0.0
    %2091 = vmatpush2.msra.mxu0 0.0
    %2092 = vmatprep.subr.mxu0 0.0
    %2093 = vmatpush2.msra.mxu0 0.0
    %2094 = vmatprep.subr.mxu0 0.0
    %2095 = vmatpush2.msra.mxu0 0.0
    %2096 = vmatprep.subr.mxu0 0.0
    %2097 = vmatpush2.msra.mxu0 0.0
    %2098 = vmatprep.subr.mxu0 0.0
    %2099 = vmatpush2.msra.mxu0 0.0
    %2100 = vmatprep.subr.mxu0 0.0
    %2101 = vmatpush2.msra.mxu0 0.0
    %2102 = vmatprep.subr.mxu0 0.0
    %2103 = vmatpush2.msra.mxu0 0.0
    %2104 = vmatprep.subr.mxu0 0.0
    %2105 = vmatpush2.msra.mxu0 0.0
    %2106 = vmatprep.subr.mxu0 0.0
    %2107 = vmatpush2.msra.mxu0 0.0
    %2108 = vmatprep.subr.mxu0 0.0
    %2109 = vmatpush2.msra.mxu0 0.0
    %2110 = vmatprep.subr.mxu0 0.0
    %2111 = vmatpush2.msra.mxu0 0.0
    %2112 = vmatprep.subr.mxu0 0.0
    %2113 = vmatpush2.msra.mxu0 0.0
    %2114 = vmatprep.subr.mxu0 0.0
    %2115 = vmatpush2.msra.mxu0 0.0
    %2116 = vmatprep.subr.mxu0 0.0
    %2117 = vmatpush2.msra.mxu0 0.0
    %2118 = vmatprep.subr.mxu0 0.0
    %2119 = vmatpush2.msra.mxu0 0.0
    %2120 = vmatprep.subr.mxu0 0.0
    %2121 = vmatpush2.msra.mxu0 0.0
    %2122 = vmatprep.mubr.f32.mxu0 0.0
    %2123 = vmatmul.mubr.f32.gmra.mxu0 %v2056
    %v2124 = vpop.f32.mrf.mxu0
    %v2125 = vadd.f32 0.0, %v2124
    %v2126 = vpop.f32.mrf.mxu0
    %2127 = vdwg.mxu0
    %v2129 = vsel %vm638, %v2026, 0
    %2131 = vmatprep.subr.mxu0 0.0
    %2132 = vmatpush1.msra.mxu0 0.0
    %2133 = vmatprep.subr.mxu0 0.0
    %2134 = vmatpush1.msra.mxu0 0.0
    %2135 = vmatprep.subr.mxu0 0.0
    %2136 = vmatpush1.msra.mxu0 0.0
    %2137 = vmatprep.subr.mxu0 0.0
    %2138 = vmatpush1.msra.mxu0 0.0
    %2139 = vmatprep.subr.mxu0 0.0
    %2140 = vmatpush1.msra.mxu0 0.0
    %2141 = vmatprep.subr.mxu0 0.0
    %2142 = vmatpush1.msra.mxu0 0.0
    %2143 = vmatprep.subr.mxu0 0.0
    %2144 = vmatpush1.msra.mxu0 0.0
    %2145 = vmatprep.subr.mxu0 0.0
    %2146 = vmatpush1.msra.mxu0 0.0
    %2147 = vmatprep.subr.mxu0 0.0
    %2148 = vmatpush1.msra.mxu0 0.0
    %2149 = vmatprep.subr.mxu0 0.0
    %2150 = vmatpush1.msra.mxu0 0.0
    %2151 = vmatprep.subr.mxu0 0.0
    %2152 = vmatpush1.msra.mxu0 0.0
    %2153 = vmatprep.subr.mxu0 0.0
    %2154 = vmatpush1.msra.mxu0 0.0
    %2155 = vmatprep.subr.mxu0 0.0
    %2156 = vmatpush1.msra.mxu0 0.0
    %2157 = vmatprep.subr.mxu0 0.0
    %2158 = vmatpush1.msra.mxu0 0.0
    %2159 = vmatprep.subr.mxu0 0.0
    %2160 = vmatpush1.msra.mxu0 0.0
    %2161 = vmatprep.subr.mxu0 0.0
    %2162 = vmatpush1.msra.mxu0 %v517
    %2163 = vmatprep.subr.mxu0 0.0
    %2164 = vmatpush2.msra.mxu0 0.0
    %2165 = vmatprep.subr.mxu0 0.0
    %2166 = vmatpush2.msra.mxu0 0.0
    %2167 = vmatprep.subr.mxu0 0.0
    %2168 = vmatpush2.msra.mxu0 0.0
    %2169 = vmatprep.subr.mxu0 0.0
    %2170 = vmatpush2.msra.mxu0 0.0
    %2171 = vmatprep.subr.mxu0 0.0
    %2172 = vmatpush2.msra.mxu0 0.0
    %2173 = vmatprep.subr.mxu0 0.0
    %2174 = vmatpush2.msra.mxu0 0.0
    %2175 = vmatprep.subr.mxu0 0.0
    %2176 = vmatpush2.msra.mxu0 0.0
    %2177 = vmatprep.subr.mxu0 0.0
    %2178 = vmatpush2.msra.mxu0 0.0
    %2179 = vmatprep.subr.mxu0 0.0
    %2180 = vmatpush2.msra.mxu0 0.0
    %2181 = vmatprep.subr.mxu0 0.0
    %2182 = vmatpush2.msra.mxu0 0.0
    %2183 = vmatprep.subr.mxu0 0.0
    %2184 = vmatpush2.msra.mxu0 0.0
    %2185 = vmatprep.subr.mxu0 0.0
    %2186 = vmatpush2.msra.mxu0 0.0
    %2187 = vmatprep.subr.mxu0 0.0
    %2188 = vmatpush2.msra.mxu0 0.0
    %2189 = vmatprep.subr.mxu0 0.0
    %2190 = vmatpush2.msra.mxu0 0.0
    %2191 = vmatprep.subr.mxu0 0.0
    %2192 = vmatpush2.msra.mxu0 0.0
    %2193 = vmatprep.subr.mxu0 0.0
    %2194 = vmatpush2.msra.mxu0 0.0
    %2195 = vmatprep.mubr.f32.mxu0 0.0
    %2196 = vmatmul.mubr.f32.gmra.mxu0 %v2129
    %v2197 = vpop.f32.mrf.mxu0
    %v2198 = vadd.f32 0.0, %v2197
    %v2199 = vpop.f32.mrf.mxu0
    %2200 = vdwg.mxu0
    %v2202 = vsel %vm638, %v2028, 0
    %2204 = vmatprep.subr.mxu0 0.0
    %2205 = vmatpush1.msra.mxu0 0.0
    %2206 = vmatprep.subr.mxu0 0.0
    %2207 = vmatpush1.msra.mxu0 0.0
    %2208 = vmatprep.subr.mxu0 0.0
    %2209 = vmatpush1.msra.mxu0 0.0
    %2210 = vmatprep.subr.mxu0 0.0
    %2211 = vmatpush1.msra.mxu0 0.0
    %2212 = vmatprep.subr.mxu0 0.0
    %2213 = vmatpush1.msra.mxu0 0.0
    %2214 = vmatprep.subr.mxu0 0.0
    %2215 = vmatpush1.msra.mxu0 0.0
    %2216 = vmatprep.subr.mxu0 0.0
    %2217 = vmatpush1.msra.mxu0 0.0
    %2218 = vmatprep.subr.mxu0 0.0
    %2219 = vmatpush1.msra.mxu0 0.0
    %2220 = vmatprep.subr.mxu0 0.0
    %2221 = vmatpush1.msra.mxu0 0.0
    %2222 = vmatprep.subr.mxu0 0.0
    %2223 = vmatpush1.msra.mxu0 0.0
    %2224 = vmatprep.subr.mxu0 0.0
    %2225 = vmatpush1.msra.mxu0 0.0
    %2226 = vmatprep.subr.mxu0 0.0
    %2227 = vmatpush1.msra.mxu0 0.0
    %2228 = vmatprep.subr.mxu0 0.0
    %2229 = vmatpush1.msra.mxu0 0.0
    %2230 = vmatprep.subr.mxu0 0.0
    %2231 = vmatpush1.msra.mxu0 0.0
    %2232 = vmatprep.subr.mxu0 0.0
    %2233 = vmatpush1.msra.mxu0 0.0
    %2234 = vmatprep.subr.mxu0 0.0
    %2235 = vmatpush1.msra.mxu0 %v522
    %2236 = vmatprep.subr.mxu0 0.0
    %2237 = vmatpush2.msra.mxu0 0.0
    %2238 = vmatprep.subr.mxu0 0.0
    %2239 = vmatpush2.msra.mxu0 0.0
    %2240 = vmatprep.subr.mxu0 0.0
    %2241 = vmatpush2.msra.mxu0 0.0
    %2242 = vmatprep.subr.mxu0 0.0
    %2243 = vmatpush2.msra.mxu0 0.0
    %2244 = vmatprep.subr.mxu0 0.0
    %2245 = vmatpush2.msra.mxu0 0.0
    %2246 = vmatprep.subr.mxu0 0.0
    %2247 = vmatpush2.msra.mxu0 0.0
    %2248 = vmatprep.subr.mxu0 0.0
    %2249 = vmatpush2.msra.mxu0 0.0
    %2250 = vmatprep.subr.mxu0 0.0
    %2251 = vmatpush2.msra.mxu0 0.0
    %2252 = vmatprep.subr.mxu0 0.0
    %2253 = vmatpush2.msra.mxu0 0.0
    %2254 = vmatprep.subr.mxu0 0.0
    %2255 = vmatpush2.msra.mxu0 0.0
    %2256 = vmatprep.subr.mxu0 0.0
    %2257 = vmatpush2.msra.mxu0 0.0
    %2258 = vmatprep.subr.mxu0 0.0
    %2259 = vmatpush2.msra.mxu0 0.0
    %2260 = vmatprep.subr.mxu0 0.0
    %2261 = vmatpush2.msra.mxu0 0.0
    %2262 = vmatprep.subr.mxu0 0.0
    %2263 = vmatpush2.msra.mxu0 0.0
    %2264 = vmatprep.subr.mxu0 0.0
    %2265 = vmatpush2.msra.mxu0 0.0
    %2266 = vmatprep.subr.mxu0 0.0
    %2267 = vmatpush2.msra.mxu0 0.0
    %2268 = vmatprep.mubr.f32.mxu0 0.0
    %2269 = vmatmul.mubr.f32.gmra.mxu0 %v2202
    %v2270 = vpop.f32.mrf.mxu0
    %v2271 = vadd.f32 0.0, %v2270
    %v2272 = vpop.f32.mrf.mxu0
    %2273 = vdwg.mxu0
    %v2275 = vsel %vm638, %v2030, 0
    %2277 = vmatprep.subr.mxu0 0.0
    %2278 = vmatpush1.msra.mxu0 0.0
    %2279 = vmatprep.subr.mxu0 0.0
    %2280 = vmatpush1.msra.mxu0 0.0
    %2281 = vmatprep.subr.mxu0 0.0
    %2282 = vmatpush1.msra.mxu0 0.0
    %2283 = vmatprep.subr.mxu0 0.0
    %2284 = vmatpush1.msra.mxu0 0.0
    %2285 = vmatprep.subr.mxu0 0.0
    %2286 = vmatpush1.msra.mxu0 0.0
    %2287 = vmatprep.subr.mxu0 0.0
    %2288 = vmatpush1.msra.mxu0 0.0
    %2289 = vmatprep.subr.mxu0 0.0
    %2290 = vmatpush1.msra.mxu0 0.0
    %2291 = vmatprep.subr.mxu0 0.0
    %2292 = vmatpush1.msra.mxu0 0.0
    %2293 = vmatprep.subr.mxu0 0.0
    %2294 = vmatpush1.msra.mxu0 0.0
    %2295 = vmatprep.subr.mxu0 0.0
    %2296 = vmatpush1.msra.mxu0 0.0
    %2297 = vmatprep.subr.mxu0 0.0
    %2298 = vmatpush1.msra.mxu0 0.0
    %2299 = vmatprep.subr.mxu0 0.0
    %2300 = vmatpush1.msra.mxu0 0.0
    %2301 = vmatprep.subr.mxu0 0.0
    %2302 = vmatpush1.msra.mxu0 0.0
    %2303 = vmatprep.subr.mxu0 0.0
    %2304 = vmatpush1.msra.mxu0 0.0
    %2305 = vmatprep.subr.mxu0 0.0
    %2306 = vmatpush1.msra.mxu0 0.0
    %2307 = vmatprep.subr.mxu0 0.0
    %2308 = vmatpush1.msra.mxu0 %v527
    %2309 = vmatprep.subr.mxu0 0.0
    %2310 = vmatpush2.msra.mxu0 0.0
    %2311 = vmatprep.subr.mxu0 0.0
    %2312 = vmatpush2.msra.mxu0 0.0
    %2313 = vmatprep.subr.mxu0 0.0
    %2314 = vmatpush2.msra.mxu0 0.0
    %2315 = vmatprep.subr.mxu0 0.0
    %2316 = vmatpush2.msra.mxu0 0.0
    %2317 = vmatprep.subr.mxu0 0.0
    %2318 = vmatpush2.msra.mxu0 0.0
    %2319 = vmatprep.subr.mxu0 0.0
    %2320 = vmatpush2.msra.mxu0 0.0
    %2321 = vmatprep.subr.mxu0 0.0
    %2322 = vmatpush2.msra.mxu0 0.0
    %2323 = vmatprep.subr.mxu0 0.0
    %2324 = vmatpush2.msra.mxu0 0.0
    %2325 = vmatprep.subr.mxu0 0.0
    %2326 = vmatpush2.msra.mxu0 0.0
    %2327 = vmatprep.subr.mxu0 0.0
    %2328 = vmatpush2.msra.mxu0 0.0
    %2329 = vmatprep.subr.mxu0 0.0
    %2330 = vmatpush2.msra.mxu0 0.0
    %2331 = vmatprep.subr.mxu0 0.0
    %2332 = vmatpush2.msra.mxu0 0.0
    %2333 = vmatprep.subr.mxu0 0.0
    %2334 = vmatpush2.msra.mxu0 0.0
    %2335 = vmatprep.subr.mxu0 0.0
    %2336 = vmatpush2.msra.mxu0 0.0
    %2337 = vmatprep.subr.mxu0 0.0
    %2338 = vmatpush2.msra.mxu0 0.0
    %2339 = vmatprep.subr.mxu0 0.0
    %2340 = vmatpush2.msra.mxu0 0.0
    %2341 = vmatprep.mubr.f32.mxu0 0.0
    %2342 = vmatmul.mubr.f32.gmra.mxu0 %v2275
    %v2343 = vpop.f32.mrf.mxu0
    %v2344 = vadd.f32 0.0, %v2343
    %v2345 = vpop.f32.mrf.mxu0
    %2346 = vdwg.mxu0
    %v2348 = vsel %vm638, %v2032, 0
    %2350 = vmatprep.subr.mxu0 0.0
    %2351 = vmatpush1.msra.mxu0 0.0
    %2352 = vmatprep.subr.mxu0 0.0
    %2353 = vmatpush1.msra.mxu0 0.0
    %2354 = vmatprep.subr.mxu0 0.0
    %2355 = vmatpush1.msra.mxu0 0.0
    %2356 = vmatprep.subr.mxu0 0.0
    %2357 = vmatpush1.msra.mxu0 0.0
    %2358 = vmatprep.subr.mxu0 0.0
    %2359 = vmatpush1.msra.mxu0 0.0
    %2360 = vmatprep.subr.mxu0 0.0
    %2361 = vmatpush1.msra.mxu0 0.0
    %2362 = vmatprep.subr.mxu0 0.0
    %2363 = vmatpush1.msra.mxu0 0.0
    %2364 = vmatprep.subr.mxu0 0.0
    %2365 = vmatpush1.msra.mxu0 0.0
    %2366 = vmatprep.subr.mxu0 0.0
    %2367 = vmatpush1.msra.mxu0 0.0
    %2368 = vmatprep.subr.mxu0 0.0
    %2369 = vmatpush1.msra.mxu0 0.0
    %2370 = vmatprep.subr.mxu0 0.0
    %2371 = vmatpush1.msra.mxu0 0.0
    %2372 = vmatprep.subr.mxu0 0.0
    %2373 = vmatpush1.msra.mxu0 0.0
    %2374 = vmatprep.subr.mxu0 0.0
    %2375 = vmatpush1.msra.mxu0 0.0
    %2376 = vmatprep.subr.mxu0 0.0
    %2377 = vmatpush1.msra.mxu0 0.0
    %2378 = vmatprep.subr.mxu0 0.0
    %2379 = vmatpush1.msra.mxu0 0.0
    %2380 = vmatprep.subr.mxu0 0.0
    %2381 = vmatpush1.msra.mxu0 %v591
    %2382 = vmatprep.subr.mxu0 0.0
    %2383 = vmatpush2.msra.mxu0 0.0
    %2384 = vmatprep.subr.mxu0 0.0
    %2385 = vmatpush2.msra.mxu0 0.0
    %2386 = vmatprep.subr.mxu0 0.0
    %2387 = vmatpush2.msra.mxu0 0.0
    %2388 = vmatprep.subr.mxu0 0.0
    %2389 = vmatpush2.msra.mxu0 0.0
    %2390 = vmatprep.subr.mxu0 0.0
    %2391 = vmatpush2.msra.mxu0 0.0
    %2392 = vmatprep.subr.mxu0 0.0
    %2393 = vmatpush2.msra.mxu0 0.0
    %2394 = vmatprep.subr.mxu0 0.0
    %2395 = vmatpush2.msra.mxu0 0.0
    %2396 = vmatprep.subr.mxu0 0.0
    %2397 = vmatpush2.msra.mxu0 0.0
    %2398 = vmatprep.subr.mxu0 0.0
    %2399 = vmatpush2.msra.mxu0 0.0
    %2400 = vmatprep.subr.mxu0 0.0
    %2401 = vmatpush2.msra.mxu0 0.0
    %2402 = vmatprep.subr.mxu0 0.0
    %2403 = vmatpush2.msra.mxu0 0.0
    %2404 = vmatprep.subr.mxu0 0.0
    %2405 = vmatpush2.msra.mxu0 0.0
    %2406 = vmatprep.subr.mxu0 0.0
    %2407 = vmatpush2.msra.mxu0 0.0
    %2408 = vmatprep.subr.mxu0 0.0
    %2409 = vmatpush2.msra.mxu0 0.0
    %2410 = vmatprep.subr.mxu0 0.0
    %2411 = vmatpush2.msra.mxu0 0.0
    %2412 = vmatprep.subr.mxu0 0.0
    %2413 = vmatpush2.msra.mxu0 0.0
    %2414 = vmatprep.mubr.f32.mxu0 0.0
    %2415 = vmatmul.mubr.f32.gmra.mxu0 %v2348
    %v2416 = vpop.f32.mrf.mxu0
    %v2417 = vadd.f32 0.0, %v2416
    %v2418 = vpop.f32.mrf.mxu0
    %2419 = vdwg.mxu0
    %v2421 = vsel %vm638, %v2034, 0
    %2423 = vmatprep.subr.mxu0 0.0
    %2424 = vmatpush1.msra.mxu0 0.0
    %2425 = vmatprep.subr.mxu0 0.0
    %2426 = vmatpush1.msra.mxu0 0.0
    %2427 = vmatprep.subr.mxu0 0.0
    %2428 = vmatpush1.msra.mxu0 0.0
    %2429 = vmatprep.subr.mxu0 0.0
    %2430 = vmatpush1.msra.mxu0 0.0
    %2431 = vmatprep.subr.mxu0 0.0
    %2432 = vmatpush1.msra.mxu0 0.0
    %2433 = vmatprep.subr.mxu0 0.0
    %2434 = vmatpush1.msra.mxu0 0.0
    %2435 = vmatprep.subr.mxu0 0.0
    %2436 = vmatpush1.msra.mxu0 0.0
    %2437 = vmatprep.subr.mxu0 0.0
    %2438 = vmatpush1.msra.mxu0 0.0
    %2439 = vmatprep.subr.mxu0 0.0
    %2440 = vmatpush1.msra.mxu0 0.0
    %2441 = vmatprep.subr.mxu0 0.0
    %2442 = vmatpush1.msra.mxu0 0.0
    %2443 = vmatprep.subr.mxu0 0.0
    %2444 = vmatpush1.msra.mxu0 0.0
    %2445 = vmatprep.subr.mxu0 0.0
    %2446 = vmatpush1.msra.mxu0 0.0
    %2447 = vmatprep.subr.mxu0 0.0
    %2448 = vmatpush1.msra.mxu0 0.0
    %2449 = vmatprep.subr.mxu0 0.0
    %2450 = vmatpush1.msra.mxu0 0.0
    %2451 = vmatprep.subr.mxu0 0.0
    %2452 = vmatpush1.msra.mxu0 0.0
    %2453 = vmatprep.subr.mxu0 0.0
    %2454 = vmatpush1.msra.mxu0 %v593
    %2455 = vmatprep.subr.mxu0 0.0
    %2456 = vmatpush2.msra.mxu0 0.0
    %2457 = vmatprep.subr.mxu0 0.0
    %2458 = vmatpush2.msra.mxu0 0.0
    %2459 = vmatprep.subr.mxu0 0.0
    %2460 = vmatpush2.msra.mxu0 0.0
    %2461 = vmatprep.subr.mxu0 0.0
    %2462 = vmatpush2.msra.mxu0 0.0
    %2463 = vmatprep.subr.mxu0 0.0
    %2464 = vmatpush2.msra.mxu0 0.0
    %2465 = vmatprep.subr.mxu0 0.0
    %2466 = vmatpush2.msra.mxu0 0.0
    %2467 = vmatprep.subr.mxu0 0.0
    %2468 = vmatpush2.msra.mxu0 0.0
    %2469 = vmatprep.subr.mxu0 0.0
    %2470 = vmatpush2.msra.mxu0 0.0
    %2471 = vmatprep.subr.mxu0 0.0
    %2472 = vmatpush2.msra.mxu0 0.0
    %2473 = vmatprep.subr.mxu0 0.0
    %2474 = vmatpush2.msra.mxu0 0.0
    %2475 = vmatprep.subr.mxu0 0.0
    %2476 = vmatpush2.msra.mxu0 0.0
    %2477 = vmatprep.subr.mxu0 0.0
    %2478 = vmatpush2.msra.mxu0 0.0
    %2479 = vmatprep.subr.mxu0 0.0
    %2480 = vmatpush2.msra.mxu0 0.0
    %2481 = vmatprep.subr.mxu0 0.0
    %2482 = vmatpush2.msra.mxu0 0.0
    %2483 = vmatprep.subr.mxu0 0.0
    %2484 = vmatpush2.msra.mxu0 0.0
    %2485 = vmatprep.subr.mxu0 0.0
    %2486 = vmatpush2.msra.mxu0 0.0
    %2487 = vmatprep.mubr.f32.mxu0 0.0
    %2488 = vmatmul.mubr.f32.gmra.mxu0 %v2421
    %v2489 = vpop.f32.mrf.mxu0
    %v2490 = vadd.f32 0.0, %v2489
    %v2491 = vpop.f32.mrf.mxu0
    %2492 = vdwg.mxu0
    %v2494 = vsel %vm638, %v2036, 0
    %2496 = vmatprep.subr.mxu0 0.0
    %2497 = vmatpush1.msra.mxu0 0.0
    %2498 = vmatprep.subr.mxu0 0.0
    %2499 = vmatpush1.msra.mxu0 0.0
    %2500 = vmatprep.subr.mxu0 0.0
    %2501 = vmatpush1.msra.mxu0 0.0
    %2502 = vmatprep.subr.mxu0 0.0
    %2503 = vmatpush1.msra.mxu0 0.0
    %2504 = vmatprep.subr.mxu0 0.0
    %2505 = vmatpush1.msra.mxu0 0.0
    %2506 = vmatprep.subr.mxu0 0.0
    %2507 = vmatpush1.msra.mxu0 0.0
    %2508 = vmatprep.subr.mxu0 0.0
    %2509 = vmatpush1.msra.mxu0 0.0
    %2510 = vmatprep.subr.mxu0 0.0
    %2511 = vmatpush1.msra.mxu0 0.0
    %2512 = vmatprep.subr.mxu0 0.0
    %2513 = vmatpush1.msra.mxu0 0.0
    %2514 = vmatprep.subr.mxu0 0.0
    %2515 = vmatpush1.msra.mxu0 0.0
    %2516 = vmatprep.subr.mxu0 0.0
    %2517 = vmatpush1.msra.mxu0 0.0
    %2518 = vmatprep.subr.mxu0 0.0
    %2519 = vmatpush1.msra.mxu0 0.0
    %2520 = vmatprep.subr.mxu0 0.0
    %2521 = vmatpush1.msra.mxu0 0.0
    %2522 = vmatprep.subr.mxu0 0.0
    %2523 = vmatpush1.msra.mxu0 0.0
    %2524 = vmatprep.subr.mxu0 0.0
    %2525 = vmatpush1.msra.mxu0 0.0
    %2526 = vmatprep.subr.mxu0 0.0
    %2527 = vmatpush1.msra.mxu0 %v595
    %2528 = vmatprep.subr.mxu0 0.0
    %2529 = vmatpush2.msra.mxu0 0.0
    %2530 = vmatprep.subr.mxu0 0.0
    %2531 = vmatpush2.msra.mxu0 0.0
    %2532 = vmatprep.subr.mxu0 0.0
    %2533 = vmatpush2.msra.mxu0 0.0
    %2534 = vmatprep.subr.mxu0 0.0
    %2535 = vmatpush2.msra.mxu0 0.0
    %2536 = vmatprep.subr.mxu0 0.0
    %2537 = vmatpush2.msra.mxu0 0.0
    %2538 = vmatprep.subr.mxu0 0.0
    %2539 = vmatpush2.msra.mxu0 0.0
    %2540 = vmatprep.subr.mxu0 0.0
    %2541 = vmatpush2.msra.mxu0 0.0
    %2542 = vmatprep.subr.mxu0 0.0
    %2543 = vmatpush2.msra.mxu0 0.0
    %2544 = vmatprep.subr.mxu0 0.0
    %2545 = vmatpush2.msra.mxu0 0.0
    %2546 = vmatprep.subr.mxu0 0.0
    %2547 = vmatpush2.msra.mxu0 0.0
    %2548 = vmatprep.subr.mxu0 0.0
    %2549 = vmatpush2.msra.mxu0 0.0
    %2550 = vmatprep.subr.mxu0 0.0
    %2551 = vmatpush2.msra.mxu0 0.0
    %2552 = vmatprep.subr.mxu0 0.0
    %2553 = vmatpush2.msra.mxu0 0.0
    %2554 = vmatprep.subr.mxu0 0.0
    %2555 = vmatpush2.msra.mxu0 0.0
    %2556 = vmatprep.subr.mxu0 0.0
    %2557 = vmatpush2.msra.mxu0 0.0
    %2558 = vmatprep.subr.mxu0 0.0
    %2559 = vmatpush2.msra.mxu0 0.0
    %2560 = vmatprep.mubr.f32.mxu0 0.0
    %2561 = vmatmul.mubr.f32.gmra.mxu0 %v2494
    %v2562 = vpop.f32.mrf.mxu0
    %v2563 = vadd.f32 0.0, %v2562
    %v2564 = vpop.f32.mrf.mxu0
    %2565 = vdwg.mxu0
    %v2567 = vsel %vm638, %v2038, 0
    %2569 = vmatprep.subr.mxu0 0.0
    %2570 = vmatpush1.msra.mxu0 0.0
    %2571 = vmatprep.subr.mxu0 0.0
    %2572 = vmatpush1.msra.mxu0 0.0
    %2573 = vmatprep.subr.mxu0 0.0
    %2574 = vmatpush1.msra.mxu0 0.0
    %2575 = vmatprep.subr.mxu0 0.0
    %2576 = vmatpush1.msra.mxu0 0.0
    %2577 = vmatprep.subr.mxu0 0.0
    %2578 = vmatpush1.msra.mxu0 0.0
    %2579 = vmatprep.subr.mxu0 0.0
    %2580 = vmatpush1.msra.mxu0 0.0
    %2581 = vmatprep.subr.mxu0 0.0
    %2582 = vmatpush1.msra.mxu0 0.0
    %2583 = vmatprep.subr.mxu0 0.0
    %2584 = vmatpush1.msra.mxu0 0.0
    %2585 = vmatprep.subr.mxu0 0.0
    %2586 = vmatpush1.msra.mxu0 0.0
    %2587 = vmatprep.subr.mxu0 0.0
    %2588 = vmatpush1.msra.mxu0 0.0
    %2589 = vmatprep.subr.mxu0 0.0
    %2590 = vmatpush1.msra.mxu0 0.0
    %2591 = vmatprep.subr.mxu0 0.0
    %2592 = vmatpush1.msra.mxu0 0.0
    %2593 = vmatprep.subr.mxu0 0.0
    %2594 = vmatpush1.msra.mxu0 0.0
    %2595 = vmatprep.subr.mxu0 0.0
    %2596 = vmatpush1.msra.mxu0 0.0
    %2597 = vmatprep.subr.mxu0 0.0
    %2598 = vmatpush1.msra.mxu0 0.0
    %2599 = vmatprep.subr.mxu0 0.0
    %2600 = vmatpush1.msra.mxu0 %v597
    %2601 = vmatprep.subr.mxu0 0.0
    %2602 = vmatpush2.msra.mxu0 0.0
    %2603 = vmatprep.subr.mxu0 0.0
    %2604 = vmatpush2.msra.mxu0 0.0
    %2605 = vmatprep.subr.mxu0 0.0
    %2606 = vmatpush2.msra.mxu0 0.0
    %2607 = vmatprep.subr.mxu0 0.0
    %2608 = vmatpush2.msra.mxu0 0.0
    %2609 = vmatprep.subr.mxu0 0.0
    %2610 = vmatpush2.msra.mxu0 0.0
    %2611 = vmatprep.subr.mxu0 0.0
    %2612 = vmatpush2.msra.mxu0 0.0
    %2613 = vmatprep.subr.mxu0 0.0
    %2614 = vmatpush2.msra.mxu0 0.0
    %2615 = vmatprep.subr.mxu0 0.0
    %2616 = vmatpush2.msra.mxu0 0.0
    %2617 = vmatprep.subr.mxu0 0.0
    %2618 = vmatpush2.msra.mxu0 0.0
    %2619 = vmatprep.subr.mxu0 0.0
    %2620 = vmatpush2.msra.mxu0 0.0
    %2621 = vmatprep.subr.mxu0 0.0
    %2622 = vmatpush2.msra.mxu0 0.0
    %2623 = vmatprep.subr.mxu0 0.0
    %2624 = vmatpush2.msra.mxu0 0.0
    %2625 = vmatprep.subr.mxu0 0.0
    %2626 = vmatpush2.msra.mxu0 0.0
    %2627 = vmatprep.subr.mxu0 0.0
    %2628 = vmatpush2.msra.mxu0 0.0
    %2629 = vmatprep.subr.mxu0 0.0
    %2630 = vmatpush2.msra.mxu0 0.0
    %2631 = vmatprep.subr.mxu0 0.0
    %2632 = vmatpush2.msra.mxu0 0.0
    %2633 = vmatprep.mubr.f32.mxu0 0.0
    %2634 = vmatmul.mubr.f32.gmra.mxu0 %v2567
    %v2635 = vpop.f32.mrf.mxu0
    %v2636 = vadd.f32 0.0, %v2635
    %v2637 = vpop.f32.mrf.mxu0
    %2638 = vdwg.mxu0
    %v2640 = vsel %vm638, %v2040, 0
    %2642 = vmatprep.subr.mxu0 0.0
    %2643 = vmatpush1.msra.mxu0 0.0
    %2644 = vmatprep.subr.mxu0 0.0
    %2645 = vmatpush1.msra.mxu0 0.0
    %2646 = vmatprep.subr.mxu0 0.0
    %2647 = vmatpush1.msra.mxu0 0.0
    %2648 = vmatprep.subr.mxu0 0.0
    %2649 = vmatpush1.msra.mxu0 0.0
    %2650 = vmatprep.subr.mxu0 0.0
    %2651 = vmatpush1.msra.mxu0 0.0
    %2652 = vmatprep.subr.mxu0 0.0
    %2653 = vmatpush1.msra.mxu0 0.0
    %2654 = vmatprep.subr.mxu0 0.0
    %2655 = vmatpush1.msra.mxu0 0.0
    %2656 = vmatprep.subr.mxu0 0.0
    %2657 = vmatpush1.msra.mxu0 0.0
    %2658 = vmatprep.subr.mxu0 0.0
    %2659 = vmatpush1.msra.mxu0 0.0
    %2660 = vmatprep.subr.mxu0 0.0
    %2661 = vmatpush1.msra.mxu0 0.0
    %2662 = vmatprep.subr.mxu0 0.0
    %2663 = vmatpush1.msra.mxu0 0.0
    %2664 = vmatprep.subr.mxu0 0.0
    %2665 = vmatpush1.msra.mxu0 0.0
    %2666 = vmatprep.subr.mxu0 0.0
    %2667 = vmatpush1.msra.mxu0 0.0
    %2668 = vmatprep.subr.mxu0 0.0
    %2669 = vmatpush1.msra.mxu0 0.0
    %2670 = vmatprep.subr.mxu0 0.0
    %2671 = vmatpush1.msra.mxu0 0.0
    %2672 = vmatprep.subr.mxu0 0.0
    %2673 = vmatpush1.msra.mxu0 %v603
    %2674 = vmatprep.subr.mxu0 0.0
    %2675 = vmatpush2.msra.mxu0 0.0
    %2676 = vmatprep.subr.mxu0 0.0
    %2677 = vmatpush2.msra.mxu0 0.0
    %2678 = vmatprep.subr.mxu0 0.0
    %2679 = vmatpush2.msra.mxu0 0.0
    %2680 = vmatprep.subr.mxu0 0.0
    %2681 = vmatpush2.msra.mxu0 0.0
    %2682 = vmatprep.subr.mxu0 0.0
    %2683 = vmatpush2.msra.mxu0 0.0
    %2684 = vmatprep.subr.mxu0 0.0
    %2685 = vmatpush2.msra.mxu0 0.0
    %2686 = vmatprep.subr.mxu0 0.0
    %2687 = vmatpush2.msra.mxu0 0.0
    %2688 = vmatprep.subr.mxu0 0.0
    %2689 = vmatpush2.msra.mxu0 0.0
    %2690 = vmatprep.subr.mxu0 0.0
    %2691 = vmatpush2.msra.mxu0 0.0
    %2692 = vmatprep.subr.mxu0 0.0
    %2693 = vmatpush2.msra.mxu0 0.0
    %2694 = vmatprep.subr.mxu0 0.0
    %2695 = vmatpush2.msra.mxu0 0.0
    %2696 = vmatprep.subr.mxu0 0.0
    %2697 = vmatpush2.msra.mxu0 0.0
    %2698 = vmatprep.subr.mxu0 0.0
    %2699 = vmatpush2.msra.mxu0 0.0
    %2700 = vmatprep.subr.mxu0 0.0
    %2701 = vmatpush2.msra.mxu0 0.0
    %2702 = vmatprep.subr.mxu0 0.0
    %2703 = vmatpush2.msra.mxu0 0.0
    %2704 = vmatprep.subr.mxu0 0.0
    %2705 = vmatpush2.msra.mxu0 0.0
    %2706 = vmatprep.mubr.f32.mxu0 0.0
    %2707 = vmatmul.mubr.f32.gmra.mxu0 %v2640
    %v2708 = vpop.f32.mrf.mxu0
    %v2709 = vadd.f32 0.0, %v2708
    %v2710 = vpop.f32.mrf.mxu0
    %2711 = vdwg.mxu0
    %v2713 = vsel %vm638, %v2042, 0
    %2715 = vmatprep.subr.mxu0 0.0
    %2716 = vmatpush1.msra.mxu0 0.0
    %2717 = vmatprep.subr.mxu0 0.0
    %2718 = vmatpush1.msra.mxu0 0.0
    %2719 = vmatprep.subr.mxu0 0.0
    %2720 = vmatpush1.msra.mxu0 0.0
    %2721 = vmatprep.subr.mxu0 0.0
    %2722 = vmatpush1.msra.mxu0 0.0
    %2723 = vmatprep.subr.mxu0 0.0
    %2724 = vmatpush1.msra.mxu0 0.0
    %2725 = vmatprep.subr.mxu0 0.0
    %2726 = vmatpush1.msra.mxu0 0.0
    %2727 = vmatprep.subr.mxu0 0.0
    %2728 = vmatpush1.msra.mxu0 0.0
    %2729 = vmatprep.subr.mxu0 0.0
    %2730 = vmatpush1.msra.mxu0 0.0
    %2731 = vmatprep.subr.mxu0 0.0
    %2732 = vmatpush1.msra.mxu0 0.0
    %2733 = vmatprep.subr.mxu0 0.0
    %2734 = vmatpush1.msra.mxu0 0.0
    %2735 = vmatprep.subr.mxu0 0.0
    %2736 = vmatpush1.msra.mxu0 0.0
    %2737 = vmatprep.subr.mxu0 0.0
    %2738 = vmatpush1.msra.mxu0 0.0
    %2739 = vmatprep.subr.mxu0 0.0
    %2740 = vmatpush1.msra.mxu0 0.0
    %2741 = vmatprep.subr.mxu0 0.0
    %2742 = vmatpush1.msra.mxu0 0.0
    %2743 = vmatprep.subr.mxu0 0.0
    %2744 = vmatpush1.msra.mxu0 0.0
    %2745 = vmatprep.subr.mxu0 0.0
    %2746 = vmatpush1.msra.mxu0 %v605
    %2747 = vmatprep.subr.mxu0 0.0
    %2748 = vmatpush2.msra.mxu0 0.0
    %2749 = vmatprep.subr.mxu0 0.0
    %2750 = vmatpush2.msra.mxu0 0.0
    %2751 = vmatprep.subr.mxu0 0.0
    %2752 = vmatpush2.msra.mxu0 0.0
    %2753 = vmatprep.subr.mxu0 0.0
    %2754 = vmatpush2.msra.mxu0 0.0
    %2755 = vmatprep.subr.mxu0 0.0
    %2756 = vmatpush2.msra.mxu0 0.0
    %2757 = vmatprep.subr.mxu0 0.0
    %2758 = vmatpush2.msra.mxu0 0.0
    %2759 = vmatprep.subr.mxu0 0.0
    %2760 = vmatpush2.msra.mxu0 0.0
    %2761 = vmatprep.subr.mxu0 0.0
    %2762 = vmatpush2.msra.mxu0 0.0
    %2763 = vmatprep.subr.mxu0 0.0
    %2764 = vmatpush2.msra.mxu0 0.0
    %2765 = vmatprep.subr.mxu0 0.0
    %2766 = vmatpush2.msra.mxu0 0.0
    %2767 = vmatprep.subr.mxu0 0.0
    %2768 = vmatpush2.msra.mxu0 0.0
    %2769 = vmatprep.subr.mxu0 0.0
    %2770 = vmatpush2.msra.mxu0 0.0
    %2771 = vmatprep.subr.mxu0 0.0
    %2772 = vmatpush2.msra.mxu0 0.0
    %2773 = vmatprep.subr.mxu0 0.0
    %2774 = vmatpush2.msra.mxu0 0.0
    %2775 = vmatprep.subr.mxu0 0.0
    %2776 = vmatpush2.msra.mxu0 0.0
    %2777 = vmatprep.subr.mxu0 0.0
    %2778 = vmatpush2.msra.mxu0 0.0
    %2779 = vmatprep.mubr.f32.mxu0 0.0
    %2780 = vmatmul.mubr.f32.gmra.mxu0 %v2713
    %v2781 = vpop.f32.mrf.mxu0
    %v2782 = vadd.f32 0.0, %v2781
    %v2783 = vpop.f32.mrf.mxu0
    %2784 = vdwg.mxu0
    %v2786 = vsel %vm638, %v2044, 0
    %2788 = vmatprep.subr.mxu0 0.0
    %2789 = vmatpush1.msra.mxu0 0.0
    %2790 = vmatprep.subr.mxu0 0.0
    %2791 = vmatpush1.msra.mxu0 0.0
    %2792 = vmatprep.subr.mxu0 0.0
    %2793 = vmatpush1.msra.mxu0 0.0
    %2794 = vmatprep.subr.mxu0 0.0
    %2795 = vmatpush1.msra.mxu0 0.0
    %2796 = vmatprep.subr.mxu0 0.0
    %2797 = vmatpush1.msra.mxu0 0.0
    %2798 = vmatprep.subr.mxu0 0.0
    %2799 = vmatpush1.msra.mxu0 0.0
    %2800 = vmatprep.subr.mxu0 0.0
    %2801 = vmatpush1.msra.mxu0 0.0
    %2802 = vmatprep.subr.mxu0 0.0
    %2803 = vmatpush1.msra.mxu0 0.0
    %2804 = vmatprep.subr.mxu0 0.0
    %2805 = vmatpush1.msra.mxu0 0.0
    %2806 = vmatprep.subr.mxu0 0.0
    %2807 = vmatpush1.msra.mxu0 0.0
    %2808 = vmatprep.subr.mxu0 0.0
    %2809 = vmatpush1.msra.mxu0 0.0
    %2810 = vmatprep.subr.mxu0 0.0
    %2811 = vmatpush1.msra.mxu0 0.0
    %2812 = vmatprep.subr.mxu0 0.0
    %2813 = vmatpush1.msra.mxu0 0.0
    %2814 = vmatprep.subr.mxu0 0.0
    %2815 = vmatpush1.msra.mxu0 0.0
    %2816 = vmatprep.subr.mxu0 0.0
    %2817 = vmatpush1.msra.mxu0 0.0
    %2818 = vmatprep.subr.mxu0 0.0
    %2819 = vmatpush1.msra.mxu0 %v607
    %2820 = vmatprep.subr.mxu0 0.0
    %2821 = vmatpush2.msra.mxu0 0.0
    %2822 = vmatprep.subr.mxu0 0.0
    %2823 = vmatpush2.msra.mxu0 0.0
    %2824 = vmatprep.subr.mxu0 0.0
    %2825 = vmatpush2.msra.mxu0 0.0
    %2826 = vmatprep.subr.mxu0 0.0
    %2827 = vmatpush2.msra.mxu0 0.0
    %2828 = vmatprep.subr.mxu0 0.0
    %2829 = vmatpush2.msra.mxu0 0.0
    %2830 = vmatprep.subr.mxu0 0.0
    %2831 = vmatpush2.msra.mxu0 0.0
    %2832 = vmatprep.subr.mxu0 0.0
    %2833 = vmatpush2.msra.mxu0 0.0
    %2834 = vmatprep.subr.mxu0 0.0
    %2835 = vmatpush2.msra.mxu0 0.0
    %2836 = vmatprep.subr.mxu0 0.0
    %2837 = vmatpush2.msra.mxu0 0.0
    %2838 = vmatprep.subr.mxu0 0.0
    %2839 = vmatpush2.msra.mxu0 0.0
    %2840 = vmatprep.subr.mxu0 0.0
    %2841 = vmatpush2.msra.mxu0 0.0
    %2842 = vmatprep.subr.mxu0 0.0
    %2843 = vmatpush2.msra.mxu0 0.0
    %2844 = vmatprep.subr.mxu0 0.0
    %2845 = vmatpush2.msra.mxu0 0.0
    %2846 = vmatprep.subr.mxu0 0.0
    %2847 = vmatpush2.msra.mxu0 0.0
    %2848 = vmatprep.subr.mxu0 0.0
    %2849 = vmatpush2.msra.mxu0 0.0
    %2850 = vmatprep.subr.mxu0 0.0
    %2851 = vmatpush2.msra.mxu0 0.0
    %2852 = vmatprep.mubr.f32.mxu0 0.0
    %2853 = vmatmul.mubr.f32.gmra.mxu0 %v2786
    %v2854 = vpop.f32.mrf.mxu0
    %v2855 = vadd.f32 0.0, %v2854
    %v2856 = vpop.f32.mrf.mxu0
    %2857 = vdwg.mxu0
    %v2859 = vsel %vm638, %v2046, 0
    %2861 = vmatprep.subr.mxu0 0.0
    %2862 = vmatpush1.msra.mxu0 0.0
    %2863 = vmatprep.subr.mxu0 0.0
    %2864 = vmatpush1.msra.mxu0 0.0
    %2865 = vmatprep.subr.mxu0 0.0
    %2866 = vmatpush1.msra.mxu0 0.0
    %2867 = vmatprep.subr.mxu0 0.0
    %2868 = vmatpush1.msra.mxu0 0.0
    %2869 = vmatprep.subr.mxu0 0.0
    %2870 = vmatpush1.msra.mxu0 0.0
    %2871 = vmatprep.subr.mxu0 0.0
    %2872 = vmatpush1.msra.mxu0 0.0
    %2873 = vmatprep.subr.mxu0 0.0
    %2874 = vmatpush1.msra.mxu0 0.0
    %2875 = vmatprep.subr.mxu0 0.0
    %2876 = vmatpush1.msra.mxu0 0.0
    %2877 = vmatprep.subr.mxu0 0.0
    %2878 = vmatpush1.msra.mxu0 0.0
    %2879 = vmatprep.subr.mxu0 0.0
    %2880 = vmatpush1.msra.mxu0 0.0
    %2881 = vmatprep.subr.mxu0 0.0
    %2882 = vmatpush1.msra.mxu0 0.0
    %2883 = vmatprep.subr.mxu0 0.0
    %2884 = vmatpush1.msra.mxu0 0.0
    %2885 = vmatprep.subr.mxu0 0.0
    %2886 = vmatpush1.msra.mxu0 0.0
    %2887 = vmatprep.subr.mxu0 0.0
    %2888 = vmatpush1.msra.mxu0 0.0
    %2889 = vmatprep.subr.mxu0 0.0
    %2890 = vmatpush1.msra.mxu0 0.0
    %2891 = vmatprep.subr.mxu0 0.0
    %2892 = vmatpush1.msra.mxu0 %v609
    %2893 = vmatprep.subr.mxu0 0.0
    %2894 = vmatpush2.msra.mxu0 0.0
    %2895 = vmatprep.subr.mxu0 0.0
    %2896 = vmatpush2.msra.mxu0 0.0
    %2897 = vmatprep.subr.mxu0 0.0
    %2898 = vmatpush2.msra.mxu0 0.0
    %2899 = vmatprep.subr.mxu0 0.0
    %2900 = vmatpush2.msra.mxu0 0.0
    %2901 = vmatprep.subr.mxu0 0.0
    %2902 = vmatpush2.msra.mxu0 0.0
    %2903 = vmatprep.subr.mxu0 0.0
    %2904 = vmatpush2.msra.mxu0 0.0
    %2905 = vmatprep.subr.mxu0 0.0
    %2906 = vmatpush2.msra.mxu0 0.0
    %2907 = vmatprep.subr.mxu0 0.0
    %2908 = vmatpush2.msra.mxu0 0.0
    %2909 = vmatprep.subr.mxu0 0.0
    %2910 = vmatpush2.msra.mxu0 0.0
    %2911 = vmatprep.subr.mxu0 0.0
    %2912 = vmatpush2.msra.mxu0 0.0
    %2913 = vmatprep.subr.mxu0 0.0
    %2914 = vmatpush2.msra.mxu0 0.0
    %2915 = vmatprep.subr.mxu0 0.0
    %2916 = vmatpush2.msra.mxu0 0.0
    %2917 = vmatprep.subr.mxu0 0.0
    %2918 = vmatpush2.msra.mxu0 0.0
    %2919 = vmatprep.subr.mxu0 0.0
    %2920 = vmatpush2.msra.mxu0 0.0
    %2921 = vmatprep.subr.mxu0 0.0
    %2922 = vmatpush2.msra.mxu0 0.0
    %2923 = vmatprep.subr.mxu0 0.0
    %2924 = vmatpush2.msra.mxu0 0.0
    %2925 = vmatprep.mubr.f32.mxu0 0.0
    %2926 = vmatmul.mubr.f32.gmra.mxu0 %v2859
    %v2927 = vpop.f32.mrf.mxu0
    %v2928 = vadd.f32 0.0, %v2927
    %v2929 = vpop.f32.mrf.mxu0
    %2930 = vdwg.mxu0
    %v2932 = vsel %vm638, %v2048, 0
    %2934 = vmatprep.subr.mxu0 0.0
    %2935 = vmatpush1.msra.mxu0 0.0
    %2936 = vmatprep.subr.mxu0 0.0
    %2937 = vmatpush1.msra.mxu0 0.0
    %2938 = vmatprep.subr.mxu0 0.0
    %2939 = vmatpush1.msra.mxu0 0.0
    %2940 = vmatprep.subr.mxu0 0.0
    %2941 = vmatpush1.msra.mxu0 0.0
    %2942 = vmatprep.subr.mxu0 0.0
    %2943 = vmatpush1.msra.mxu0 0.0
    %2944 = vmatprep.subr.mxu0 0.0
    %2945 = vmatpush1.msra.mxu0 0.0
    %2946 = vmatprep.subr.mxu0 0.0
    %2947 = vmatpush1.msra.mxu0 0.0
    %2948 = vmatprep.subr.mxu0 0.0
    %2949 = vmatpush1.msra.mxu0 0.0
    %2950 = vmatprep.subr.mxu0 0.0
    %2951 = vmatpush1.msra.mxu0 0.0
    %2952 = vmatprep.subr.mxu0 0.0
    %2953 = vmatpush1.msra.mxu0 0.0
    %2954 = vmatprep.subr.mxu0 0.0
    %2955 = vmatpush1.msra.mxu0 0.0
    %2956 = vmatprep.subr.mxu0 0.0
    %2957 = vmatpush1.msra.mxu0 0.0
    %2958 = vmatprep.subr.mxu0 0.0
    %2959 = vmatpush1.msra.mxu0 0.0
    %2960 = vmatprep.subr.mxu0 0.0
    %2961 = vmatpush1.msra.mxu0 0.0
    %2962 = vmatprep.subr.mxu0 0.0
    %2963 = vmatpush1.msra.mxu0 0.0
    %2964 = vmatprep.subr.mxu0 0.0
    %2965 = vmatpush1.msra.mxu0 %v615
    %2966 = vmatprep.subr.mxu0 0.0
    %2967 = vmatpush2.msra.mxu0 0.0
    %2968 = vmatprep.subr.mxu0 0.0
    %2969 = vmatpush2.msra.mxu0 0.0
    %2970 = vmatprep.subr.mxu0 0.0
    %2971 = vmatpush2.msra.mxu0 0.0
    %2972 = vmatprep.subr.mxu0 0.0
    %2973 = vmatpush2.msra.mxu0 0.0
    %2974 = vmatprep.subr.mxu0 0.0
    %2975 = vmatpush2.msra.mxu0 0.0
    %2976 = vmatprep.subr.mxu0 0.0
    %2977 = vmatpush2.msra.mxu0 0.0
    %2978 = vmatprep.subr.mxu0 0.0
    %2979 = vmatpush2.msra.mxu0 0.0
    %2980 = vmatprep.subr.mxu0 0.0
    %2981 = vmatpush2.msra.mxu0 0.0
    %2982 = vmatprep.subr.mxu0 0.0
    %2983 = vmatpush2.msra.mxu0 0.0
    %2984 = vmatprep.subr.mxu0 0.0
    %2985 = vmatpush2.msra.mxu0 0.0
    %2986 = vmatprep.subr.mxu0 0.0
    %2987 = vmatpush2.msra.mxu0 0.0
    %2988 = vmatprep.subr.mxu0 0.0
    %2989 = vmatpush2.msra.mxu0 0.0
    %2990 = vmatprep.subr.mxu0 0.0
    %2991 = vmatpush2.msra.mxu0 0.0
    %2992 = vmatprep.subr.mxu0 0.0
    %2993 = vmatpush2.msra.mxu0 0.0
    %2994 = vmatprep.subr.mxu0 0.0
    %2995 = vmatpush2.msra.mxu0 0.0
    %2996 = vmatprep.subr.mxu0 0.0
    %2997 = vmatpush2.msra.mxu0 0.0
    %2998 = vmatprep.mubr.f32.mxu0 0.0
    %2999 = vmatmul.mubr.f32.gmra.mxu0 %v2932
    %v3000 = vpop.f32.mrf.mxu0
    %v3001 = vadd.f32 0.0, %v3000
    %v3002 = vpop.f32.mrf.mxu0
    %3003 = vdwg.mxu0
    %v3005 = vsel %vm638, %v2050, 0
    %3007 = vmatprep.subr.mxu0 0.0
    %3008 = vmatpush1.msra.mxu0 0.0
    %3009 = vmatprep.subr.mxu0 0.0
    %3010 = vmatpush1.msra.mxu0 0.0
    %3011 = vmatprep.subr.mxu0 0.0
    %3012 = vmatpush1.msra.mxu0 0.0
    %3013 = vmatprep.subr.mxu0 0.0
    %3014 = vmatpush1.msra.mxu0 0.0
    %3015 = vmatprep.subr.mxu0 0.0
    %3016 = vmatpush1.msra.mxu0 0.0
    %3017 = vmatprep.subr.mxu0 0.0
    %3018 = vmatpush1.msra.mxu0 0.0
    %3019 = vmatprep.subr.mxu0 0.0
    %3020 = vmatpush1.msra.mxu0 0.0
    %3021 = vmatprep.subr.mxu0 0.0
    %3022 = vmatpush1.msra.mxu0 0.0
    %3023 = vmatprep.subr.mxu0 0.0
    %3024 = vmatpush1.msra.mxu0 0.0
    %3025 = vmatprep.subr.mxu0 0.0
    %3026 = vmatpush1.msra.mxu0 0.0
    %3027 = vmatprep.subr.mxu0 0.0
    %3028 = vmatpush1.msra.mxu0 0.0
    %3029 = vmatprep.subr.mxu0 0.0
    %3030 = vmatpush1.msra.mxu0 0.0
    %3031 = vmatprep.subr.mxu0 0.0
    %3032 = vmatpush1.msra.mxu0 0.0
    %3033 = vmatprep.subr.mxu0 0.0
    %3034 = vmatpush1.msra.mxu0 0.0
    %3035 = vmatprep.subr.mxu0 0.0
    %3036 = vmatpush1.msra.mxu0 0.0
    %3037 = vmatprep.subr.mxu0 0.0
    %3038 = vmatpush1.msra.mxu0 %v617
    %3039 = vmatprep.subr.mxu0 0.0
    %3040 = vmatpush2.msra.mxu0 0.0
    %3041 = vmatprep.subr.mxu0 0.0
    %3042 = vmatpush2.msra.mxu0 0.0
    %3043 = vmatprep.subr.mxu0 0.0
    %3044 = vmatpush2.msra.mxu0 0.0
    %3045 = vmatprep.subr.mxu0 0.0
    %3046 = vmatpush2.msra.mxu0 0.0
    %3047 = vmatprep.subr.mxu0 0.0
    %3048 = vmatpush2.msra.mxu0 0.0
    %3049 = vmatprep.subr.mxu0 0.0
    %3050 = vmatpush2.msra.mxu0 0.0
    %3051 = vmatprep.subr.mxu0 0.0
    %3052 = vmatpush2.msra.mxu0 0.0
    %3053 = vmatprep.subr.mxu0 0.0
    %3054 = vmatpush2.msra.mxu0 0.0
    %3055 = vmatprep.subr.mxu0 0.0
    %3056 = vmatpush2.msra.mxu0 0.0
    %3057 = vmatprep.subr.mxu0 0.0
    %3058 = vmatpush2.msra.mxu0 0.0
    %3059 = vmatprep.subr.mxu0 0.0
    %3060 = vmatpush2.msra.mxu0 0.0
    %3061 = vmatprep.subr.mxu0 0.0
    %3062 = vmatpush2.msra.mxu0 0.0
    %3063 = vmatprep.subr.mxu0 0.0
    %3064 = vmatpush2.msra.mxu0 0.0
    %3065 = vmatprep.subr.mxu0 0.0
    %3066 = vmatpush2.msra.mxu0 0.0
    %3067 = vmatprep.subr.mxu0 0.0
    %3068 = vmatpush2.msra.mxu0 0.0
    %3069 = vmatprep.subr.mxu0 0.0
    %3070 = vmatpush2.msra.mxu0 0.0
    %3071 = vmatprep.mubr.f32.mxu0 0.0
    %3072 = vmatmul.mubr.f32.gmra.mxu0 %v3005
    %v3073 = vpop.f32.mrf.mxu0
    %v3074 = vadd.f32 0.0, %v3073
    %v3075 = vpop.f32.mrf.mxu0
    %3076 = vdwg.mxu0
    %v3078 = vsel %vm638, %v2052, 0
    %3080 = vmatprep.subr.mxu0 0.0
    %3081 = vmatpush1.msra.mxu0 0.0
    %3082 = vmatprep.subr.mxu0 0.0
    %3083 = vmatpush1.msra.mxu0 0.0
    %3084 = vmatprep.subr.mxu0 0.0
    %3085 = vmatpush1.msra.mxu0 0.0
    %3086 = vmatprep.subr.mxu0 0.0
    %3087 = vmatpush1.msra.mxu0 0.0
    %3088 = vmatprep.subr.mxu0 0.0
    %3089 = vmatpush1.msra.mxu0 0.0
    %3090 = vmatprep.subr.mxu0 0.0
    %3091 = vmatpush1.msra.mxu0 0.0
    %3092 = vmatprep.subr.mxu0 0.0
    %3093 = vmatpush1.msra.mxu0 0.0
    %3094 = vmatprep.subr.mxu0 0.0
    %3095 = vmatpush1.msra.mxu0 0.0
    %3096 = vmatprep.subr.mxu0 0.0
    %3097 = vmatpush1.msra.mxu0 0.0
    %3098 = vmatprep.subr.mxu0 0.0
    %3099 = vmatpush1.msra.mxu0 0.0
    %3100 = vmatprep.subr.mxu0 0.0
    %3101 = vmatpush1.msra.mxu0 0.0
    %3102 = vmatprep.subr.mxu0 0.0
    %3103 = vmatpush1.msra.mxu0 0.0
    %3104 = vmatprep.subr.mxu0 0.0
    %3105 = vmatpush1.msra.mxu0 0.0
    %3106 = vmatprep.subr.mxu0 0.0
    %3107 = vmatpush1.msra.mxu0 0.0
    %3108 = vmatprep.subr.mxu0 0.0
    %3109 = vmatpush1.msra.mxu0 0.0
    %3110 = vmatprep.subr.mxu0 0.0
    %3111 = vmatpush1.msra.mxu0 %v619
    %3112 = vmatprep.subr.mxu0 0.0
    %3113 = vmatpush2.msra.mxu0 0.0
    %3114 = vmatprep.subr.mxu0 0.0
    %3115 = vmatpush2.msra.mxu0 0.0
    %3116 = vmatprep.subr.mxu0 0.0
    %3117 = vmatpush2.msra.mxu0 0.0
    %3118 = vmatprep.subr.mxu0 0.0
    %3119 = vmatpush2.msra.mxu0 0.0
    %3120 = vmatprep.subr.mxu0 0.0
    %3121 = vmatpush2.msra.mxu0 0.0
    %3122 = vmatprep.subr.mxu0 0.0
    %3123 = vmatpush2.msra.mxu0 0.0
    %3124 = vmatprep.subr.mxu0 0.0
    %3125 = vmatpush2.msra.mxu0 0.0
    %3126 = vmatprep.subr.mxu0 0.0
    %3127 = vmatpush2.msra.mxu0 0.0
    %3128 = vmatprep.subr.mxu0 0.0
    %3129 = vmatpush2.msra.mxu0 0.0
    %3130 = vmatprep.subr.mxu0 0.0
    %3131 = vmatpush2.msra.mxu0 0.0
    %3132 = vmatprep.subr.mxu0 0.0
    %3133 = vmatpush2.msra.mxu0 0.0
    %3134 = vmatprep.subr.mxu0 0.0
    %3135 = vmatpush2.msra.mxu0 0.0
    %3136 = vmatprep.subr.mxu0 0.0
    %3137 = vmatpush2.msra.mxu0 0.0
    %3138 = vmatprep.subr.mxu0 0.0
    %3139 = vmatpush2.msra.mxu0 0.0
    %3140 = vmatprep.subr.mxu0 0.0
    %3141 = vmatpush2.msra.mxu0 0.0
    %3142 = vmatprep.subr.mxu0 0.0
    %3143 = vmatpush2.msra.mxu0 0.0
    %3144 = vmatprep.mubr.f32.mxu0 0.0
    %3145 = vmatmul.mubr.f32.gmra.mxu0 %v3078
    %v3146 = vpop.f32.mrf.mxu0
    %v3147 = vadd.f32 0.0, %v3146
    %v3148 = vpop.f32.mrf.mxu0
    %3149 = vdwg.mxu0
    %v3151 = vsel %vm638, %v2054, 0
    %3153 = vmatprep.subr.mxu0 0.0
    %3154 = vmatpush1.msra.mxu0 0.0
    %3155 = vmatprep.subr.mxu0 0.0
    %3156 = vmatpush1.msra.mxu0 0.0
    %3157 = vmatprep.subr.mxu0 0.0
    %3158 = vmatpush1.msra.mxu0 0.0
    %3159 = vmatprep.subr.mxu0 0.0
    %3160 = vmatpush1.msra.mxu0 0.0
    %3161 = vmatprep.subr.mxu0 0.0
    %3162 = vmatpush1.msra.mxu0 0.0
    %3163 = vmatprep.subr.mxu0 0.0
    %3164 = vmatpush1.msra.mxu0 0.0
    %3165 = vmatprep.subr.mxu0 0.0
    %3166 = vmatpush1.msra.mxu0 0.0
    %3167 = vmatprep.subr.mxu0 0.0
    %3168 = vmatpush1.msra.mxu0 0.0
    %3169 = vmatprep.subr.mxu0 0.0
    %3170 = vmatpush1.msra.mxu0 0.0
    %3171 = vmatprep.subr.mxu0 0.0
    %3172 = vmatpush1.msra.mxu0 0.0
    %3173 = vmatprep.subr.mxu0 0.0
    %3174 = vmatpush1.msra.mxu0 0.0
    %3175 = vmatprep.subr.mxu0 0.0
    %3176 = vmatpush1.msra.mxu0 0.0
    %3177 = vmatprep.subr.mxu0 0.0
    %3178 = vmatpush1.msra.mxu0 0.0
    %3179 = vmatprep.subr.mxu0 0.0
    %3180 = vmatpush1.msra.mxu0 0.0
    %3181 = vmatprep.subr.mxu0 0.0
    %3182 = vmatpush1.msra.mxu0 0.0
    %3183 = vmatprep.subr.mxu0 0.0
    %3184 = vmatpush1.msra.mxu0 %v621
    %3185 = vmatprep.subr.mxu0 0.0
    %3186 = vmatpush2.msra.mxu0 0.0
    %3187 = vmatprep.subr.mxu0 0.0
    %3188 = vmatpush2.msra.mxu0 0.0
    %3189 = vmatprep.subr.mxu0 0.0
    %3190 = vmatpush2.msra.mxu0 0.0
    %3191 = vmatprep.subr.mxu0 0.0
    %3192 = vmatpush2.msra.mxu0 0.0
    %3193 = vmatprep.subr.mxu0 0.0
    %3194 = vmatpush2.msra.mxu0 0.0
    %3195 = vmatprep.subr.mxu0 0.0
    %3196 = vmatpush2.msra.mxu0 0.0
    %3197 = vmatprep.subr.mxu0 0.0
    %3198 = vmatpush2.msra.mxu0 0.0
    %3199 = vmatprep.subr.mxu0 0.0
    %3200 = vmatpush2.msra.mxu0 0.0
    %3201 = vmatprep.subr.mxu0 0.0
    %3202 = vmatpush2.msra.mxu0 0.0
    %3203 = vmatprep.subr.mxu0 0.0
    %3204 = vmatpush2.msra.mxu0 0.0
    %3205 = vmatprep.subr.mxu0 0.0
    %3206 = vmatpush2.msra.mxu0 0.0
    %3207 = vmatprep.subr.mxu0 0.0
    %3208 = vmatpush2.msra.mxu0 0.0
    %3209 = vmatprep.subr.mxu0 0.0
    %3210 = vmatpush2.msra.mxu0 0.0
    %3211 = vmatprep.subr.mxu0 0.0
    %3212 = vmatpush2.msra.mxu0 0.0
    %3213 = vmatprep.subr.mxu0 0.0
    %3214 = vmatpush2.msra.mxu0 0.0
    %3215 = vmatprep.subr.mxu0 0.0
    %3216 = vmatpush2.msra.mxu0 0.0
    %3217 = vmatprep.mubr.f32.mxu0 0.0
    %3218 = vmatmul.mubr.f32.gmra.mxu0 %v3151
    %v3219 = vpop.f32.mrf.mxu0
    %v3220 = vadd.f32 0.0, %v3219
    %v3221 = vpop.f32.mrf.mxu0
    %3222 = vdwg.mxu0
    %v3223 = vld [vmem:[%s10] sm:$0xff]
    %v3224 = vld [vmem:[%s10 + $0x8] sm:$0xff]
    %v3225 = vld [vmem:[%s10 + $0x10] sm:$0xff]
    %v3226 = vld [vmem:[%s10 + $0x18] sm:$0xff]
    %v3228 = vsel %vm638, %v2417, 0
    %v3231 = vsel %vm638, %v2490, 0
    %v3234 = vsel %vm638, %v2563, 0
    %v3237 = vsel %vm638, %v2636, 0
    %3239 = vmatprep.subr.mxu0 0.0
    %3240 = vmatpush1.msra.mxu0 0.0
    %3241 = vmatprep.subr.mxu0 0.0
    %3242 = vmatpush1.msra.mxu0 0.0
    %3243 = vmatprep.subr.mxu0 0.0
    %3244 = vmatpush1.msra.mxu0 0.0
    %3245 = vmatprep.subr.mxu0 0.0
    %3246 = vmatpush1.msra.mxu0 0.0
    %3247 = vmatprep.subr.mxu0 0.0
    %3248 = vmatpush1.msra.mxu0 0.0
    %3249 = vmatprep.subr.mxu0 0.0
    %3250 = vmatpush1.msra.mxu0 0.0
    %3251 = vmatprep.subr.mxu0 0.0
    %3252 = vmatpush1.msra.mxu0 0.0
    %3253 = vmatprep.subr.mxu0 0.0
    %3254 = vmatpush1.msra.mxu0 0.0
    %3255 = vmatprep.subr.mxu0 0.0
    %3256 = vmatpush1.msra.mxu0 0.0
    %3257 = vmatprep.subr.mxu0 0.0
    %3258 = vmatpush1.msra.mxu0 0.0
    %3259 = vmatprep.subr.mxu0 0.0
    %3260 = vmatpush1.msra.mxu0 0.0
    %3261 = vmatprep.subr.mxu0 0.0
    %3262 = vmatpush1.msra.mxu0 0.0
    %3263 = vmatprep.subr.mxu0 0.0
    %3264 = vmatpush1.msra.mxu0 0.0
    %3265 = vmatprep.subr.mxu0 0.0
    %3266 = vmatpush1.msra.mxu0 0.0
    %3267 = vmatprep.subr.mxu0 0.0
    %3268 = vmatpush1.msra.mxu0 0.0
    %3269 = vmatprep.subr.mxu0 0.0
    %3270 = vmatpush1.msra.mxu0 %v3224
    %3271 = vmatprep.subr.mxu0 0.0
    %3272 = vmatpush2.msra.mxu0 0.0
    %3273 = vmatprep.subr.mxu0 0.0
    %3274 = vmatpush2.msra.mxu0 0.0
    %3275 = vmatprep.subr.mxu0 0.0
    %3276 = vmatpush2.msra.mxu0 0.0
    %3277 = vmatprep.subr.mxu0 0.0
    %3278 = vmatpush2.msra.mxu0 0.0
    %3279 = vmatprep.subr.mxu0 0.0
    %3280 = vmatpush2.msra.mxu0 0.0
    %3281 = vmatprep.subr.mxu0 0.0
    %3282 = vmatpush2.msra.mxu0 0.0
    %3283 = vmatprep.subr.mxu0 0.0
    %3284 = vmatpush2.msra.mxu0 0.0
    %3285 = vmatprep.subr.mxu0 0.0
    %3286 = vmatpush2.msra.mxu0 0.0
    %3287 = vmatprep.subr.mxu0 0.0
    %3288 = vmatpush2.msra.mxu0 0.0
    %3289 = vmatprep.subr.mxu0 0.0
    %3290 = vmatpush2.msra.mxu0 0.0
    %3291 = vmatprep.subr.mxu0 0.0
    %3292 = vmatpush2.msra.mxu0 0.0
    %3293 = vmatprep.subr.mxu0 0.0
    %3294 = vmatpush2.msra.mxu0 0.0
    %3295 = vmatprep.subr.mxu0 0.0
    %3296 = vmatpush2.msra.mxu0 0.0
    %3297 = vmatprep.subr.mxu0 0.0
    %3298 = vmatpush2.msra.mxu0 0.0
    %3299 = vmatprep.subr.mxu0 0.0
    %3300 = vmatpush2.msra.mxu0 0.0
    %3301 = vmatprep.subr.mxu0 0.0
    %3302 = vmatpush2.msra.mxu0 0.0
    %3303 = vmatprep.mubr.f32.mxu0 0.0
    %3304 = vmatmul.mubr.f32.gmra.mxu0 %v3228
    %v3305 = vpop.f32.mrf.mxu0
    %v3306 = vadd.f32 0.0, %v3305
    %v3307 = vpop.f32.mrf.mxu0
    %3308 = vmatprep.mubr.f32.mxu0 0.0
    %3309 = vmatmul.mubr.f32.gmra.mxu0 %v3231
    %v3310 = vpop.f32.mrf.mxu0
    %v3311 = vadd.f32 0.0, %v3310
    %v3312 = vpop.f32.mrf.mxu0
    %3313 = vmatprep.mubr.f32.mxu0 0.0
    %3314 = vmatmul.mubr.f32.gmra.mxu0 %v3234
    %v3315 = vpop.f32.mrf.mxu0
    %v3316 = vadd.f32 0.0, %v3315
    %v3317 = vpop.f32.mrf.mxu0
    %3318 = vmatprep.mubr.f32.mxu0 0.0
    %3319 = vmatmul.mubr.f32.gmra.mxu0 %v3237
    %v3320 = vpop.f32.mrf.mxu0
    %v3321 = vadd.f32 0.0, %v3320
    %v3322 = vpop.f32.mrf.mxu0
    %3323 = vdwg.mxu0
    %v3325 = vsel %vm638, %v2125, 0
    %v3328 = vsel %vm638, %v2198, 0
    %v3331 = vsel %vm638, %v2271, 0
    %v3334 = vsel %vm638, %v2344, 0
    %3336 = vmatprep.subr.mxu0 0.0
    %3337 = vmatpush1.msra.mxu0 0.0
    %3338 = vmatprep.subr.mxu0 0.0
    %3339 = vmatpush1.msra.mxu0 0.0
    %3340 = vmatprep.subr.mxu0 0.0
    %3341 = vmatpush1.msra.mxu0 0.0
    %3342 = vmatprep.subr.mxu0 0.0
    %3343 = vmatpush1.msra.mxu0 0.0
    %3344 = vmatprep.subr.mxu0 0.0
    %3345 = vmatpush1.msra.mxu0 0.0
    %3346 = vmatprep.subr.mxu0 0.0
    %3347 = vmatpush1.msra.mxu0 0.0
    %3348 = vmatprep.subr.mxu0 0.0
    %3349 = vmatpush1.msra.mxu0 0.0
    %3350 = vmatprep.subr.mxu0 0.0
    %3351 = vmatpush1.msra.mxu0 0.0
    %3352 = vmatprep.subr.mxu0 0.0
    %3353 = vmatpush1.msra.mxu0 0.0
    %3354 = vmatprep.subr.mxu0 0.0
    %3355 = vmatpush1.msra.mxu0 0.0
    %3356 = vmatprep.subr.mxu0 0.0
    %3357 = vmatpush1.msra.mxu0 0.0
    %3358 = vmatprep.subr.mxu0 0.0
    %3359 = vmatpush1.msra.mxu0 0.0
    %3360 = vmatprep.subr.mxu0 0.0
    %3361 = vmatpush1.msra.mxu0 0.0
    %3362 = vmatprep.subr.mxu0 0.0
    %3363 = vmatpush1.msra.mxu0 0.0
    %3364 = vmatprep.subr.mxu0 0.0
    %3365 = vmatpush1.msra.mxu0 0.0
    %3366 = vmatprep.subr.mxu0 0.0
    %3367 = vmatpush1.msra.mxu0 %v3223
    %3368 = vmatprep.subr.mxu0 0.0
    %3369 = vmatpush2.msra.mxu0 0.0
    %3370 = vmatprep.subr.mxu0 0.0
    %3371 = vmatpush2.msra.mxu0 0.0
    %3372 = vmatprep.subr.mxu0 0.0
    %3373 = vmatpush2.msra.mxu0 0.0
    %3374 = vmatprep.subr.mxu0 0.0
    %3375 = vmatpush2.msra.mxu0 0.0
    %3376 = vmatprep.subr.mxu0 0.0
    %3377 = vmatpush2.msra.mxu0 0.0
    %3378 = vmatprep.subr.mxu0 0.0
    %3379 = vmatpush2.msra.mxu0 0.0
    %3380 = vmatprep.subr.mxu0 0.0
    %3381 = vmatpush2.msra.mxu0 0.0
    %3382 = vmatprep.subr.mxu0 0.0
    %3383 = vmatpush2.msra.mxu0 0.0
    %3384 = vmatprep.subr.mxu0 0.0
    %3385 = vmatpush2.msra.mxu0 0.0
    %3386 = vmatprep.subr.mxu0 0.0
    %3387 = vmatpush2.msra.mxu0 0.0
    %3388 = vmatprep.subr.mxu0 0.0
    %3389 = vmatpush2.msra.mxu0 0.0
    %3390 = vmatprep.subr.mxu0 0.0
    %3391 = vmatpush2.msra.mxu0 0.0
    %3392 = vmatprep.subr.mxu0 0.0
    %3393 = vmatpush2.msra.mxu0 0.0
    %3394 = vmatprep.subr.mxu0 0.0
    %3395 = vmatpush2.msra.mxu0 0.0
    %3396 = vmatprep.subr.mxu0 0.0
    %3397 = vmatpush2.msra.mxu0 0.0
    %3398 = vmatprep.subr.mxu0 0.0
    %3399 = vmatpush2.msra.mxu0 0.0
    %3400 = vmatprep.mubr.f32.mxu0 0.0
    %3401 = vmatmul.mubr.f32.gmra.mxu0 %v3325
    %v3402 = vpop.f32.mrf.mxu0
    %v3403 = vadd.f32 %v3306, %v3402
    %v3404 = vpop.f32.mrf.mxu0
    %3405 = vmatprep.mubr.f32.mxu0 0.0
    %3406 = vmatmul.mubr.f32.gmra.mxu0 %v3328
    %v3407 = vpop.f32.mrf.mxu0
    %v3408 = vadd.f32 %v3311, %v3407
    %v3409 = vpop.f32.mrf.mxu0
    %3410 = vmatprep.mubr.f32.mxu0 0.0
    %3411 = vmatmul.mubr.f32.gmra.mxu0 %v3331
    %v3412 = vpop.f32.mrf.mxu0
    %v3413 = vadd.f32 %v3316, %v3412
    %v3414 = vpop.f32.mrf.mxu0
    %3415 = vmatprep.mubr.f32.mxu0 0.0
    %3416 = vmatmul.mubr.f32.gmra.mxu0 %v3334
    %v3417 = vpop.f32.mrf.mxu0
    %v3418 = vadd.f32 %v3321, %v3417
    %v3419 = vpop.f32.mrf.mxu0
    %3420 = vdwg.mxu0
    %v3422 = vsel %vm638, %v2709, 0
    %v3425 = vsel %vm638, %v2782, 0
    %v3428 = vsel %vm638, %v2855, 0
    %v3431 = vsel %vm638, %v2928, 0
    %3433 = vmatprep.subr.mxu0 0.0
    %3434 = vmatpush1.msra.mxu0 0.0
    %3435 = vmatprep.subr.mxu0 0.0
    %3436 = vmatpush1.msra.mxu0 0.0
    %3437 = vmatprep.subr.mxu0 0.0
    %3438 = vmatpush1.msra.mxu0 0.0
    %3439 = vmatprep.subr.mxu0 0.0
    %3440 = vmatpush1.msra.mxu0 0.0
    %3441 = vmatprep.subr.mxu0 0.0
    %3442 = vmatpush1.msra.mxu0 0.0
    %3443 = vmatprep.subr.mxu0 0.0
    %3444 = vmatpush1.msra.mxu0 0.0
    %3445 = vmatprep.subr.mxu0 0.0
    %3446 = vmatpush1.msra.mxu0 0.0
    %3447 = vmatprep.subr.mxu0 0.0
    %3448 = vmatpush1.msra.mxu0 0.0
    %3449 = vmatprep.subr.mxu0 0.0
    %3450 = vmatpush1.msra.mxu0 0.0
    %3451 = vmatprep.subr.mxu0 0.0
    %3452 = vmatpush1.msra.mxu0 0.0
    %3453 = vmatprep.subr.mxu0 0.0
    %3454 = vmatpush1.msra.mxu0 0.0
    %3455 = vmatprep.subr.mxu0 0.0
    %3456 = vmatpush1.msra.mxu0 0.0
    %3457 = vmatprep.subr.mxu0 0.0
    %3458 = vmatpush1.msra.mxu0 0.0
    %3459 = vmatprep.subr.mxu0 0.0
    %3460 = vmatpush1.msra.mxu0 0.0
    %3461 = vmatprep.subr.mxu0 0.0
    %3462 = vmatpush1.msra.mxu0 0.0
    %3463 = vmatprep.subr.mxu0 0.0
    %3464 = vmatpush1.msra.mxu0 %v3225
    %3465 = vmatprep.subr.mxu0 0.0
    %3466 = vmatpush2.msra.mxu0 0.0
    %3467 = vmatprep.subr.mxu0 0.0
    %3468 = vmatpush2.msra.mxu0 0.0
    %3469 = vmatprep.subr.mxu0 0.0
    %3470 = vmatpush2.msra.mxu0 0.0
    %3471 = vmatprep.subr.mxu0 0.0
    %3472 = vmatpush2.msra.mxu0 0.0
    %3473 = vmatprep.subr.mxu0 0.0
    %3474 = vmatpush2.msra.mxu0 0.0
    %3475 = vmatprep.subr.mxu0 0.0
    %3476 = vmatpush2.msra.mxu0 0.0
    %3477 = vmatprep.subr.mxu0 0.0
    %3478 = vmatpush2.msra.mxu0 0.0
    %3479 = vmatprep.subr.mxu0 0.0
    %3480 = vmatpush2.msra.mxu0 0.0
    %3481 = vmatprep.subr.mxu0 0.0
    %3482 = vmatpush2.msra.mxu0 0.0
    %3483 = vmatprep.subr.mxu0 0.0
    %3484 = vmatpush2.msra.mxu0 0.0
    %3485 = vmatprep.subr.mxu0 0.0
    %3486 = vmatpush2.msra.mxu0 0.0
    %3487 = vmatprep.subr.mxu0 0.0
    %3488 = vmatpush2.msra.mxu0 0.0
    %3489 = vmatprep.subr.mxu0 0.0
    %3490 = vmatpush2.msra.mxu0 0.0
    %3491 = vmatprep.subr.mxu0 0.0
    %3492 = vmatpush2.msra.mxu0 0.0
    %3493 = vmatprep.subr.mxu0 0.0
    %3494 = vmatpush2.msra.mxu0 0.0
    %3495 = vmatprep.subr.mxu0 0.0
    %3496 = vmatpush2.msra.mxu0 0.0
    %3497 = vmatprep.mubr.f32.mxu0 0.0
    %3498 = vmatmul.mubr.f32.gmra.mxu0 %v3422
    %v3499 = vpop.f32.mrf.mxu0
    %v3500 = vadd.f32 0.0, %v3499
    %v3501 = vpop.f32.mrf.mxu0
    %3502 = vmatprep.mubr.f32.mxu0 0.0
    %3503 = vmatmul.mubr.f32.gmra.mxu0 %v3425
    %v3504 = vpop.f32.mrf.mxu0
    %v3505 = vadd.f32 0.0, %v3504
    %v3506 = vpop.f32.mrf.mxu0
    %3507 = vmatprep.mubr.f32.mxu0 0.0
    %3508 = vmatmul.mubr.f32.gmra.mxu0 %v3428
    %v3509 = vpop.f32.mrf.mxu0
    %v3510 = vadd.f32 0.0, %v3509
    %v3511 = vpop.f32.mrf.mxu0
    %3512 = vmatprep.mubr.f32.mxu0 0.0
    %3513 = vmatmul.mubr.f32.gmra.mxu0 %v3431
    %v3514 = vpop.f32.mrf.mxu0
    %v3515 = vadd.f32 0.0, %v3514
    %v3516 = vpop.f32.mrf.mxu0
    %3517 = vdwg.mxu0
    %v3518 = vadd.f32 %v3403, %v3500
    %v3519 = vadd.f32 %v3408, %v3505
    %v3520 = vadd.f32 %v3413, %v3510
    %v3521 = vadd.f32 %v3418, %v3515
    %v3523 = vsel %vm638, %v3001, 0
    %v3526 = vsel %vm638, %v3074, 0
    %v3529 = vsel %vm638, %v3147, 0
    %v3532 = vsel %vm638, %v3220, 0
    %3534 = vmatprep.subr.mxu0 0.0
    %3535 = vmatpush1.msra.mxu0 0.0
    %3536 = vmatprep.subr.mxu0 0.0
    %3537 = vmatpush1.msra.mxu0 0.0
    %3538 = vmatprep.subr.mxu0 0.0
    %3539 = vmatpush1.msra.mxu0 0.0
    %3540 = vmatprep.subr.mxu0 0.0
    %3541 = vmatpush1.msra.mxu0 0.0
    %3542 = vmatprep.subr.mxu0 0.0
    %3543 = vmatpush1.msra.mxu0 0.0
    %3544 = vmatprep.subr.mxu0 0.0
    %3545 = vmatpush1.msra.mxu0 0.0
    %3546 = vmatprep.subr.mxu0 0.0
    %3547 = vmatpush1.msra.mxu0 0.0
    %3548 = vmatprep.subr.mxu0 0.0
    %3549 = vmatpush1.msra.mxu0 0.0
    %3550 = vmatprep.subr.mxu0 0.0
    %3551 = vmatpush1.msra.mxu0 0.0
    %3552 = vmatprep.subr.mxu0 0.0
    %3553 = vmatpush1.msra.mxu0 0.0
    %3554 = vmatprep.subr.mxu0 0.0
    %3555 = vmatpush1.msra.mxu0 0.0
    %3556 = vmatprep.subr.mxu0 0.0
    %3557 = vmatpush1.msra.mxu0 0.0
    %3558 = vmatprep.subr.mxu0 0.0
    %3559 = vmatpush1.msra.mxu0 0.0
    %3560 = vmatprep.subr.mxu0 0.0
    %3561 = vmatpush1.msra.mxu0 0.0
    %3562 = vmatprep.subr.mxu0 0.0
    %3563 = vmatpush1.msra.mxu0 0.0
    %3564 = vmatprep.subr.mxu0 0.0
    %3565 = vmatpush1.msra.mxu0 %v3226
    %3566 = vmatprep.subr.mxu0 0.0
    %3567 = vmatpush2.msra.mxu0 0.0
    %3568 = vmatprep.subr.mxu0 0.0
    %3569 = vmatpush2.msra.mxu0 0.0
    %3570 = vmatprep.subr.mxu0 0.0
    %3571 = vmatpush2.msra.mxu0 0.0
    %3572 = vmatprep.subr.mxu0 0.0
    %3573 = vmatpush2.msra.mxu0 0.0
    %3574 = vmatprep.subr.mxu0 0.0
    %3575 = vmatpush2.msra.mxu0 0.0
    %3576 = vmatprep.subr.mxu0 0.0
    %3577 = vmatpush2.msra.mxu0 0.0
    %3578 = vmatprep.subr.mxu0 0.0
    %3579 = vmatpush2.msra.mxu0 0.0
    %3580 = vmatprep.subr.mxu0 0.0
    %3581 = vmatpush2.msra.mxu0 0.0
    %3582 = vmatprep.subr.mxu0 0.0
    %3583 = vmatpush2.msra.mxu0 0.0
    %3584 = vmatprep.subr.mxu0 0.0
    %3585 = vmatpush2.msra.mxu0 0.0
    %3586 = vmatprep.subr.mxu0 0.0
    %3587 = vmatpush2.msra.mxu0 0.0
    %3588 = vmatprep.subr.mxu0 0.0
    %3589 = vmatpush2.msra.mxu0 0.0
    %3590 = vmatprep.subr.mxu0 0.0
    %3591 = vmatpush2.msra.mxu0 0.0
    %3592 = vmatprep.subr.mxu0 0.0
    %3593 = vmatpush2.msra.mxu0 0.0
    %3594 = vmatprep.subr.mxu0 0.0
    %3595 = vmatpush2.msra.mxu0 0.0
    %3596 = vmatprep.subr.mxu0 0.0
    %3597 = vmatpush2.msra.mxu0 0.0
    %3598 = vmatprep.mubr.f32.mxu0 0.0
    %3599 = vmatmul.mubr.f32.gmra.mxu0 %v3523
    %v3600 = vpop.f32.mrf.mxu0
    %v3601 = vadd.f32 0.0, %v3600
    %v3602 = vpop.f32.mrf.mxu0
    %3603 = vmatprep.mubr.f32.mxu0 0.0
    %3604 = vmatmul.mubr.f32.gmra.mxu0 %v3526
    %v3605 = vpop.f32.mrf.mxu0
    %v3606 = vadd.f32 0.0, %v3605
    %v3607 = vpop.f32.mrf.mxu0
    %3608 = vmatprep.mubr.f32.mxu0 0.0
    %3609 = vmatmul.mubr.f32.gmra.mxu0 %v3529
    %v3610 = vpop.f32.mrf.mxu0
    %v3611 = vadd.f32 0.0, %v3610
    %v3612 = vpop.f32.mrf.mxu0
    %3613 = vmatprep.mubr.f32.mxu0 0.0
    %3614 = vmatmul.mubr.f32.gmra.mxu0 %v3532
    %v3615 = vpop.f32.mrf.mxu0
    %v3616 = vadd.f32 0.0, %v3615
    %v3617 = vpop.f32.mrf.mxu0
    %3618 = vdwg.mxu0
    %v3619 = vadd.f32 %v3518, %v3601
    %v3620 = vadd.f32 %v3519, %v3606
    %v3621 = vadd.f32 %v3520, %v3611
    %v3622 = vadd.f32 %v3521, %v3616
    %v3623 = vld [vmem:[%s11] sm:$0x1]
    %v3625 = vlaneseq
    %v3626 = vshrl.u32 %v3625, 7
    %v3627 = vsub.s32 0, %v3626
    %v3628 = vrot.slane %v3623, %v3627
    %v3630 = vadd.f32 %v3619, %v3628
    %v3631 = vadd.f32 %v3620, %v3628
    %v3632 = vadd.f32 %v3621, %v3628
    %v3633 = vadd.f32 %v3622, %v3628
    %v3634 = vadd.f32 %v211, %v3630
    %v3635 = vadd.f32 %v216, %v3631
    %v3636 = vadd.f32 %v221, %v3632
    %v3637 = vadd.f32 %v226, %v3633
    %v3638 = vld [vmem:[%s12] sm:$0x1]
    %v3639 = vld [vmem:[%s13] sm:$0x1]
    %v3640 = vsel %vm240, %v3634, 0.0
    %3641 = vadd.xlane.f32.xlu0 %v3640
    %v3642 = vpop.xlane.xlu0 %3641
    %v3643 = vsel %vm240, %v3635, 0.0
    %3644 = vadd.xlane.f32.xlu0 %v3643
    %v3645 = vpop.xlane.xlu0 %3644
    %v3646 = vsel %vm240, %v3636, 0.0
    %3647 = vadd.xlane.f32.xlu0 %v3646
    %v3648 = vpop.xlane.xlu0 %3647
    %v3649 = vsel %vm240, %v3637, 0.0
    %3650 = vadd.xlane.f32.xlu0 %v3649
    %v3651 = vpop.xlane.xlu0 %3650
    %v3652 = vrcp.pop 32.0
    %v3653 = vmul.f32 %v3642, %v3652
    %v3654 = vmul.f32 %v3645, %v3652
    %v3655 = vmul.f32 %v3648, %v3652
    %v3656 = vmul.f32 %v3651, %v3652
    %v3657 = vsub.f32 %v3634, %v3653
    %v3658 = vsub.f32 %v3635, %v3654
    %v3659 = vsub.f32 %v3636, %v3655
    %v3660 = vsub.f32 %v3637, %v3656
    %v3661 = vmul.f32 %v3657, %v3657
    %v3662 = vmul.f32 %v3658, %v3658
    %v3663 = vmul.f32 %v3659, %v3659
    %v3664 = vmul.f32 %v3660, %v3660
    %v3665 = vsel %vm240, %v3661, 0.0
    %3666 = vadd.xlane.f32.xlu0 %v3665
    %v3667 = vpop.xlane.xlu0 %3666
    %v3668 = vsel %vm240, %v3662, 0.0
    %3669 = vadd.xlane.f32.xlu0 %v3668
    %v3670 = vpop.xlane.xlu0 %3669
    %v3671 = vsel %vm240, %v3663, 0.0
    %3672 = vadd.xlane.f32.xlu0 %v3671
    %v3673 = vpop.xlane.xlu0 %3672
    %v3674 = vsel %vm240, %v3664, 0.0
    %3675 = vadd.xlane.f32.xlu0 %v3674
    %v3676 = vpop.xlane.xlu0 %3675
    %v3677 = vmul.f32 %v3667, %v3652
    %v3678 = vmul.f32 %v3670, %v3652
    %v3679 = vmul.f32 %v3673, %v3652
    %v3680 = vmul.f32 %v3676, %v3652
    %v3681 = vadd.f32 %v3677, 1e-05
    %v3682 = vadd.f32 %v3678, 1e-05
    %v3683 = vadd.f32 %v3679, 1e-05
    %v3684 = vadd.f32 %v3680, 1e-05
    %v3685 = vrsqrt.pop %v3681
    %v3686 = vrsqrt.pop %v3682
    %v3687 = vrsqrt.pop %v3683
    %v3688 = vrsqrt.pop %v3684
    %v3689 = vmul.f32 %v3657, %v3685
    %v3690 = vmul.f32 %v3658, %v3686
    %v3691 = vmul.f32 %v3659, %v3687
    %v3692 = vmul.f32 %v3660, %v3688
    %v3694 = vlaneseq
    %v3695 = vshrl.u32 %v3694, 7
    %v3696 = vsub.s32 0, %v3695
    %v3697 = vrot.slane %v3638, %v3696
    %v3699 = vmul.f32 %v3689, %v3697
    %v3700 = vmul.f32 %v3690, %v3697
    %v3701 = vmul.f32 %v3691, %v3697
    %v3702 = vmul.f32 %v3692, %v3697
    %v3704 = vlaneseq
    %v3705 = vshrl.u32 %v3704, 7
    %v3706 = vsub.s32 0, %v3705
    %v3707 = vrot.slane %v3639, %v3706
    %v3709 = vadd.f32 %v3699, %v3707
    %v3710 = vadd.f32 %v3700, %v3707
    %v3711 = vadd.f32 %v3701, %v3707
    %v3712 = vadd.f32 %v3702, %v3707
    %v3713 = vld [vmem:[%s14] sm:$0xff]
    %v3714 = vld [vmem:[%s14 + $0x8] sm:$0xff]
    %v3715 = vld [vmem:[%s14 + $0x10] sm:$0xff]
    %v3716 = vld [vmem:[%s14 + $0x18] sm:$0xff]
    %v3717 = vld [vmem:[%s15] sm:$0x1]
    %v3719 = vlaneseq
    %v3720 = vshrl.u32 %v3719, 7
    %v3721 = vsub.s32 0, %v3720
    %v3722 = vrot.slane %v3717, %v3721
    %v3725 = vsel %vm240, %v3709, 0
    %v3728 = vsel %vm240, %v3710, 0
    %v3731 = vsel %vm240, %v3711, 0
    %v3734 = vsel %vm240, %v3712, 0
    %3736 = vmatprep.subr.mxu0 0.0
    %3737 = vmatpush1.msra.mxu0 0.0
    %3738 = vmatprep.subr.mxu0 0.0
    %3739 = vmatpush1.msra.mxu0 0.0
    %3740 = vmatprep.subr.mxu0 0.0
    %3741 = vmatpush1.msra.mxu0 0.0
    %3742 = vmatprep.subr.mxu0 0.0
    %3743 = vmatpush1.msra.mxu0 0.0
    %3744 = vmatprep.subr.mxu0 0.0
    %3745 = vmatpush1.msra.mxu0 0.0
    %3746 = vmatprep.subr.mxu0 0.0
    %3747 = vmatpush1.msra.mxu0 0.0
    %3748 = vmatprep.subr.mxu0 0.0
    %3749 = vmatpush1.msra.mxu0 0.0
    %3750 = vmatprep.subr.mxu0 0.0
    %3751 = vmatpush1.msra.mxu0 0.0
    %3752 = vmatprep.subr.mxu0 0.0
    %3753 = vmatpush1.msra.mxu0 0.0
    %3754 = vmatprep.subr.mxu0 0.0
    %3755 = vmatpush1.msra.mxu0 0.0
    %3756 = vmatprep.subr.mxu0 0.0
    %3757 = vmatpush1.msra.mxu0 0.0
    %3758 = vmatprep.subr.mxu0 0.0
    %3759 = vmatpush1.msra.mxu0 0.0
    %3760 = vmatprep.subr.mxu0 0.0
    %3761 = vmatpush1.msra.mxu0 %v3716
    %3762 = vmatprep.subr.mxu0 0.0
    %3763 = vmatpush1.msra.mxu0 %v3715
    %3764 = vmatprep.subr.mxu0 0.0
    %3765 = vmatpush1.msra.mxu0 %v3714
    %3766 = vmatprep.subr.mxu0 0.0
    %3767 = vmatpush1.msra.mxu0 %v3713
    %3768 = vmatprep.subr.mxu0 0.0
    %3769 = vmatpush2.msra.mxu0 0.0
    %3770 = vmatprep.subr.mxu0 0.0
    %3771 = vmatpush2.msra.mxu0 0.0
    %3772 = vmatprep.subr.mxu0 0.0
    %3773 = vmatpush2.msra.mxu0 0.0
    %3774 = vmatprep.subr.mxu0 0.0
    %3775 = vmatpush2.msra.mxu0 0.0
    %3776 = vmatprep.subr.mxu0 0.0
    %3777 = vmatpush2.msra.mxu0 0.0
    %3778 = vmatprep.subr.mxu0 0.0
    %3779 = vmatpush2.msra.mxu0 0.0
    %3780 = vmatprep.subr.mxu0 0.0
    %3781 = vmatpush2.msra.mxu0 0.0
    %3782 = vmatprep.subr.mxu0 0.0
    %3783 = vmatpush2.msra.mxu0 0.0
    %3784 = vmatprep.subr.mxu0 0.0
    %3785 = vmatpush2.msra.mxu0 0.0
    %3786 = vmatprep.subr.mxu0 0.0
    %3787 = vmatpush2.msra.mxu0 0.0
    %3788 = vmatprep.subr.mxu0 0.0
    %3789 = vmatpush2.msra.mxu0 0.0
    %3790 = vmatprep.subr.mxu0 0.0
    %3791 = vmatpush2.msra.mxu0 0.0
    %3792 = vmatprep.subr.mxu0 0.0
    %3793 = vmatpush2.msra.mxu0 0.0
    %3794 = vmatprep.subr.mxu0 0.0
    %3795 = vmatpush2.msra.mxu0 0.0
    %3796 = vmatprep.subr.mxu0 0.0
    %3797 = vmatpush2.msra.mxu0 0.0
    %3798 = vmatprep.subr.mxu0 0.0
    %3799 = vmatpush2.msra.mxu0 0.0
    %3800 = vmatprep.mubr.f32.mxu0 0.0
    %3801 = vmatmul.mubr.f32.gmra.mxu0 %v3725
    %v3802 = vpop.f32.mrf.mxu0
    %v3803 = vadd.f32 %v3722, %v3802
    %v3804 = vpop.f32.mrf.mxu0
    %3805 = vmatprep.mubr.f32.mxu0 0.0
    %3806 = vmatmul.mubr.f32.gmra.mxu0 %v3728
    %v3807 = vpop.f32.mrf.mxu0
    %v3808 = vadd.f32 %v3722, %v3807
    %v3809 = vpop.f32.mrf.mxu0
    %3810 = vmatprep.mubr.f32.mxu0 0.0
    %3811 = vmatmul.mubr.f32.gmra.mxu0 %v3731
    %v3812 = vpop.f32.mrf.mxu0
    %v3813 = vadd.f32 %v3722, %v3812
    %v3814 = vpop.f32.mrf.mxu0
    %3815 = vmatprep.mubr.f32.mxu0 0.0
    %3816 = vmatmul.mubr.f32.gmra.mxu0 %v3734
    %v3817 = vpop.f32.mrf.mxu0
    %v3818 = vadd.f32 %v3722, %v3817
    %v3819 = vpop.f32.mrf.mxu0
    %3820 = vdwg.mxu0
    %v3821 = vmax.f32 %v3803, 0.0
    %v3822 = vmax.f32 %v3808, 0.0
    %v3823 = vmax.f32 %v3813, 0.0
    %v3824 = vmax.f32 %v3818, 0.0
    %v3825 = vld [vmem:[%s16] sm:$0xff]
    %v3826 = vld [vmem:[%s16 + $0x8] sm:$0xff]
    %v3827 = vld [vmem:[%s16 + $0x10] sm:$0xff]
    %v3828 = vld [vmem:[%s16 + $0x18] sm:$0xff]
    %v3829 = vld [vmem:[%s16 + $0x20] sm:$0xff]
    %v3830 = vld [vmem:[%s16 + $0x28] sm:$0xff]
    %v3831 = vld [vmem:[%s16 + $0x30] sm:$0xff]
    %v3832 = vld [vmem:[%s16 + $0x38] sm:$0xff]
    %v3833 = vld [vmem:[%s17] sm:$0x1]
    %v3835 = vlaneseq
    %v3836 = vshrl.u32 %v3835, 7
    %v3837 = vsub.s32 0, %v3836
    %v3838 = vrot.slane %v3833, %v3837
    %vm3840 = vcmask 523264
    %v3842 = vsel %vm3840, %v3821, 0
    %v3845 = vsel %vm3840, %v3822, 0
    %v3848 = vsel %vm3840, %v3823, 0
    %v3851 = vsel %vm3840, %v3824, 0
    %3853 = vmatprep.subr.mxu0 0.0
    %3854 = vmatpush1.msra.mxu0 0.0
    %3855 = vmatprep.subr.mxu0 0.0
    %3856 = vmatpush1.msra.mxu0 0.0
    %3857 = vmatprep.subr.mxu0 0.0
    %3858 = vmatpush1.msra.mxu0 0.0
    %3859 = vmatprep.subr.mxu0 0.0
    %3860 = vmatpush1.msra.mxu0 0.0
    %3861 = vmatprep.subr.mxu0 0.0
    %3862 = vmatpush1.msra.mxu0 0.0
    %3863 = vmatprep.subr.mxu0 0.0
    %3864 = vmatpush1.msra.mxu0 0.0
    %3865 = vmatprep.subr.mxu0 0.0
    %3866 = vmatpush1.msra.mxu0 0.0
    %3867 = vmatprep.subr.mxu0 0.0
    %3868 = vmatpush1.msra.mxu0 0.0
    %3869 = vmatprep.subr.mxu0 0.0
    %3870 = vmatpush1.msra.mxu0 %v3832
    %3871 = vmatprep.subr.mxu0 0.0
    %3872 = vmatpush1.msra.mxu0 %v3831
    %3873 = vmatprep.subr.mxu0 0.0
    %3874 = vmatpush1.msra.mxu0 %v3830
    %3875 = vmatprep.subr.mxu0 0.0
    %3876 = vmatpush1.msra.mxu0 %v3829
    %3877 = vmatprep.subr.mxu0 0.0
    %3878 = vmatpush1.msra.mxu0 %v3828
    %3879 = vmatprep.subr.mxu0 0.0
    %3880 = vmatpush1.msra.mxu0 %v3827
    %3881 = vmatprep.subr.mxu0 0.0
    %3882 = vmatpush1.msra.mxu0 %v3826
    %3883 = vmatprep.subr.mxu0 0.0
    %3884 = vmatpush1.msra.mxu0 %v3825
    %3885 = vmatprep.subr.mxu0 0.0
    %3886 = vmatpush2.msra.mxu0 0.0
    %3887 = vmatprep.subr.mxu0 0.0
    %3888 = vmatpush2.msra.mxu0 0.0
    %3889 = vmatprep.subr.mxu0 0.0
    %3890 = vmatpush2.msra.mxu0 0.0
    %3891 = vmatprep.subr.mxu0 0.0
    %3892 = vmatpush2.msra.mxu0 0.0
    %3893 = vmatprep.subr.mxu0 0.0
    %3894 = vmatpush2.msra.mxu0 0.0
    %3895 = vmatprep.subr.mxu0 0.0
    %3896 = vmatpush2.msra.mxu0 0.0
    %3897 = vmatprep.subr.mxu0 0.0
    %3898 = vmatpush2.msra.mxu0 0.0
    %3899 = vmatprep.subr.mxu0 0.0
    %3900 = vmatpush2.msra.mxu0 0.0
    %3901 = vmatprep.subr.mxu0 0.0
    %3902 = vmatpush2.msra.mxu0 0.0
    %3903 = vmatprep.subr.mxu0 0.0
    %3904 = vmatpush2.msra.mxu0 0.0
    %3905 = vmatprep.subr.mxu0 0.0
    %3906 = vmatpush2.msra.mxu0 0.0
    %3907 = vmatprep.subr.mxu0 0.0
    %3908 = vmatpush2.msra.mxu0 0.0
    %3909 = vmatprep.subr.mxu0 0.0
    %3910 = vmatpush2.msra.mxu0 0.0
    %3911 = vmatprep.subr.mxu0 0.0
    %3912 = vmatpush2.msra.mxu0 0.0
    %3913 = vmatprep.subr.mxu0 0.0
    %3914 = vmatpush2.msra.mxu0 0.0
    %3915 = vmatprep.subr.mxu0 0.0
    %3916 = vmatpush2.msra.mxu0 0.0
    %3917 = vmatprep.mubr.f32.mxu0 0.0
    %3918 = vmatmul.mubr.f32.gmra.mxu0 %v3842
    %v3919 = vpop.f32.mrf.mxu0
    %v3920 = vadd.f32 %v3838, %v3919
    %v3921 = vpop.f32.mrf.mxu0
    %3922 = vmatprep.mubr.f32.mxu0 0.0
    %3923 = vmatmul.mubr.f32.gmra.mxu0 %v3845
    %v3924 = vpop.f32.mrf.mxu0
    %v3925 = vadd.f32 %v3838, %v3924
    %v3926 = vpop.f32.mrf.mxu0
    %3927 = vmatprep.mubr.f32.mxu0 0.0
    %3928 = vmatmul.mubr.f32.gmra.mxu0 %v3848
    %v3929 = vpop.f32.mrf.mxu0
    %v3930 = vadd.f32 %v3838, %v3929
    %v3931 = vpop.f32.mrf.mxu0
    %3932 = vmatprep.mubr.f32.mxu0 0.0
    %3933 = vmatmul.mubr.f32.gmra.mxu0 %v3851
    %v3934 = vpop.f32.mrf.mxu0
    %v3935 = vadd.f32 %v3838, %v3934
    %v3936 = vpop.f32.mrf.mxu0
    %3937 = vdwg.mxu0
    %v3938 = vadd.f32 %v3709, %v3920
    %v3939 = vadd.f32 %v3710, %v3925
    %v3940 = vadd.f32 %v3711, %v3930
    %v3941 = vadd.f32 %v3712, %v3935
    %v3942 = vld [vmem:[%s18] sm:$0x1]
    %v3943 = vld [vmem:[%s19] sm:$0x1]
    %v3944 = vsel %vm240, %v3938, 0.0
    %3945 = vadd.xlane.f32.xlu0 %v3944
    %v3946 = vpop.xlane.xlu0 %3945
    %v3947 = vsel %vm240, %v3939, 0.0
    %3948 = vadd.xlane.f32.xlu0 %v3947
    %v3949 = vpop.xlane.xlu0 %3948
    %v3950 = vsel %vm240, %v3940, 0.0
    %3951 = vadd.xlane.f32.xlu0 %v3950
    %v3952 = vpop.xlane.xlu0 %3951
    %v3953 = vsel %vm240, %v3941, 0.0
    %3954 = vadd.xlane.f32.xlu0 %v3953
    %v3955 = vpop.xlane.xlu0 %3954
    %v3956 = vmul.f32 %v3946, %v3652
    %v3957 = vmul.f32 %v3949, %v3652
    %v3958 = vmul.f32 %v3952, %v3652
    %v3959 = vmul.f32 %v3955, %v3652
    %v3960 = vsub.f32 %v3938, %v3956
    %v3961 = vsub.f32 %v3939, %v3957
    %v3962 = vsub.f32 %v3940, %v3958
    %v3963 = vsub.f32 %v3941, %v3959
    %v3964 = vmul.f32 %v3960, %v3960
    %v3965 = vmul.f32 %v3961, %v3961
    %v3966 = vmul.f32 %v3962, %v3962
    %v3967 = vmul.f32 %v3963, %v3963
    %v3968 = vsel %vm240, %v3964, 0.0
    %3969 = vadd.xlane.f32.xlu0 %v3968
    %v3970 = vpop.xlane.xlu0 %3969
    %v3971 = vsel %vm240, %v3965, 0.0
    %3972 = vadd.xlane.f32.xlu0 %v3971
    %v3973 = vpop.xlane.xlu0 %3972
    %v3974 = vsel %vm240, %v3966, 0.0
    %3975 = vadd.xlane.f32.xlu0 %v3974
    %v3976 = vpop.xlane.xlu0 %3975
    %v3977 = vsel %vm240, %v3967, 0.0
    %3978 = vadd.xlane.f32.xlu0 %v3977
    %v3979 = vpop.xlane.xlu0 %3978
    %v3980 = vmul.f32 %v3970, %v3652
    %v3981 = vmul.f32 %v3973, %v3652
    %v3982 = vmul.f32 %v3976, %v3652
    %v3983 = vmul.f32 %v3979, %v3652
    %v3984 = vadd.f32 %v3980, 1e-05
    %v3985 = vadd.f32 %v3981, 1e-05
    %v3986 = vadd.f32 %v3982, 1e-05
    %v3987 = vadd.f32 %v3983, 1e-05
    %v3988 = vrsqrt.pop %v3984
    %v3989 = vrsqrt.pop %v3985
    %v3990 = vrsqrt.pop %v3986
    %v3991 = vrsqrt.pop %v3987
    %v3992 = vmul.f32 %v3960, %v3988
    %v3993 = vmul.f32 %v3961, %v3989
    %v3994 = vmul.f32 %v3962, %v3990
    %v3995 = vmul.f32 %v3963, %v3991
    %v3997 = vlaneseq
    %v3998 = vshrl.u32 %v3997, 7
    %v3999 = vsub.s32 0, %v3998
    %v4000 = vrot.slane %v3942, %v3999
    %v4002 = vmul.f32 %v3992, %v4000
    %v4003 = vmul.f32 %v3993, %v4000
    %v4004 = vmul.f32 %v3994, %v4000
    %v4005 = vmul.f32 %v3995, %v4000
    %v4007 = vlaneseq
    %v4008 = vshrl.u32 %v4007, 7
    %v4009 = vsub.s32 0, %v4008
    %v4010 = vrot.slane %v3943, %v4009
    %v4012 = vadd.f32 %v4002, %v4010
    %v4013 = vadd.f32 %v4003, %v4010
    %v4014 = vadd.f32 %v4004, %v4010
    %v4015 = vadd.f32 %v4005, %v4010
    %v4016 = vld [vmem:[%s20] sm:$0xff]
    %v4017 = vld [vmem:[%s20 + $0x8] sm:$0xff]
    %v4018 = vld [vmem:[%s20 + $0x10] sm:$0xff]
    %v4019 = vld [vmem:[%s20 + $0x18] sm:$0xff]
    %v4020 = vld [vmem:[%s22] sm:$0x1]
    %v4022 = vlaneseq
    %v4023 = vshrl.u32 %v4022, 7
    %v4024 = vsub.s32 0, %v4023
    %v4025 = vrot.slane %v4020, %v4024
    %v4028 = vsel %vm240, %v4012, 0
    %v4031 = vsel %vm240, %v4013, 0
    %v4034 = vsel %vm240, %v4014, 0
    %v4037 = vsel %vm240, %v4015, 0
    %4039 = vmatprep.subr.mxu0 0.0
    %4040 = vmatpush1.msra.mxu0 0.0
    %4041 = vmatprep.subr.mxu0 0.0
    %4042 = vmatpush1.msra.mxu0 0.0
    %4043 = vmatprep.subr.mxu0 0.0
    %4044 = vmatpush1.msra.mxu0 0.0
    %4045 = vmatprep.subr.mxu0 0.0
    %4046 = vmatpush1.msra.mxu0 0.0
    %4047 = vmatprep.subr.mxu0 0.0
    %4048 = vmatpush1.msra.mxu0 0.0
    %4049 = vmatprep.subr.mxu0 0.0
    %4050 = vmatpush1.msra.mxu0 0.0
    %4051 = vmatprep.subr.mxu0 0.0
    %4052 = vmatpush1.msra.mxu0 0.0
    %4053 = vmatprep.subr.mxu0 0.0
    %4054 = vmatpush1.msra.mxu0 0.0
    %4055 = vmatprep.subr.mxu0 0.0
    %4056 = vmatpush1.msra.mxu0 0.0
    %4057 = vmatprep.subr.mxu0 0.0
    %4058 = vmatpush1.msra.mxu0 0.0
    %4059 = vmatprep.subr.mxu0 0.0
    %4060 = vmatpush1.msra.mxu0 0.0
    %4061 = vmatprep.subr.mxu0 0.0
    %4062 = vmatpush1.msra.mxu0 0.0
    %4063 = vmatprep.subr.mxu0 0.0
    %4064 = vmatpush1.msra.mxu0 %v4019
    %4065 = vmatprep.subr.mxu0 0.0
    %4066 = vmatpush1.msra.mxu0 %v4018
    %4067 = vmatprep.subr.mxu0 0.0
    %4068 = vmatpush1.msra.mxu0 %v4017
    %4069 = vmatprep.subr.mxu0 0.0
    %4070 = vmatpush1.msra.mxu0 %v4016
    %4071 = vmatprep.subr.mxu0 0.0
    %4072 = vmatpush2.msra.mxu0 0.0
    %4073 = vmatprep.subr.mxu0 0.0
    %4074 = vmatpush2.msra.mxu0 0.0
    %4075 = vmatprep.subr.mxu0 0.0
    %4076 = vmatpush2.msra.mxu0 0.0
    %4077 = vmatprep.subr.mxu0 0.0
    %4078 = vmatpush2.msra.mxu0 0.0
    %4079 = vmatprep.subr.mxu0 0.0
    %4080 = vmatpush2.msra.mxu0 0.0
    %4081 = vmatprep.subr.mxu0 0.0
    %4082 = vmatpush2.msra.mxu0 0.0
    %4083 = vmatprep.subr.mxu0 0.0
    %4084 = vmatpush2.msra.mxu0 0.0
    %4085 = vmatprep.subr.mxu0 0.0
    %4086 = vmatpush2.msra.mxu0 0.0
    %4087 = vmatprep.subr.mxu0 0.0
    %4088 = vmatpush2.msra.mxu0 0.0
    %4089 = vmatprep.subr.mxu0 0.0
    %4090 = vmatpush2.msra.mxu0 0.0
    %4091 = vmatprep.subr.mxu0 0.0
    %4092 = vmatpush2.msra.mxu0 0.0
    %4093 = vmatprep.subr.mxu0 0.0
    %4094 = vmatpush2.msra.mxu0 0.0
    %4095 = vmatprep.subr.mxu0 0.0
    %4096 = vmatpush2.msra.mxu0 0.0
    %4097 = vmatprep.subr.mxu0 0.0
    %4098 = vmatpush2.msra.mxu0 0.0
    %4099 = vmatprep.subr.mxu0 0.0
    %4100 = vmatpush2.msra.mxu0 0.0
    %4101 = vmatprep.subr.mxu0 0.0
    %4102 = vmatpush2.msra.mxu0 0.0
    %4103 = vmatprep.mubr.f32.mxu0 0.0
    %4104 = vmatmul.mubr.f32.gmra.mxu0 %v4028
    %v4105 = vpop.f32.mrf.mxu0
    %v4106 = vadd.f32 %v4025, %v4105
    %v4107 = vpop.f32.mrf.mxu0
    %4108 = vmatprep.mubr.f32.mxu0 0.0
    %4109 = vmatmul.mubr.f32.gmra.mxu0 %v4031
    %v4110 = vpop.f32.mrf.mxu0
    %v4111 = vadd.f32 %v4025, %v4110
    %v4112 = vpop.f32.mrf.mxu0
    %4113 = vmatprep.mubr.f32.mxu0 0.0
    %4114 = vmatmul.mubr.f32.gmra.mxu0 %v4034
    %v4115 = vpop.f32.mrf.mxu0
    %v4116 = vadd.f32 %v4025, %v4115
    %v4117 = vpop.f32.mrf.mxu0
    %4118 = vmatprep.mubr.f32.mxu0 0.0
    %4119 = vmatmul.mubr.f32.gmra.mxu0 %v4037
    %v4120 = vpop.f32.mrf.mxu0
    %v4121 = vadd.f32 %v4025, %v4120
    %v4122 = vpop.f32.mrf.mxu0
    %4123 = vdwg.mxu0
    %v4124 = vld [vmem:[%s21] sm:$0xff]
    %v4125 = vld [vmem:[%s21 + $0x8] sm:$0xff]
    %v4126 = vld [vmem:[%s21 + $0x10] sm:$0xff]
    %v4127 = vld [vmem:[%s21 + $0x18] sm:$0xff]
    %v4128 = vld [vmem:[%s23] sm:$0x1]
    %v4129 = vld [vmem:[%s2] sm:$0xf]
    %v4131 = vlaneseq
    %v4132 = vshrl.u32 %v4131, 7
    %v4133 = vsub.s32 0, %v4132
    %v4134 = vrot.slane %v4128, %v4133
    %v4137 = vsel %vm240, 0.0, 0
    %4139 = vmatprep.subr.mxu0 0.0
    %4140 = vmatpush1.msra.mxu0 0.0
    %4141 = vmatprep.subr.mxu0 0.0
    %4142 = vmatpush1.msra.mxu0 0.0
    %4143 = vmatprep.subr.mxu0 0.0
    %4144 = vmatpush1.msra.mxu0 0.0
    %4145 = vmatprep.subr.mxu0 0.0
    %4146 = vmatpush1.msra.mxu0 0.0
    %4147 = vmatprep.subr.mxu0 0.0
    %4148 = vmatpush1.msra.mxu0 0.0
    %4149 = vmatprep.subr.mxu0 0.0
    %4150 = vmatpush1.msra.mxu0 0.0
    %4151 = vmatprep.subr.mxu0 0.0
    %4152 = vmatpush1.msra.mxu0 0.0
    %4153 = vmatprep.subr.mxu0 0.0
    %4154 = vmatpush1.msra.mxu0 0.0
    %4155 = vmatprep.subr.mxu0 0.0
    %4156 = vmatpush1.msra.mxu0 0.0
    %4157 = vmatprep.subr.mxu0 0.0
    %4158 = vmatpush1.msra.mxu0 0.0
    %4159 = vmatprep.subr.mxu0 0.0
    %4160 = vmatpush1.msra.mxu0 0.0
    %4161 = vmatprep.subr.mxu0 0.0
    %4162 = vmatpush1.msra.mxu0 0.0
    %4163 = vmatprep.subr.mxu0 0.0
    %4164 = vmatpush1.msra.mxu0 %v4127
    %4165 = vmatprep.subr.mxu0 0.0
    %4166 = vmatpush1.msra.mxu0 %v4126
    %4167 = vmatprep.subr.mxu0 0.0
    %4168 = vmatpush1.msra.mxu0 %v4125
    %4169 = vmatprep.subr.mxu0 0.0
    %4170 = vmatpush1.msra.mxu0 %v4124
    %4171 = vmatprep.subr.mxu0 0.0
    %4172 = vmatpush2.msra.mxu0 0.0
    %4173 = vmatprep.subr.mxu0 0.0
    %4174 = vmatpush2.msra.mxu0 0.0
    %4175 = vmatprep.subr.mxu0 0.0
    %4176 = vmatpush2.msra.mxu0 0.0
    %4177 = vmatprep.subr.mxu0 0.0
    %4178 = vmatpush2.msra.mxu0 0.0
    %4179 = vmatprep.subr.mxu0 0.0
    %4180 = vmatpush2.msra.mxu0 0.0
    %4181 = vmatprep.subr.mxu0 0.0
    %4182 = vmatpush2.msra.mxu0 0.0
    %4183 = vmatprep.subr.mxu0 0.0
    %4184 = vmatpush2.msra.mxu0 0.0
    %4185 = vmatprep.subr.mxu0 0.0
    %4186 = vmatpush2.msra.mxu0 0.0
    %4187 = vmatprep.subr.mxu0 0.0
    %4188 = vmatpush2.msra.mxu0 0.0
    %4189 = vmatprep.subr.mxu0 0.0
    %4190 = vmatpush2.msra.mxu0 0.0
    %4191 = vmatprep.subr.mxu0 0.0
    %4192 = vmatpush2.msra.mxu0 0.0
    %4193 = vmatprep.subr.mxu0 0.0
    %4194 = vmatpush2.msra.mxu0 0.0
    %4195 = vmatprep.subr.mxu0 0.0
    %4196 = vmatpush2.msra.mxu0 0.0
    %4197 = vmatprep.subr.mxu0 0.0
    %4198 = vmatpush2.msra.mxu0 0.0
    %4199 = vmatprep.subr.mxu0 0.0
    %4200 = vmatpush2.msra.mxu0 0.0
    %4201 = vmatprep.subr.mxu0 0.0
    %4202 = vmatpush2.msra.mxu0 0.0
    %4203 = vmatprep.mubr.f32.mxu0 0.0
    %4204 = vmatmul.mubr.f32.gmra.mxu0 %v4137
    %v4205 = vpop.f32.mrf.mxu0
    %v4206 = vadd.f32 %v4134, %v4205
    %v4207 = vpop.f32.mrf.mxu0
    %4208 = vdwg.mxu0
    %v4210 = vrot.slane %v4206, 1
    %v4211 = vrot.slane %v4206, 2
    %v4212 = vrot.slane %v4206, 3
    %v4217 = vadd.f32 %v4106, %v4206
    %v4218 = vadd.f32 %v4111, %v4210
    %v4219 = vadd.f32 %v4116, %v4211
    %v4220 = vadd.f32 %v4121, %v4212
    %v4221 = vxor.u32 %v4217, 2147483648
    %v4222 = vxor.u32 %v4218, 2147483648
    %v4223 = vxor.u32 %v4219, 2147483648
    %v4224 = vxor.u32 %v4220, 2147483648
    %v4225 = vmul.f32 %v4221, 1.442695
    %v4226 = vpow.pop %v4225
    %v4227 = vmul.f32 %v4222, 1.442695
    %v4228 = vpow.pop %v4227
    %v4229 = vmul.f32 %v4223, 1.442695
    %v4230 = vpow.pop %v4229
    %v4231 = vmul.f32 %v4224, 1.442695
    %v4232 = vpow.pop %v4231
    %v4233 = vadd.f32 %v4226, 1.0
    %v4234 = vadd.f32 %v4228, 1.0
    %v4235 = vadd.f32 %v4230, 1.0
    %v4236 = vadd.f32 %v4232, 1.0
    %v4237 = vrcp.pop %v4233
    %v4238 = vmul.f32 1.0, %v4237
    %v4239 = vrcp.pop %v4234
    %v4240 = vmul.f32 1.0, %v4239
    %v4241 = vrcp.pop %v4235
    %v4242 = vmul.f32 1.0, %v4241
    %v4243 = vrcp.pop %v4236
    %v4244 = vmul.f32 1.0, %v4243
    %4245 = vrot.lane.b32.xlu0 %v4206, 64
    %v4246 = vpop.permute.xlu0 %4245
    %4247 = vrot.lane.b32.xlu0 %v4210, 64
    %v4248 = vpop.permute.xlu0 %4247
    %4249 = vrot.lane.b32.xlu0 %v4211, 64
    %v4250 = vpop.permute.xlu0 %4249
    %4251 = vrot.lane.b32.xlu0 %v4212, 64
    %v4252 = vpop.permute.xlu0 %4251
    %v4257 = vmul.f32 %v4238, %v4246
    %v4258 = vmul.f32 %v4240, %v4248
    %v4259 = vmul.f32 %v4242, %v4250
    %v4260 = vmul.f32 %v4244, %v4252
    %4265 = vrot.lane.b32.xlu0 %v4257, 64
    %v4266 = vpop.permute.xlu0 %4265
    %4267 = vrot.lane.b32.xlu0 %v4258, 64
    %v4268 = vpop.permute.xlu0 %4267
    %4269 = vrot.lane.b32.xlu0 %v4259, 64
    %v4270 = vpop.permute.xlu0 %4269
    %4271 = vrot.lane.b32.xlu0 %v4260, 64
    %v4272 = vpop.permute.xlu0 %4271
    %v4277 = vadd.f32 %v4106, %v4266
    %v4278 = vadd.f32 %v4111, %v4268
    %v4279 = vadd.f32 %v4116, %v4270
    %v4280 = vadd.f32 %v4121, %v4272
    %v4281 = vtanh.pop %v4277
    %v4282 = vtanh.pop %v4278
    %v4283 = vtanh.pop %v4279
    %v4284 = vtanh.pop %v4280
    %v4285 = vsub.f32 1.0, %v4238
    %v4286 = vsub.f32 1.0, %v4240
    %v4287 = vsub.f32 1.0, %v4242
    %v4288 = vsub.f32 1.0, %v4244
    %4293 = vrot.lane.b32.xlu0 %v4281, 96
    %v4294 = vpop.permute.xlu0 %4293
    %4295 = vrot.lane.b32.xlu0 %v4282, 96
    %v4296 = vpop.permute.xlu0 %4295
    %4297 = vrot.lane.b32.xlu0 %v4283, 96
    %v4298 = vpop.permute.xlu0 %4297
    %4299 = vrot.lane.b32.xlu0 %v4284, 96
    %v4300 = vpop.permute.xlu0 %4299
    %v4305 = vmul.f32 %v4285, %v4294
    %v4306 = vmul.f32 %v4286, %v4296
    %v4307 = vmul.f32 %v4287, %v4298
    %v4308 = vmul.f32 %v4288, %v4300
    %v4309 = vmul.f32 %v4238, 0.0
    %v4310 = vmul.f32 %v4240, 0.0
    %v4311 = vmul.f32 %v4242, 0.0
    %v4312 = vmul.f32 %v4244, 0.0
    %v4313 = vadd.f32 %v4305, %v4309
    %v4314 = vadd.f32 %v4306, %v4310
    %v4315 = vadd.f32 %v4307, %v4311
    %v4316 = vadd.f32 %v4308, %v4312
    %vm4317 = vcmp.gt.s32.totalorder %v4129, 0
    %v4318 = vsel %vm4317, 1, 0
    %4319 = vset.pattern.permute.xlu0 0
    %4320 = vperm.xlu0 %4319, %v4318
    %v4321 = vpop.permute.xlu0 %4320
    %vm4322 = vcmp.eq.s32.totalorder %v4321, 1
    %v4327 = vrot.slane %v4314, 7
    %vm4328 = vcmask 1041409
    %v4329 = vsel %vm4328, %v4327, %v4313
    %v4330 = vrot.slane %v4315, 6
    %vm4331 = vcmask 1042434
    %v4332 = vsel %vm4331, %v4330, %v4329
    %v4333 = vrot.slane %v4316, 5
    %vm4334 = vcmask 1043459
    %v4335 = vsel %vm4334, %v4333, %v4332
    %4336 = vrot.lane.b32.xlu0 %v4335, 96
    %v4337 = vpop.permute.xlu0 %4336
    %v4339 = vsel %vm4322, %v4337, 0.0
    %v4341 = vsel %vm240, %v4339, 0
    %4343 = vmatprep.subr.mxu0 0.0
    %4344 = vmatpush1.msra.mxu0 0.0
    %4345 = vmatprep.subr.mxu0 0.0
    %4346 = vmatpush1.msra.mxu0 0.0
    %4347 = vmatprep.subr.mxu0 0.0
    %4348 = vmatpush1.msra.mxu0 0.0
    %4349 = vmatprep.subr.mxu0 0.0
    %4350 = vmatpush1.msra.mxu0 0.0
    %4351 = vmatprep.subr.mxu0 0.0
    %4352 = vmatpush1.msra.mxu0 0.0
    %4353 = vmatprep.subr.mxu0 0.0
    %4354 = vmatpush1.msra.mxu0 0.0
    %4355 = vmatprep.subr.mxu0 0.0
    %4356 = vmatpush1.msra.mxu0 0.0
    %4357 = vmatprep.subr.mxu0 0.0
    %4358 = vmatpush1.msra.mxu0 0.0
    %4359 = vmatprep.subr.mxu0 0.0
    %4360 = vmatpush1.msra.mxu0 0.0
    %4361 = vmatprep.subr.mxu0 0.0
    %4362 = vmatpush1.msra.mxu0 0.0
    %4363 = vmatprep.subr.mxu0 0.0
    %4364 = vmatpush1.msra.mxu0 0.0
    %4365 = vmatprep.subr.mxu0 0.0
    %4366 = vmatpush1.msra.mxu0 0.0
    %4367 = vmatprep.subr.mxu0 0.0
    %4368 = vmatpush1.msra.mxu0 %v4127
    %4369 = vmatprep.subr.mxu0 0.0
    %4370 = vmatpush1.msra.mxu0 %v4126
    %4371 = vmatprep.subr.mxu0 0.0
    %4372 = vmatpush1.msra.mxu0 %v4125
    %4373 = vmatprep.subr.mxu0 0.0
    %4374 = vmatpush1.msra.mxu0 %v4124
    %4375 = vmatprep.subr.mxu0 0.0
    %4376 = vmatpush2.msra.mxu0 0.0
    %4377 = vmatprep.subr.mxu0 0.0
    %4378 = vmatpush2.msra.mxu0 0.0
    %4379 = vmatprep.subr.mxu0 0.0
    %4380 = vmatpush2.msra.mxu0 0.0
    %4381 = vmatprep.subr.mxu0 0.0
    %4382 = vmatpush2.msra.mxu0 0.0
    %4383 = vmatprep.subr.mxu0 0.0
    %4384 = vmatpush2.msra.mxu0 0.0
    %4385 = vmatprep.subr.mxu0 0.0
    %4386 = vmatpush2.msra.mxu0 0.0
    %4387 = vmatprep.subr.mxu0 0.0
    %4388 = vmatpush2.msra.mxu0 0.0
    %4389 = vmatprep.subr.mxu0 0.0
    %4390 = vmatpush2.msra.mxu0 0.0
    %4391 = vmatprep.subr.mxu0 0.0
    %4392 = vmatpush2.msra.mxu0 0.0
    %4393 = vmatprep.subr.mxu0 0.0
    %4394 = vmatpush2.msra.mxu0 0.0
    %4395 = vmatprep.subr.mxu0 0.0
    %4396 = vmatpush2.msra.mxu0 0.0
    %4397 = vmatprep.subr.mxu0 0.0
    %4398 = vmatpush2.msra.mxu0 0.0
    %4399 = vmatprep.subr.mxu0 0.0
    %4400 = vmatpush2.msra.mxu0 0.0
    %4401 = vmatprep.subr.mxu0 0.0
    %4402 = vmatpush2.msra.mxu0 0.0
    %4403 = vmatprep.subr.mxu0 0.0
    %4404 = vmatpush2.msra.mxu0 0.0
    %4405 = vmatprep.subr.mxu0 0.0
    %4406 = vmatpush2.msra.mxu0 0.0
    %4407 = vmatprep.mubr.f32.mxu0 0.0
    %4408 = vmatmul.mubr.f32.gmra.mxu0 %v4341
    %v4409 = vpop.f32.mrf.mxu0
    %v4410 = vadd.f32 %v4134, %v4409
    %v4411 = vpop.f32.mrf.mxu0
    %4412 = vdwg.mxu0
    %v4414 = vrot.slane %v4410, 7
    %v4415 = vrot.slane %v4410, 1
    %v4416 = vrot.slane %v4410, 2
    %v4421 = vadd.f32 %v4106, %v4414
    %v4422 = vadd.f32 %v4111, %v4410
    %v4423 = vadd.f32 %v4116, %v4415
    %v4424 = vadd.f32 %v4121, %v4416
    %v4425 = vxor.u32 %v4421, 2147483648
    %v4426 = vxor.u32 %v4422, 2147483648
    %v4427 = vxor.u32 %v4423, 2147483648
    %v4428 = vxor.u32 %v4424, 2147483648
    %v4429 = vmul.f32 %v4425, 1.442695
    %v4430 = vpow.pop %v4429
    %v4431 = vmul.f32 %v4426, 1.442695
    %v4432 = vpow.pop %v4431
    %v4433 = vmul.f32 %v4427, 1.442695
    %v4434 = vpow.pop %v4433
    %v4435 = vmul.f32 %v4428, 1.442695
    %v4436 = vpow.pop %v4435
    %v4437 = vadd.f32 %v4430, 1.0
    %v4438 = vadd.f32 %v4432, 1.0
    %v4439 = vadd.f32 %v4434, 1.0
    %v4440 = vadd.f32 %v4436, 1.0
    %v4441 = vrcp.pop %v4437
    %v4442 = vmul.f32 1.0, %v4441
    %v4443 = vrcp.pop %v4438
    %v4444 = vmul.f32 1.0, %v4443
    %v4445 = vrcp.pop %v4439
    %v4446 = vmul.f32 1.0, %v4445
    %v4447 = vrcp.pop %v4440
    %v4448 = vmul.f32 1.0, %v4447
    %4449 = vrot.lane.b32.xlu0 %v4414, 64
    %v4450 = vpop.permute.xlu0 %4449
    %4451 = vrot.lane.b32.xlu0 %v4410, 64
    %v4452 = vpop.permute.xlu0 %4451
    %4453 = vrot.lane.b32.xlu0 %v4415, 64
    %v4454 = vpop.permute.xlu0 %4453
    %4455 = vrot.lane.b32.xlu0 %v4416, 64
    %v4456 = vpop.permute.xlu0 %4455
    %v4461 = vmul.f32 %v4442, %v4450
    %v4462 = vmul.f32 %v4444, %v4452
    %v4463 = vmul.f32 %v4446, %v4454
    %v4464 = vmul.f32 %v4448, %v4456
    %4469 = vrot.lane.b32.xlu0 %v4461, 64
    %v4470 = vpop.permute.xlu0 %4469
    %4471 = vrot.lane.b32.xlu0 %v4462, 64
    %v4472 = vpop.permute.xlu0 %4471
    %4473 = vrot.lane.b32.xlu0 %v4463, 64
    %v4474 = vpop.permute.xlu0 %4473
    %4475 = vrot.lane.b32.xlu0 %v4464, 64
    %v4476 = vpop.permute.xlu0 %4475
    %v4481 = vadd.f32 %v4106, %v4470
    %v4482 = vadd.f32 %v4111, %v4472
    %v4483 = vadd.f32 %v4116, %v4474
    %v4484 = vadd.f32 %v4121, %v4476
    %v4485 = vtanh.pop %v4481
    %v4486 = vtanh.pop %v4482
    %v4487 = vtanh.pop %v4483
    %v4488 = vtanh.pop %v4484
    %v4489 = vsub.f32 1.0, %v4442
    %v4490 = vsub.f32 1.0, %v4444
    %v4491 = vsub.f32 1.0, %v4446
    %v4492 = vsub.f32 1.0, %v4448
    %4497 = vrot.lane.b32.xlu0 %v4485, 96
    %v4498 = vpop.permute.xlu0 %4497
    %4499 = vrot.lane.b32.xlu0 %v4486, 96
    %v4500 = vpop.permute.xlu0 %4499
    %4501 = vrot.lane.b32.xlu0 %v4487, 96
    %v4502 = vpop.permute.xlu0 %4501
    %4503 = vrot.lane.b32.xlu0 %v4488, 96
    %v4504 = vpop.permute.xlu0 %4503
    %v4509 = vmul.f32 %v4489, %v4498
    %v4510 = vmul.f32 %v4490, %v4500
    %v4511 = vmul.f32 %v4491, %v4502
    %v4512 = vmul.f32 %v4492, %v4504
    %v4513 = vrot.slane %v4339, 7
    %v4514 = vrot.slane %v4339, 1
    %v4515 = vrot.slane %v4339, 2
    %4516 = vrot.lane.b32.xlu0 %v4513, 32
    %v4517 = vpop.permute.xlu0 %4516
    %4518 = vrot.lane.b32.xlu0 %v4339, 32
    %v4519 = vpop.permute.xlu0 %4518
    %4520 = vrot.lane.b32.xlu0 %v4514, 32
    %v4521 = vpop.permute.xlu0 %4520
    %4522 = vrot.lane.b32.xlu0 %v4515, 32
    %v4523 = vpop.permute.xlu0 %4522
    %v4528 = vmul.f32 %v4442, %v4517
    %v4529 = vmul.f32 %v4444, %v4519
    %v4530 = vmul.f32 %v4446, %v4521
    %v4531 = vmul.f32 %v4448, %v4523
    %v4532 = vadd.f32 %v4509, %v4528
    %v4533 = vadd.f32 %v4510, %v4529
    %v4534 = vadd.f32 %v4511, %v4530
    %v4535 = vadd.f32 %v4512, %v4531
    %vm4536 = vcmp.gt.s32.totalorder %v4129, 1
    %v4537 = vsel %vm4536, 1, 0
    %4538 = vset.pattern.permute.xlu0 0
    %4539 = vperm.xlu0 %4538, %v4537
    %v4540 = vpop.permute.xlu0 %4539
    %vm4541 = vcmp.eq.s32.totalorder %v4540, 1
    %v4546 = vrot.slane %v4532, 1
    %v4547 = vsel %vm4328, %v4533, %v4546
    %v4548 = vrot.slane %v4534, 7
    %v4549 = vsel %vm4331, %v4548, %v4547
    %v4550 = vrot.slane %v4535, 6
    %v4551 = vsel %vm4334, %v4550, %v4549
    %4552 = vrot.lane.b32.xlu0 %v4551, 96
    %v4553 = vpop.permute.xlu0 %4552
    %v4555 = vsel %vm4541, %v4553, %v4339
    %v4557 = vsel %vm240, %v4555, 0
    %4559 = vmatprep.subr.mxu0 0.0
    %4560 = vmatpush1.msra.mxu0 0.0
    %4561 = vmatprep.subr.mxu0 0.0
    %4562 = vmatpush1.msra.mxu0 0.0
    %4563 = vmatprep.subr.mxu0 0.0
    %4564 = vmatpush1.msra.mxu0 0.0
    %4565 = vmatprep.subr.mxu0 0.0
    %4566 = vmatpush1.msra.mxu0 0.0
    %4567 = vmatprep.subr.mxu0 0.0
    %4568 = vmatpush1.msra.mxu0 0.0
    %4569 = vmatprep.subr.mxu0 0.0
    %4570 = vmatpush1.msra.mxu0 0.0
    %4571 = vmatprep.subr.mxu0 0.0
    %4572 = vmatpush1.msra.mxu0 0.0
    %4573 = vmatprep.subr.mxu0 0.0
    %4574 = vmatpush1.msra.mxu0 0.0
    %4575 = vmatprep.subr.mxu0 0.0
    %4576 = vmatpush1.msra.mxu0 0.0
    %4577 = vmatprep.subr.mxu0 0.0
    %4578 = vmatpush1.msra.mxu0 0.0
    %4579 = vmatprep.subr.mxu0 0.0
    %4580 = vmatpush1.msra.mxu0 0.0
    %4581 = vmatprep.subr.mxu0 0.0
    %4582 = vmatpush1.msra.mxu0 0.0
    %4583 = vmatprep.subr.mxu0 0.0
    %4584 = vmatpush1.msra.mxu0 %v4127
    %4585 = vmatprep.subr.mxu0 0.0
    %4586 = vmatpush1.msra.mxu0 %v4126
    %4587 = vmatprep.subr.mxu0 0.0
    %4588 = vmatpush1.msra.mxu0 %v4125
    %4589 = vmatprep.subr.mxu0 0.0
    %4590 = vmatpush1.msra.mxu0 %v4124
    %4591 = vmatprep.subr.mxu0 0.0
    %4592 = vmatpush2.msra.mxu0 0.0
    %4593 = vmatprep.subr.mxu0 0.0
    %4594 = vmatpush2.msra.mxu0 0.0
    %4595 = vmatprep.subr.mxu0 0.0
    %4596 = vmatpush2.msra.mxu0 0.0
    %4597 = vmatprep.subr.mxu0 0.0
    %4598 = vmatpush2.msra.mxu0 0.0
    %4599 = vmatprep.subr.mxu0 0.0
    %4600 = vmatpush2.msra.mxu0 0.0
    %4601 = vmatprep.subr.mxu0 0.0
    %4602 = vmatpush2.msra.mxu0 0.0
    %4603 = vmatprep.subr.mxu0 0.0
    %4604 = vmatpush2.msra.mxu0 0.0
    %4605 = vmatprep.subr.mxu0 0.0
    %4606 = vmatpush2.msra.mxu0 0.0
    %4607 = vmatprep.subr.mxu0 0.0
    %4608 = vmatpush2.msra.mxu0 0.0
    %4609 = vmatprep.subr.mxu0 0.0
    %4610 = vmatpush2.msra.mxu0 0.0
    %4611 = vmatprep.subr.mxu0 0.0
    %4612 = vmatpush2.msra.mxu0 0.0
    %4613 = vmatprep.subr.mxu0 0.0
    %4614 = vmatpush2.msra.mxu0 0.0
    %4615 = vmatprep.subr.mxu0 0.0
    %4616 = vmatpush2.msra.mxu0 0.0
    %4617 = vmatprep.subr.mxu0 0.0
    %4618 = vmatpush2.msra.mxu0 0.0
    %4619 = vmatprep.subr.mxu0 0.0
    %4620 = vmatpush2.msra.mxu0 0.0
    %4621 = vmatprep.subr.mxu0 0.0
    %4622 = vmatpush2.msra.mxu0 0.0
    %4623 = vmatprep.mubr.f32.mxu0 0.0
    %4624 = vmatmul.mubr.f32.gmra.mxu0 %v4557
    %v4625 = vpop.f32.mrf.mxu0
    %v4626 = vadd.f32 %v4134, %v4625
    %v4627 = vpop.f32.mrf.mxu0
    %4628 = vdwg.mxu0
    %v4630 = vrot.slane %v4626, 6
    %v4631 = vrot.slane %v4626, 7
    %v4632 = vrot.slane %v4626, 1
    %v4637 = vadd.f32 %v4106, %v4630
    %v4638 = vadd.f32 %v4111, %v4631
    %v4639 = vadd.f32 %v4116, %v4626
    %v4640 = vadd.f32 %v4121, %v4632
    %v4641 = vxor.u32 %v4637, 2147483648
    %v4642 = vxor.u32 %v4638, 2147483648
    %v4643 = vxor.u32 %v4639, 2147483648
    %v4644 = vxor.u32 %v4640, 2147483648
    %v4645 = vmul.f32 %v4641, 1.442695
    %v4646 = vpow.pop %v4645
    %v4647 = vmul.f32 %v4642, 1.442695
    %v4648 = vpow.pop %v4647
    %v4649 = vmul.f32 %v4643, 1.442695
    %v4650 = vpow.pop %v4649
    %v4651 = vmul.f32 %v4644, 1.442695
    %v4652 = vpow.pop %v4651
    %v4653 = vadd.f32 %v4646, 1.0
    %v4654 = vadd.f32 %v4648, 1.0
    %v4655 = vadd.f32 %v4650, 1.0
    %v4656 = vadd.f32 %v4652, 1.0
    %v4657 = vrcp.pop %v4653
    %v4658 = vmul.f32 1.0, %v4657
    %v4659 = vrcp.pop %v4654
    %v4660 = vmul.f32 1.0, %v4659
    %v4661 = vrcp.pop %v4655
    %v4662 = vmul.f32 1.0, %v4661
    %v4663 = vrcp.pop %v4656
    %v4664 = vmul.f32 1.0, %v4663
    %4665 = vrot.lane.b32.xlu0 %v4630, 64
    %v4666 = vpop.permute.xlu0 %4665
    %4667 = vrot.lane.b32.xlu0 %v4631, 64
    %v4668 = vpop.permute.xlu0 %4667
    %4669 = vrot.lane.b32.xlu0 %v4626, 64
    %v4670 = vpop.permute.xlu0 %4669
    %4671 = vrot.lane.b32.xlu0 %v4632, 64
    %v4672 = vpop.permute.xlu0 %4671
    %v4677 = vmul.f32 %v4658, %v4666
    %v4678 = vmul.f32 %v4660, %v4668
    %v4679 = vmul.f32 %v4662, %v4670
    %v4680 = vmul.f32 %v4664, %v4672
    %4685 = vrot.lane.b32.xlu0 %v4677, 64
    %v4686 = vpop.permute.xlu0 %4685
    %4687 = vrot.lane.b32.xlu0 %v4678, 64
    %v4688 = vpop.permute.xlu0 %4687
    %4689 = vrot.lane.b32.xlu0 %v4679, 64
    %v4690 = vpop.permute.xlu0 %4689
    %4691 = vrot.lane.b32.xlu0 %v4680, 64
    %v4692 = vpop.permute.xlu0 %4691
    %v4697 = vadd.f32 %v4106, %v4686
    %v4698 = vadd.f32 %v4111, %v4688
    %v4699 = vadd.f32 %v4116, %v4690
    %v4700 = vadd.f32 %v4121, %v4692
    %v4701 = vtanh.pop %v4697
    %v4702 = vtanh.pop %v4698
    %v4703 = vtanh.pop %v4699
    %v4704 = vtanh.pop %v4700
    %v4705 = vsub.f32 1.0, %v4658
    %v4706 = vsub.f32 1.0, %v4660
    %v4707 = vsub.f32 1.0, %v4662
    %v4708 = vsub.f32 1.0, %v4664
    %4713 = vrot.lane.b32.xlu0 %v4701, 96
    %v4714 = vpop.permute.xlu0 %4713
    %4715 = vrot.lane.b32.xlu0 %v4702, 96
    %v4716 = vpop.permute.xlu0 %4715
    %4717 = vrot.lane.b32.xlu0 %v4703, 96
    %v4718 = vpop.permute.xlu0 %4717
    %4719 = vrot.lane.b32.xlu0 %v4704, 96
    %v4720 = vpop.permute.xlu0 %4719
    %v4725 = vmul.f32 %v4705, %v4714
    %v4726 = vmul.f32 %v4706, %v4716
    %v4727 = vmul.f32 %v4707, %v4718
    %v4728 = vmul.f32 %v4708, %v4720
    %v4729 = vrot.slane %v4555, 6
    %v4730 = vrot.slane %v4555, 7
    %v4731 = vrot.slane %v4555, 1
    %4732 = vrot.lane.b32.xlu0 %v4729, 32
    %v4733 = vpop.permute.xlu0 %4732
    %4734 = vrot.lane.b32.xlu0 %v4730, 32
    %v4735 = vpop.permute.xlu0 %4734
    %4736 = vrot.lane.b32.xlu0 %v4555, 32
    %v4737 = vpop.permute.xlu0 %4736
    %4738 = vrot.lane.b32.xlu0 %v4731, 32
    %v4739 = vpop.permute.xlu0 %4738
    %v4744 = vmul.f32 %v4658, %v4733
    %v4745 = vmul.f32 %v4660, %v4735
    %v4746 = vmul.f32 %v4662, %v4737
    %v4747 = vmul.f32 %v4664, %v4739
    %v4748 = vadd.f32 %v4725, %v4744
    %v4749 = vadd.f32 %v4726, %v4745
    %v4750 = vadd.f32 %v4727, %v4746
    %v4751 = vadd.f32 %v4728, %v4747
    %vm4752 = vcmp.gt.s32.totalorder %v4129, 2
    %v4753 = vsel %vm4752, 1, 0
    %4754 = vset.pattern.permute.xlu0 0
    %4755 = vperm.xlu0 %4754, %v4753
    %v4756 = vpop.permute.xlu0 %4755
    %vm4757 = vcmp.eq.s32.totalorder %v4756, 1
    %v4762 = vrot.slane %v4748, 2
    %v4763 = vrot.slane %v4749, 1
    %v4764 = vsel %vm4328, %v4763, %v4762
    %v4765 = vsel %vm4331, %v4750, %v4764
    %v4766 = vrot.slane %v4751, 7
    %v4767 = vsel %vm4334, %v4766, %v4765
    %4768 = vrot.lane.b32.xlu0 %v4767, 96
    %v4769 = vpop.permute.xlu0 %4768
    %v4771 = vsel %vm4757, %v4769, %v4555
    %v4773 = vsel %vm240, %v4771, 0
    %4775 = vmatprep.subr.mxu0 0.0
    %4776 = vmatpush1.msra.mxu0 0.0
    %4777 = vmatprep.subr.mxu0 0.0
    %4778 = vmatpush1.msra.mxu0 0.0
    %4779 = vmatprep.subr.mxu0 0.0
    %4780 = vmatpush1.msra.mxu0 0.0
    %4781 = vmatprep.subr.mxu0 0.0
    %4782 = vmatpush1.msra.mxu0 0.0
    %4783 = vmatprep.subr.mxu0 0.0
    %4784 = vmatpush1.msra.mxu0 0.0
    %4785 = vmatprep.subr.mxu0 0.0
    %4786 = vmatpush1.msra.mxu0 0.0
    %4787 = vmatprep.subr.mxu0 0.0
    %4788 = vmatpush1.msra.mxu0 0.0
    %4789 = vmatprep.subr.mxu0 0.0
    %4790 = vmatpush1.msra.mxu0 0.0
    %4791 = vmatprep.subr.mxu0 0.0
    %4792 = vmatpush1.msra.mxu0 0.0
    %4793 = vmatprep.subr.mxu0 0.0
    %4794 = vmatpush1.msra.mxu0 0.0
    %4795 = vmatprep.subr.mxu0 0.0
    %4796 = vmatpush1.msra.mxu0 0.0
    %4797 = vmatprep.subr.mxu0 0.0
    %4798 = vmatpush1.msra.mxu0 0.0
    %4799 = vmatprep.subr.mxu0 0.0
    %4800 = vmatpush1.msra.mxu0 %v4127
    %4801 = vmatprep.subr.mxu0 0.0
    %4802 = vmatpush1.msra.mxu0 %v4126
    %4803 = vmatprep.subr.mxu0 0.0
    %4804 = vmatpush1.msra.mxu0 %v4125
    %4805 = vmatprep.subr.mxu0 0.0
    %4806 = vmatpush1.msra.mxu0 %v4124
    %4807 = vmatprep.subr.mxu0 0.0
    %4808 = vmatpush2.msra.mxu0 0.0
    %4809 = vmatprep.subr.mxu0 0.0
    %4810 = vmatpush2.msra.mxu0 0.0
    %4811 = vmatprep.subr.mxu0 0.0
    %4812 = vmatpush2.msra.mxu0 0.0
    %4813 = vmatprep.subr.mxu0 0.0
    %4814 = vmatpush2.msra.mxu0 0.0
    %4815 = vmatprep.subr.mxu0 0.0
    %4816 = vmatpush2.msra.mxu0 0.0
    %4817 = vmatprep.subr.mxu0 0.0
    %4818 = vmatpush2.msra.mxu0 0.0
    %4819 = vmatprep.subr.mxu0 0.0
    %4820 = vmatpush2.msra.mxu0 0.0
    %4821 = vmatprep.subr.mxu0 0.0
    %4822 = vmatpush2.msra.mxu0 0.0
    %4823 = vmatprep.subr.mxu0 0.0
    %4824 = vmatpush2.msra.mxu0 0.0
    %4825 = vmatprep.subr.mxu0 0.0
    %4826 = vmatpush2.msra.mxu0 0.0
    %4827 = vmatprep.subr.mxu0 0.0
    %4828 = vmatpush2.msra.mxu0 0.0
    %4829 = vmatprep.subr.mxu0 0.0
    %4830 = vmatpush2.msra.mxu0 0.0
    %4831 = vmatprep.subr.mxu0 0.0
    %4832 = vmatpush2.msra.mxu0 0.0
    %4833 = vmatprep.subr.mxu0 0.0
    %4834 = vmatpush2.msra.mxu0 0.0
    %4835 = vmatprep.subr.mxu0 0.0
    %4836 = vmatpush2.msra.mxu0 0.0
    %4837 = vmatprep.subr.mxu0 0.0
    %4838 = vmatpush2.msra.mxu0 0.0
    %4839 = vmatprep.mubr.f32.mxu0 0.0
    %4840 = vmatmul.mubr.f32.gmra.mxu0 %v4773
    %v4841 = vpop.f32.mrf.mxu0
    %v4842 = vadd.f32 %v4134, %v4841
    %v4843 = vpop.f32.mrf.mxu0
    %4844 = vdwg.mxu0
    %v4846 = vrot.slane %v4842, 5
    %v4847 = vrot.slane %v4842, 6
    %v4848 = vrot.slane %v4842, 7
    %v4853 = vadd.f32 %v4106, %v4846
    %v4854 = vadd.f32 %v4111, %v4847
    %v4855 = vadd.f32 %v4116, %v4848
    %v4856 = vadd.f32 %v4121, %v4842
    %v4857 = vxor.u32 %v4853, 2147483648
    %v4858 = vxor.u32 %v4854, 2147483648
    %v4859 = vxor.u32 %v4855, 2147483648
    %v4860 = vxor.u32 %v4856, 2147483648
    %v4861 = vmul.f32 %v4857, 1.442695
    %v4862 = vpow.pop %v4861
    %v4863 = vmul.f32 %v4858, 1.442695
    %v4864 = vpow.pop %v4863
    %v4865 = vmul.f32 %v4859, 1.442695
    %v4866 = vpow.pop %v4865
    %v4867 = vmul.f32 %v4860, 1.442695
    %v4868 = vpow.pop %v4867
    %v4869 = vadd.f32 %v4862, 1.0
    %v4870 = vadd.f32 %v4864, 1.0
    %v4871 = vadd.f32 %v4866, 1.0
    %v4872 = vadd.f32 %v4868, 1.0
    %v4873 = vrcp.pop %v4869
    %v4874 = vmul.f32 1.0, %v4873
    %v4875 = vrcp.pop %v4870
    %v4876 = vmul.f32 1.0, %v4875
    %v4877 = vrcp.pop %v4871
    %v4878 = vmul.f32 1.0, %v4877
    %v4879 = vrcp.pop %v4872
    %v4880 = vmul.f32 1.0, %v4879
    %4881 = vrot.lane.b32.xlu0 %v4846, 64
    %v4882 = vpop.permute.xlu0 %4881
    %4883 = vrot.lane.b32.xlu0 %v4847, 64
    %v4884 = vpop.permute.xlu0 %4883
    %4885 = vrot.lane.b32.xlu0 %v4848, 64
    %v4886 = vpop.permute.xlu0 %4885
    %4887 = vrot.lane.b32.xlu0 %v4842, 64
    %v4888 = vpop.permute.xlu0 %4887
    %v4893 = vmul.f32 %v4874, %v4882
    %v4894 = vmul.f32 %v4876, %v4884
    %v4895 = vmul.f32 %v4878, %v4886
    %v4896 = vmul.f32 %v4880, %v4888
    %4901 = vrot.lane.b32.xlu0 %v4893, 64
    %v4902 = vpop.permute.xlu0 %4901
    %4903 = vrot.lane.b32.xlu0 %v4894, 64
    %v4904 = vpop.permute.xlu0 %4903
    %4905 = vrot.lane.b32.xlu0 %v4895, 64
    %v4906 = vpop.permute.xlu0 %4905
    %4907 = vrot.lane.b32.xlu0 %v4896, 64
    %v4908 = vpop.permute.xlu0 %4907
    %v4913 = vadd.f32 %v4106, %v4902
    %v4914 = vadd.f32 %v4111, %v4904
    %v4915 = vadd.f32 %v4116, %v4906
    %v4916 = vadd.f32 %v4121, %v4908
    %v4917 = vtanh.pop %v4913
    %v4918 = vtanh.pop %v4914
    %v4919 = vtanh.pop %v4915
    %v4920 = vtanh.pop %v4916
    %v4921 = vsub.f32 1.0, %v4874
    %v4922 = vsub.f32 1.0, %v4876
    %v4923 = vsub.f32 1.0, %v4878
    %v4924 = vsub.f32 1.0, %v4880
    %4929 = vrot.lane.b32.xlu0 %v4917, 96
    %v4930 = vpop.permute.xlu0 %4929
    %4931 = vrot.lane.b32.xlu0 %v4918, 96
    %v4932 = vpop.permute.xlu0 %4931
    %4933 = vrot.lane.b32.xlu0 %v4919, 96
    %v4934 = vpop.permute.xlu0 %4933
    %4935 = vrot.lane.b32.xlu0 %v4920, 96
    %v4936 = vpop.permute.xlu0 %4935
    %v4941 = vmul.f32 %v4921, %v4930
    %v4942 = vmul.f32 %v4922, %v4932
    %v4943 = vmul.f32 %v4923, %v4934
    %v4944 = vmul.f32 %v4924, %v4936
    %v4945 = vrot.slane %v4771, 5
    %v4946 = vrot.slane %v4771, 6
    %v4947 = vrot.slane %v4771, 7
    %4948 = vrot.lane.b32.xlu0 %v4945, 32
    %v4949 = vpop.permute.xlu0 %4948
    %4950 = vrot.lane.b32.xlu0 %v4946, 32
    %v4951 = vpop.permute.xlu0 %4950
    %4952 = vrot.lane.b32.xlu0 %v4947, 32
    %v4953 = vpop.permute.xlu0 %4952
    %4954 = vrot.lane.b32.xlu0 %v4771, 32
    %v4955 = vpop.permute.xlu0 %4954
    %v4960 = vmul.f32 %v4874, %v4949
    %v4961 = vmul.f32 %v4876, %v4951
    %v4962 = vmul.f32 %v4878, %v4953
    %v4963 = vmul.f32 %v4880, %v4955
    %v4964 = vadd.f32 %v4941, %v4960
    %v4965 = vadd.f32 %v4942, %v4961
    %v4966 = vadd.f32 %v4943, %v4962
    %v4967 = vadd.f32 %v4944, %v4963
    %vm4968 = vcmp.gt.s32.totalorder %v4129, 3
    %v4969 = vsel %vm4968, 1, 0
    %4970 = vset.pattern.permute.xlu0 0
    %4971 = vperm.xlu0 %4970, %v4969
    %v4972 = vpop.permute.xlu0 %4971
    %vm4973 = vcmp.eq.s32.totalorder %v4972, 1
    %v4978 = vrot.slane %v4964, 3
    %v4979 = vrot.slane %v4965, 2
    %v4980 = vsel %vm4328, %v4979, %v4978
    %v4981 = vrot.slane %v4966, 1
    %v4982 = vsel %vm4331, %v4981, %v4980
    %v4983 = vsel %vm4334, %v4967, %v4982
    %4984 = vrot.lane.b32.xlu0 %v4983, 96
    %v4985 = vpop.permute.xlu0 %4984
    %v4987 = vsel %vm4973, %v4985, %v4771
    %v4989 = vsel %vm240, %v4987, 0
    %4991 = vmatprep.subr.mxu0 0.0
    %4992 = vmatpush1.msra.mxu0 0.0
    %4993 = vmatprep.subr.mxu0 0.0
    %4994 = vmatpush1.msra.mxu0 0.0
    %4995 = vmatprep.subr.mxu0 0.0
    %4996 = vmatpush1.msra.mxu0 0.0
    %4997 = vmatprep.subr.mxu0 0.0
    %4998 = vmatpush1.msra.mxu0 0.0
    %4999 = vmatprep.subr.mxu0 0.0
    %5000 = vmatpush1.msra.mxu0 0.0
    %5001 = vmatprep.subr.mxu0 0.0
    %5002 = vmatpush1.msra.mxu0 0.0
    %5003 = vmatprep.subr.mxu0 0.0
    %5004 = vmatpush1.msra.mxu0 0.0
    %5005 = vmatprep.subr.mxu0 0.0
    %5006 = vmatpush1.msra.mxu0 0.0
    %5007 = vmatprep.subr.mxu0 0.0
    %5008 = vmatpush1.msra.mxu0 0.0
    %5009 = vmatprep.subr.mxu0 0.0
    %5010 = vmatpush1.msra.mxu0 0.0
    %5011 = vmatprep.subr.mxu0 0.0
    %5012 = vmatpush1.msra.mxu0 0.0
    %5013 = vmatprep.subr.mxu0 0.0
    %5014 = vmatpush1.msra.mxu0 0.0
    %5015 = vmatprep.subr.mxu0 0.0
    %5016 = vmatpush1.msra.mxu0 %v4127
    %5017 = vmatprep.subr.mxu0 0.0
    %5018 = vmatpush1.msra.mxu0 %v4126
    %5019 = vmatprep.subr.mxu0 0.0
    %5020 = vmatpush1.msra.mxu0 %v4125
    %5021 = vmatprep.subr.mxu0 0.0
    %5022 = vmatpush1.msra.mxu0 %v4124
    %5023 = vmatprep.subr.mxu0 0.0
    %5024 = vmatpush2.msra.mxu0 0.0
    %5025 = vmatprep.subr.mxu0 0.0
    %5026 = vmatpush2.msra.mxu0 0.0
    %5027 = vmatprep.subr.mxu0 0.0
    %5028 = vmatpush2.msra.mxu0 0.0
    %5029 = vmatprep.subr.mxu0 0.0
    %5030 = vmatpush2.msra.mxu0 0.0
    %5031 = vmatprep.subr.mxu0 0.0
    %5032 = vmatpush2.msra.mxu0 0.0
    %5033 = vmatprep.subr.mxu0 0.0
    %5034 = vmatpush2.msra.mxu0 0.0
    %5035 = vmatprep.subr.mxu0 0.0
    %5036 = vmatpush2.msra.mxu0 0.0
    %5037 = vmatprep.subr.mxu0 0.0
    %5038 = vmatpush2.msra.mxu0 0.0
    %5039 = vmatprep.subr.mxu0 0.0
    %5040 = vmatpush2.msra.mxu0 0.0
    %5041 = vmatprep.subr.mxu0 0.0
    %5042 = vmatpush2.msra.mxu0 0.0
    %5043 = vmatprep.subr.mxu0 0.0
    %5044 = vmatpush2.msra.mxu0 0.0
    %5045 = vmatprep.subr.mxu0 0.0
    %5046 = vmatpush2.msra.mxu0 0.0
    %5047 = vmatprep.subr.mxu0 0.0
    %5048 = vmatpush2.msra.mxu0 0.0
    %5049 = vmatprep.subr.mxu0 0.0
    %5050 = vmatpush2.msra.mxu0 0.0
    %5051 = vmatprep.subr.mxu0 0.0
    %5052 = vmatpush2.msra.mxu0 0.0
    %5053 = vmatprep.subr.mxu0 0.0
    %5054 = vmatpush2.msra.mxu0 0.0
    %5055 = vmatprep.mubr.f32.mxu0 0.0
    %5056 = vmatmul.mubr.f32.gmra.mxu0 %v4989
    %v5057 = vpop.f32.mrf.mxu0
    %v5058 = vadd.f32 %v4134, %v5057
    %v5059 = vpop.f32.mrf.mxu0
    %5060 = vdwg.mxu0
    %v5062 = vrot.slane %v5058, 4
    %v5063 = vrot.slane %v5058, 5
    %v5064 = vrot.slane %v5058, 6
    %v5065 = vrot.slane %v5058, 7
    %v5070 = vadd.f32 %v4106, %v5062
    %v5071 = vadd.f32 %v4111, %v5063
    %v5072 = vadd.f32 %v4116, %v5064
    %v5073 = vadd.f32 %v4121, %v5065
    %v5074 = vxor.u32 %v5070, 2147483648
    %v5075 = vxor.u32 %v5071, 2147483648
    %v5076 = vxor.u32 %v5072, 2147483648
    %v5077 = vxor.u32 %v5073, 2147483648
    %v5078 = vmul.f32 %v5074, 1.442695
    %v5079 = vpow.pop %v5078
    %v5080 = vmul.f32 %v5075, 1.442695
    %v5081 = vpow.pop %v5080
    %v5082 = vmul.f32 %v5076, 1.442695
    %v5083 = vpow.pop %v5082
    %v5084 = vmul.f32 %v5077, 1.442695
    %v5085 = vpow.pop %v5084
    %v5086 = vadd.f32 %v5079, 1.0
    %v5087 = vadd.f32 %v5081, 1.0
    %v5088 = vadd.f32 %v5083, 1.0
    %v5089 = vadd.f32 %v5085, 1.0
    %v5090 = vrcp.pop %v5086
    %v5091 = vmul.f32 1.0, %v5090
    %v5092 = vrcp.pop %v5087
    %v5093 = vmul.f32 1.0, %v5092
    %v5094 = vrcp.pop %v5088
    %v5095 = vmul.f32 1.0, %v5094
    %v5096 = vrcp.pop %v5089
    %v5097 = vmul.f32 1.0, %v5096
    %5098 = vrot.lane.b32.xlu0 %v5062, 64
    %v5099 = vpop.permute.xlu0 %5098
    %5100 = vrot.lane.b32.xlu0 %v5063, 64
    %v5101 = vpop.permute.xlu0 %5100
    %5102 = vrot.lane.b32.xlu0 %v5064, 64
    %v5103 = vpop.permute.xlu0 %5102
    %5104 = vrot.lane.b32.xlu0 %v5065, 64
    %v5105 = vpop.permute.xlu0 %5104
    %v5110 = vmul.f32 %v5091, %v5099
    %v5111 = vmul.f32 %v5093, %v5101
    %v5112 = vmul.f32 %v5095, %v5103
    %v5113 = vmul.f32 %v5097, %v5105
    %5118 = vrot.lane.b32.xlu0 %v5110, 64
    %v5119 = vpop.permute.xlu0 %5118
    %5120 = vrot.lane.b32.xlu0 %v5111, 64
    %v5121 = vpop.permute.xlu0 %5120
    %5122 = vrot.lane.b32.xlu0 %v5112, 64
    %v5123 = vpop.permute.xlu0 %5122
    %5124 = vrot.lane.b32.xlu0 %v5113, 64
    %v5125 = vpop.permute.xlu0 %5124
    %v5130 = vadd.f32 %v4106, %v5119
    %v5131 = vadd.f32 %v4111, %v5121
    %v5132 = vadd.f32 %v4116, %v5123
    %v5133 = vadd.f32 %v4121, %v5125
    %v5134 = vtanh.pop %v5130
    %v5135 = vtanh.pop %v5131
    %v5136 = vtanh.pop %v5132
    %v5137 = vtanh.pop %v5133
    %v5138 = vsub.f32 1.0, %v5091
    %v5139 = vsub.f32 1.0, %v5093
    %v5140 = vsub.f32 1.0, %v5095
    %v5141 = vsub.f32 1.0, %v5097
    %5146 = vrot.lane.b32.xlu0 %v5134, 96
    %v5147 = vpop.permute.xlu0 %5146
    %5148 = vrot.lane.b32.xlu0 %v5135, 96
    %v5149 = vpop.permute.xlu0 %5148
    %5150 = vrot.lane.b32.xlu0 %v5136, 96
    %v5151 = vpop.permute.xlu0 %5150
    %5152 = vrot.lane.b32.xlu0 %v5137, 96
    %v5153 = vpop.permute.xlu0 %5152
    %v5158 = vmul.f32 %v5138, %v5147
    %v5159 = vmul.f32 %v5139, %v5149
    %v5160 = vmul.f32 %v5140, %v5151
    %v5161 = vmul.f32 %v5141, %v5153
    %v5162 = vrot.slane %v4987, 4
    %v5163 = vrot.slane %v4987, 5
    %v5164 = vrot.slane %v4987, 6
    %v5165 = vrot.slane %v4987, 7
    %5166 = vrot.lane.b32.xlu0 %v5162, 32
    %v5167 = vpop.permute.xlu0 %5166
    %5168 = vrot.lane.b32.xlu0 %v5163, 32
    %v5169 = vpop.permute.xlu0 %5168
    %5170 = vrot.lane.b32.xlu0 %v5164, 32
    %v5171 = vpop.permute.xlu0 %5170
    %5172 = vrot.lane.b32.xlu0 %v5165, 32
    %v5173 = vpop.permute.xlu0 %5172
    %v5178 = vmul.f32 %v5091, %v5167
    %v5179 = vmul.f32 %v5093, %v5169
    %v5180 = vmul.f32 %v5095, %v5171
    %v5181 = vmul.f32 %v5097, %v5173
    %v5182 = vadd.f32 %v5158, %v5178
    %v5183 = vadd.f32 %v5159, %v5179
    %v5184 = vadd.f32 %v5160, %v5180
    %v5185 = vadd.f32 %v5161, %v5181
    %vm5186 = vcmp.gt.s32.totalorder %v4129, 4
    %v5187 = vsel %vm5186, 1, 0
    %5188 = vset.pattern.permute.xlu0 0
    %5189 = vperm.xlu0 %5188, %v5187
    %v5190 = vpop.permute.xlu0 %5189
    %vm5191 = vcmp.eq.s32.totalorder %v5190, 1
    %v5196 = vrot.slane %v5182, 4
    %v5197 = vrot.slane %v5183, 3
    %v5198 = vsel %vm4328, %v5197, %v5196
    %v5199 = vrot.slane %v5184, 2
    %v5200 = vsel %vm4331, %v5199, %v5198
    %v5201 = vrot.slane %v5185, 1
    %v5202 = vsel %vm4334, %v5201, %v5200
    %5203 = vrot.lane.b32.xlu0 %v5202, 96
    %v5204 = vpop.permute.xlu0 %5203
    %v5206 = vsel %vm5191, %v5204, %v4987
    %v5208 = vsel %vm240, %v5206, 0
    %5210 = vmatprep.subr.mxu0 0.0
    %5211 = vmatpush1.msra.mxu0 0.0
    %5212 = vmatprep.subr.mxu0 0.0
    %5213 = vmatpush1.msra.mxu0 0.0
    %5214 = vmatprep.subr.mxu0 0.0
    %5215 = vmatpush1.msra.mxu0 0.0
    %5216 = vmatprep.subr.mxu0 0.0
    %5217 = vmatpush1.msra.mxu0 0.0
    %5218 = vmatprep.subr.mxu0 0.0
    %5219 = vmatpush1.msra.mxu0 0.0
    %5220 = vmatprep.subr.mxu0 0.0
    %5221 = vmatpush1.msra.mxu0 0.0
    %5222 = vmatprep.subr.mxu0 0.0
    %5223 = vmatpush1.msra.mxu0 0.0
    %5224 = vmatprep.subr.mxu0 0.0
    %5225 = vmatpush1.msra.mxu0 0.0
    %5226 = vmatprep.subr.mxu0 0.0
    %5227 = vmatpush1.msra.mxu0 0.0
    %5228 = vmatprep.subr.mxu0 0.0
    %5229 = vmatpush1.msra.mxu0 0.0
    %5230 = vmatprep.subr.mxu0 0.0
    %5231 = vmatpush1.msra.mxu0 0.0
    %5232 = vmatprep.subr.mxu0 0.0
    %5233 = vmatpush1.msra.mxu0 0.0
    %5234 = vmatprep.subr.mxu0 0.0
    %5235 = vmatpush1.msra.mxu0 %v4127
    %5236 = vmatprep.subr.mxu0 0.0
    %5237 = vmatpush1.msra.mxu0 %v4126
    %5238 = vmatprep.subr.mxu0 0.0
    %5239 = vmatpush1.msra.mxu0 %v4125
    %5240 = vmatprep.subr.mxu0 0.0
    %5241 = vmatpush1.msra.mxu0 %v4124
    %5242 = vmatprep.subr.mxu0 0.0
    %5243 = vmatpush2.msra.mxu0 0.0
    %5244 = vmatprep.subr.mxu0 0.0
    %5245 = vmatpush2.msra.mxu0 0.0
    %5246 = vmatprep.subr.mxu0 0.0
    %5247 = vmatpush2.msra.mxu0 0.0
    %5248 = vmatprep.subr.mxu0 0.0
    %5249 = vmatpush2.msra.mxu0 0.0
    %5250 = vmatprep.subr.mxu0 0.0
    %5251 = vmatpush2.msra.mxu0 0.0
    %5252 = vmatprep.subr.mxu0 0.0
    %5253 = vmatpush2.msra.mxu0 0.0
    %5254 = vmatprep.subr.mxu0 0.0
    %5255 = vmatpush2.msra.mxu0 0.0
    %5256 = vmatprep.subr.mxu0 0.0
    %5257 = vmatpush2.msra.mxu0 0.0
    %5258 = vmatprep.subr.mxu0 0.0
    %5259 = vmatpush2.msra.mxu0 0.0
    %5260 = vmatprep.subr.mxu0 0.0
    %5261 = vmatpush2.msra.mxu0 0.0
    %5262 = vmatprep.subr.mxu0 0.0
    %5263 = vmatpush2.msra.mxu0 0.0
    %5264 = vmatprep.subr.mxu0 0.0
    %5265 = vmatpush2.msra.mxu0 0.0
    %5266 = vmatprep.subr.mxu0 0.0
    %5267 = vmatpush2.msra.mxu0 0.0
    %5268 = vmatprep.subr.mxu0 0.0
    %5269 = vmatpush2.msra.mxu0 0.0
    %5270 = vmatprep.subr.mxu0 0.0
    %5271 = vmatpush2.msra.mxu0 0.0
    %5272 = vmatprep.subr.mxu0 0.0
    %5273 = vmatpush2.msra.mxu0 0.0
    %5274 = vmatprep.mubr.f32.mxu0 0.0
    %5275 = vmatmul.mubr.f32.gmra.mxu0 %v5208
    %v5276 = vpop.f32.mrf.mxu0
    %v5277 = vadd.f32 %v4134, %v5276
    %v5278 = vpop.f32.mrf.mxu0
    %5279 = vdwg.mxu0
    %v5281 = vrot.slane %v5277, 3
    %v5282 = vrot.slane %v5277, 4
    %v5283 = vrot.slane %v5277, 5
    %v5284 = vrot.slane %v5277, 6
    %v5289 = vadd.f32 %v4106, %v5281
    %v5290 = vadd.f32 %v4111, %v5282
    %v5291 = vadd.f32 %v4116, %v5283
    %v5292 = vadd.f32 %v4121, %v5284
    %v5293 = vxor.u32 %v5289, 2147483648
    %v5294 = vxor.u32 %v5290, 2147483648
    %v5295 = vxor.u32 %v5291, 2147483648
    %v5296 = vxor.u32 %v5292, 2147483648
    %v5297 = vmul.f32 %v5293, 1.442695
    %v5298 = vpow.pop %v5297
    %v5299 = vmul.f32 %v5294, 1.442695
    %v5300 = vpow.pop %v5299
    %v5301 = vmul.f32 %v5295, 1.442695
    %v5302 = vpow.pop %v5301
    %v5303 = vmul.f32 %v5296, 1.442695
    %v5304 = vpow.pop %v5303
    %v5305 = vadd.f32 %v5298, 1.0
    %v5306 = vadd.f32 %v5300, 1.0
    %v5307 = vadd.f32 %v5302, 1.0
    %v5308 = vadd.f32 %v5304, 1.0
    %v5309 = vrcp.pop %v5305
    %v5310 = vmul.f32 1.0, %v5309
    %v5311 = vrcp.pop %v5306
    %v5312 = vmul.f32 1.0, %v5311
    %v5313 = vrcp.pop %v5307
    %v5314 = vmul.f32 1.0, %v5313
    %v5315 = vrcp.pop %v5308
    %v5316 = vmul.f32 1.0, %v5315
    %5317 = vrot.lane.b32.xlu0 %v5281, 64
    %v5318 = vpop.permute.xlu0 %5317
    %5319 = vrot.lane.b32.xlu0 %v5282, 64
    %v5320 = vpop.permute.xlu0 %5319
    %5321 = vrot.lane.b32.xlu0 %v5283, 64
    %v5322 = vpop.permute.xlu0 %5321
    %5323 = vrot.lane.b32.xlu0 %v5284, 64
    %v5324 = vpop.permute.xlu0 %5323
    %v5329 = vmul.f32 %v5310, %v5318
    %v5330 = vmul.f32 %v5312, %v5320
    %v5331 = vmul.f32 %v5314, %v5322
    %v5332 = vmul.f32 %v5316, %v5324
    %5337 = vrot.lane.b32.xlu0 %v5329, 64
    %v5338 = vpop.permute.xlu0 %5337
    %5339 = vrot.lane.b32.xlu0 %v5330, 64
    %v5340 = vpop.permute.xlu0 %5339
    %5341 = vrot.lane.b32.xlu0 %v5331, 64
    %v5342 = vpop.permute.xlu0 %5341
    %5343 = vrot.lane.b32.xlu0 %v5332, 64
    %v5344 = vpop.permute.xlu0 %5343
    %v5349 = vadd.f32 %v4106, %v5338
    %v5350 = vadd.f32 %v4111, %v5340
    %v5351 = vadd.f32 %v4116, %v5342
    %v5352 = vadd.f32 %v4121, %v5344
    %v5353 = vtanh.pop %v5349
    %v5354 = vtanh.pop %v5350
    %v5355 = vtanh.pop %v5351
    %v5356 = vtanh.pop %v5352
    %v5357 = vsub.f32 1.0, %v5310
    %v5358 = vsub.f32 1.0, %v5312
    %v5359 = vsub.f32 1.0, %v5314
    %v5360 = vsub.f32 1.0, %v5316
    %5365 = vrot.lane.b32.xlu0 %v5353, 96
    %v5366 = vpop.permute.xlu0 %5365
    %5367 = vrot.lane.b32.xlu0 %v5354, 96
    %v5368 = vpop.permute.xlu0 %5367
    %5369 = vrot.lane.b32.xlu0 %v5355, 96
    %v5370 = vpop.permute.xlu0 %5369
    %5371 = vrot.lane.b32.xlu0 %v5356, 96
    %v5372 = vpop.permute.xlu0 %5371
    %v5377 = vmul.f32 %v5357, %v5366
    %v5378 = vmul.f32 %v5358, %v5368
    %v5379 = vmul.f32 %v5359, %v5370
    %v5380 = vmul.f32 %v5360, %v5372
    %v5381 = vrot.slane %v5206, 3
    %v5382 = vrot.slane %v5206, 4
    %v5383 = vrot.slane %v5206, 5
    %v5384 = vrot.slane %v5206, 6
    %5385 = vrot.lane.b32.xlu0 %v5381, 32
    %v5386 = vpop.permute.xlu0 %5385
    %5387 = vrot.lane.b32.xlu0 %v5382, 32
    %v5388 = vpop.permute.xlu0 %5387
    %5389 = vrot.lane.b32.xlu0 %v5383, 32
    %v5390 = vpop.permute.xlu0 %5389
    %5391 = vrot.lane.b32.xlu0 %v5384, 32
    %v5392 = vpop.permute.xlu0 %5391
    %v5397 = vmul.f32 %v5310, %v5386
    %v5398 = vmul.f32 %v5312, %v5388
    %v5399 = vmul.f32 %v5314, %v5390
    %v5400 = vmul.f32 %v5316, %v5392
    %v5401 = vadd.f32 %v5377, %v5397
    %v5402 = vadd.f32 %v5378, %v5398
    %v5403 = vadd.f32 %v5379, %v5399
    %v5404 = vadd.f32 %v5380, %v5400
    %vm5405 = vcmp.gt.s32.totalorder %v4129, 5
    %v5406 = vsel %vm5405, 1, 0
    %5407 = vset.pattern.permute.xlu0 0
    %5408 = vperm.xlu0 %5407, %v5406
    %v5409 = vpop.permute.xlu0 %5408
    %vm5410 = vcmp.eq.s32.totalorder %v5409, 1
    %v5415 = vrot.slane %v5401, 5
    %v5416 = vrot.slane %v5402, 4
    %v5417 = vsel %vm4328, %v5416, %v5415
    %v5418 = vrot.slane %v5403, 3
    %v5419 = vsel %vm4331, %v5418, %v5417
    %v5420 = vrot.slane %v5404, 2
    %v5421 = vsel %vm4334, %v5420, %v5419
    %5422 = vrot.lane.b32.xlu0 %v5421, 96
    %v5423 = vpop.permute.xlu0 %5422
    %v5425 = vsel %vm5410, %v5423, %v5206
    %v5427 = vsel %vm240, %v5425, 0
    %5429 = vmatprep.subr.mxu0 0.0
    %5430 = vmatpush1.msra.mxu0 0.0
    %5431 = vmatprep.subr.mxu0 0.0
    %5432 = vmatpush1.msra.mxu0 0.0
    %5433 = vmatprep.subr.mxu0 0.0
    %5434 = vmatpush1.msra.mxu0 0.0
    %5435 = vmatprep.subr.mxu0 0.0
    %5436 = vmatpush1.msra.mxu0 0.0
    %5437 = vmatprep.subr.mxu0 0.0
    %5438 = vmatpush1.msra.mxu0 0.0
    %5439 = vmatprep.subr.mxu0 0.0
    %5440 = vmatpush1.msra.mxu0 0.0
    %5441 = vmatprep.subr.mxu0 0.0
    %5442 = vmatpush1.msra.mxu0 0.0
    %5443 = vmatprep.subr.mxu0 0.0
    %5444 = vmatpush1.msra.mxu0 0.0
    %5445 = vmatprep.subr.mxu0 0.0
    %5446 = vmatpush1.msra.mxu0 0.0
    %5447 = vmatprep.subr.mxu0 0.0
    %5448 = vmatpush1.msra.mxu0 0.0
    %5449 = vmatprep.subr.mxu0 0.0
    %5450 = vmatpush1.msra.mxu0 0.0
    %5451 = vmatprep.subr.mxu0 0.0
    %5452 = vmatpush1.msra.mxu0 0.0
    %5453 = vmatprep.subr.mxu0 0.0
    %5454 = vmatpush1.msra.mxu0 %v4127
    %5455 = vmatprep.subr.mxu0 0.0
    %5456 = vmatpush1.msra.mxu0 %v4126
    %5457 = vmatprep.subr.mxu0 0.0
    %5458 = vmatpush1.msra.mxu0 %v4125
    %5459 = vmatprep.subr.mxu0 0.0
    %5460 = vmatpush1.msra.mxu0 %v4124
    %5461 = vmatprep.subr.mxu0 0.0
    %5462 = vmatpush2.msra.mxu0 0.0
    %5463 = vmatprep.subr.mxu0 0.0
    %5464 = vmatpush2.msra.mxu0 0.0
    %5465 = vmatprep.subr.mxu0 0.0
    %5466 = vmatpush2.msra.mxu0 0.0
    %5467 = vmatprep.subr.mxu0 0.0
    %5468 = vmatpush2.msra.mxu0 0.0
    %5469 = vmatprep.subr.mxu0 0.0
    %5470 = vmatpush2.msra.mxu0 0.0
    %5471 = vmatprep.subr.mxu0 0.0
    %5472 = vmatpush2.msra.mxu0 0.0
    %5473 = vmatprep.subr.mxu0 0.0
    %5474 = vmatpush2.msra.mxu0 0.0
    %5475 = vmatprep.subr.mxu0 0.0
    %5476 = vmatpush2.msra.mxu0 0.0
    %5477 = vmatprep.subr.mxu0 0.0
    %5478 = vmatpush2.msra.mxu0 0.0
    %5479 = vmatprep.subr.mxu0 0.0
    %5480 = vmatpush2.msra.mxu0 0.0
    %5481 = vmatprep.subr.mxu0 0.0
    %5482 = vmatpush2.msra.mxu0 0.0
    %5483 = vmatprep.subr.mxu0 0.0
    %5484 = vmatpush2.msra.mxu0 0.0
    %5485 = vmatprep.subr.mxu0 0.0
    %5486 = vmatpush2.msra.mxu0 0.0
    %5487 = vmatprep.subr.mxu0 0.0
    %5488 = vmatpush2.msra.mxu0 0.0
    %5489 = vmatprep.subr.mxu0 0.0
    %5490 = vmatpush2.msra.mxu0 0.0
    %5491 = vmatprep.subr.mxu0 0.0
    %5492 = vmatpush2.msra.mxu0 0.0
    %5493 = vmatprep.mubr.f32.mxu0 0.0
    %5494 = vmatmul.mubr.f32.gmra.mxu0 %v5427
    %v5495 = vpop.f32.mrf.mxu0
    %v5496 = vadd.f32 %v4134, %v5495
    %v5497 = vpop.f32.mrf.mxu0
    %5498 = vdwg.mxu0
    %v5500 = vrot.slane %v5496, 2
    %v5501 = vrot.slane %v5496, 3
    %v5502 = vrot.slane %v5496, 4
    %v5503 = vrot.slane %v5496, 5
    %v5508 = vadd.f32 %v4106, %v5500
    %v5509 = vadd.f32 %v4111, %v5501
    %v5510 = vadd.f32 %v4116, %v5502
    %v5511 = vadd.f32 %v4121, %v5503
    %v5512 = vxor.u32 %v5508, 2147483648
    %v5513 = vxor.u32 %v5509, 2147483648
    %v5514 = vxor.u32 %v5510, 2147483648
    %v5515 = vxor.u32 %v5511, 2147483648
    %v5516 = vmul.f32 %v5512, 1.442695
    %v5517 = vpow.pop %v5516
    %v5518 = vmul.f32 %v5513, 1.442695
    %v5519 = vpow.pop %v5518
    %v5520 = vmul.f32 %v5514, 1.442695
    %v5521 = vpow.pop %v5520
    %v5522 = vmul.f32 %v5515, 1.442695
    %v5523 = vpow.pop %v5522
    %v5524 = vadd.f32 %v5517, 1.0
    %v5525 = vadd.f32 %v5519, 1.0
    %v5526 = vadd.f32 %v5521, 1.0
    %v5527 = vadd.f32 %v5523, 1.0
    %v5528 = vrcp.pop %v5524
    %v5529 = vmul.f32 1.0, %v5528
    %v5530 = vrcp.pop %v5525
    %v5531 = vmul.f32 1.0, %v5530
    %v5532 = vrcp.pop %v5526
    %v5533 = vmul.f32 1.0, %v5532
    %v5534 = vrcp.pop %v5527
    %v5535 = vmul.f32 1.0, %v5534
    %5536 = vrot.lane.b32.xlu0 %v5500, 64
    %v5537 = vpop.permute.xlu0 %5536
    %5538 = vrot.lane.b32.xlu0 %v5501, 64
    %v5539 = vpop.permute.xlu0 %5538
    %5540 = vrot.lane.b32.xlu0 %v5502, 64
    %v5541 = vpop.permute.xlu0 %5540
    %5542 = vrot.lane.b32.xlu0 %v5503, 64
    %v5543 = vpop.permute.xlu0 %5542
    %v5548 = vmul.f32 %v5529, %v5537
    %v5549 = vmul.f32 %v5531, %v5539
    %v5550 = vmul.f32 %v5533, %v5541
    %v5551 = vmul.f32 %v5535, %v5543
    %5556 = vrot.lane.b32.xlu0 %v5548, 64
    %v5557 = vpop.permute.xlu0 %5556
    %5558 = vrot.lane.b32.xlu0 %v5549, 64
    %v5559 = vpop.permute.xlu0 %5558
    %5560 = vrot.lane.b32.xlu0 %v5550, 64
    %v5561 = vpop.permute.xlu0 %5560
    %5562 = vrot.lane.b32.xlu0 %v5551, 64
    %v5563 = vpop.permute.xlu0 %5562
    %v5568 = vadd.f32 %v4106, %v5557
    %v5569 = vadd.f32 %v4111, %v5559
    %v5570 = vadd.f32 %v4116, %v5561
    %v5571 = vadd.f32 %v4121, %v5563
    %v5572 = vtanh.pop %v5568
    %v5573 = vtanh.pop %v5569
    %v5574 = vtanh.pop %v5570
    %v5575 = vtanh.pop %v5571
    %v5576 = vsub.f32 1.0, %v5529
    %v5577 = vsub.f32 1.0, %v5531
    %v5578 = vsub.f32 1.0, %v5533
    %v5579 = vsub.f32 1.0, %v5535
    %5584 = vrot.lane.b32.xlu0 %v5572, 96
    %v5585 = vpop.permute.xlu0 %5584
    %5586 = vrot.lane.b32.xlu0 %v5573, 96
    %v5587 = vpop.permute.xlu0 %5586
    %5588 = vrot.lane.b32.xlu0 %v5574, 96
    %v5589 = vpop.permute.xlu0 %5588
    %5590 = vrot.lane.b32.xlu0 %v5575, 96
    %v5591 = vpop.permute.xlu0 %5590
    %v5596 = vmul.f32 %v5576, %v5585
    %v5597 = vmul.f32 %v5577, %v5587
    %v5598 = vmul.f32 %v5578, %v5589
    %v5599 = vmul.f32 %v5579, %v5591
    %v5600 = vrot.slane %v5425, 2
    %v5601 = vrot.slane %v5425, 3
    %v5602 = vrot.slane %v5425, 4
    %v5603 = vrot.slane %v5425, 5
    %5604 = vrot.lane.b32.xlu0 %v5600, 32
    %v5605 = vpop.permute.xlu0 %5604
    %5606 = vrot.lane.b32.xlu0 %v5601, 32
    %v5607 = vpop.permute.xlu0 %5606
    %5608 = vrot.lane.b32.xlu0 %v5602, 32
    %v5609 = vpop.permute.xlu0 %5608
    %5610 = vrot.lane.b32.xlu0 %v5603, 32
    %v5611 = vpop.permute.xlu0 %5610
    %v5616 = vmul.f32 %v5529, %v5605
    %v5617 = vmul.f32 %v5531, %v5607
    %v5618 = vmul.f32 %v5533, %v5609
    %v5619 = vmul.f32 %v5535, %v5611
    %v5620 = vadd.f32 %v5596, %v5616
    %v5621 = vadd.f32 %v5597, %v5617
    %v5622 = vadd.f32 %v5598, %v5618
    %v5623 = vadd.f32 %v5599, %v5619
    %vm5624 = vcmp.gt.s32.totalorder %v4129, 6
    %v5625 = vsel %vm5624, 1, 0
    %5626 = vset.pattern.permute.xlu0 0
    %5627 = vperm.xlu0 %5626, %v5625
    %v5628 = vpop.permute.xlu0 %5627
    %vm5629 = vcmp.eq.s32.totalorder %v5628, 1
    %v5634 = vrot.slane %v5620, 6
    %v5635 = vrot.slane %v5621, 5
    %v5636 = vsel %vm4328, %v5635, %v5634
    %v5637 = vrot.slane %v5622, 4
    %v5638 = vsel %vm4331, %v5637, %v5636
    %v5639 = vrot.slane %v5623, 3
    %v5640 = vsel %vm4334, %v5639, %v5638
    %5641 = vrot.lane.b32.xlu0 %v5640, 96
    %v5642 = vpop.permute.xlu0 %5641
    %v5644 = vsel %vm5629, %v5642, %v5425
    %v5646 = vsel %vm240, %v5644, 0
    %5648 = vmatprep.subr.mxu0 0.0
    %5649 = vmatpush1.msra.mxu0 0.0
    %5650 = vmatprep.subr.mxu0 0.0
    %5651 = vmatpush1.msra.mxu0 0.0
    %5652 = vmatprep.subr.mxu0 0.0
    %5653 = vmatpush1.msra.mxu0 0.0
    %5654 = vmatprep.subr.mxu0 0.0
    %5655 = vmatpush1.msra.mxu0 0.0
    %5656 = vmatprep.subr.mxu0 0.0
    %5657 = vmatpush1.msra.mxu0 0.0
    %5658 = vmatprep.subr.mxu0 0.0
    %5659 = vmatpush1.msra.mxu0 0.0
    %5660 = vmatprep.subr.mxu0 0.0
    %5661 = vmatpush1.msra.mxu0 0.0
    %5662 = vmatprep.subr.mxu0 0.0
    %5663 = vmatpush1.msra.mxu0 0.0
    %5664 = vmatprep.subr.mxu0 0.0
    %5665 = vmatpush1.msra.mxu0 0.0
    %5666 = vmatprep.subr.mxu0 0.0
    %5667 = vmatpush1.msra.mxu0 0.0
    %5668 = vmatprep.subr.mxu0 0.0
    %5669 = vmatpush1.msra.mxu0 0.0
    %5670 = vmatprep.subr.mxu0 0.0
    %5671 = vmatpush1.msra.mxu0 0.0
    %5672 = vmatprep.subr.mxu0 0.0
    %5673 = vmatpush1.msra.mxu0 %v4127
    %5674 = vmatprep.subr.mxu0 0.0
    %5675 = vmatpush1.msra.mxu0 %v4126
    %5676 = vmatprep.subr.mxu0 0.0
    %5677 = vmatpush1.msra.mxu0 %v4125
    %5678 = vmatprep.subr.mxu0 0.0
    %5679 = vmatpush1.msra.mxu0 %v4124
    %5680 = vmatprep.subr.mxu0 0.0
    %5681 = vmatpush2.msra.mxu0 0.0
    %5682 = vmatprep.subr.mxu0 0.0
    %5683 = vmatpush2.msra.mxu0 0.0
    %5684 = vmatprep.subr.mxu0 0.0
    %5685 = vmatpush2.msra.mxu0 0.0
    %5686 = vmatprep.subr.mxu0 0.0
    %5687 = vmatpush2.msra.mxu0 0.0
    %5688 = vmatprep.subr.mxu0 0.0
    %5689 = vmatpush2.msra.mxu0 0.0
    %5690 = vmatprep.subr.mxu0 0.0
    %5691 = vmatpush2.msra.mxu0 0.0
    %5692 = vmatprep.subr.mxu0 0.0
    %5693 = vmatpush2.msra.mxu0 0.0
    %5694 = vmatprep.subr.mxu0 0.0
    %5695 = vmatpush2.msra.mxu0 0.0
    %5696 = vmatprep.subr.mxu0 0.0
    %5697 = vmatpush2.msra.mxu0 0.0
    %5698 = vmatprep.subr.mxu0 0.0
    %5699 = vmatpush2.msra.mxu0 0.0
    %5700 = vmatprep.subr.mxu0 0.0
    %5701 = vmatpush2.msra.mxu0 0.0
    %5702 = vmatprep.subr.mxu0 0.0
    %5703 = vmatpush2.msra.mxu0 0.0
    %5704 = vmatprep.subr.mxu0 0.0
    %5705 = vmatpush2.msra.mxu0 0.0
    %5706 = vmatprep.subr.mxu0 0.0
    %5707 = vmatpush2.msra.mxu0 0.0
    %5708 = vmatprep.subr.mxu0 0.0
    %5709 = vmatpush2.msra.mxu0 0.0
    %5710 = vmatprep.subr.mxu0 0.0
    %5711 = vmatpush2.msra.mxu0 0.0
    %5712 = vmatprep.mubr.f32.mxu0 0.0
    %5713 = vmatmul.mubr.f32.gmra.mxu0 %v5646
    %v5714 = vpop.f32.mrf.mxu0
    %v5715 = vadd.f32 %v4134, %v5714
    %v5716 = vpop.f32.mrf.mxu0
    %5717 = vdwg.mxu0
    %v5719 = vrot.slane %v5715, 1
    %v5720 = vrot.slane %v5715, 2
    %v5721 = vrot.slane %v5715, 3
    %v5722 = vrot.slane %v5715, 4
    %v5727 = vadd.f32 %v4106, %v5719
    %v5728 = vadd.f32 %v4111, %v5720
    %v5729 = vadd.f32 %v4116, %v5721
    %v5730 = vadd.f32 %v4121, %v5722
    %v5731 = vxor.u32 %v5727, 2147483648
    %v5732 = vxor.u32 %v5728, 2147483648
    %v5733 = vxor.u32 %v5729, 2147483648
    %v5734 = vxor.u32 %v5730, 2147483648
    %v5735 = vmul.f32 %v5731, 1.442695
    %v5736 = vpow.pop %v5735
    %v5737 = vmul.f32 %v5732, 1.442695
    %v5738 = vpow.pop %v5737
    %v5739 = vmul.f32 %v5733, 1.442695
    %v5740 = vpow.pop %v5739
    %v5741 = vmul.f32 %v5734, 1.442695
    %v5742 = vpow.pop %v5741
    %v5743 = vadd.f32 %v5736, 1.0
    %v5744 = vadd.f32 %v5738, 1.0
    %v5745 = vadd.f32 %v5740, 1.0
    %v5746 = vadd.f32 %v5742, 1.0
    %v5747 = vrcp.pop %v5743
    %v5748 = vmul.f32 1.0, %v5747
    %v5749 = vrcp.pop %v5744
    %v5750 = vmul.f32 1.0, %v5749
    %v5751 = vrcp.pop %v5745
    %v5752 = vmul.f32 1.0, %v5751
    %v5753 = vrcp.pop %v5746
    %v5754 = vmul.f32 1.0, %v5753
    %5755 = vrot.lane.b32.xlu0 %v5719, 64
    %v5756 = vpop.permute.xlu0 %5755
    %5757 = vrot.lane.b32.xlu0 %v5720, 64
    %v5758 = vpop.permute.xlu0 %5757
    %5759 = vrot.lane.b32.xlu0 %v5721, 64
    %v5760 = vpop.permute.xlu0 %5759
    %5761 = vrot.lane.b32.xlu0 %v5722, 64
    %v5762 = vpop.permute.xlu0 %5761
    %v5767 = vmul.f32 %v5748, %v5756
    %v5768 = vmul.f32 %v5750, %v5758
    %v5769 = vmul.f32 %v5752, %v5760
    %v5770 = vmul.f32 %v5754, %v5762
    %5775 = vrot.lane.b32.xlu0 %v5767, 64
    %v5776 = vpop.permute.xlu0 %5775
    %5777 = vrot.lane.b32.xlu0 %v5768, 64
    %v5778 = vpop.permute.xlu0 %5777
    %5779 = vrot.lane.b32.xlu0 %v5769, 64
    %v5780 = vpop.permute.xlu0 %5779
    %5781 = vrot.lane.b32.xlu0 %v5770, 64
    %v5782 = vpop.permute.xlu0 %5781
    %v5787 = vadd.f32 %v4106, %v5776
    %v5788 = vadd.f32 %v4111, %v5778
    %v5789 = vadd.f32 %v4116, %v5780
    %v5790 = vadd.f32 %v4121, %v5782
    %v5791 = vtanh.pop %v5787
    %v5792 = vtanh.pop %v5788
    %v5793 = vtanh.pop %v5789
    %v5794 = vtanh.pop %v5790
    %v5795 = vsub.f32 1.0, %v5748
    %v5796 = vsub.f32 1.0, %v5750
    %v5797 = vsub.f32 1.0, %v5752
    %v5798 = vsub.f32 1.0, %v5754
    %5803 = vrot.lane.b32.xlu0 %v5791, 96
    %v5804 = vpop.permute.xlu0 %5803
    %5805 = vrot.lane.b32.xlu0 %v5792, 96
    %v5806 = vpop.permute.xlu0 %5805
    %5807 = vrot.lane.b32.xlu0 %v5793, 96
    %v5808 = vpop.permute.xlu0 %5807
    %5809 = vrot.lane.b32.xlu0 %v5794, 96
    %v5810 = vpop.permute.xlu0 %5809
    %v5815 = vmul.f32 %v5795, %v5804
    %v5816 = vmul.f32 %v5796, %v5806
    %v5817 = vmul.f32 %v5797, %v5808
    %v5818 = vmul.f32 %v5798, %v5810
    %v5819 = vrot.slane %v5644, 1
    %v5820 = vrot.slane %v5644, 2
    %v5821 = vrot.slane %v5644, 3
    %v5822 = vrot.slane %v5644, 4
    %5823 = vrot.lane.b32.xlu0 %v5819, 32
    %v5824 = vpop.permute.xlu0 %5823
    %5825 = vrot.lane.b32.xlu0 %v5820, 32
    %v5826 = vpop.permute.xlu0 %5825
    %5827 = vrot.lane.b32.xlu0 %v5821, 32
    %v5828 = vpop.permute.xlu0 %5827
    %5829 = vrot.lane.b32.xlu0 %v5822, 32
    %v5830 = vpop.permute.xlu0 %5829
    %v5835 = vmul.f32 %v5748, %v5824
    %v5836 = vmul.f32 %v5750, %v5826
    %v5837 = vmul.f32 %v5752, %v5828
    %v5838 = vmul.f32 %v5754, %v5830
    %v5839 = vadd.f32 %v5815, %v5835
    %v5840 = vadd.f32 %v5816, %v5836
    %v5841 = vadd.f32 %v5817, %v5837
    %v5842 = vadd.f32 %v5818, %v5838
    %vm5843 = vcmp.gt.s32.totalorder %v4129, 7
    %v5844 = vsel %vm5843, 1, 0
    %5845 = vset.pattern.permute.xlu0 0
    %5846 = vperm.xlu0 %5845, %v5844
    %v5847 = vpop.permute.xlu0 %5846
    %vm5848 = vcmp.eq.s32.totalorder %v5847, 1
    %v5853 = vrot.slane %v5839, 7
    %v5854 = vrot.slane %v5840, 6
    %v5855 = vsel %vm4328, %v5854, %v5853
    %v5856 = vrot.slane %v5841, 5
    %v5857 = vsel %vm4331, %v5856, %v5855
    %v5858 = vrot.slane %v5842, 4
    %v5859 = vsel %vm4334, %v5858, %v5857
    %5860 = vrot.lane.b32.xlu0 %v5859, 96
    %v5861 = vpop.permute.xlu0 %5860
    %v5863 = vsel %vm5848, %v5861, %v5644
    %v5865 = vrot.slane %v5863, 2
    %v5867 = vsub.f32 %v5863, %v5865
    %v5868 = vand.u32 2147483647, %v5867
    %v5869 = vmul.f32 %v5863, %v5865
    %5870 = vrot.lane.b32.xlu0 %v5865, 32
    %v5871 = vpop.permute.xlu0 %5870
    %5874 = vrot.lane.b32.xlu0 %v5868, 64
    %v5875 = vpop.permute.xlu0 %5874
    %5878 = vrot.lane.b32.xlu0 %v5869, 96
    %v5879 = vpop.permute.xlu0 %5878
    %v5881 = vsel %vm240, %v5863, %v5871
    %v5882 = vsel %vm3840, %v5881, %v5875
    %vm5883 = vcmask 785408
    %v5884 = vsel %vm5883, %v5882, %v5879
    %v5885 = vld [vmem:[%s24] sm:$0xff]
    %v5886 = vld [vmem:[%s24 + $0x8] sm:$0xff]
    %v5887 = vld [vmem:[%s24 + $0x10] sm:$0xff]
    %v5888 = vld [vmem:[%s24 + $0x18] sm:$0xff]
    %v5889 = vld [vmem:[%s24 + $0x20] sm:$0xff]
    %v5890 = vld [vmem:[%s24 + $0x28] sm:$0xff]
    %v5891 = vld [vmem:[%s24 + $0x30] sm:$0xff]
    %v5892 = vld [vmem:[%s24 + $0x38] sm:$0xff]
    %v5893 = vld [vmem:[%s24 + $0x40] sm:$0xff]
    %v5894 = vld [vmem:[%s24 + $0x48] sm:$0xff]
    %v5895 = vld [vmem:[%s24 + $0x50] sm:$0xff]
    %v5896 = vld [vmem:[%s24 + $0x58] sm:$0xff]
    %v5897 = vld [vmem:[%s24 + $0x60] sm:$0xff]
    %v5898 = vld [vmem:[%s24 + $0x68] sm:$0xff]
    %v5899 = vld [vmem:[%s24 + $0x70] sm:$0xff]
    %v5900 = vld [vmem:[%s24 + $0x78] sm:$0xff]
    %v5901 = vld [vmem:[%s25] sm:$0x1]
    %v5903 = vlaneseq
    %v5904 = vshrl.u32 %v5903, 7
    %v5905 = vsub.s32 0, %v5904
    %v5906 = vrot.slane %v5901, %v5905
    %5908 = vmatprep.subr.mxu0 0.0
    %5909 = vmatpush1.msra.mxu0 %v5900
    %5910 = vmatprep.subr.mxu0 0.0
    %5911 = vmatpush1.msra.mxu0 %v5899
    %5912 = vmatprep.subr.mxu0 0.0
    %5913 = vmatpush1.msra.mxu0 %v5898
    %5914 = vmatprep.subr.mxu0 0.0
    %5915 = vmatpush1.msra.mxu0 %v5897
    %5916 = vmatprep.subr.mxu0 0.0
    %5917 = vmatpush1.msra.mxu0 %v5896
    %5918 = vmatprep.subr.mxu0 0.0
    %5919 = vmatpush1.msra.mxu0 %v5895
    %5920 = vmatprep.subr.mxu0 0.0
    %5921 = vmatpush1.msra.mxu0 %v5894
    %5922 = vmatprep.subr.mxu0 0.0
    %5923 = vmatpush1.msra.mxu0 %v5893
    %5924 = vmatprep.subr.mxu0 0.0
    %5925 = vmatpush1.msra.mxu0 %v5892
    %5926 = vmatprep.subr.mxu0 0.0
    %5927 = vmatpush1.msra.mxu0 %v5891
    %5928 = vmatprep.subr.mxu0 0.0
    %5929 = vmatpush1.msra.mxu0 %v5890
    %5930 = vmatprep.subr.mxu0 0.0
    %5931 = vmatpush1.msra.mxu0 %v5889
    %5932 = vmatprep.subr.mxu0 0.0
    %5933 = vmatpush1.msra.mxu0 %v5888
    %5934 = vmatprep.subr.mxu0 0.0
    %5935 = vmatpush1.msra.mxu0 %v5887
    %5936 = vmatprep.subr.mxu0 0.0
    %5937 = vmatpush1.msra.mxu0 %v5886
    %5938 = vmatprep.subr.mxu0 0.0
    %5939 = vmatpush1.msra.mxu0 %v5885
    %5940 = vmatprep.subr.mxu0 0.0
    %5941 = vmatpush2.msra.mxu0 0.0
    %5942 = vmatprep.subr.mxu0 0.0
    %5943 = vmatpush2.msra.mxu0 0.0
    %5944 = vmatprep.subr.mxu0 0.0
    %5945 = vmatpush2.msra.mxu0 0.0
    %5946 = vmatprep.subr.mxu0 0.0
    %5947 = vmatpush2.msra.mxu0 0.0
    %5948 = vmatprep.subr.mxu0 0.0
    %5949 = vmatpush2.msra.mxu0 0.0
    %5950 = vmatprep.subr.mxu0 0.0
    %5951 = vmatpush2.msra.mxu0 0.0
    %5952 = vmatprep.subr.mxu0 0.0
    %5953 = vmatpush2.msra.mxu0 0.0
    %5954 = vmatprep.subr.mxu0 0.0
    %5955 = vmatpush2.msra.mxu0 0.0
    %5956 = vmatprep.subr.mxu0 0.0
    %5957 = vmatpush2.msra.mxu0 0.0
    %5958 = vmatprep.subr.mxu0 0.0
    %5959 = vmatpush2.msra.mxu0 0.0
    %5960 = vmatprep.subr.mxu0 0.0
    %5961 = vmatpush2.msra.mxu0 0.0
    %5962 = vmatprep.subr.mxu0 0.0
    %5963 = vmatpush2.msra.mxu0 0.0
    %5964 = vmatprep.subr.mxu0 0.0
    %5965 = vmatpush2.msra.mxu0 0.0
    %5966 = vmatprep.subr.mxu0 0.0
    %5967 = vmatpush2.msra.mxu0 0.0
    %5968 = vmatprep.subr.mxu0 0.0
    %5969 = vmatpush2.msra.mxu0 0.0
    %5970 = vmatprep.subr.mxu0 0.0
    %5971 = vmatpush2.msra.mxu0 0.0
    %5972 = vmatprep.mubr.f32.mxu0 0.0
    %5973 = vmatmul.mubr.f32.gmra.mxu0 %v5884
    %v5974 = vpop.f32.mrf.mxu0
    %v5975 = vadd.f32 %v5906, %v5974
    %v5976 = vpop.f32.mrf.mxu0
    %5977 = vdwg.mxu0
    %v5978 = vmax.f32 %v5975, 0.0
    %v5979 = vld [vmem:[%s26] sm:$0xff]
    %v5980 = vld [vmem:[%s26 + $0x8] sm:$0xff]
    %v5981 = vld [vmem:[%s26 + $0x10] sm:$0xff]
    %v5982 = vld [vmem:[%s26 + $0x18] sm:$0xff]
    %v5983 = vld [vmem:[%s27] sm:$0x1]
    %v5985 = vlaneseq
    %v5986 = vshrl.u32 %v5985, 7
    %v5987 = vsub.s32 0, %v5986
    %v5988 = vrot.slane %v5983, %v5987
    %v5991 = vsel %vm240, %v5978, 0
    %5993 = vmatprep.subr.mxu0 0.0
    %5994 = vmatpush1.msra.mxu0 0.0
    %5995 = vmatprep.subr.mxu0 0.0
    %5996 = vmatpush1.msra.mxu0 0.0
    %5997 = vmatprep.subr.mxu0 0.0
    %5998 = vmatpush1.msra.mxu0 0.0
    %5999 = vmatprep.subr.mxu0 0.0
    %6000 = vmatpush1.msra.mxu0 0.0
    %6001 = vmatprep.subr.mxu0 0.0
    %6002 = vmatpush1.msra.mxu0 0.0
    %6003 = vmatprep.subr.mxu0 0.0
    %6004 = vmatpush1.msra.mxu0 0.0
    %6005 = vmatprep.subr.mxu0 0.0
    %6006 = vmatpush1.msra.mxu0 0.0
    %6007 = vmatprep.subr.mxu0 0.0
    %6008 = vmatpush1.msra.mxu0 0.0
    %6009 = vmatprep.subr.mxu0 0.0
    %6010 = vmatpush1.msra.mxu0 0.0
    %6011 = vmatprep.subr.mxu0 0.0
    %6012 = vmatpush1.msra.mxu0 0.0
    %6013 = vmatprep.subr.mxu0 0.0
    %6014 = vmatpush1.msra.mxu0 0.0
    %6015 = vmatprep.subr.mxu0 0.0
    %6016 = vmatpush1.msra.mxu0 0.0
    %6017 = vmatprep.subr.mxu0 0.0
    %6018 = vmatpush1.msra.mxu0 %v5982
    %6019 = vmatprep.subr.mxu0 0.0
    %6020 = vmatpush1.msra.mxu0 %v5981
    %6021 = vmatprep.subr.mxu0 0.0
    %6022 = vmatpush1.msra.mxu0 %v5980
    %6023 = vmatprep.subr.mxu0 0.0
    %6024 = vmatpush1.msra.mxu0 %v5979
    %6025 = vmatprep.subr.mxu0 0.0
    %6026 = vmatpush2.msra.mxu0 0.0
    %6027 = vmatprep.subr.mxu0 0.0
    %6028 = vmatpush2.msra.mxu0 0.0
    %6029 = vmatprep.subr.mxu0 0.0
    %6030 = vmatpush2.msra.mxu0 0.0
    %6031 = vmatprep.subr.mxu0 0.0
    %6032 = vmatpush2.msra.mxu0 0.0
    %6033 = vmatprep.subr.mxu0 0.0
    %6034 = vmatpush2.msra.mxu0 0.0
    %6035 = vmatprep.subr.mxu0 0.0
    %6036 = vmatpush2.msra.mxu0 0.0
    %6037 = vmatprep.subr.mxu0 0.0
    %6038 = vmatpush2.msra.mxu0 0.0
    %6039 = vmatprep.subr.mxu0 0.0
    %6040 = vmatpush2.msra.mxu0 0.0
    %6041 = vmatprep.subr.mxu0 0.0
    %6042 = vmatpush2.msra.mxu0 0.0
    %6043 = vmatprep.subr.mxu0 0.0
    %6044 = vmatpush2.msra.mxu0 0.0
    %6045 = vmatprep.subr.mxu0 0.0
    %6046 = vmatpush2.msra.mxu0 0.0
    %6047 = vmatprep.subr.mxu0 0.0
    %6048 = vmatpush2.msra.mxu0 0.0
    %6049 = vmatprep.subr.mxu0 0.0
    %6050 = vmatpush2.msra.mxu0 0.0
    %6051 = vmatprep.subr.mxu0 0.0
    %6052 = vmatpush2.msra.mxu0 0.0
    %6053 = vmatprep.subr.mxu0 0.0
    %6054 = vmatpush2.msra.mxu0 0.0
    %6055 = vmatprep.subr.mxu0 0.0
    %6056 = vmatpush2.msra.mxu0 0.0
    %6057 = vmatprep.mubr.f32.mxu0 0.0
    %6058 = vmatmul.mubr.f32.gmra.mxu0 %v5991
    %v6059 = vpop.f32.mrf.mxu0
    %v6060 = vadd.f32 %v5988, %v6059
    %v6061 = vpop.f32.mrf.mxu0
    %6062 = vdwg.mxu0
    %vm6063 = vcmask 9216
    %6064 = vst.msk [vmem:[#allocation2] sm:$0x3] %vm6063, %v6060
    // Predicated region
    $region114: #{tpu_custom_call.1} parent=1 // pred_check
      _
    $region115: #{tpu_custom_call.1} parent=1 // pred_check_branch
      %6066 = sbr.rel (0) target = $region117
    $region116: #{tpu_custom_call.1} parent=1 // pred_region
      %s6068 = ssub.s32 32, 32
      %6069 = vsyncadd [#allocation3], %s6068
      %s6071 = sshll.u32 [#allocation2], 4
      %s6072 = int_to_ptr.vmem [resolvable:$true] %s6071
      %6074 = dma.vmem_to_hbm [thread:$0]  %s6072, 32, %s28, [#allocation3]
    $region117: #{tpu_custom_call.1} parent=1 // pred_fallthru
      _
    // Predicated region
    $region118: #{tpu_custom_call.1} parent=1 // pred_check
      _
    $region119: #{tpu_custom_call.1} parent=1 // pred_check_branch
      %6076 = sbr.rel (0) target = $region121
    $region120: #{tpu_custom_call.1} parent=1 // pred_region
      %6077 = dma.done [#allocation3], 32
    $region121: #{tpu_custom_call.1} parent=1 // pred_fallthru
      _
    %6078 = vsyncpa [#allocation3], 1

</llo_original>
